<compile_context>
chip_gen: v7x
topology: tpu7x:2x2x1
jax: 0.10.0
libtpu: 0.0.40
codegen_flags: <defaults>
</compile_context>

<pallas_src>
import jax
import jax.numpy as jnp
from jax.experimental import pallas as pl
from jax.experimental.pallas import tpu as pltpu


D_IN, D1, D2, D3, D_OUT = 128 * 128, 512, 128, 64, 4


def _fc1_kernel(x_ref, w1_ref, o_ref, acc_ref):
    """K-tiled fc1 matmul for one 256-wide slice of the 512 outputs.

    Grid = (n_split, K // tk); axis 0 is parallel over output-column halves,
    axis 1 is the K reduction ("arbitrary").  bf16 x bf16 -> f32 accumulate.
    """
    k = pl.program_id(1)

    @pl.when(k == 0)
    def _():
        acc_ref[...] = jnp.zeros_like(acc_ref)

    # Native MXU mode: bf16 operands, f32 accumulation. No dtype upcast of the
    # 4 MiB W1 tile.
    acc_ref[...] += jnp.dot(
        x_ref[...], w1_ref[...], preferred_element_type=jnp.float32
    )

    @pl.when(k == pl.num_programs(1) - 1)
    def _():
        o_ref[...] = acc_ref[...]


def _tail_kernel(h_ref, b1_ref, w2_ref, b2_ref, w3_ref, b3_ref, w4_ref, b4_ref,
                 o_ref):
    """b1 + ReLU, then fc2/fc3/fc4 (+ReLUs).  Everything is tiny (<0.5 MiB)."""
    h1 = jnp.maximum(h_ref[...] + b1_ref[...], 0.0)                       # (M, 512)
    h2 = jnp.maximum(
        jnp.dot(h1, w2_ref[...], preferred_element_type=jnp.float32)
        + b2_ref[...],
        0.0,
    )                                                                     # (M, 128)
    h3 = jnp.maximum(
        jnp.dot(h2, w3_ref[...], preferred_element_type=jnp.float32)
        + b3_ref[...],
        0.0,
    )                                                                     # (M, 64)
    o_ref[...] = (
        jnp.dot(h3, w4_ref[...], preferred_element_type=jnp.float32)
        + b4_ref[...]
    ).astype(o_ref.dtype)                                                 # (M, 4)


def simple_nn_pallas(x, params, *, tk=8192, n_split=2):
    """Full SimpleNN forward.  x: (M, 16384) f32."""
    (w1, b1), (w2, b2), (w3, b3), (w4, b4) = params
    M, K = x.shape
    assert K == D_IN and w1.shape == (D_IN, D1)
    tk = min(tk, K)
    assert K % tk == 0, "reduction dim must divide the K tile"
    assert D1 % n_split == 0
    tn = D1 // n_split

    # Only 128 KiB at batch=2; feed bf16 straight to the MXU.
    x_bf16 = x.astype(jnp.bfloat16)

    # ---- fc1: the HBM-bound part (16 MiB bf16 W1 stream). ----
    h1_pre = pl.pallas_call(
        _fc1_kernel,
        out_shape=jax.ShapeDtypeStruct((M, D1), jnp.float32),
        grid_spec=pltpu.PrefetchScalarGridSpec(
            num_scalar_prefetch=0,
            grid=(n_split, K // tk),
            in_specs=[
                pl.BlockSpec((M, tk), lambda j, k: (0, k)),    # x   K-tile (bf16)
                pl.BlockSpec((tk, tn), lambda j, k: (k, j)),   # W1  K/N-tile (bf16)
            ],
            out_specs=pl.BlockSpec((M, tn), lambda j, k: (0, j)),
            scratch_shapes=[pltpu.VMEM((M, tn), jnp.float32)],  # f32 accumulator
        ),
        compiler_params=pltpu.CompilerParams(
            # N-halves are independent (shardable across TCs on v7x); K reduces.
            dimension_semantics=("parallel", "arbitrary"),
            vmem_limit_bytes=32 * 1024 * 1024,
        ),
    )(x_bf16, w1)

    # ---- fc2-fc4 tail: tiny, single grid point, everything resident in VMEM. ----
    out = pl.pallas_call(
        _tail_kernel,
        out_shape=jax.ShapeDtypeStruct((M, D_OUT), jnp.float32),
    )(
        h1_pre,
        b1.reshape(1, D1),
        w2, b2.reshape(1, D2),
        w3, b3.reshape(1, D3),
        w4, b4.reshape(1, D_OUT),
    )
    return out


def init_params(key):
    """Deterministic init matching SimpleNN.__init__ shapes (weights stored as
    (in_features, out_features) so y = x @ W + b == nn.Linear).

    W1 is stored in bf16 (the streamed dtype); W2-W4 and all biases stay f32.
    """
    dims = [(D_IN, D1), (D1, D2), (D2, D3), (D3, D_OUT)]
    params = []
    for i, (fan_in, fan_out) in enumerate(dims):
        kw, kb, key = jax.random.split(key, 3)
        bound = 1.0 / jnp.sqrt(fan_in)
        w = jax.random.uniform(kw, (fan_in, fan_out), jnp.float32, -bound, bound)
        b = jax.random.uniform(kb, (fan_out,), jnp.float32, -bound, bound)
        if i == 0:
            w = w.astype(jnp.bfloat16)  # halve the dominant HBM stream
        params.append((w, b))
    return params


@jax.jit
def simple_nn_forward(x, params):
    return simple_nn_pallas(x, params)


if __name__ == "__main__":
    key = jax.random.PRNGKey(0)
    kx, kp = jax.random.split(key)

    batch = 2
    x = jax.random.normal(kx, (batch, D_IN), jnp.float32)
    params = init_params(kp)

    out = simple_nn_forward(x, params)
    jax.block_until_ready(out)

    # Plain-JAX reference using the same dtypes the kernel consumes
    # (bf16 x / bf16 W1, f32 elsewhere).  This validates the kernel given the
    # quantization choices; bf16-vs-f32 model error is a separate concern.
    ref = x.astype(jnp.bfloat16).astype(jnp.float32)
    for i, (w, b) in enumerate(params):
        ref = ref @ w.astype(jnp.float32) + b
        if i < 3:
            ref = jnp.maximum(ref, 0.0)

    assert out.shape == (batch, D_OUT)
    max_err = jnp.max(jnp.abs(out - ref))
    assert jnp.allclose(out, ref, atol=2e-3, rtol=2e-3), f"max abs err {max_err}"

    print("KERNEL_OK")
</pallas_src>

<mosaic_0001>
module attributes {stable_mosaic.version = 11 : i64} {
  func.func @_fc1_kernel(%arg0: i32, %arg1: i32, %arg2: memref<2x8192xbf16, #tpu.memory_space<vmem>>, %arg3: memref<8192x256xbf16, #tpu.memory_space<vmem>>, %arg4: memref<2x256xf32, #tpu.memory_space<vmem>>, %arg5: memref<2x256xf32, #tpu.memory_space<vmem>>) attributes {dimension_semantics = [#tpu.dimension_semantics<parallel>, #tpu.dimension_semantics<arbitrary>], iteration_bounds = array<i64: 2, 2>, scalar_prefetch = 0 : i64, scratch_operands = 1 : i64, tpu.core_type = #tpu.core_type<tc>, window_params = [{transform_indices = @transform_0, window_bounds = array<i64: 2, 8192>}, {transform_indices = @transform_1, window_bounds = array<i64: 8192, 256>}, {transform_indices = @transform_2, window_bounds = array<i64: 2, 256>}]} {
    %c0_i32 = arith.constant 0 : i32
    %0 = arith.cmpi eq, %arg1, %c0_i32 : i32
    %1 = arith.extui %0 : i1 to i32
    %c0_i32_0 = arith.constant 0 : i32
    %2 = arith.cmpi ne, %1, %c0_i32_0 : i32
    scf.if %2 {
      %cst_9 = arith.constant 0.000000e+00 : f32
      %12 = vector.broadcast %cst_9 : f32 to vector<2x256xf32>
      %c0_10 = arith.constant 0 : index
      %c0_11 = arith.constant 0 : index
      %13 = vector.load %arg5[%c0_10, %c0_11] : memref<2x256xf32, #tpu.memory_space<vmem>>, vector<2x256xf32>
      tpu.vector_store %arg5[%c0_10, %c0_11], %12 {strides = array<i32>} : memref<2x256xf32, #tpu.memory_space<vmem>>, vector<2x256xf32>,
    } else {
    }
    %c0 = arith.constant 0 : index
    %c0_1 = arith.constant 0 : index
    %3 = vector.load %arg5[%c0, %c0_1] : memref<2x256xf32, #tpu.memory_space<vmem>>, vector<2x256xf32>
    %c0_2 = arith.constant 0 : index
    %c0_3 = arith.constant 0 : index
    %4 = vector.load %arg2[%c0_2, %c0_3] : memref<2x8192xbf16, #tpu.memory_space<vmem>>, vector<2x8192xbf16>
    %c0_4 = arith.constant 0 : index
    %c0_5 = arith.constant 0 : index
    %5 = vector.load %arg3[%c0_4, %c0_5] : memref<8192x256xbf16, #tpu.memory_space<vmem>>, vector<8192x256xbf16>
    %cst = arith.constant dense<0.000000e+00> : vector<2x256xf32>
    %6 = tpu.matmul %4, %5, %cst {dimension_numbers = #tpu.dot_dimension_numbers<[1], [0], [0], [1], [0, 0, 1, 1], [], []>} : vector<2x8192xbf16>, vector<8192x256xbf16>, vector<2x256xf32> -> vector<2x256xf32>
    %7 = arith.addf %3, %6 : vector<2x256xf32>
    %c0_6 = arith.constant 0 : index
    %c0_7 = arith.constant 0 : index
    %8 = vector.load %arg5[%c0_6, %c0_7] : memref<2x256xf32, #tpu.memory_space<vmem>>, vector<2x256xf32>
    tpu.vector_store %arg5[%c0_6, %c0_7], %7 {strides = array<i32>} : memref<2x256xf32, #tpu.memory_space<vmem>>, vector<2x256xf32>,
    %c1_i32 = arith.constant 1 : i32
    %9 = arith.cmpi eq, %arg1, %c1_i32 : i32
    %10 = arith.extui %9 : i1 to i32
    %c0_i32_8 = arith.constant 0 : i32
    %11 = arith.cmpi ne, %10, %c0_i32_8 : i32
    scf.if %11 {
      %c0_9 = arith.constant 0 : index
      %c0_10 = arith.constant 0 : index
      %12 = vector.load %arg5[%c0_9, %c0_10] : memref<2x256xf32, #tpu.memory_space<vmem>>, vector<2x256xf32>
      %c0_11 = arith.constant 0 : index
      %c0_12 = arith.constant 0 : index
      %13 = vector.load %arg4[%c0_11, %c0_12] : memref<2x256xf32, #tpu.memory_space<vmem>>, vector<2x256xf32>
      tpu.vector_store %arg4[%c0_11, %c0_12], %12 {strides = array<i32>} : memref<2x256xf32, #tpu.memory_space<vmem>>, vector<2x256xf32>,
    } else {
    }
    return
  }
  func.func @transform_0(%arg0: i32, %arg1: i32) -> (i32, i32) {
    %c0_i32 = arith.constant 0 : i32
    %c0_i32_0 = arith.constant 0 : i32
    return %c0_i32, %arg1 : i32, i32
  }
  func.func @transform_1(%arg0: i32, %arg1: i32) -> (i32, i32) {
    %c0_i32 = arith.constant 0 : i32
    return %arg1, %arg0 : i32, i32
  }
  func.func @transform_2(%arg0: i32, %arg1: i32) -> (i32, i32) {
    %c0_i32 = arith.constant 0 : i32
    %c0_i32_0 = arith.constant 0 : i32
    return %c0_i32, %arg0 : i32, i32
  }
}

module attributes {stable_mosaic.version = 11 : i64} {
  func.func @_tail_kernel(%arg0: memref<2x512xf32, #tpu.memory_space<vmem>>, %arg1: memref<1x512xf32, #tpu.memory_space<vmem>>, %arg2: memref<512x128xf32, #tpu.memory_space<vmem>>, %arg3: memref<1x128xf32, #tpu.memory_space<vmem>>, %arg4: memref<128x64xf32, #tpu.memory_space<vmem>>, %arg5: memref<1x64xf32, #tpu.memory_space<vmem>>, %arg6: memref<64x4xf32, #tpu.memory_space<vmem>>, %arg7: memref<1x4xf32, #tpu.memory_space<vmem>>, %arg8: memref<2x4xf32, #tpu.memory_space<vmem>>) attributes {dimension_semantics = [], scalar_prefetch = 0 : i64, scratch_operands = 0 : i64, tpu.core_type = #tpu.core_type<tc>} {
    %c0 = arith.constant 0 : index
    %c0_0 = arith.constant 0 : index
    %0 = vector.load %arg0[%c0, %c0_0] : memref<2x512xf32, #tpu.memory_space<vmem>>, vector<2x512xf32>
    %c0_1 = arith.constant 0 : index
    %c0_2 = arith.constant 0 : index
    %1 = vector.load %arg1[%c0_1, %c0_2] : memref<1x512xf32, #tpu.memory_space<vmem>>, vector<1x512xf32>
    %2 = vector.broadcast %1 : vector<1x512xf32> to vector<2x512xf32>
    %3 = arith.addf %0, %2 : vector<2x512xf32>
    %cst = arith.constant 0.000000e+00 : f32
    %4 = vector.broadcast %cst : f32 to vector<2x512xf32>
    %5 = arith.maximumf %3, %4 : vector<2x512xf32>
    %c0_3 = arith.constant 0 : index
    %c0_4 = arith.constant 0 : index
    %6 = vector.load %arg2[%c0_3, %c0_4] : memref<512x128xf32, #tpu.memory_space<vmem>>, vector<512x128xf32>
    %cst_5 = arith.constant dense<0.000000e+00> : vector<2x128xf32>
    %7 = tpu.matmul %5, %6, %cst_5 {dimension_numbers = #tpu.dot_dimension_numbers<[1], [0], [0], [1], [0, 0, 1, 1], [], []>} : vector<2x512xf32>, vector<512x128xf32>, vector<2x128xf32> -> vector<2x128xf32>
    %c0_6 = arith.constant 0 : index
    %c0_7 = arith.constant 0 : index
    %8 = vector.load %arg3[%c0_6, %c0_7] : memref<1x128xf32, #tpu.memory_space<vmem>>, vector<1x128xf32>
    %9 = vector.broadcast %8 : vector<1x128xf32> to vector<2x128xf32>
    %10 = arith.addf %7, %9 : vector<2x128xf32>
    %cst_8 = arith.constant 0.000000e+00 : f32
    %11 = vector.broadcast %cst_8 : f32 to vector<2x128xf32>
    %12 = arith.maximumf %10, %11 : vector<2x128xf32>
    %c0_9 = arith.constant 0 : index
    %c0_10 = arith.constant 0 : index
    %13 = vector.load %arg4[%c0_9, %c0_10] : memref<128x64xf32, #tpu.memory_space<vmem>>, vector<128x64xf32>
    %cst_11 = arith.constant dense<0.000000e+00> : vector<2x64xf32>
    %14 = tpu.matmul %12, %13, %cst_11 {dimension_numbers = #tpu.dot_dimension_numbers<[1], [0], [0], [1], [0, 0, 1, 1], [], []>} : vector<2x128xf32>, vector<128x64xf32>, vector<2x64xf32> -> vector<2x64xf32>
    %c0_12 = arith.constant 0 : index
    %c0_13 = arith.constant 0 : index
    %15 = vector.load %arg5[%c0_12, %c0_13] : memref<1x64xf32, #tpu.memory_space<vmem>>, vector<1x64xf32>
    %16 = vector.broadcast %15 : vector<1x64xf32> to vector<2x64xf32>
    %17 = arith.addf %14, %16 : vector<2x64xf32>
    %cst_14 = arith.constant 0.000000e+00 : f32
    %18 = vector.broadcast %cst_14 : f32 to vector<2x64xf32>
    %19 = arith.maximumf %17, %18 : vector<2x64xf32>
    %c0_15 = arith.constant 0 : index
    %c0_16 = arith.constant 0 : index
    %20 = vector.load %arg6[%c0_15, %c0_16] : memref<64x4xf32, #tpu.memory_space<vmem>>, vector<64x4xf32>
    %cst_17 = arith.constant dense<0.000000e+00> : vector<2x4xf32>
    %21 = tpu.matmul %19, %20, %cst_17 {dimension_numbers = #tpu.dot_dimension_numbers<[1], [0], [0], [1], [0, 0, 1, 1], [], []>} : vector<2x64xf32>, vector<64x4xf32>, vector<2x4xf32> -> vector<2x4xf32>
    %c0_18 = arith.constant 0 : index
    %c0_19 = arith.constant 0 : index
    %22 = vector.load %arg7[%c0_18, %c0_19] : memref<1x4xf32, #tpu.memory_space<vmem>>, vector<1x4xf32>
    %23 = vector.broadcast %22 : vector<1x4xf32> to vector<2x4xf32>
    %24 = arith.addf %21, %23 : vector<2x4xf32>
    %c0_20 = arith.constant 0 : index
    %c0_21 = arith.constant 0 : index
    %25 = vector.load %arg8[%c0_20, %c0_21] : memref<2x4xf32, #tpu.memory_space<vmem>>, vector<2x4xf32>
    tpu.vector_store %arg8[%c0_20, %c0_21], %24 {strides = array<i32>} : memref<2x4xf32, #tpu.memory_space<vmem>>, vector<2x4xf32>,
    return
  }
}

</mosaic_0001>

<llo_original>
// kernel: simple_nn_forward.3
$region0: #{simple_nn_forward.3}
  #allocation0 [shape = 'u32[]', space=smem, size = 0x4, offset = 0x4, fixed_abs, tag = 'smem constant byte address 0x4 - core index']
  #allocation1 [shape = 'u32[144,128]{1,0:T(1,128)}', space=vmem, size = 0x12000, scoped, tag = 'internal scratch']
  %s0 = inlined_call_operand.vmem [shape: f32[2,512], index: 0, kind: input, shape index: {}]
  %s1 = inlined_call_operand.vmem [shape: f32[1,512], index: 1, kind: input, shape index: {}]
  %s2 = inlined_call_operand.vmem [shape: f32[512,128], index: 2, kind: input, shape index: {}]
  %s3 = inlined_call_operand.vmem [shape: f32[1,128], index: 3, kind: input, shape index: {}]
  %s4 = inlined_call_operand.vmem [shape: f32[128,64], index: 4, kind: input, shape index: {}]
  %s5 = inlined_call_operand.vmem [shape: f32[1,64], index: 5, kind: input, shape index: {}]
  %s6 = inlined_call_operand.vmem [shape: f32[64,4], index: 6, kind: input, shape index: {}]
  %s7 = inlined_call_operand.vmem [shape: f32[1,4], index: 7, kind: input, shape index: {}]
  %s8 = inlined_call_operand.hbm [shape: f32[2,4], index: 8, kind: output, shape index: {}]
  %s9 = sld [smem:[#allocation0]]
  $region42: #{simple_nn_forward.3} parent=0
    _
  %s11 = ssub.s32 1, %s9
  %s12 = scalar_select 0, %s11, %s9
  $region1: #{simple_nn_forward.3} parent=0
    #allocation2 [shape = 'u8[1024]{0}', space=vmem, size = 0x400, scoped, tag = 'output window, operand 0, single buffered']
    #allocation3 [shape = 's32[1]{0}', space=sflag, size = 0x4, scoped, tag = 'scoped memory for simple_nn_forward.3']
    %13 = vsyncpa [#allocation3], 0
    // Predicated region
    $region2: #{simple_nn_forward.3} parent=1 // pred_check
      _
    $region3: #{simple_nn_forward.3} parent=1 // pred_check_branch
      %15 = sbr.rel (0) target = $region5
    $region4: #{simple_nn_forward.3} parent=1 // pred_region
      _
    $region5: #{simple_nn_forward.3} parent=1 // pred_fallthru
      _
    // Predicated region
    $region6: #{simple_nn_forward.3} parent=1 // pred_check
      _
    $region7: #{simple_nn_forward.3} parent=1 // pred_check_branch
      %17 = sbr.rel (0) target = $region9
    $region8: #{simple_nn_forward.3} parent=1 // pred_region
      _
    $region9: #{simple_nn_forward.3} parent=1 // pred_fallthru
      _
    // Predicated region
    $region10: #{simple_nn_forward.3} parent=1 // pred_check
      _
    $region11: #{simple_nn_forward.3} parent=1 // pred_check_branch
      %19 = sbr.rel (0) target = $region13
    $region12: #{simple_nn_forward.3} parent=1 // pred_region
      _
    $region13: #{simple_nn_forward.3} parent=1 // pred_fallthru
      _
    // Predicated region
    $region14: #{simple_nn_forward.3} parent=1 // pred_check
      _
    $region15: #{simple_nn_forward.3} parent=1 // pred_check_branch
      %21 = sbr.rel (0) target = $region17
    $region16: #{simple_nn_forward.3} parent=1 // pred_region
      _
    $region17: #{simple_nn_forward.3} parent=1 // pred_fallthru
      _
    // Predicated region
    $region18: #{simple_nn_forward.3} parent=1 // pred_check
      _
    $region19: #{simple_nn_forward.3} parent=1 // pred_check_branch
      %23 = sbr.rel (0) target = $region21
    $region20: #{simple_nn_forward.3} parent=1 // pred_region
      _
    $region21: #{simple_nn_forward.3} parent=1 // pred_fallthru
      _
    // Predicated region
    $region22: #{simple_nn_forward.3} parent=1 // pred_check
      _
    $region23: #{simple_nn_forward.3} parent=1 // pred_check_branch
      %25 = sbr.rel (0) target = $region25
    $region24: #{simple_nn_forward.3} parent=1 // pred_region
      _
    $region25: #{simple_nn_forward.3} parent=1 // pred_fallthru
      _
    // Predicated region
    $region26: #{simple_nn_forward.3} parent=1 // pred_check
      _
    $region27: #{simple_nn_forward.3} parent=1 // pred_check_branch
      %27 = sbr.rel (0) target = $region29
    $region28: #{simple_nn_forward.3} parent=1 // pred_region
      _
    $region29: #{simple_nn_forward.3} parent=1 // pred_fallthru
      _
    // Predicated region
    $region30: #{simple_nn_forward.3} parent=1 // pred_check
      _
    $region31: #{simple_nn_forward.3} parent=1 // pred_check_branch
      %29 = sbr.rel (0) target = $region33
    $region32: #{simple_nn_forward.3} parent=1 // pred_region
      _
    $region33: #{simple_nn_forward.3} parent=1 // pred_fallthru
      _
    %v30 = vld [vmem:[%s0] sm:$0xff]
    %v31 = vld [vmem:[%s1] sm:$0xf]
    %v33 = vlaneseq
    %v34 = vshrl.u32 %v33, 7
    %v35 = vsub.s32 0, %v34
    %v36 = vrot.slane %v31, %v35
    %v37 = vlaneseq
    %v38 = vshrl.u32 %v37, 7
    %v39 = vsub.s32 1, %v38
    %v40 = vrot.slane %v31, %v39
    %v41 = vlaneseq
    %v42 = vshrl.u32 %v41, 7
    %v43 = vsub.s32 2, %v42
    %v44 = vrot.slane %v31, %v43
    %v45 = vlaneseq
    %v46 = vshrl.u32 %v45, 7
    %v47 = vsub.s32 3, %v46
    %v48 = vrot.slane %v31, %v47
    %v49 = vcombine.low %v36, %v40
    %v50 = vcombine.low %v44, %v48
    %v52 = vunpack.c.l.s4 1983009808
    %v53 = vunpack.c.0.s8 %v52
    %v54 = vlaneseq
    %v55 = vshrl.u32 %v54, 7
    %v56 = vsub.s32 %v53, %v55
    %v57 = vrot.slane %v49, %v56
    %v59 = vunpack.c.l.s4 1983009808
    %v60 = vunpack.c.0.s8 %v59
    %v61 = vlaneseq
    %v62 = vshrl.u32 %v61, 7
    %v63 = vsub.s32 %v60, %v62
    %v64 = vrot.slane %v50, %v63
    %v65 = vcombine.low %v57, %v64
    %v67 = vadd.f32 %v30, %v65
    %v68 = vmax.f32 %v67, 0.0
    %v69 = vld [vmem:[%s2] sm:$0xff]
    %v70 = vld [vmem:[%s2 + $0x8] sm:$0xff]
    %v71 = vld [vmem:[%s2 + $0x10] sm:$0xff]
    %v72 = vld [vmem:[%s2 + $0x18] sm:$0xff]
    %v73 = vld [vmem:[%s2 + $0x20] sm:$0xff]
    %v74 = vld [vmem:[%s2 + $0x28] sm:$0xff]
    %v75 = vld [vmem:[%s2 + $0x30] sm:$0xff]
    %v76 = vld [vmem:[%s2 + $0x38] sm:$0xff]
    %v77 = vld [vmem:[%s2 + $0x40] sm:$0xff]
    %v78 = vld [vmem:[%s2 + $0x48] sm:$0xff]
    %v79 = vld [vmem:[%s2 + $0x50] sm:$0xff]
    %v80 = vld [vmem:[%s2 + $0x58] sm:$0xff]
    %v81 = vld [vmem:[%s2 + $0x60] sm:$0xff]
    %v82 = vld [vmem:[%s2 + $0x68] sm:$0xff]
    %v83 = vld [vmem:[%s2 + $0x70] sm:$0xff]
    %v84 = vld [vmem:[%s2 + $0x78] sm:$0xff]
    %v85 = vld [vmem:[%s2 + $0x80] sm:$0xff]
    %v86 = vld [vmem:[%s2 + $0x88] sm:$0xff]
    %v87 = vld [vmem:[%s2 + $0x90] sm:$0xff]
    %v88 = vld [vmem:[%s2 + $0x98] sm:$0xff]
    %v89 = vld [vmem:[%s2 + $0xa0] sm:$0xff]
    %v90 = vld [vmem:[%s2 + $0xa8] sm:$0xff]
    %v91 = vld [vmem:[%s2 + $0xb0] sm:$0xff]
    %v92 = vld [vmem:[%s2 + $0xb8] sm:$0xff]
    %v93 = vld [vmem:[%s2 + $0xc0] sm:$0xff]
    %v94 = vld [vmem:[%s2 + $0xc8] sm:$0xff]
    %v95 = vld [vmem:[%s2 + $0xd0] sm:$0xff]
    %v96 = vld [vmem:[%s2 + $0xd8] sm:$0xff]
    %v97 = vld [vmem:[%s2 + $0xe0] sm:$0xff]
    %v98 = vld [vmem:[%s2 + $0xe8] sm:$0xff]
    %v99 = vld [vmem:[%s2 + $0xf0] sm:$0xff]
    %v100 = vld [vmem:[%s2 + $0xf8] sm:$0xff]
    %v101 = vld [vmem:[%s2 + $0x100] sm:$0xff]
    %v102 = vld [vmem:[%s2 + $0x108] sm:$0xff]
    %v103 = vld [vmem:[%s2 + $0x110] sm:$0xff]
    %v104 = vld [vmem:[%s2 + $0x118] sm:$0xff]
    %v105 = vld [vmem:[%s2 + $0x120] sm:$0xff]
    %v106 = vld [vmem:[%s2 + $0x128] sm:$0xff]
    %v107 = vld [vmem:[%s2 + $0x130] sm:$0xff]
    %v108 = vld [vmem:[%s2 + $0x138] sm:$0xff]
    %v109 = vld [vmem:[%s2 + $0x140] sm:$0xff]
    %v110 = vld [vmem:[%s2 + $0x148] sm:$0xff]
    %v111 = vld [vmem:[%s2 + $0x150] sm:$0xff]
    %v112 = vld [vmem:[%s2 + $0x158] sm:$0xff]
    %v113 = vld [vmem:[%s2 + $0x160] sm:$0xff]
    %v114 = vld [vmem:[%s2 + $0x168] sm:$0xff]
    %v115 = vld [vmem:[%s2 + $0x170] sm:$0xff]
    %v116 = vld [vmem:[%s2 + $0x178] sm:$0xff]
    %v117 = vld [vmem:[%s2 + $0x180] sm:$0xff]
    %v118 = vld [vmem:[%s2 + $0x188] sm:$0xff]
    %v119 = vld [vmem:[%s2 + $0x190] sm:$0xff]
    %v120 = vld [vmem:[%s2 + $0x198] sm:$0xff]
    %v121 = vld [vmem:[%s2 + $0x1a0] sm:$0xff]
    %v122 = vld [vmem:[%s2 + $0x1a8] sm:$0xff]
    %v123 = vld [vmem:[%s2 + $0x1b0] sm:$0xff]
    %v124 = vld [vmem:[%s2 + $0x1b8] sm:$0xff]
    %v125 = vld [vmem:[%s2 + $0x1c0] sm:$0xff]
    %v126 = vld [vmem:[%s2 + $0x1c8] sm:$0xff]
    %v127 = vld [vmem:[%s2 + $0x1d0] sm:$0xff]
    %v128 = vld [vmem:[%s2 + $0x1d8] sm:$0xff]
    %v129 = vld [vmem:[%s2 + $0x1e0] sm:$0xff]
    %v130 = vld [vmem:[%s2 + $0x1e8] sm:$0xff]
    %v131 = vld [vmem:[%s2 + $0x1f0] sm:$0xff]
    %v132 = vld [vmem:[%s2 + $0x1f8] sm:$0xff]
    %v133 = vld [vmem:[%s3] sm:$0x1]
    %v135 = vlaneseq
    %v136 = vshrl.u32 %v135, 7
    %v137 = vsub.s32 0, %v136
    %v138 = vrot.slane %v133, %v137
    %v141 = vcombine.high %v68, %v68
    %v143 = vunpack.c.l.s4 1983009808
    %v144 = vunpack.c.0.s8 %v143
    %v145 = vlaneseq
    %v146 = vshrl.u32 %v145, 7
    %v147 = vsub.s32 %v144, %v146
    %v148 = vrot.slane %v68, %v147
    %v150 = vunpack.c.l.s4 1983009808
    %v151 = vunpack.c.0.s8 %v150
    %v152 = vlaneseq
    %v153 = vshrl.u32 %v152, 7
    %v154 = vsub.s32 %v151, %v153
    %v155 = vrot.slane %v141, %v154
    %v156 = vcombine.high %v148, %v148
    %v157 = vcombine.high %v155, %v155
    %162 = vmatprep.subr.mxu0 0.0
    %163 = vmatpush1.msra.mxu0 %v69
    %164 = vmatprep.subr.mxu0 0.0
    %165 = vmatpush1.msra.mxu0 %v70
    %166 = vmatprep.subr.mxu0 0.0
    %167 = vmatpush1.msra.mxu0 %v71
    %168 = vmatprep.subr.mxu0 0.0
    %169 = vmatpush1.msra.mxu0 %v72
    %170 = vmatprep.subr.mxu0 0.0
    %171 = vmatpush1.msra.mxu0 %v73
    %172 = vmatprep.subr.mxu0 0.0
    %173 = vmatpush1.msra.mxu0 %v74
    %174 = vmatprep.subr.mxu0 0.0
    %175 = vmatpush1.msra.mxu0 %v75
    %176 = vmatprep.subr.mxu0 0.0
    %177 = vmatpush1.msra.mxu0 %v76
    %178 = vmatprep.subr.mxu0 0.0
    %179 = vmatpush1.msra.mxu0 %v77
    %180 = vmatprep.subr.mxu0 0.0
    %181 = vmatpush1.msra.mxu0 %v78
    %182 = vmatprep.subr.mxu0 0.0
    %183 = vmatpush1.msra.mxu0 %v79
    %184 = vmatprep.subr.mxu0 0.0
    %185 = vmatpush1.msra.mxu0 %v80
    %186 = vmatprep.subr.mxu0 0.0
    %187 = vmatpush1.msra.mxu0 %v81
    %188 = vmatprep.subr.mxu0 0.0
    %189 = vmatpush1.msra.mxu0 %v82
    %190 = vmatprep.subr.mxu0 0.0
    %191 = vmatpush1.msra.mxu0 %v83
    %192 = vmatprep.subr.mxu0 0.0
    %193 = vmatpush1.msra.mxu0 %v84
    %194 = vmatprep.subr.mxu0 0.0
    %195 = vmatpush1.msra.mxu0 %v85
    %196 = vmatprep.subr.mxu0 0.0
    %197 = vmatpush1.msra.mxu0 %v86
    %198 = vmatprep.subr.mxu0 0.0
    %199 = vmatpush1.msra.mxu0 %v87
    %200 = vmatprep.subr.mxu0 0.0
    %201 = vmatpush1.msra.mxu0 %v88
    %202 = vmatprep.subr.mxu0 0.0
    %203 = vmatpush1.msra.mxu0 %v89
    %204 = vmatprep.subr.mxu0 0.0
    %205 = vmatpush1.msra.mxu0 %v90
    %206 = vmatprep.subr.mxu0 0.0
    %207 = vmatpush1.msra.mxu0 %v91
    %208 = vmatprep.subr.mxu0 0.0
    %209 = vmatpush1.msra.mxu0 %v92
    %210 = vmatprep.subr.mxu0 0.0
    %211 = vmatpush1.msra.mxu0 %v93
    %212 = vmatprep.subr.mxu0 0.0
    %213 = vmatpush1.msra.mxu0 %v94
    %214 = vmatprep.subr.mxu0 0.0
    %215 = vmatpush1.msra.mxu0 %v95
    %216 = vmatprep.subr.mxu0 0.0
    %217 = vmatpush1.msra.mxu0 %v96
    %218 = vmatprep.subr.mxu0 0.0
    %219 = vmatpush1.msra.mxu0 %v97
    %220 = vmatprep.subr.mxu0 0.0
    %221 = vmatpush1.msra.mxu0 %v98
    %222 = vmatprep.subr.mxu0 0.0
    %223 = vmatpush1.msra.mxu0 %v99
    %224 = vmatprep.subr.mxu0 0.0
    %225 = vmatpush1.msra.mxu0 %v100
    %226 = vmatprep.mubr.f32.mxu0 %v156
    %227 = vmatmul.mubr.f32.gmra.mrb[0].mxu0 %v148
    %v228 = vpop.f32.mrb[0].mxu0
    %v229 = vadd.f32 %v138, %v228
    %v230 = vpop.f32.mrb[0].mxu0
    %231 = vdwg.mxu0
    %232 = vmatprep.subr.mxu0 0.0
    %233 = vmatpush1.msra.mxu0 %v101
    %234 = vmatprep.subr.mxu0 0.0
    %235 = vmatpush1.msra.mxu0 %v102
    %236 = vmatprep.subr.mxu0 0.0
    %237 = vmatpush1.msra.mxu0 %v103
    %238 = vmatprep.subr.mxu0 0.0
    %239 = vmatpush1.msra.mxu0 %v104
    %240 = vmatprep.subr.mxu0 0.0
    %241 = vmatpush1.msra.mxu0 %v105
    %242 = vmatprep.subr.mxu0 0.0
    %243 = vmatpush1.msra.mxu0 %v106
    %244 = vmatprep.subr.mxu0 0.0
    %245 = vmatpush1.msra.mxu0 %v107
    %246 = vmatprep.subr.mxu0 0.0
    %247 = vmatpush1.msra.mxu0 %v108
    %248 = vmatprep.subr.mxu0 0.0
    %249 = vmatpush1.msra.mxu0 %v109
    %250 = vmatprep.subr.mxu0 0.0
    %251 = vmatpush1.msra.mxu0 %v110
    %252 = vmatprep.subr.mxu0 0.0
    %253 = vmatpush1.msra.mxu0 %v111
    %254 = vmatprep.subr.mxu0 0.0
    %255 = vmatpush1.msra.mxu0 %v112
    %256 = vmatprep.subr.mxu0 0.0
    %257 = vmatpush1.msra.mxu0 %v113
    %258 = vmatprep.subr.mxu0 0.0
    %259 = vmatpush1.msra.mxu0 %v114
    %260 = vmatprep.subr.mxu0 0.0
    %261 = vmatpush1.msra.mxu0 %v115
    %262 = vmatprep.subr.mxu0 0.0
    %263 = vmatpush1.msra.mxu0 %v116
    %264 = vmatprep.subr.mxu0 0.0
    %265 = vmatpush1.msra.mxu0 %v117
    %266 = vmatprep.subr.mxu0 0.0
    %267 = vmatpush1.msra.mxu0 %v118
    %268 = vmatprep.subr.mxu0 0.0
    %269 = vmatpush1.msra.mxu0 %v119
    %270 = vmatprep.subr.mxu0 0.0
    %271 = vmatpush1.msra.mxu0 %v120
    %272 = vmatprep.subr.mxu0 0.0
    %273 = vmatpush1.msra.mxu0 %v121
    %274 = vmatprep.subr.mxu0 0.0
    %275 = vmatpush1.msra.mxu0 %v122
    %276 = vmatprep.subr.mxu0 0.0
    %277 = vmatpush1.msra.mxu0 %v123
    %278 = vmatprep.subr.mxu0 0.0
    %279 = vmatpush1.msra.mxu0 %v124
    %280 = vmatprep.subr.mxu0 0.0
    %281 = vmatpush1.msra.mxu0 %v125
    %282 = vmatprep.subr.mxu0 0.0
    %283 = vmatpush1.msra.mxu0 %v126
    %284 = vmatprep.subr.mxu0 0.0
    %285 = vmatpush1.msra.mxu0 %v127
    %286 = vmatprep.subr.mxu0 0.0
    %287 = vmatpush1.msra.mxu0 %v128
    %288 = vmatprep.subr.mxu0 0.0
    %289 = vmatpush1.msra.mxu0 %v129
    %290 = vmatprep.subr.mxu0 0.0
    %291 = vmatpush1.msra.mxu0 %v130
    %292 = vmatprep.subr.mxu0 0.0
    %293 = vmatpush1.msra.mxu0 %v131
    %294 = vmatprep.subr.mxu0 0.0
    %295 = vmatpush1.msra.mxu0 %v132
    %296 = vmatprep.mubr.f32.mxu0 %v157
    %297 = vmatmul.mubr.f32.gmra.mrb[0].mxu0 %v155
    %v298 = vpop.f32.mrb[0].mxu0
    %v299 = vadd.f32 %v229, %v298
    %v300 = vpop.f32.mrb[0].mxu0
    %301 = vdwg.mxu0
    %v302 = vmax.f32 %v299, 0.0
    %v303 = vld [vmem:[%s4] sm:$0xff]
    %v304 = vld [vmem:[%s4 + $0x8] sm:$0xff]
    %v305 = vld [vmem:[%s4 + $0x10] sm:$0xff]
    %v306 = vld [vmem:[%s4 + $0x18] sm:$0xff]
    %v307 = vld [vmem:[%s4 + $0x20] sm:$0xff]
    %v308 = vld [vmem:[%s4 + $0x28] sm:$0xff]
    %v309 = vld [vmem:[%s4 + $0x30] sm:$0xff]
    %v310 = vld [vmem:[%s4 + $0x38] sm:$0xff]
    %v311 = vld [vmem:[%s4 + $0x40] sm:$0xff]
    %v312 = vld [vmem:[%s4 + $0x48] sm:$0xff]
    %v313 = vld [vmem:[%s4 + $0x50] sm:$0xff]
    %v314 = vld [vmem:[%s4 + $0x58] sm:$0xff]
    %v315 = vld [vmem:[%s4 + $0x60] sm:$0xff]
    %v316 = vld [vmem:[%s4 + $0x68] sm:$0xff]
    %v317 = vld [vmem:[%s4 + $0x70] sm:$0xff]
    %v318 = vld [vmem:[%s4 + $0x78] sm:$0xff]
    %v319 = vld [vmem:[%s5] sm:$0x1]
    %v321 = vlaneseq
    %v322 = vshrl.u32 %v321, 7
    %v323 = vsub.s32 0, %v322
    %v324 = vrot.slane %v319, %v323
    %326 = vmatprep.subr.mxu0 0.0
    %327 = vmatpush1.msra.mxu0 %v303
    %328 = vmatprep.subr.mxu0 0.0
    %329 = vmatpush1.msra.mxu0 %v304
    %330 = vmatprep.subr.mxu0 0.0
    %331 = vmatpush1.msra.mxu0 %v305
    %332 = vmatprep.subr.mxu0 0.0
    %333 = vmatpush1.msra.mxu0 %v306
    %334 = vmatprep.subr.mxu0 0.0
    %335 = vmatpush1.msra.mxu0 %v307
    %336 = vmatprep.subr.mxu0 0.0
    %337 = vmatpush1.msra.mxu0 %v308
    %338 = vmatprep.subr.mxu0 0.0
    %339 = vmatpush1.msra.mxu0 %v309
    %340 = vmatprep.subr.mxu0 0.0
    %341 = vmatpush1.msra.mxu0 %v310
    %342 = vmatprep.subr.mxu0 0.0
    %343 = vmatpush1.msra.mxu0 %v311
    %344 = vmatprep.subr.mxu0 0.0
    %345 = vmatpush1.msra.mxu0 %v312
    %346 = vmatprep.subr.mxu0 0.0
    %347 = vmatpush1.msra.mxu0 %v313
    %348 = vmatprep.subr.mxu0 0.0
    %349 = vmatpush1.msra.mxu0 %v314
    %350 = vmatprep.subr.mxu0 0.0
    %351 = vmatpush1.msra.mxu0 %v315
    %352 = vmatprep.subr.mxu0 0.0
    %353 = vmatpush1.msra.mxu0 %v316
    %354 = vmatprep.subr.mxu0 0.0
    %355 = vmatpush1.msra.mxu0 %v317
    %356 = vmatprep.subr.mxu0 0.0
    %357 = vmatpush1.msra.mxu0 %v318
    %358 = vmatprep.subr.mxu0 0.0
    %359 = vmatpush1.msra.mxu0 0.0
    %360 = vmatprep.subr.mxu0 0.0
    %361 = vmatpush1.msra.mxu0 0.0
    %362 = vmatprep.subr.mxu0 0.0
    %363 = vmatpush1.msra.mxu0 0.0
    %364 = vmatprep.subr.mxu0 0.0
    %365 = vmatpush1.msra.mxu0 0.0
    %366 = vmatprep.subr.mxu0 0.0
    %367 = vmatpush1.msra.mxu0 0.0
    %368 = vmatprep.subr.mxu0 0.0
    %369 = vmatpush1.msra.mxu0 0.0
    %370 = vmatprep.subr.mxu0 0.0
    %371 = vmatpush1.msra.mxu0 0.0
    %372 = vmatprep.subr.mxu0 0.0
    %373 = vmatpush1.msra.mxu0 0.0
    %374 = vmatprep.subr.mxu0 0.0
    %375 = vmatpush1.msra.mxu0 0.0
    %376 = vmatprep.subr.mxu0 0.0
    %377 = vmatpush1.msra.mxu0 0.0
    %378 = vmatprep.subr.mxu0 0.0
    %379 = vmatpush1.msra.mxu0 0.0
    %380 = vmatprep.subr.mxu0 0.0
    %381 = vmatpush1.msra.mxu0 0.0
    %382 = vmatprep.subr.mxu0 0.0
    %383 = vmatpush1.msra.mxu0 0.0
    %384 = vmatprep.subr.mxu0 0.0
    %385 = vmatpush1.msra.mxu0 0.0
    %386 = vmatprep.subr.mxu0 0.0
    %387 = vmatpush1.msra.mxu0 0.0
    %388 = vmatprep.subr.mxu0 0.0
    %389 = vmatpush1.msra.mxu0 0.0
    %390 = vmatprep.mubr.f32.mxu0 0.0
    %391 = vmatmul.mubr.f32.gmra.mrb[0].mxu0 %v302
    %v392 = vpop.f32.mrb[0].mxu0
    %v393 = vadd.f32 %v324, %v392
    %v394 = vpop.f32.mrb[0].mxu0
    %395 = vdwg.mxu0
    %v396 = vmax.f32 %v393, 0.0
    %v397 = vld [vmem:[%s6] sm:$0xff]
    %v398 = vld [vmem:[%s6 + $0x8] sm:$0xff]
    %v399 = vld [vmem:[%s6 + $0x10] sm:$0xff]
    %v400 = vld [vmem:[%s6 + $0x18] sm:$0xff]
    %v401 = vld [vmem:[%s6 + $0x20] sm:$0xff]
    %v402 = vld [vmem:[%s6 + $0x28] sm:$0xff]
    %v403 = vld [vmem:[%s6 + $0x30] sm:$0xff]
    %v404 = vld [vmem:[%s6 + $0x38] sm:$0xff]
    %v405 = vld [vmem:[%s7] sm:$0x1]
    %v407 = vlaneseq
    %v408 = vshrl.u32 %v407, 7
    %v409 = vsub.s32 0, %v408
    %v410 = vrot.slane %v405, %v409
    %vm412 = vcmask 523264
    %v414 = vsel %vm412, %v396, 0
    %416 = vmatprep.subr.mxu0 0.0
    %417 = vmatpush1.msra.mxu0 %v397
    %418 = vmatprep.subr.mxu0 0.0
    %419 = vmatpush1.msra.mxu0 %v398
    %420 = vmatprep.subr.mxu0 0.0
    %421 = vmatpush1.msra.mxu0 %v399
    %422 = vmatprep.subr.mxu0 0.0
    %423 = vmatpush1.msra.mxu0 %v400
    %424 = vmatprep.subr.mxu0 0.0
    %425 = vmatpush1.msra.mxu0 %v401
    %426 = vmatprep.subr.mxu0 0.0
    %427 = vmatpush1.msra.mxu0 %v402
    %428 = vmatprep.subr.mxu0 0.0
    %429 = vmatpush1.msra.mxu0 %v403
    %430 = vmatprep.subr.mxu0 0.0
    %431 = vmatpush1.msra.mxu0 %v404
    %432 = vmatprep.subr.mxu0 0.0
    %433 = vmatpush1.msra.mxu0 0.0
    %434 = vmatprep.subr.mxu0 0.0
    %435 = vmatpush1.msra.mxu0 0.0
    %436 = vmatprep.subr.mxu0 0.0
    %437 = vmatpush1.msra.mxu0 0.0
    %438 = vmatprep.subr.mxu0 0.0
    %439 = vmatpush1.msra.mxu0 0.0
    %440 = vmatprep.subr.mxu0 0.0
    %441 = vmatpush1.msra.mxu0 0.0
    %442 = vmatprep.subr.mxu0 0.0
    %443 = vmatpush1.msra.mxu0 0.0
    %444 = vmatprep.subr.mxu0 0.0
    %445 = vmatpush1.msra.mxu0 0.0
    %446 = vmatprep.subr.mxu0 0.0
    %447 = vmatpush1.msra.mxu0 0.0
    %448 = vmatprep.subr.mxu0 0.0
    %449 = vmatpush1.msra.mxu0 0.0
    %450 = vmatprep.subr.mxu0 0.0
    %451 = vmatpush1.msra.mxu0 0.0
    %452 = vmatprep.subr.mxu0 0.0
    %453 = vmatpush1.msra.mxu0 0.0
    %454 = vmatprep.subr.mxu0 0.0
    %455 = vmatpush1.msra.mxu0 0.0
    %456 = vmatprep.subr.mxu0 0.0
    %457 = vmatpush1.msra.mxu0 0.0
    %458 = vmatprep.subr.mxu0 0.0
    %459 = vmatpush1.msra.mxu0 0.0
    %460 = vmatprep.subr.mxu0 0.0
    %461 = vmatpush1.msra.mxu0 0.0
    %462 = vmatprep.subr.mxu0 0.0
    %463 = vmatpush1.msra.mxu0 0.0
    %464 = vmatprep.subr.mxu0 0.0
    %465 = vmatpush1.msra.mxu0 0.0
    %466 = vmatprep.subr.mxu0 0.0
    %467 = vmatpush1.msra.mxu0 0.0
    %468 = vmatprep.subr.mxu0 0.0
    %469 = vmatpush1.msra.mxu0 0.0
    %470 = vmatprep.subr.mxu0 0.0
    %471 = vmatpush1.msra.mxu0 0.0
    %472 = vmatprep.subr.mxu0 0.0
    %473 = vmatpush1.msra.mxu0 0.0
    %474 = vmatprep.subr.mxu0 0.0
    %475 = vmatpush1.msra.mxu0 0.0
    %476 = vmatprep.subr.mxu0 0.0
    %477 = vmatpush1.msra.mxu0 0.0
    %478 = vmatprep.subr.mxu0 0.0
    %479 = vmatpush1.msra.mxu0 0.0
    %480 = vmatprep.mubr.f32.mxu0 0.0
    %481 = vmatmul.mubr.f32.gmra.mrb[0].mxu0 %v414
    %v482 = vpop.f32.mrb[0].mxu0
    %v483 = vadd.f32 %v410, %v482
    %v484 = vpop.f32.mrb[0].mxu0
    %485 = vdwg.mxu0
    %vm486 = vcmask 25600
    %487 = vst.msk [vmem:[#allocation2] sm:$0x3] %vm486, %v483
    // Predicated region
    $region34: #{simple_nn_forward.3} parent=1 // pred_check
      _
    $region35: #{simple_nn_forward.3} parent=1 // pred_check_branch
      %489 = sbr.rel (0) target = $region37
    $region36: #{simple_nn_forward.3} parent=1 // pred_region
      %s491 = ssub.s32 32, 32
      %492 = vsyncadd [#allocation3], %s491
      %s494 = sshll.u32 [#allocation2], 4
      %s495 = int_to_ptr.vmem [resolvable:$true] %s494
      %497 = dma.vmem_to_hbm [thread:$0]  %s495, 32, %s8, [#allocation3]
    $region37: #{simple_nn_forward.3} parent=1 // pred_fallthru
      _
    // Predicated region
    $region38: #{simple_nn_forward.3} parent=1 // pred_check
      _
    $region39: #{simple_nn_forward.3} parent=1 // pred_check_branch
      %499 = sbr.rel (0) target = $region41
    $region40: #{simple_nn_forward.3} parent=1 // pred_region
      %500 = dma.done [#allocation3], 32
    $region41: #{simple_nn_forward.3} parent=1 // pred_fallthru
      _
    %501 = vsyncpa [#allocation3], 1

// kernel: simple_nn_forward.2
$region0: #{simple_nn_forward.2}
  #allocation0 [shape = 'u32[]', space=smem, size = 0x4, offset = 0x4, fixed_abs, tag = 'smem constant byte address 0x4 - core index']
  #allocation1 [shape = 'u32[144,128]{1,0:T(1,128)}', space=vmem, size = 0x12000, scoped, tag = 'internal scratch']
  #allocation2 [shape = 'f32[2,256]{1,0:T(2,128)}', space=vmem, size = 0x800, scoped, tag = 'scratch operand']
  %s0 = inlined_call_operand.vmem [shape: bf16[2,16384], index: 0, kind: input, shape index: {}]
  %s1 = inlined_call_operand.hbm [shape: bf16[16384,512], index: 1, kind: input, shape index: {}]
  %s2 = inlined_call_operand.vmem [shape: f32[2,512], index: 2, kind: output, shape index: {}]
  %s3 = sld [smem:[#allocation0]]
  $region53: #{simple_nn_forward.2} parent=0
    _
  %s5 = ssub.s32 1, %s3
  %s6 = scalar_select 0, %s5, %s3
  $region1: #{simple_nn_forward.2} parent=0
    #allocation3 [shape = 'u8[8388608]{0}', space=vmem, size = 0x800000, scoped, tag = 'input window, operand 1']
    #allocation4 [shape = 's32[2]{0}', space=sflag, size = 0x8, scoped, tag = 'scoped memory for simple_nn_forward.2']
    %7 = vsyncpa [#allocation4], 0
    %s8 = scalar_lea.sflag [#allocation4], 1
    %9 = vsyncpa %s8, 0
    loop: start=0, step=1, limit=6
    $region2: #{simple_nn_forward.2} parent=1 // loop_pre_header
      _
    $region3: #{simple_nn_forward.2} parent=1 // loop_header
      %s11 = sphi 0, %s15
      %p12 = scmp.ge.s32.totalorder %s11, 6
      %s18 = sphi 0, %s30
      %s19 = sphi 0, %s26
      %s20 = sphi 0, %s18
      %s21 = sphi 0, %s19
      %s22 = sphi 0, %s20
      %s23 = sphi 0, %s21
      %s33 = sphi 0, %s35
      %s36 = sphi 0, %s33
      %s37 = sphi 0, %s36
      %s53 = sphi 0, %s37
      %s61 = sphi 0, %s63
      %s64 = sphi 0, %s61
      %s65 = sphi 0, %s64
      %s81 = sphi 0, %s65
      %s87 = sphi 0, %s89
      %s90 = sphi 0, %s87
      %s91 = sphi 0, %s90
      %s107 = sphi 0, %s91
    $region4: #{simple_nn_forward.2} parent=1 // loop_header_branch
      %14 = sbr.rel (%p12) target = $region8
    $region5: #{simple_nn_forward.2} parent=1 // loop_body
      %s16 = ssub.s32 %s11, 1
      %s17 = ssub.s32 %s11, 2
      %s24 = sadd.s32 1, %s19
      %p25 = scmp.ge.s32.totalorder %s24, 2
      %s26 = scalar_select %p25, 0, %s24
      %s27 = sadd.s32 1, %s18
      %s28 = scalar_select %p25, %s27, %s18
      %p29 = scmp.ge.s32.totalorder %s28, 2
      %s30 = scalar_select %p29, 0, %s28
      %s31 = ssub.s32 %s19, %s26
      %p32 = scmp.eq.s32.totalorder %s31, 0
      %s34 = sadd.s32 %s33, 1
      %s35 = scalar_select %p32, %s33, %s34
      %p38 = pneg %p32
      %p39 = scmp.eq.s32.totalorder %s11, 3
      %p40 = por %p38, %p39
      %p41 = scmp.ne.s32.totalorder %s33, %s36
      %p42 = scmp.eq.s32.totalorder %s11, 0
      %p43 = por %p41, %p42
      %p44 = scmp.ne.s32.totalorder %s33, %s36
      %p45 = scmp.eq.s32.totalorder %s16, 3
      %p46 = por %p44, %p45
      %p47 = scmp.ne.s32.totalorder %s36, %s37
      %p48 = scmp.eq.s32.totalorder %s16, 0
      %p49 = por %p47, %p48
      %p50 = scmp.ne.s32.totalorder %s36, %s37
      %p51 = scmp.eq.s32.totalorder %s17, 3
      %p52 = por %p50, %p51
      %p54 = scmp.ne.s32.totalorder %s37, %s53
      %p55 = scmp.eq.s32.totalorder %s17, 0
      %p56 = por %p54, %p55
      %s57 = ssub.s32 %s19, %s26
      %s58 = ssub.s32 %s18, %s30
      %s59 = sor.u32 %s57, %s58
      %p60 = scmp.eq.s32.totalorder %s59, 0
      %s62 = sadd.s32 %s61, 1
      %s63 = scalar_select %p60, %s61, %s62
      %p66 = pneg %p60
      %p67 = scmp.eq.s32.totalorder %s11, 3
      %p68 = por %p66, %p67
      %p69 = scmp.ne.s32.totalorder %s61, %s64
      %p70 = scmp.eq.s32.totalorder %s11, 0
      %p71 = por %p69, %p70
      %p72 = scmp.ne.s32.totalorder %s61, %s64
      %p73 = scmp.eq.s32.totalorder %s16, 3
      %p74 = por %p72, %p73
      %p75 = scmp.ne.s32.totalorder %s64, %s65
      %p76 = scmp.eq.s32.totalorder %s16, 0
      %p77 = por %p75, %p76
      %p78 = scmp.ne.s32.totalorder %s64, %s65
      %p79 = scmp.eq.s32.totalorder %s17, 3
      %p80 = por %p78, %p79
      %p82 = scmp.ne.s32.totalorder %s65, %s81
      %p83 = scmp.eq.s32.totalorder %s17, 0
      %p84 = por %p82, %p83
      %s85 = ssub.s32 %s18, %s30
      %p86 = scmp.eq.s32.totalorder %s85, 0
      %s88 = sadd.s32 %s87, 1
      %s89 = scalar_select %p86, %s87, %s88
      %p92 = pneg %p86
      %p93 = scmp.eq.s32.totalorder %s11, 3
      %p94 = por %p92, %p93
      %p95 = scmp.ne.s32.totalorder %s87, %s90
      %p96 = scmp.eq.s32.totalorder %s11, 0
      %p97 = por %p95, %p96
      %p98 = scmp.ne.s32.totalorder %s87, %s90
      %p99 = scmp.eq.s32.totalorder %s16, 3
      %p100 = por %p98, %p99
      %p101 = scmp.ne.s32.totalorder %s90, %s91
      %p102 = scmp.eq.s32.totalorder %s16, 0
      %p103 = por %p101, %p102
      %p104 = scmp.ne.s32.totalorder %s90, %s91
      %p105 = scmp.eq.s32.totalorder %s17, 3
      %p106 = por %p104, %p105
      %p108 = scmp.ne.s32.totalorder %s91, %s107
      %p109 = scmp.eq.s32.totalorder %s17, 0
      %p110 = por %p108, %p109
      %p111 = scmp.le.s32.totalorder 1, %s11
      %p112 = scmp.lt.s32.totalorder %s11, 5
      %p113 = pnand %p111, %p112
      %p114 = pneg %p113
      // Predicated region
      $region9: #{simple_nn_forward.2} parent=5 // pred_check
        _
      $region10: #{simple_nn_forward.2} parent=5 // pred_check_branch
        %116 = sbr.rel (%p113) target = $region12
      $region11: #{simple_nn_forward.2} parent=5 // pred_region
        %s117 = ssub.s32 %s11, 1
      $region12: #{simple_nn_forward.2} parent=5 // pred_fallthru
        _
      %p118 = scmp.lt.s32.totalorder %s11, 4
      // Predicated region
      $region13: #{simple_nn_forward.2} parent=5 // pred_check
        %p119 = pneg %p118
      $region14: #{simple_nn_forward.2} parent=5 // pred_check_branch
        %121 = sbr.rel (%p119) target = $region16
      $region15: #{simple_nn_forward.2} parent=5 // pred_region
        // Predicated region
        $region17: #{simple_nn_forward.2} parent=15 // pred_check
          %p122 = pneg %p43
        $region18: #{simple_nn_forward.2} parent=15 // pred_check_branch
          %124 = sbr.rel (%p122) target = $region20
        $region19: #{simple_nn_forward.2} parent=15 // pred_region
          %s125 = smul.u32 64, %s19
          %p126 = scmp.lt.s32.totalorder %s125, 127
          %s127 = scalar_select %p126, %s125, 127
          %s128 = scalar_lea.vmem %s0, %s127
          %s129 = smul.u32 64, %s19
        $region20: #{simple_nn_forward.2} parent=15 // pred_fallthru
          _
        // Predicated region
        $region21: #{simple_nn_forward.2} parent=15 // pred_check
          %p130 = pneg %p71
        $region22: #{simple_nn_forward.2} parent=15 // pred_check_branch
          %132 = sbr.rel (%p130) target = $region24
        $region23: #{simple_nn_forward.2} parent=15 // pred_region
          %s133 = sand.u32 %s61, 1
          %s134 = scalar_lea.sflag [#allocation4], %s133
          %s135 = sand.u32 %s61, 1
          %s136 = smul.addr %s135, 8192
          %s137 = scalar_lea.vmem [#allocation3], %s136
          %s138 = smul.u32 1024, %s19
          %s139 = smul.u32 2, %s18
          %s141 = ssub.s32 131072, 131072
          %142 = vsyncadd %s134, %s141
          %s143 = smul.addr %s138, 4
          %s144 = sadd.s32 %s139, %s143
          %s145 = smul.addr %s144, 64
          %s146 = scalar_lea.hbm %s1, %s145
          %s147 = sshll.u32 %s137, 4
          %s148 = int_to_ptr.vmem [resolvable:$true] %s147
          %153 = dma.hbm_to_vmem [thread:$0]  %s146, 131072, %s148, %s134, 256, 128, 8
        $region24: #{simple_nn_forward.2} parent=15 // pred_fallthru
          _
      $region16: #{simple_nn_forward.2} parent=5 // pred_fallthru
        _
      %p154 = scmp.le.s32.totalorder 1, %s11
      %p155 = scmp.lt.s32.totalorder %s11, 5
      %p156 = pnand %p154, %p155
      %p157 = pneg %p156
      // Predicated region
      $region25: #{simple_nn_forward.2} parent=5 // pred_check
        _
      $region26: #{simple_nn_forward.2} parent=5 // pred_check_branch
        %159 = sbr.rel (%p156) target = $region28
      $region27: #{simple_nn_forward.2} parent=5 // pred_region
        %s160 = ssub.s32 %s11, 1
        %s161 = sand.u32 %s64, 1
        %s162 = scalar_lea.sflag [#allocation4], %s161
        %s163 = sand.u32 %s64, 1
        %s164 = smul.addr %s163, 8192
        %s165 = scalar_lea.vmem [#allocation3], %s164
        // Predicated region
        $region29: #{simple_nn_forward.2} parent=27 // pred_check
          %p166 = pneg %p77
        $region30: #{simple_nn_forward.2} parent=27 // pred_check_branch
          %168 = sbr.rel (%p166) target = $region32
        $region31: #{simple_nn_forward.2} parent=27 // pred_region
          %169 = dma.done %s162, 131072
        $region32: #{simple_nn_forward.2} parent=27 // pred_fallthru
          _
        %s170 = smul.u32 64, %s21
        %p171 = scmp.lt.s32.totalorder %s170, 127
        %s172 = scalar_select %p171, %s170, 127
        %s173 = scalar_lea.vmem %s0, %s172
        %p174 = pneg %p49
        %p175 = pneg %p46
        %s176 = sand.u32 %s64, 1
        %s177 = scalar_lea.sflag [#allocation4], %s176
        %s178 = sand.u32 %s64, 1
        %s179 = smul.addr %s178, 8192
        %s180 = scalar_lea.vmem [#allocation3], %s179
        %p181 = pneg %p77
        %p182 = pneg %p74
        %p183 = pneg %p103
        %p184 = pneg %p100
        %s185 = smul.u32 2, %s20
        %p186 = scmp.lt.s32.totalorder %s185, 3
        %s187 = scalar_select %p186, %s185, 3
        %s188 = smul.addr %s187, 2
        %s189 = scalar_lea.vmem %s2, %s188
        %s190 = smul.u32 64, %s21
        %p191 = scmp.lt.s32.totalorder %s190, 127
        %s192 = scalar_select %p191, %s190, 127
        %s193 = scalar_lea.vmem %s0, %s192
        %s194 = smul.u32 64, %s21
        %s195 = smul.u32 1024, %s21
        %s196 = smul.u32 2, %s20
        %s197 = smul.u32 2, %s20
        %p198 = scmp.lt.s32.totalorder %s197, 3
        %s199 = scalar_select %p198, %s197, 3
        %s200 = smul.addr %s199, 2
        %s201 = scalar_lea.vmem %s2, %s200
        %s202 = smul.u32 2, %s20
        %p203 = scmp.eq.s32.totalorder %s21, 0
        // Predicated region
        $region33: #{simple_nn_forward.2} parent=27 // pred_check
          %p204 = pneg %p203
        $region34: #{simple_nn_forward.2} parent=27 // pred_check_branch
          %206 = sbr.rel (%p204) target = $region36
        $region35: #{simple_nn_forward.2} parent=27 // pred_region
          %207 = vst [vmem:[#allocation2] sm:$0xf] 0.0
        $region36: #{simple_nn_forward.2} parent=27 // pred_fallthru
          _
        %v208 = vld [vmem:[#allocation2] sm:$0xf]
        %v209 = vld [vmem:[%s193] sm:$0xff]
        %v210 = vld [vmem:[%s193 + $0x8] sm:$0xff]
        %v211 = vld [vmem:[%s193 + $0x10] sm:$0xff]
        %v212 = vld [vmem:[%s193 + $0x18] sm:$0xff]
        %v213 = vld [vmem:[%s193 + $0x20] sm:$0xff]
        %v214 = vld [vmem:[%s193 + $0x28] sm:$0xff]
        %v215 = vld [vmem:[%s193 + $0x30] sm:$0xff]
        %v216 = vld [vmem:[%s193 + $0x38] sm:$0xff]
        %v217 = vld [vmem:[%s165] sm:$0xff]
        %v218 = vld [vmem:[%s165 + $0x8] sm:$0xff]
        %v219 = vld [vmem:[%s165 + $0x10] sm:$0xff]
        %v220 = vld [vmem:[%s165 + $0x18] sm:$0xff]
        %v221 = vld [vmem:[%s165 + $0x20] sm:$0xff]
        %v222 = vld [vmem:[%s165 + $0x28] sm:$0xff]
        %v223 = vld [vmem:[%s165 + $0x30] sm:$0xff]
        %v224 = vld [vmem:[%s165 + $0x38] sm:$0xff]
        %v225 = vld [vmem:[%s165 + $0x40] sm:$0xff]
        %v226 = vld [vmem:[%s165 + $0x48] sm:$0xff]
        %v227 = vld [vmem:[%s165 + $0x50] sm:$0xff]
        %v228 = vld [vmem:[%s165 + $0x58] sm:$0xff]
        %v229 = vld [vmem:[%s165 + $0x60] sm:$0xff]
        %v230 = vld [vmem:[%s165 + $0x68] sm:$0xff]
        %v231 = vld [vmem:[%s165 + $0x70] sm:$0xff]
        %v232 = vld [vmem:[%s165 + $0x78] sm:$0xff]
        %v233 = vld [vmem:[%s165 + $0x80] sm:$0xff]
        %v234 = vld [vmem:[%s165 + $0x88] sm:$0xff]
        %v235 = vld [vmem:[%s165 + $0x90] sm:$0xff]
        %v236 = vld [vmem:[%s165 + $0x98] sm:$0xff]
        %v237 = vld [vmem:[%s165 + $0xa0] sm:$0xff]
        %v238 = vld [vmem:[%s165 + $0xa8] sm:$0xff]
        %v239 = vld [vmem:[%s165 + $0xb0] sm:$0xff]
        %v240 = vld [vmem:[%s165 + $0xb8] sm:$0xff]
        %v241 = vld [vmem:[%s165 + $0xc0] sm:$0xff]
        %v242 = vld [vmem:[%s165 + $0xc8] sm:$0xff]
        %v243 = vld [vmem:[%s165 + $0xd0] sm:$0xff]
        %v244 = vld [vmem:[%s165 + $0xd8] sm:$0xff]
        %v245 = vld [vmem:[%s165 + $0xe0] sm:$0xff]
        %v246 = vld [vmem:[%s165 + $0xe8] sm:$0xff]
        %v247 = vld [vmem:[%s165 + $0xf0] sm:$0xff]
        %v248 = vld [vmem:[%s165 + $0xf8] sm:$0xff]
        %v249 = vld [vmem:[%s165 + $0x100] sm:$0xff]
        %v250 = vld [vmem:[%s165 + $0x108] sm:$0xff]
        %v251 = vld [vmem:[%s165 + $0x110] sm:$0xff]
        %v252 = vld [vmem:[%s165 + $0x118] sm:$0xff]
        %v253 = vld [vmem:[%s165 + $0x120] sm:$0xff]
        %v254 = vld [vmem:[%s165 + $0x128] sm:$0xff]
        %v255 = vld [vmem:[%s165 + $0x130] sm:$0xff]
        %v256 = vld [vmem:[%s165 + $0x138] sm:$0xff]
        %v257 = vld [vmem:[%s165 + $0x140] sm:$0xff]
        %v258 = vld [vmem:[%s165 + $0x148] sm:$0xff]
        %v259 = vld [vmem:[%s165 + $0x150] sm:$0xff]
        %v260 = vld [vmem:[%s165 + $0x158] sm:$0xff]
        %v261 = vld [vmem:[%s165 + $0x160] sm:$0xff]
        %v262 = vld [vmem:[%s165 + $0x168] sm:$0xff]
        %v263 = vld [vmem:[%s165 + $0x170] sm:$0xff]
        %v264 = vld [vmem:[%s165 + $0x178] sm:$0xff]
        %v265 = vld [vmem:[%s165 + $0x180] sm:$0xff]
        %v266 = vld [vmem:[%s165 + $0x188] sm:$0xff]
        %v267 = vld [vmem:[%s165 + $0x190] sm:$0xff]
        %v268 = vld [vmem:[%s165 + $0x198] sm:$0xff]
        %v269 = vld [vmem:[%s165 + $0x1a0] sm:$0xff]
        %v270 = vld [vmem:[%s165 + $0x1a8] sm:$0xff]
        %v271 = vld [vmem:[%s165 + $0x1b0] sm:$0xff]
        %v272 = vld [vmem:[%s165 + $0x1b8] sm:$0xff]
        %v273 = vld [vmem:[%s165 + $0x1c0] sm:$0xff]
        %v274 = vld [vmem:[%s165 + $0x1c8] sm:$0xff]
        %v275 = vld [vmem:[%s165 + $0x1d0] sm:$0xff]
        %v276 = vld [vmem:[%s165 + $0x1d8] sm:$0xff]
        %v277 = vld [vmem:[%s165 + $0x1e0] sm:$0xff]
        %v278 = vld [vmem:[%s165 + $0x1e8] sm:$0xff]
        %v279 = vld [vmem:[%s165 + $0x1f0] sm:$0xff]
        %v280 = vld [vmem:[%s165 + $0x1f8] sm:$0xff]
        %v281 = vld [vmem:[%s165 + $0x200] sm:$0xff]
        %v282 = vld [vmem:[%s165 + $0x208] sm:$0xff]
        %v283 = vld [vmem:[%s165 + $0x210] sm:$0xff]
        %v284 = vld [vmem:[%s165 + $0x218] sm:$0xff]
        %v285 = vld [vmem:[%s165 + $0x220] sm:$0xff]
        %v286 = vld [vmem:[%s165 + $0x228] sm:$0xff]
        %v287 = vld [vmem:[%s165 + $0x230] sm:$0xff]
        %v288 = vld [vmem:[%s165 + $0x238] sm:$0xff]
        %v289 = vld [vmem:[%s165 + $0x240] sm:$0xff]
        %v290 = vld [vmem:[%s165 + $0x248] sm:$0xff]
        %v291 = vld [vmem:[%s165 + $0x250] sm:$0xff]
        %v292 = vld [vmem:[%s165 + $0x258] sm:$0xff]
        %v293 = vld [vmem:[%s165 + $0x260] sm:$0xff]
        %v294 = vld [vmem:[%s165 + $0x268] sm:$0xff]
        %v295 = vld [vmem:[%s165 + $0x270] sm:$0xff]
        %v296 = vld [vmem:[%s165 + $0x278] sm:$0xff]
        %v297 = vld [vmem:[%s165 + $0x280] sm:$0xff]
        %v298 = vld [vmem:[%s165 + $0x288] sm:$0xff]
        %v299 = vld [vmem:[%s165 + $0x290] sm:$0xff]
        %v300 = vld [vmem:[%s165 + $0x298] sm:$0xff]
        %v301 = vld [vmem:[%s165 + $0x2a0] sm:$0xff]
        %v302 = vld [vmem:[%s165 + $0x2a8] sm:$0xff]
        %v303 = vld [vmem:[%s165 + $0x2b0] sm:$0xff]
        %v304 = vld [vmem:[%s165 + $0x2b8] sm:$0xff]
        %v305 = vld [vmem:[%s165 + $0x2c0] sm:$0xff]
        %v306 = vld [vmem:[%s165 + $0x2c8] sm:$0xff]
        %v307 = vld [vmem:[%s165 + $0x2d0] sm:$0xff]
        %v308 = vld [vmem:[%s165 + $0x2d8] sm:$0xff]
        %v309 = vld [vmem:[%s165 + $0x2e0] sm:$0xff]
        %v310 = vld [vmem:[%s165 + $0x2e8] sm:$0xff]
        %v311 = vld [vmem:[%s165 + $0x2f0] sm:$0xff]
        %v312 = vld [vmem:[%s165 + $0x2f8] sm:$0xff]
        %v313 = vld [vmem:[%s165 + $0x300] sm:$0xff]
        %v314 = vld [vmem:[%s165 + $0x308] sm:$0xff]
        %v315 = vld [vmem:[%s165 + $0x310] sm:$0xff]
        %v316 = vld [vmem:[%s165 + $0x318] sm:$0xff]
        %v317 = vld [vmem:[%s165 + $0x320] sm:$0xff]
        %v318 = vld [vmem:[%s165 + $0x328] sm:$0xff]
        %v319 = vld [vmem:[%s165 + $0x330] sm:$0xff]
        %v320 = vld [vmem:[%s165 + $0x338] sm:$0xff]
        %v321 = vld [vmem:[%s165 + $0x340] sm:$0xff]
        %v322 = vld [vmem:[%s165 + $0x348] sm:$0xff]
        %v323 = vld [vmem:[%s165 + $0x350] sm:$0xff]
        %v324 = vld [vmem:[%s165 + $0x358] sm:$0xff]
        %v325 = vld [vmem:[%s165 + $0x360] sm:$0xff]
        %v326 = vld [vmem:[%s165 + $0x368] sm:$0xff]
        %v327 = vld [vmem:[%s165 + $0x370] sm:$0xff]
        %v328 = vld [vmem:[%s165 + $0x378] sm:$0xff]
        %v329 = vld [vmem:[%s165 + $0x380] sm:$0xff]
        %v330 = vld [vmem:[%s165 + $0x388] sm:$0xff]
        %v331 = vld [vmem:[%s165 + $0x390] sm:$0xff]
        %v332 = vld [vmem:[%s165 + $0x398] sm:$0xff]
        %v333 = vld [vmem:[%s165 + $0x3a0] sm:$0xff]
        %v334 = vld [vmem:[%s165 + $0x3a8] sm:$0xff]
        %v335 = vld [vmem:[%s165 + $0x3b0] sm:$0xff]
        %v336 = vld [vmem:[%s165 + $0x3b8] sm:$0xff]
        %v337 = vld [vmem:[%s165 + $0x3c0] sm:$0xff]
        %v338 = vld [vmem:[%s165 + $0x3c8] sm:$0xff]
        %v339 = vld [vmem:[%s165 + $0x3d0] sm:$0xff]
        %v340 = vld [vmem:[%s165 + $0x3d8] sm:$0xff]
        %v341 = vld [vmem:[%s165 + $0x3e0] sm:$0xff]
        %v342 = vld [vmem:[%s165 + $0x3e8] sm:$0xff]
        %v343 = vld [vmem:[%s165 + $0x3f0] sm:$0xff]
        %v344 = vld [vmem:[%s165 + $0x3f8] sm:$0xff]
        %v345 = vld [vmem:[%s165 + $0x400] sm:$0xff]
        %v346 = vld [vmem:[%s165 + $0x408] sm:$0xff]
        %v347 = vld [vmem:[%s165 + $0x410] sm:$0xff]
        %v348 = vld [vmem:[%s165 + $0x418] sm:$0xff]
        %v349 = vld [vmem:[%s165 + $0x420] sm:$0xff]
        %v350 = vld [vmem:[%s165 + $0x428] sm:$0xff]
        %v351 = vld [vmem:[%s165 + $0x430] sm:$0xff]
        %v352 = vld [vmem:[%s165 + $0x438] sm:$0xff]
        %v353 = vld [vmem:[%s165 + $0x440] sm:$0xff]
        %v354 = vld [vmem:[%s165 + $0x448] sm:$0xff]
        %v355 = vld [vmem:[%s165 + $0x450] sm:$0xff]
        %v356 = vld [vmem:[%s165 + $0x458] sm:$0xff]
        %v357 = vld [vmem:[%s165 + $0x460] sm:$0xff]
        %v358 = vld [vmem:[%s165 + $0x468] sm:$0xff]
        %v359 = vld [vmem:[%s165 + $0x470] sm:$0xff]
        %v360 = vld [vmem:[%s165 + $0x478] sm:$0xff]
        %v361 = vld [vmem:[%s165 + $0x480] sm:$0xff]
        %v362 = vld [vmem:[%s165 + $0x488] sm:$0xff]
        %v363 = vld [vmem:[%s165 + $0x490] sm:$0xff]
        %v364 = vld [vmem:[%s165 + $0x498] sm:$0xff]
        %v365 = vld [vmem:[%s165 + $0x4a0] sm:$0xff]
        %v366 = vld [vmem:[%s165 + $0x4a8] sm:$0xff]
        %v367 = vld [vmem:[%s165 + $0x4b0] sm:$0xff]
        %v368 = vld [vmem:[%s165 + $0x4b8] sm:$0xff]
        %v369 = vld [vmem:[%s165 + $0x4c0] sm:$0xff]
        %v370 = vld [vmem:[%s165 + $0x4c8] sm:$0xff]
        %v371 = vld [vmem:[%s165 + $0x4d0] sm:$0xff]
        %v372 = vld [vmem:[%s165 + $0x4d8] sm:$0xff]
        %v373 = vld [vmem:[%s165 + $0x4e0] sm:$0xff]
        %v374 = vld [vmem:[%s165 + $0x4e8] sm:$0xff]
        %v375 = vld [vmem:[%s165 + $0x4f0] sm:$0xff]
        %v376 = vld [vmem:[%s165 + $0x4f8] sm:$0xff]
        %v377 = vld [vmem:[%s165 + $0x500] sm:$0xff]
        %v378 = vld [vmem:[%s165 + $0x508] sm:$0xff]
        %v379 = vld [vmem:[%s165 + $0x510] sm:$0xff]
        %v380 = vld [vmem:[%s165 + $0x518] sm:$0xff]
        %v381 = vld [vmem:[%s165 + $0x520] sm:$0xff]
        %v382 = vld [vmem:[%s165 + $0x528] sm:$0xff]
        %v383 = vld [vmem:[%s165 + $0x530] sm:$0xff]
        %v384 = vld [vmem:[%s165 + $0x538] sm:$0xff]
        %v385 = vld [vmem:[%s165 + $0x540] sm:$0xff]
        %v386 = vld [vmem:[%s165 + $0x548] sm:$0xff]
        %v387 = vld [vmem:[%s165 + $0x550] sm:$0xff]
        %v388 = vld [vmem:[%s165 + $0x558] sm:$0xff]
        %v389 = vld [vmem:[%s165 + $0x560] sm:$0xff]
        %v390 = vld [vmem:[%s165 + $0x568] sm:$0xff]
        %v391 = vld [vmem:[%s165 + $0x570] sm:$0xff]
        %v392 = vld [vmem:[%s165 + $0x578] sm:$0xff]
        %v393 = vld [vmem:[%s165 + $0x580] sm:$0xff]
        %v394 = vld [vmem:[%s165 + $0x588] sm:$0xff]
        %v395 = vld [vmem:[%s165 + $0x590] sm:$0xff]
        %v396 = vld [vmem:[%s165 + $0x598] sm:$0xff]
        %v397 = vld [vmem:[%s165 + $0x5a0] sm:$0xff]
        %v398 = vld [vmem:[%s165 + $0x5a8] sm:$0xff]
        %v399 = vld [vmem:[%s165 + $0x5b0] sm:$0xff]
        %v400 = vld [vmem:[%s165 + $0x5b8] sm:$0xff]
        %v401 = vld [vmem:[%s165 + $0x5c0] sm:$0xff]
        %v402 = vld [vmem:[%s165 + $0x5c8] sm:$0xff]
        %v403 = vld [vmem:[%s165 + $0x5d0] sm:$0xff]
        %v404 = vld [vmem:[%s165 + $0x5d8] sm:$0xff]
        %v405 = vld [vmem:[%s165 + $0x5e0] sm:$0xff]
        %v406 = vld [vmem:[%s165 + $0x5e8] sm:$0xff]
        %v407 = vld [vmem:[%s165 + $0x5f0] sm:$0xff]
        %v408 = vld [vmem:[%s165 + $0x5f8] sm:$0xff]
        %v409 = vld [vmem:[%s165 + $0x600] sm:$0xff]
        %v410 = vld [vmem:[%s165 + $0x608] sm:$0xff]
        %v411 = vld [vmem:[%s165 + $0x610] sm:$0xff]
        %v412 = vld [vmem:[%s165 + $0x618] sm:$0xff]
        %v413 = vld [vmem:[%s165 + $0x620] sm:$0xff]
        %v414 = vld [vmem:[%s165 + $0x628] sm:$0xff]
        %v415 = vld [vmem:[%s165 + $0x630] sm:$0xff]
        %v416 = vld [vmem:[%s165 + $0x638] sm:$0xff]
        %v417 = vld [vmem:[%s165 + $0x640] sm:$0xff]
        %v418 = vld [vmem:[%s165 + $0x648] sm:$0xff]
        %v419 = vld [vmem:[%s165 + $0x650] sm:$0xff]
        %v420 = vld [vmem:[%s165 + $0x658] sm:$0xff]
        %v421 = vld [vmem:[%s165 + $0x660] sm:$0xff]
        %v422 = vld [vmem:[%s165 + $0x668] sm:$0xff]
        %v423 = vld [vmem:[%s165 + $0x670] sm:$0xff]
        %v424 = vld [vmem:[%s165 + $0x678] sm:$0xff]
        %v425 = vld [vmem:[%s165 + $0x680] sm:$0xff]
        %v426 = vld [vmem:[%s165 + $0x688] sm:$0xff]
        %v427 = vld [vmem:[%s165 + $0x690] sm:$0xff]
        %v428 = vld [vmem:[%s165 + $0x698] sm:$0xff]
        %v429 = vld [vmem:[%s165 + $0x6a0] sm:$0xff]
        %v430 = vld [vmem:[%s165 + $0x6a8] sm:$0xff]
        %v431 = vld [vmem:[%s165 + $0x6b0] sm:$0xff]
        %v432 = vld [vmem:[%s165 + $0x6b8] sm:$0xff]
        %v433 = vld [vmem:[%s165 + $0x6c0] sm:$0xff]
        %v434 = vld [vmem:[%s165 + $0x6c8] sm:$0xff]
        %v435 = vld [vmem:[%s165 + $0x6d0] sm:$0xff]
        %v436 = vld [vmem:[%s165 + $0x6d8] sm:$0xff]
        %v437 = vld [vmem:[%s165 + $0x6e0] sm:$0xff]
        %v438 = vld [vmem:[%s165 + $0x6e8] sm:$0xff]
        %v439 = vld [vmem:[%s165 + $0x6f0] sm:$0xff]
        %v440 = vld [vmem:[%s165 + $0x6f8] sm:$0xff]
        %v441 = vld [vmem:[%s165 + $0x700] sm:$0xff]
        %v442 = vld [vmem:[%s165 + $0x708] sm:$0xff]
        %v443 = vld [vmem:[%s165 + $0x710] sm:$0xff]
        %v444 = vld [vmem:[%s165 + $0x718] sm:$0xff]
        %v445 = vld [vmem:[%s165 + $0x720] sm:$0xff]
        %v446 = vld [vmem:[%s165 + $0x728] sm:$0xff]
        %v447 = vld [vmem:[%s165 + $0x730] sm:$0xff]
        %v448 = vld [vmem:[%s165 + $0x738] sm:$0xff]
        %v449 = vld [vmem:[%s165 + $0x740] sm:$0xff]
        %v450 = vld [vmem:[%s165 + $0x748] sm:$0xff]
        %v451 = vld [vmem:[%s165 + $0x750] sm:$0xff]
        %v452 = vld [vmem:[%s165 + $0x758] sm:$0xff]
        %v453 = vld [vmem:[%s165 + $0x760] sm:$0xff]
        %v454 = vld [vmem:[%s165 + $0x768] sm:$0xff]
        %v455 = vld [vmem:[%s165 + $0x770] sm:$0xff]
        %v456 = vld [vmem:[%s165 + $0x778] sm:$0xff]
        %v457 = vld [vmem:[%s165 + $0x780] sm:$0xff]
        %v458 = vld [vmem:[%s165 + $0x788] sm:$0xff]
        %v459 = vld [vmem:[%s165 + $0x790] sm:$0xff]
        %v460 = vld [vmem:[%s165 + $0x798] sm:$0xff]
        %v461 = vld [vmem:[%s165 + $0x7a0] sm:$0xff]
        %v462 = vld [vmem:[%s165 + $0x7a8] sm:$0xff]
        %v463 = vld [vmem:[%s165 + $0x7b0] sm:$0xff]
        %v464 = vld [vmem:[%s165 + $0x7b8] sm:$0xff]
        %v465 = vld [vmem:[%s165 + $0x7c0] sm:$0xff]
        %v466 = vld [vmem:[%s165 + $0x7c8] sm:$0xff]
        %v467 = vld [vmem:[%s165 + $0x7d0] sm:$0xff]
        %v468 = vld [vmem:[%s165 + $0x7d8] sm:$0xff]
        %v469 = vld [vmem:[%s165 + $0x7e0] sm:$0xff]
        %v470 = vld [vmem:[%s165 + $0x7e8] sm:$0xff]
        %v471 = vld [vmem:[%s165 + $0x7f0] sm:$0xff]
        %v472 = vld [vmem:[%s165 + $0x7f8] sm:$0xff]
        %v473 = vld [vmem:[%s165 + $0x800] sm:$0xff]
        %v474 = vld [vmem:[%s165 + $0x808] sm:$0xff]
        %v475 = vld [vmem:[%s165 + $0x810] sm:$0xff]
        %v476 = vld [vmem:[%s165 + $0x818] sm:$0xff]
        %v477 = vld [vmem:[%s165 + $0x820] sm:$0xff]
        %v478 = vld [vmem:[%s165 + $0x828] sm:$0xff]
        %v479 = vld [vmem:[%s165 + $0x830] sm:$0xff]
        %v480 = vld [vmem:[%s165 + $0x838] sm:$0xff]
        %v481 = vld [vmem:[%s165 + $0x840] sm:$0xff]
        %v482 = vld [vmem:[%s165 + $0x848] sm:$0xff]
        %v483 = vld [vmem:[%s165 + $0x850] sm:$0xff]
        %v484 = vld [vmem:[%s165 + $0x858] sm:$0xff]
        %v485 = vld [vmem:[%s165 + $0x860] sm:$0xff]
        %v486 = vld [vmem:[%s165 + $0x868] sm:$0xff]
        %v487 = vld [vmem:[%s165 + $0x870] sm:$0xff]
        %v488 = vld [vmem:[%s165 + $0x878] sm:$0xff]
        %v489 = vld [vmem:[%s165 + $0x880] sm:$0xff]
        %v490 = vld [vmem:[%s165 + $0x888] sm:$0xff]
        %v491 = vld [vmem:[%s165 + $0x890] sm:$0xff]
        %v492 = vld [vmem:[%s165 + $0x898] sm:$0xff]
        %v493 = vld [vmem:[%s165 + $0x8a0] sm:$0xff]
        %v494 = vld [vmem:[%s165 + $0x8a8] sm:$0xff]
        %v495 = vld [vmem:[%s165 + $0x8b0] sm:$0xff]
        %v496 = vld [vmem:[%s165 + $0x8b8] sm:$0xff]
        %v497 = vld [vmem:[%s165 + $0x8c0] sm:$0xff]
        %v498 = vld [vmem:[%s165 + $0x8c8] sm:$0xff]
        %v499 = vld [vmem:[%s165 + $0x8d0] sm:$0xff]
        %v500 = vld [vmem:[%s165 + $0x8d8] sm:$0xff]
        %v501 = vld [vmem:[%s165 + $0x8e0] sm:$0xff]
        %v502 = vld [vmem:[%s165 + $0x8e8] sm:$0xff]
        %v503 = vld [vmem:[%s165 + $0x8f0] sm:$0xff]
        %v504 = vld [vmem:[%s165 + $0x8f8] sm:$0xff]
        %v505 = vld [vmem:[%s165 + $0x900] sm:$0xff]
        %v506 = vld [vmem:[%s165 + $0x908] sm:$0xff]
        %v507 = vld [vmem:[%s165 + $0x910] sm:$0xff]
        %v508 = vld [vmem:[%s165 + $0x918] sm:$0xff]
        %v509 = vld [vmem:[%s165 + $0x920] sm:$0xff]
        %v510 = vld [vmem:[%s165 + $0x928] sm:$0xff]
        %v511 = vld [vmem:[%s165 + $0x930] sm:$0xff]
        %v512 = vld [vmem:[%s165 + $0x938] sm:$0xff]
        %v513 = vld [vmem:[%s165 + $0x940] sm:$0xff]
        %v514 = vld [vmem:[%s165 + $0x948] sm:$0xff]
        %v515 = vld [vmem:[%s165 + $0x950] sm:$0xff]
        %v516 = vld [vmem:[%s165 + $0x958] sm:$0xff]
        %v517 = vld [vmem:[%s165 + $0x960] sm:$0xff]
        %v518 = vld [vmem:[%s165 + $0x968] sm:$0xff]
        %v519 = vld [vmem:[%s165 + $0x970] sm:$0xff]
        %v520 = vld [vmem:[%s165 + $0x978] sm:$0xff]
        %v521 = vld [vmem:[%s165 + $0x980] sm:$0xff]
        %v522 = vld [vmem:[%s165 + $0x988] sm:$0xff]
        %v523 = vld [vmem:[%s165 + $0x990] sm:$0xff]
        %v524 = vld [vmem:[%s165 + $0x998] sm:$0xff]
        %v525 = vld [vmem:[%s165 + $0x9a0] sm:$0xff]
        %v526 = vld [vmem:[%s165 + $0x9a8] sm:$0xff]
        %v527 = vld [vmem:[%s165 + $0x9b0] sm:$0xff]
        %v528 = vld [vmem:[%s165 + $0x9b8] sm:$0xff]
        %v529 = vld [vmem:[%s165 + $0x9c0] sm:$0xff]
        %v530 = vld [vmem:[%s165 + $0x9c8] sm:$0xff]
        %v531 = vld [vmem:[%s165 + $0x9d0] sm:$0xff]
        %v532 = vld [vmem:[%s165 + $0x9d8] sm:$0xff]
        %v533 = vld [vmem:[%s165 + $0x9e0] sm:$0xff]
        %v534 = vld [vmem:[%s165 + $0x9e8] sm:$0xff]
        %v535 = vld [vmem:[%s165 + $0x9f0] sm:$0xff]
        %v536 = vld [vmem:[%s165 + $0x9f8] sm:$0xff]
        %v537 = vld [vmem:[%s165 + $0xa00] sm:$0xff]
        %v538 = vld [vmem:[%s165 + $0xa08] sm:$0xff]
        %v539 = vld [vmem:[%s165 + $0xa10] sm:$0xff]
        %v540 = vld [vmem:[%s165 + $0xa18] sm:$0xff]
        %v541 = vld [vmem:[%s165 + $0xa20] sm:$0xff]
        %v542 = vld [vmem:[%s165 + $0xa28] sm:$0xff]
        %v543 = vld [vmem:[%s165 + $0xa30] sm:$0xff]
        %v544 = vld [vmem:[%s165 + $0xa38] sm:$0xff]
        %v545 = vld [vmem:[%s165 + $0xa40] sm:$0xff]
        %v546 = vld [vmem:[%s165 + $0xa48] sm:$0xff]
        %v547 = vld [vmem:[%s165 + $0xa50] sm:$0xff]
        %v548 = vld [vmem:[%s165 + $0xa58] sm:$0xff]
        %v549 = vld [vmem:[%s165 + $0xa60] sm:$0xff]
        %v550 = vld [vmem:[%s165 + $0xa68] sm:$0xff]
        %v551 = vld [vmem:[%s165 + $0xa70] sm:$0xff]
        %v552 = vld [vmem:[%s165 + $0xa78] sm:$0xff]
        %v553 = vld [vmem:[%s165 + $0xa80] sm:$0xff]
        %v554 = vld [vmem:[%s165 + $0xa88] sm:$0xff]
        %v555 = vld [vmem:[%s165 + $0xa90] sm:$0xff]
        %v556 = vld [vmem:[%s165 + $0xa98] sm:$0xff]
        %v557 = vld [vmem:[%s165 + $0xaa0] sm:$0xff]
        %v558 = vld [vmem:[%s165 + $0xaa8] sm:$0xff]
        %v559 = vld [vmem:[%s165 + $0xab0] sm:$0xff]
        %v560 = vld [vmem:[%s165 + $0xab8] sm:$0xff]
        %v561 = vld [vmem:[%s165 + $0xac0] sm:$0xff]
        %v562 = vld [vmem:[%s165 + $0xac8] sm:$0xff]
        %v563 = vld [vmem:[%s165 + $0xad0] sm:$0xff]
        %v564 = vld [vmem:[%s165 + $0xad8] sm:$0xff]
        %v565 = vld [vmem:[%s165 + $0xae0] sm:$0xff]
        %v566 = vld [vmem:[%s165 + $0xae8] sm:$0xff]
        %v567 = vld [vmem:[%s165 + $0xaf0] sm:$0xff]
        %v568 = vld [vmem:[%s165 + $0xaf8] sm:$0xff]
        %v569 = vld [vmem:[%s165 + $0xb00] sm:$0xff]
        %v570 = vld [vmem:[%s165 + $0xb08] sm:$0xff]
        %v571 = vld [vmem:[%s165 + $0xb10] sm:$0xff]
        %v572 = vld [vmem:[%s165 + $0xb18] sm:$0xff]
        %v573 = vld [vmem:[%s165 + $0xb20] sm:$0xff]
        %v574 = vld [vmem:[%s165 + $0xb28] sm:$0xff]
        %v575 = vld [vmem:[%s165 + $0xb30] sm:$0xff]
        %v576 = vld [vmem:[%s165 + $0xb38] sm:$0xff]
        %v577 = vld [vmem:[%s165 + $0xb40] sm:$0xff]
        %v578 = vld [vmem:[%s165 + $0xb48] sm:$0xff]
        %v579 = vld [vmem:[%s165 + $0xb50] sm:$0xff]
        %v580 = vld [vmem:[%s165 + $0xb58] sm:$0xff]
        %v581 = vld [vmem:[%s165 + $0xb60] sm:$0xff]
        %v582 = vld [vmem:[%s165 + $0xb68] sm:$0xff]
        %v583 = vld [vmem:[%s165 + $0xb70] sm:$0xff]
        %v584 = vld [vmem:[%s165 + $0xb78] sm:$0xff]
        %v585 = vld [vmem:[%s165 + $0xb80] sm:$0xff]
        %v586 = vld [vmem:[%s165 + $0xb88] sm:$0xff]
        %v587 = vld [vmem:[%s165 + $0xb90] sm:$0xff]
        %v588 = vld [vmem:[%s165 + $0xb98] sm:$0xff]
        %v589 = vld [vmem:[%s165 + $0xba0] sm:$0xff]
        %v590 = vld [vmem:[%s165 + $0xba8] sm:$0xff]
        %v591 = vld [vmem:[%s165 + $0xbb0] sm:$0xff]
        %v592 = vld [vmem:[%s165 + $0xbb8] sm:$0xff]
        %v593 = vld [vmem:[%s165 + $0xbc0] sm:$0xff]
        %v594 = vld [vmem:[%s165 + $0xbc8] sm:$0xff]
        %v595 = vld [vmem:[%s165 + $0xbd0] sm:$0xff]
        %v596 = vld [vmem:[%s165 + $0xbd8] sm:$0xff]
        %v597 = vld [vmem:[%s165 + $0xbe0] sm:$0xff]
        %v598 = vld [vmem:[%s165 + $0xbe8] sm:$0xff]
        %v599 = vld [vmem:[%s165 + $0xbf0] sm:$0xff]
        %v600 = vld [vmem:[%s165 + $0xbf8] sm:$0xff]
        %v601 = vld [vmem:[%s165 + $0xc00] sm:$0xff]
        %v602 = vld [vmem:[%s165 + $0xc08] sm:$0xff]
        %v603 = vld [vmem:[%s165 + $0xc10] sm:$0xff]
        %v604 = vld [vmem:[%s165 + $0xc18] sm:$0xff]
        %v605 = vld [vmem:[%s165 + $0xc20] sm:$0xff]
        %v606 = vld [vmem:[%s165 + $0xc28] sm:$0xff]
        %v607 = vld [vmem:[%s165 + $0xc30] sm:$0xff]
        %v608 = vld [vmem:[%s165 + $0xc38] sm:$0xff]
        %v609 = vld [vmem:[%s165 + $0xc40] sm:$0xff]
        %v610 = vld [vmem:[%s165 + $0xc48] sm:$0xff]
        %v611 = vld [vmem:[%s165 + $0xc50] sm:$0xff]
        %v612 = vld [vmem:[%s165 + $0xc58] sm:$0xff]
        %v613 = vld [vmem:[%s165 + $0xc60] sm:$0xff]
        %v614 = vld [vmem:[%s165 + $0xc68] sm:$0xff]
        %v615 = vld [vmem:[%s165 + $0xc70] sm:$0xff]
        %v616 = vld [vmem:[%s165 + $0xc78] sm:$0xff]
        %v617 = vld [vmem:[%s165 + $0xc80] sm:$0xff]
        %v618 = vld [vmem:[%s165 + $0xc88] sm:$0xff]
        %v619 = vld [vmem:[%s165 + $0xc90] sm:$0xff]
        %v620 = vld [vmem:[%s165 + $0xc98] sm:$0xff]
        %v621 = vld [vmem:[%s165 + $0xca0] sm:$0xff]
        %v622 = vld [vmem:[%s165 + $0xca8] sm:$0xff]
        %v623 = vld [vmem:[%s165 + $0xcb0] sm:$0xff]
        %v624 = vld [vmem:[%s165 + $0xcb8] sm:$0xff]
        %v625 = vld [vmem:[%s165 + $0xcc0] sm:$0xff]
        %v626 = vld [vmem:[%s165 + $0xcc8] sm:$0xff]
        %v627 = vld [vmem:[%s165 + $0xcd0] sm:$0xff]
        %v628 = vld [vmem:[%s165 + $0xcd8] sm:$0xff]
        %v629 = vld [vmem:[%s165 + $0xce0] sm:$0xff]
        %v630 = vld [vmem:[%s165 + $0xce8] sm:$0xff]
        %v631 = vld [vmem:[%s165 + $0xcf0] sm:$0xff]
        %v632 = vld [vmem:[%s165 + $0xcf8] sm:$0xff]
        %v633 = vld [vmem:[%s165 + $0xd00] sm:$0xff]
        %v634 = vld [vmem:[%s165 + $0xd08] sm:$0xff]
        %v635 = vld [vmem:[%s165 + $0xd10] sm:$0xff]
        %v636 = vld [vmem:[%s165 + $0xd18] sm:$0xff]
        %v637 = vld [vmem:[%s165 + $0xd20] sm:$0xff]
        %v638 = vld [vmem:[%s165 + $0xd28] sm:$0xff]
        %v639 = vld [vmem:[%s165 + $0xd30] sm:$0xff]
        %v640 = vld [vmem:[%s165 + $0xd38] sm:$0xff]
        %v641 = vld [vmem:[%s165 + $0xd40] sm:$0xff]
        %v642 = vld [vmem:[%s165 + $0xd48] sm:$0xff]
        %v643 = vld [vmem:[%s165 + $0xd50] sm:$0xff]
        %v644 = vld [vmem:[%s165 + $0xd58] sm:$0xff]
        %v645 = vld [vmem:[%s165 + $0xd60] sm:$0xff]
        %v646 = vld [vmem:[%s165 + $0xd68] sm:$0xff]
        %v647 = vld [vmem:[%s165 + $0xd70] sm:$0xff]
        %v648 = vld [vmem:[%s165 + $0xd78] sm:$0xff]
        %v649 = vld [vmem:[%s165 + $0xd80] sm:$0xff]
        %v650 = vld [vmem:[%s165 + $0xd88] sm:$0xff]
        %v651 = vld [vmem:[%s165 + $0xd90] sm:$0xff]
        %v652 = vld [vmem:[%s165 + $0xd98] sm:$0xff]
        %v653 = vld [vmem:[%s165 + $0xda0] sm:$0xff]
        %v654 = vld [vmem:[%s165 + $0xda8] sm:$0xff]
        %v655 = vld [vmem:[%s165 + $0xdb0] sm:$0xff]
        %v656 = vld [vmem:[%s165 + $0xdb8] sm:$0xff]
        %v657 = vld [vmem:[%s165 + $0xdc0] sm:$0xff]
        %v658 = vld [vmem:[%s165 + $0xdc8] sm:$0xff]
        %v659 = vld [vmem:[%s165 + $0xdd0] sm:$0xff]
        %v660 = vld [vmem:[%s165 + $0xdd8] sm:$0xff]
        %v661 = vld [vmem:[%s165 + $0xde0] sm:$0xff]
        %v662 = vld [vmem:[%s165 + $0xde8] sm:$0xff]
        %v663 = vld [vmem:[%s165 + $0xdf0] sm:$0xff]
        %v664 = vld [vmem:[%s165 + $0xdf8] sm:$0xff]
        %v665 = vld [vmem:[%s165 + $0xe00] sm:$0xff]
        %v666 = vld [vmem:[%s165 + $0xe08] sm:$0xff]
        %v667 = vld [vmem:[%s165 + $0xe10] sm:$0xff]
        %v668 = vld [vmem:[%s165 + $0xe18] sm:$0xff]
        %v669 = vld [vmem:[%s165 + $0xe20] sm:$0xff]
        %v670 = vld [vmem:[%s165 + $0xe28] sm:$0xff]
        %v671 = vld [vmem:[%s165 + $0xe30] sm:$0xff]
        %v672 = vld [vmem:[%s165 + $0xe38] sm:$0xff]
        %v673 = vld [vmem:[%s165 + $0xe40] sm:$0xff]
        %v674 = vld [vmem:[%s165 + $0xe48] sm:$0xff]
        %v675 = vld [vmem:[%s165 + $0xe50] sm:$0xff]
        %v676 = vld [vmem:[%s165 + $0xe58] sm:$0xff]
        %v677 = vld [vmem:[%s165 + $0xe60] sm:$0xff]
        %v678 = vld [vmem:[%s165 + $0xe68] sm:$0xff]
        %v679 = vld [vmem:[%s165 + $0xe70] sm:$0xff]
        %v680 = vld [vmem:[%s165 + $0xe78] sm:$0xff]
        %v681 = vld [vmem:[%s165 + $0xe80] sm:$0xff]
        %v682 = vld [vmem:[%s165 + $0xe88] sm:$0xff]
        %v683 = vld [vmem:[%s165 + $0xe90] sm:$0xff]
        %v684 = vld [vmem:[%s165 + $0xe98] sm:$0xff]
        %v685 = vld [vmem:[%s165 + $0xea0] sm:$0xff]
        %v686 = vld [vmem:[%s165 + $0xea8] sm:$0xff]
        %v687 = vld [vmem:[%s165 + $0xeb0] sm:$0xff]
        %v688 = vld [vmem:[%s165 + $0xeb8] sm:$0xff]
        %v689 = vld [vmem:[%s165 + $0xec0] sm:$0xff]
        %v690 = vld [vmem:[%s165 + $0xec8] sm:$0xff]
        %v691 = vld [vmem:[%s165 + $0xed0] sm:$0xff]
        %v692 = vld [vmem:[%s165 + $0xed8] sm:$0xff]
        %v693 = vld [vmem:[%s165 + $0xee0] sm:$0xff]
        %v694 = vld [vmem:[%s165 + $0xee8] sm:$0xff]
        %v695 = vld [vmem:[%s165 + $0xef0] sm:$0xff]
        %v696 = vld [vmem:[%s165 + $0xef8] sm:$0xff]
        %v697 = vld [vmem:[%s165 + $0xf00] sm:$0xff]
        %v698 = vld [vmem:[%s165 + $0xf08] sm:$0xff]
        %v699 = vld [vmem:[%s165 + $0xf10] sm:$0xff]
        %v700 = vld [vmem:[%s165 + $0xf18] sm:$0xff]
        %v701 = vld [vmem:[%s165 + $0xf20] sm:$0xff]
        %v702 = vld [vmem:[%s165 + $0xf28] sm:$0xff]
        %v703 = vld [vmem:[%s165 + $0xf30] sm:$0xff]
        %v704 = vld [vmem:[%s165 + $0xf38] sm:$0xff]
        %v705 = vld [vmem:[%s165 + $0xf40] sm:$0xff]
        %v706 = vld [vmem:[%s165 + $0xf48] sm:$0xff]
        %v707 = vld [vmem:[%s165 + $0xf50] sm:$0xff]
        %v708 = vld [vmem:[%s165 + $0xf58] sm:$0xff]
        %v709 = vld [vmem:[%s165 + $0xf60] sm:$0xff]
        %v710 = vld [vmem:[%s165 + $0xf68] sm:$0xff]
        %v711 = vld [vmem:[%s165 + $0xf70] sm:$0xff]
        %v712 = vld [vmem:[%s165 + $0xf78] sm:$0xff]
        %v713 = vld [vmem:[%s165 + $0xf80] sm:$0xff]
        %v714 = vld [vmem:[%s165 + $0xf88] sm:$0xff]
        %v715 = vld [vmem:[%s165 + $0xf90] sm:$0xff]
        %v716 = vld [vmem:[%s165 + $0xf98] sm:$0xff]
        %v717 = vld [vmem:[%s165 + $0xfa0] sm:$0xff]
        %v718 = vld [vmem:[%s165 + $0xfa8] sm:$0xff]
        %v719 = vld [vmem:[%s165 + $0xfb0] sm:$0xff]
        %v720 = vld [vmem:[%s165 + $0xfb8] sm:$0xff]
        %v721 = vld [vmem:[%s165 + $0xfc0] sm:$0xff]
        %v722 = vld [vmem:[%s165 + $0xfc8] sm:$0xff]
        %v723 = vld [vmem:[%s165 + $0xfd0] sm:$0xff]
        %v724 = vld [vmem:[%s165 + $0xfd8] sm:$0xff]
        %v725 = vld [vmem:[%s165 + $0xfe0] sm:$0xff]
        %v726 = vld [vmem:[%s165 + $0xfe8] sm:$0xff]
        %v727 = vld [vmem:[%s165 + $0xff0] sm:$0xff]
        %v728 = vld [vmem:[%s165 + $0xff8] sm:$0xff]
        %v729 = vld [vmem:[%s165 + $0x1000] sm:$0xff]
        %v730 = vld [vmem:[%s165 + $0x1008] sm:$0xff]
        %v731 = vld [vmem:[%s165 + $0x1010] sm:$0xff]
        %v732 = vld [vmem:[%s165 + $0x1018] sm:$0xff]
        %v733 = vld [vmem:[%s165 + $0x1020] sm:$0xff]
        %v734 = vld [vmem:[%s165 + $0x1028] sm:$0xff]
        %v735 = vld [vmem:[%s165 + $0x1030] sm:$0xff]
        %v736 = vld [vmem:[%s165 + $0x1038] sm:$0xff]
        %v737 = vld [vmem:[%s165 + $0x1040] sm:$0xff]
        %v738 = vld [vmem:[%s165 + $0x1048] sm:$0xff]
        %v739 = vld [vmem:[%s165 + $0x1050] sm:$0xff]
        %v740 = vld [vmem:[%s165 + $0x1058] sm:$0xff]
        %v741 = vld [vmem:[%s165 + $0x1060] sm:$0xff]
        %v742 = vld [vmem:[%s165 + $0x1068] sm:$0xff]
        %v743 = vld [vmem:[%s165 + $0x1070] sm:$0xff]
        %v744 = vld [vmem:[%s165 + $0x1078] sm:$0xff]
        %v745 = vld [vmem:[%s165 + $0x1080] sm:$0xff]
        %v746 = vld [vmem:[%s165 + $0x1088] sm:$0xff]
        %v747 = vld [vmem:[%s165 + $0x1090] sm:$0xff]
        %v748 = vld [vmem:[%s165 + $0x1098] sm:$0xff]
        %v749 = vld [vmem:[%s165 + $0x10a0] sm:$0xff]
        %v750 = vld [vmem:[%s165 + $0x10a8] sm:$0xff]
        %v751 = vld [vmem:[%s165 + $0x10b0] sm:$0xff]
        %v752 = vld [vmem:[%s165 + $0x10b8] sm:$0xff]
        %v753 = vld [vmem:[%s165 + $0x10c0] sm:$0xff]
        %v754 = vld [vmem:[%s165 + $0x10c8] sm:$0xff]
        %v755 = vld [vmem:[%s165 + $0x10d0] sm:$0xff]
        %v756 = vld [vmem:[%s165 + $0x10d8] sm:$0xff]
        %v757 = vld [vmem:[%s165 + $0x10e0] sm:$0xff]
        %v758 = vld [vmem:[%s165 + $0x10e8] sm:$0xff]
        %v759 = vld [vmem:[%s165 + $0x10f0] sm:$0xff]
        %v760 = vld [vmem:[%s165 + $0x10f8] sm:$0xff]
        %v761 = vld [vmem:[%s165 + $0x1100] sm:$0xff]
        %v762 = vld [vmem:[%s165 + $0x1108] sm:$0xff]
        %v763 = vld [vmem:[%s165 + $0x1110] sm:$0xff]
        %v764 = vld [vmem:[%s165 + $0x1118] sm:$0xff]
        %v765 = vld [vmem:[%s165 + $0x1120] sm:$0xff]
        %v766 = vld [vmem:[%s165 + $0x1128] sm:$0xff]
        %v767 = vld [vmem:[%s165 + $0x1130] sm:$0xff]
        %v768 = vld [vmem:[%s165 + $0x1138] sm:$0xff]
        %v769 = vld [vmem:[%s165 + $0x1140] sm:$0xff]
        %v770 = vld [vmem:[%s165 + $0x1148] sm:$0xff]
        %v771 = vld [vmem:[%s165 + $0x1150] sm:$0xff]
        %v772 = vld [vmem:[%s165 + $0x1158] sm:$0xff]
        %v773 = vld [vmem:[%s165 + $0x1160] sm:$0xff]
        %v774 = vld [vmem:[%s165 + $0x1168] sm:$0xff]
        %v775 = vld [vmem:[%s165 + $0x1170] sm:$0xff]
        %v776 = vld [vmem:[%s165 + $0x1178] sm:$0xff]
        %v777 = vld [vmem:[%s165 + $0x1180] sm:$0xff]
        %v778 = vld [vmem:[%s165 + $0x1188] sm:$0xff]
        %v779 = vld [vmem:[%s165 + $0x1190] sm:$0xff]
        %v780 = vld [vmem:[%s165 + $0x1198] sm:$0xff]
        %v781 = vld [vmem:[%s165 + $0x11a0] sm:$0xff]
        %v782 = vld [vmem:[%s165 + $0x11a8] sm:$0xff]
        %v783 = vld [vmem:[%s165 + $0x11b0] sm:$0xff]
        %v784 = vld [vmem:[%s165 + $0x11b8] sm:$0xff]
        %v785 = vld [vmem:[%s165 + $0x11c0] sm:$0xff]
        %v786 = vld [vmem:[%s165 + $0x11c8] sm:$0xff]
        %v787 = vld [vmem:[%s165 + $0x11d0] sm:$0xff]
        %v788 = vld [vmem:[%s165 + $0x11d8] sm:$0xff]
        %v789 = vld [vmem:[%s165 + $0x11e0] sm:$0xff]
        %v790 = vld [vmem:[%s165 + $0x11e8] sm:$0xff]
        %v791 = vld [vmem:[%s165 + $0x11f0] sm:$0xff]
        %v792 = vld [vmem:[%s165 + $0x11f8] sm:$0xff]
        %v793 = vld [vmem:[%s165 + $0x1200] sm:$0xff]
        %v794 = vld [vmem:[%s165 + $0x1208] sm:$0xff]
        %v795 = vld [vmem:[%s165 + $0x1210] sm:$0xff]
        %v796 = vld [vmem:[%s165 + $0x1218] sm:$0xff]
        %v797 = vld [vmem:[%s165 + $0x1220] sm:$0xff]
        %v798 = vld [vmem:[%s165 + $0x1228] sm:$0xff]
        %v799 = vld [vmem:[%s165 + $0x1230] sm:$0xff]
        %v800 = vld [vmem:[%s165 + $0x1238] sm:$0xff]
        %v801 = vld [vmem:[%s165 + $0x1240] sm:$0xff]
        %v802 = vld [vmem:[%s165 + $0x1248] sm:$0xff]
        %v803 = vld [vmem:[%s165 + $0x1250] sm:$0xff]
        %v804 = vld [vmem:[%s165 + $0x1258] sm:$0xff]
        %v805 = vld [vmem:[%s165 + $0x1260] sm:$0xff]
        %v806 = vld [vmem:[%s165 + $0x1268] sm:$0xff]
        %v807 = vld [vmem:[%s165 + $0x1270] sm:$0xff]
        %v808 = vld [vmem:[%s165 + $0x1278] sm:$0xff]
        %v809 = vld [vmem:[%s165 + $0x1280] sm:$0xff]
        %v810 = vld [vmem:[%s165 + $0x1288] sm:$0xff]
        %v811 = vld [vmem:[%s165 + $0x1290] sm:$0xff]
        %v812 = vld [vmem:[%s165 + $0x1298] sm:$0xff]
        %v813 = vld [vmem:[%s165 + $0x12a0] sm:$0xff]
        %v814 = vld [vmem:[%s165 + $0x12a8] sm:$0xff]
        %v815 = vld [vmem:[%s165 + $0x12b0] sm:$0xff]
        %v816 = vld [vmem:[%s165 + $0x12b8] sm:$0xff]
        %v817 = vld [vmem:[%s165 + $0x12c0] sm:$0xff]
        %v818 = vld [vmem:[%s165 + $0x12c8] sm:$0xff]
        %v819 = vld [vmem:[%s165 + $0x12d0] sm:$0xff]
        %v820 = vld [vmem:[%s165 + $0x12d8] sm:$0xff]
        %v821 = vld [vmem:[%s165 + $0x12e0] sm:$0xff]
        %v822 = vld [vmem:[%s165 + $0x12e8] sm:$0xff]
        %v823 = vld [vmem:[%s165 + $0x12f0] sm:$0xff]
        %v824 = vld [vmem:[%s165 + $0x12f8] sm:$0xff]
        %v825 = vld [vmem:[%s165 + $0x1300] sm:$0xff]
        %v826 = vld [vmem:[%s165 + $0x1308] sm:$0xff]
        %v827 = vld [vmem:[%s165 + $0x1310] sm:$0xff]
        %v828 = vld [vmem:[%s165 + $0x1318] sm:$0xff]
        %v829 = vld [vmem:[%s165 + $0x1320] sm:$0xff]
        %v830 = vld [vmem:[%s165 + $0x1328] sm:$0xff]
        %v831 = vld [vmem:[%s165 + $0x1330] sm:$0xff]
        %v832 = vld [vmem:[%s165 + $0x1338] sm:$0xff]
        %v833 = vld [vmem:[%s165 + $0x1340] sm:$0xff]
        %v834 = vld [vmem:[%s165 + $0x1348] sm:$0xff]
        %v835 = vld [vmem:[%s165 + $0x1350] sm:$0xff]
        %v836 = vld [vmem:[%s165 + $0x1358] sm:$0xff]
        %v837 = vld [vmem:[%s165 + $0x1360] sm:$0xff]
        %v838 = vld [vmem:[%s165 + $0x1368] sm:$0xff]
        %v839 = vld [vmem:[%s165 + $0x1370] sm:$0xff]
        %v840 = vld [vmem:[%s165 + $0x1378] sm:$0xff]
        %v841 = vld [vmem:[%s165 + $0x1380] sm:$0xff]
        %v842 = vld [vmem:[%s165 + $0x1388] sm:$0xff]
        %v843 = vld [vmem:[%s165 + $0x1390] sm:$0xff]
        %v844 = vld [vmem:[%s165 + $0x1398] sm:$0xff]
        %v845 = vld [vmem:[%s165 + $0x13a0] sm:$0xff]
        %v846 = vld [vmem:[%s165 + $0x13a8] sm:$0xff]
        %v847 = vld [vmem:[%s165 + $0x13b0] sm:$0xff]
        %v848 = vld [vmem:[%s165 + $0x13b8] sm:$0xff]
        %v849 = vld [vmem:[%s165 + $0x13c0] sm:$0xff]
        %v850 = vld [vmem:[%s165 + $0x13c8] sm:$0xff]
        %v851 = vld [vmem:[%s165 + $0x13d0] sm:$0xff]
        %v852 = vld [vmem:[%s165 + $0x13d8] sm:$0xff]
        %v853 = vld [vmem:[%s165 + $0x13e0] sm:$0xff]
        %v854 = vld [vmem:[%s165 + $0x13e8] sm:$0xff]
        %v855 = vld [vmem:[%s165 + $0x13f0] sm:$0xff]
        %v856 = vld [vmem:[%s165 + $0x13f8] sm:$0xff]
        %v857 = vld [vmem:[%s165 + $0x1400] sm:$0xff]
        %v858 = vld [vmem:[%s165 + $0x1408] sm:$0xff]
        %v859 = vld [vmem:[%s165 + $0x1410] sm:$0xff]
        %v860 = vld [vmem:[%s165 + $0x1418] sm:$0xff]
        %v861 = vld [vmem:[%s165 + $0x1420] sm:$0xff]
        %v862 = vld [vmem:[%s165 + $0x1428] sm:$0xff]
        %v863 = vld [vmem:[%s165 + $0x1430] sm:$0xff]
        %v864 = vld [vmem:[%s165 + $0x1438] sm:$0xff]
        %v865 = vld [vmem:[%s165 + $0x1440] sm:$0xff]
        %v866 = vld [vmem:[%s165 + $0x1448] sm:$0xff]
        %v867 = vld [vmem:[%s165 + $0x1450] sm:$0xff]
        %v868 = vld [vmem:[%s165 + $0x1458] sm:$0xff]
        %v869 = vld [vmem:[%s165 + $0x1460] sm:$0xff]
        %v870 = vld [vmem:[%s165 + $0x1468] sm:$0xff]
        %v871 = vld [vmem:[%s165 + $0x1470] sm:$0xff]
        %v872 = vld [vmem:[%s165 + $0x1478] sm:$0xff]
        %v873 = vld [vmem:[%s165 + $0x1480] sm:$0xff]
        %v874 = vld [vmem:[%s165 + $0x1488] sm:$0xff]
        %v875 = vld [vmem:[%s165 + $0x1490] sm:$0xff]
        %v876 = vld [vmem:[%s165 + $0x1498] sm:$0xff]
        %v877 = vld [vmem:[%s165 + $0x14a0] sm:$0xff]
        %v878 = vld [vmem:[%s165 + $0x14a8] sm:$0xff]
        %v879 = vld [vmem:[%s165 + $0x14b0] sm:$0xff]
        %v880 = vld [vmem:[%s165 + $0x14b8] sm:$0xff]
        %v881 = vld [vmem:[%s165 + $0x14c0] sm:$0xff]
        %v882 = vld [vmem:[%s165 + $0x14c8] sm:$0xff]
        %v883 = vld [vmem:[%s165 + $0x14d0] sm:$0xff]
        %v884 = vld [vmem:[%s165 + $0x14d8] sm:$0xff]
        %v885 = vld [vmem:[%s165 + $0x14e0] sm:$0xff]
        %v886 = vld [vmem:[%s165 + $0x14e8] sm:$0xff]
        %v887 = vld [vmem:[%s165 + $0x14f0] sm:$0xff]
        %v888 = vld [vmem:[%s165 + $0x14f8] sm:$0xff]
        %v889 = vld [vmem:[%s165 + $0x1500] sm:$0xff]
        %v890 = vld [vmem:[%s165 + $0x1508] sm:$0xff]
        %v891 = vld [vmem:[%s165 + $0x1510] sm:$0xff]
        %v892 = vld [vmem:[%s165 + $0x1518] sm:$0xff]
        %v893 = vld [vmem:[%s165 + $0x1520] sm:$0xff]
        %v894 = vld [vmem:[%s165 + $0x1528] sm:$0xff]
        %v895 = vld [vmem:[%s165 + $0x1530] sm:$0xff]
        %v896 = vld [vmem:[%s165 + $0x1538] sm:$0xff]
        %v897 = vld [vmem:[%s165 + $0x1540] sm:$0xff]
        %v898 = vld [vmem:[%s165 + $0x1548] sm:$0xff]
        %v899 = vld [vmem:[%s165 + $0x1550] sm:$0xff]
        %v900 = vld [vmem:[%s165 + $0x1558] sm:$0xff]
        %v901 = vld [vmem:[%s165 + $0x1560] sm:$0xff]
        %v902 = vld [vmem:[%s165 + $0x1568] sm:$0xff]
        %v903 = vld [vmem:[%s165 + $0x1570] sm:$0xff]
        %v904 = vld [vmem:[%s165 + $0x1578] sm:$0xff]
        %v905 = vld [vmem:[%s165 + $0x1580] sm:$0xff]
        %v906 = vld [vmem:[%s165 + $0x1588] sm:$0xff]
        %v907 = vld [vmem:[%s165 + $0x1590] sm:$0xff]
        %v908 = vld [vmem:[%s165 + $0x1598] sm:$0xff]
        %v909 = vld [vmem:[%s165 + $0x15a0] sm:$0xff]
        %v910 = vld [vmem:[%s165 + $0x15a8] sm:$0xff]
        %v911 = vld [vmem:[%s165 + $0x15b0] sm:$0xff]
        %v912 = vld [vmem:[%s165 + $0x15b8] sm:$0xff]
        %v913 = vld [vmem:[%s165 + $0x15c0] sm:$0xff]
        %v914 = vld [vmem:[%s165 + $0x15c8] sm:$0xff]
        %v915 = vld [vmem:[%s165 + $0x15d0] sm:$0xff]
        %v916 = vld [vmem:[%s165 + $0x15d8] sm:$0xff]
        %v917 = vld [vmem:[%s165 + $0x15e0] sm:$0xff]
        %v918 = vld [vmem:[%s165 + $0x15e8] sm:$0xff]
        %v919 = vld [vmem:[%s165 + $0x15f0] sm:$0xff]
        %v920 = vld [vmem:[%s165 + $0x15f8] sm:$0xff]
        %v921 = vld [vmem:[%s165 + $0x1600] sm:$0xff]
        %v922 = vld [vmem:[%s165 + $0x1608] sm:$0xff]
        %v923 = vld [vmem:[%s165 + $0x1610] sm:$0xff]
        %v924 = vld [vmem:[%s165 + $0x1618] sm:$0xff]
        %v925 = vld [vmem:[%s165 + $0x1620] sm:$0xff]
        %v926 = vld [vmem:[%s165 + $0x1628] sm:$0xff]
        %v927 = vld [vmem:[%s165 + $0x1630] sm:$0xff]
        %v928 = vld [vmem:[%s165 + $0x1638] sm:$0xff]
        %v929 = vld [vmem:[%s165 + $0x1640] sm:$0xff]
        %v930 = vld [vmem:[%s165 + $0x1648] sm:$0xff]
        %v931 = vld [vmem:[%s165 + $0x1650] sm:$0xff]
        %v932 = vld [vmem:[%s165 + $0x1658] sm:$0xff]
        %v933 = vld [vmem:[%s165 + $0x1660] sm:$0xff]
        %v934 = vld [vmem:[%s165 + $0x1668] sm:$0xff]
        %v935 = vld [vmem:[%s165 + $0x1670] sm:$0xff]
        %v936 = vld [vmem:[%s165 + $0x1678] sm:$0xff]
        %v937 = vld [vmem:[%s165 + $0x1680] sm:$0xff]
        %v938 = vld [vmem:[%s165 + $0x1688] sm:$0xff]
        %v939 = vld [vmem:[%s165 + $0x1690] sm:$0xff]
        %v940 = vld [vmem:[%s165 + $0x1698] sm:$0xff]
        %v941 = vld [vmem:[%s165 + $0x16a0] sm:$0xff]
        %v942 = vld [vmem:[%s165 + $0x16a8] sm:$0xff]
        %v943 = vld [vmem:[%s165 + $0x16b0] sm:$0xff]
        %v944 = vld [vmem:[%s165 + $0x16b8] sm:$0xff]
        %v945 = vld [vmem:[%s165 + $0x16c0] sm:$0xff]
        %v946 = vld [vmem:[%s165 + $0x16c8] sm:$0xff]
        %v947 = vld [vmem:[%s165 + $0x16d0] sm:$0xff]
        %v948 = vld [vmem:[%s165 + $0x16d8] sm:$0xff]
        %v949 = vld [vmem:[%s165 + $0x16e0] sm:$0xff]
        %v950 = vld [vmem:[%s165 + $0x16e8] sm:$0xff]
        %v951 = vld [vmem:[%s165 + $0x16f0] sm:$0xff]
        %v952 = vld [vmem:[%s165 + $0x16f8] sm:$0xff]
        %v953 = vld [vmem:[%s165 + $0x1700] sm:$0xff]
        %v954 = vld [vmem:[%s165 + $0x1708] sm:$0xff]
        %v955 = vld [vmem:[%s165 + $0x1710] sm:$0xff]
        %v956 = vld [vmem:[%s165 + $0x1718] sm:$0xff]
        %v957 = vld [vmem:[%s165 + $0x1720] sm:$0xff]
        %v958 = vld [vmem:[%s165 + $0x1728] sm:$0xff]
        %v959 = vld [vmem:[%s165 + $0x1730] sm:$0xff]
        %v960 = vld [vmem:[%s165 + $0x1738] sm:$0xff]
        %v961 = vld [vmem:[%s165 + $0x1740] sm:$0xff]
        %v962 = vld [vmem:[%s165 + $0x1748] sm:$0xff]
        %v963 = vld [vmem:[%s165 + $0x1750] sm:$0xff]
        %v964 = vld [vmem:[%s165 + $0x1758] sm:$0xff]
        %v965 = vld [vmem:[%s165 + $0x1760] sm:$0xff]
        %v966 = vld [vmem:[%s165 + $0x1768] sm:$0xff]
        %v967 = vld [vmem:[%s165 + $0x1770] sm:$0xff]
        %v968 = vld [vmem:[%s165 + $0x1778] sm:$0xff]
        %v969 = vld [vmem:[%s165 + $0x1780] sm:$0xff]
        %v970 = vld [vmem:[%s165 + $0x1788] sm:$0xff]
        %v971 = vld [vmem:[%s165 + $0x1790] sm:$0xff]
        %v972 = vld [vmem:[%s165 + $0x1798] sm:$0xff]
        %v973 = vld [vmem:[%s165 + $0x17a0] sm:$0xff]
        %v974 = vld [vmem:[%s165 + $0x17a8] sm:$0xff]
        %v975 = vld [vmem:[%s165 + $0x17b0] sm:$0xff]
        %v976 = vld [vmem:[%s165 + $0x17b8] sm:$0xff]
        %v977 = vld [vmem:[%s165 + $0x17c0] sm:$0xff]
        %v978 = vld [vmem:[%s165 + $0x17c8] sm:$0xff]
        %v979 = vld [vmem:[%s165 + $0x17d0] sm:$0xff]
        %v980 = vld [vmem:[%s165 + $0x17d8] sm:$0xff]
        %v981 = vld [vmem:[%s165 + $0x17e0] sm:$0xff]
        %v982 = vld [vmem:[%s165 + $0x17e8] sm:$0xff]
        %v983 = vld [vmem:[%s165 + $0x17f0] sm:$0xff]
        %v984 = vld [vmem:[%s165 + $0x17f8] sm:$0xff]
        %v985 = vld [vmem:[%s165 + $0x1800] sm:$0xff]
        %v986 = vld [vmem:[%s165 + $0x1808] sm:$0xff]
        %v987 = vld [vmem:[%s165 + $0x1810] sm:$0xff]
        %v988 = vld [vmem:[%s165 + $0x1818] sm:$0xff]
        %v989 = vld [vmem:[%s165 + $0x1820] sm:$0xff]
        %v990 = vld [vmem:[%s165 + $0x1828] sm:$0xff]
        %v991 = vld [vmem:[%s165 + $0x1830] sm:$0xff]
        %v992 = vld [vmem:[%s165 + $0x1838] sm:$0xff]
        %v993 = vld [vmem:[%s165 + $0x1840] sm:$0xff]
        %v994 = vld [vmem:[%s165 + $0x1848] sm:$0xff]
        %v995 = vld [vmem:[%s165 + $0x1850] sm:$0xff]
        %v996 = vld [vmem:[%s165 + $0x1858] sm:$0xff]
        %v997 = vld [vmem:[%s165 + $0x1860] sm:$0xff]
        %v998 = vld [vmem:[%s165 + $0x1868] sm:$0xff]
        %v999 = vld [vmem:[%s165 + $0x1870] sm:$0xff]
        %v1000 = vld [vmem:[%s165 + $0x1878] sm:$0xff]
        %v1001 = vld [vmem:[%s165 + $0x1880] sm:$0xff]
        %v1002 = vld [vmem:[%s165 + $0x1888] sm:$0xff]
        %v1003 = vld [vmem:[%s165 + $0x1890] sm:$0xff]
        %v1004 = vld [vmem:[%s165 + $0x1898] sm:$0xff]
        %v1005 = vld [vmem:[%s165 + $0x18a0] sm:$0xff]
        %v1006 = vld [vmem:[%s165 + $0x18a8] sm:$0xff]
        %v1007 = vld [vmem:[%s165 + $0x18b0] sm:$0xff]
        %v1008 = vld [vmem:[%s165 + $0x18b8] sm:$0xff]
        %v1009 = vld [vmem:[%s165 + $0x18c0] sm:$0xff]
        %v1010 = vld [vmem:[%s165 + $0x18c8] sm:$0xff]
        %v1011 = vld [vmem:[%s165 + $0x18d0] sm:$0xff]
        %v1012 = vld [vmem:[%s165 + $0x18d8] sm:$0xff]
        %v1013 = vld [vmem:[%s165 + $0x18e0] sm:$0xff]
        %v1014 = vld [vmem:[%s165 + $0x18e8] sm:$0xff]
        %v1015 = vld [vmem:[%s165 + $0x18f0] sm:$0xff]
        %v1016 = vld [vmem:[%s165 + $0x18f8] sm:$0xff]
        %v1017 = vld [vmem:[%s165 + $0x1900] sm:$0xff]
        %v1018 = vld [vmem:[%s165 + $0x1908] sm:$0xff]
        %v1019 = vld [vmem:[%s165 + $0x1910] sm:$0xff]
        %v1020 = vld [vmem:[%s165 + $0x1918] sm:$0xff]
        %v1021 = vld [vmem:[%s165 + $0x1920] sm:$0xff]
        %v1022 = vld [vmem:[%s165 + $0x1928] sm:$0xff]
        %v1023 = vld [vmem:[%s165 + $0x1930] sm:$0xff]
        %v1024 = vld [vmem:[%s165 + $0x1938] sm:$0xff]
        %v1025 = vld [vmem:[%s165 + $0x1940] sm:$0xff]
        %v1026 = vld [vmem:[%s165 + $0x1948] sm:$0xff]
        %v1027 = vld [vmem:[%s165 + $0x1950] sm:$0xff]
        %v1028 = vld [vmem:[%s165 + $0x1958] sm:$0xff]
        %v1029 = vld [vmem:[%s165 + $0x1960] sm:$0xff]
        %v1030 = vld [vmem:[%s165 + $0x1968] sm:$0xff]
        %v1031 = vld [vmem:[%s165 + $0x1970] sm:$0xff]
        %v1032 = vld [vmem:[%s165 + $0x1978] sm:$0xff]
        %v1033 = vld [vmem:[%s165 + $0x1980] sm:$0xff]
        %v1034 = vld [vmem:[%s165 + $0x1988] sm:$0xff]
        %v1035 = vld [vmem:[%s165 + $0x1990] sm:$0xff]
        %v1036 = vld [vmem:[%s165 + $0x1998] sm:$0xff]
        %v1037 = vld [vmem:[%s165 + $0x19a0] sm:$0xff]
        %v1038 = vld [vmem:[%s165 + $0x19a8] sm:$0xff]
        %v1039 = vld [vmem:[%s165 + $0x19b0] sm:$0xff]
        %v1040 = vld [vmem:[%s165 + $0x19b8] sm:$0xff]
        %v1041 = vld [vmem:[%s165 + $0x19c0] sm:$0xff]
        %v1042 = vld [vmem:[%s165 + $0x19c8] sm:$0xff]
        %v1043 = vld [vmem:[%s165 + $0x19d0] sm:$0xff]
        %v1044 = vld [vmem:[%s165 + $0x19d8] sm:$0xff]
        %v1045 = vld [vmem:[%s165 + $0x19e0] sm:$0xff]
        %v1046 = vld [vmem:[%s165 + $0x19e8] sm:$0xff]
        %v1047 = vld [vmem:[%s165 + $0x19f0] sm:$0xff]
        %v1048 = vld [vmem:[%s165 + $0x19f8] sm:$0xff]
        %v1049 = vld [vmem:[%s165 + $0x1a00] sm:$0xff]
        %v1050 = vld [vmem:[%s165 + $0x1a08] sm:$0xff]
        %v1051 = vld [vmem:[%s165 + $0x1a10] sm:$0xff]
        %v1052 = vld [vmem:[%s165 + $0x1a18] sm:$0xff]
        %v1053 = vld [vmem:[%s165 + $0x1a20] sm:$0xff]
        %v1054 = vld [vmem:[%s165 + $0x1a28] sm:$0xff]
        %v1055 = vld [vmem:[%s165 + $0x1a30] sm:$0xff]
        %v1056 = vld [vmem:[%s165 + $0x1a38] sm:$0xff]
        %v1057 = vld [vmem:[%s165 + $0x1a40] sm:$0xff]
        %v1058 = vld [vmem:[%s165 + $0x1a48] sm:$0xff]
        %v1059 = vld [vmem:[%s165 + $0x1a50] sm:$0xff]
        %v1060 = vld [vmem:[%s165 + $0x1a58] sm:$0xff]
        %v1061 = vld [vmem:[%s165 + $0x1a60] sm:$0xff]
        %v1062 = vld [vmem:[%s165 + $0x1a68] sm:$0xff]
        %v1063 = vld [vmem:[%s165 + $0x1a70] sm:$0xff]
        %v1064 = vld [vmem:[%s165 + $0x1a78] sm:$0xff]
        %v1065 = vld [vmem:[%s165 + $0x1a80] sm:$0xff]
        %v1066 = vld [vmem:[%s165 + $0x1a88] sm:$0xff]
        %v1067 = vld [vmem:[%s165 + $0x1a90] sm:$0xff]
        %v1068 = vld [vmem:[%s165 + $0x1a98] sm:$0xff]
        %v1069 = vld [vmem:[%s165 + $0x1aa0] sm:$0xff]
        %v1070 = vld [vmem:[%s165 + $0x1aa8] sm:$0xff]
        %v1071 = vld [vmem:[%s165 + $0x1ab0] sm:$0xff]
        %v1072 = vld [vmem:[%s165 + $0x1ab8] sm:$0xff]
        %v1073 = vld [vmem:[%s165 + $0x1ac0] sm:$0xff]
        %v1074 = vld [vmem:[%s165 + $0x1ac8] sm:$0xff]
        %v1075 = vld [vmem:[%s165 + $0x1ad0] sm:$0xff]
        %v1076 = vld [vmem:[%s165 + $0x1ad8] sm:$0xff]
        %v1077 = vld [vmem:[%s165 + $0x1ae0] sm:$0xff]
        %v1078 = vld [vmem:[%s165 + $0x1ae8] sm:$0xff]
        %v1079 = vld [vmem:[%s165 + $0x1af0] sm:$0xff]
        %v1080 = vld [vmem:[%s165 + $0x1af8] sm:$0xff]
        %v1081 = vld [vmem:[%s165 + $0x1b00] sm:$0xff]
        %v1082 = vld [vmem:[%s165 + $0x1b08] sm:$0xff]
        %v1083 = vld [vmem:[%s165 + $0x1b10] sm:$0xff]
        %v1084 = vld [vmem:[%s165 + $0x1b18] sm:$0xff]
        %v1085 = vld [vmem:[%s165 + $0x1b20] sm:$0xff]
        %v1086 = vld [vmem:[%s165 + $0x1b28] sm:$0xff]
        %v1087 = vld [vmem:[%s165 + $0x1b30] sm:$0xff]
        %v1088 = vld [vmem:[%s165 + $0x1b38] sm:$0xff]
        %v1089 = vld [vmem:[%s165 + $0x1b40] sm:$0xff]
        %v1090 = vld [vmem:[%s165 + $0x1b48] sm:$0xff]
        %v1091 = vld [vmem:[%s165 + $0x1b50] sm:$0xff]
        %v1092 = vld [vmem:[%s165 + $0x1b58] sm:$0xff]
        %v1093 = vld [vmem:[%s165 + $0x1b60] sm:$0xff]
        %v1094 = vld [vmem:[%s165 + $0x1b68] sm:$0xff]
        %v1095 = vld [vmem:[%s165 + $0x1b70] sm:$0xff]
        %v1096 = vld [vmem:[%s165 + $0x1b78] sm:$0xff]
        %v1097 = vld [vmem:[%s165 + $0x1b80] sm:$0xff]
        %v1098 = vld [vmem:[%s165 + $0x1b88] sm:$0xff]
        %v1099 = vld [vmem:[%s165 + $0x1b90] sm:$0xff]
        %v1100 = vld [vmem:[%s165 + $0x1b98] sm:$0xff]
        %v1101 = vld [vmem:[%s165 + $0x1ba0] sm:$0xff]
        %v1102 = vld [vmem:[%s165 + $0x1ba8] sm:$0xff]
        %v1103 = vld [vmem:[%s165 + $0x1bb0] sm:$0xff]
        %v1104 = vld [vmem:[%s165 + $0x1bb8] sm:$0xff]
        %v1105 = vld [vmem:[%s165 + $0x1bc0] sm:$0xff]
        %v1106 = vld [vmem:[%s165 + $0x1bc8] sm:$0xff]
        %v1107 = vld [vmem:[%s165 + $0x1bd0] sm:$0xff]
        %v1108 = vld [vmem:[%s165 + $0x1bd8] sm:$0xff]
        %v1109 = vld [vmem:[%s165 + $0x1be0] sm:$0xff]
        %v1110 = vld [vmem:[%s165 + $0x1be8] sm:$0xff]
        %v1111 = vld [vmem:[%s165 + $0x1bf0] sm:$0xff]
        %v1112 = vld [vmem:[%s165 + $0x1bf8] sm:$0xff]
        %v1113 = vld [vmem:[%s165 + $0x1c00] sm:$0xff]
        %v1114 = vld [vmem:[%s165 + $0x1c08] sm:$0xff]
        %v1115 = vld [vmem:[%s165 + $0x1c10] sm:$0xff]
        %v1116 = vld [vmem:[%s165 + $0x1c18] sm:$0xff]
        %v1117 = vld [vmem:[%s165 + $0x1c20] sm:$0xff]
        %v1118 = vld [vmem:[%s165 + $0x1c28] sm:$0xff]
        %v1119 = vld [vmem:[%s165 + $0x1c30] sm:$0xff]
        %v1120 = vld [vmem:[%s165 + $0x1c38] sm:$0xff]
        %v1121 = vld [vmem:[%s165 + $0x1c40] sm:$0xff]
        %v1122 = vld [vmem:[%s165 + $0x1c48] sm:$0xff]
        %v1123 = vld [vmem:[%s165 + $0x1c50] sm:$0xff]
        %v1124 = vld [vmem:[%s165 + $0x1c58] sm:$0xff]
        %v1125 = vld [vmem:[%s165 + $0x1c60] sm:$0xff]
        %v1126 = vld [vmem:[%s165 + $0x1c68] sm:$0xff]
        %v1127 = vld [vmem:[%s165 + $0x1c70] sm:$0xff]
        %v1128 = vld [vmem:[%s165 + $0x1c78] sm:$0xff]
        %v1129 = vld [vmem:[%s165 + $0x1c80] sm:$0xff]
        %v1130 = vld [vmem:[%s165 + $0x1c88] sm:$0xff]
        %v1131 = vld [vmem:[%s165 + $0x1c90] sm:$0xff]
        %v1132 = vld [vmem:[%s165 + $0x1c98] sm:$0xff]
        %v1133 = vld [vmem:[%s165 + $0x1ca0] sm:$0xff]
        %v1134 = vld [vmem:[%s165 + $0x1ca8] sm:$0xff]
        %v1135 = vld [vmem:[%s165 + $0x1cb0] sm:$0xff]
        %v1136 = vld [vmem:[%s165 + $0x1cb8] sm:$0xff]
        %v1137 = vld [vmem:[%s165 + $0x1cc0] sm:$0xff]
        %v1138 = vld [vmem:[%s165 + $0x1cc8] sm:$0xff]
        %v1139 = vld [vmem:[%s165 + $0x1cd0] sm:$0xff]
        %v1140 = vld [vmem:[%s165 + $0x1cd8] sm:$0xff]
        %v1141 = vld [vmem:[%s165 + $0x1ce0] sm:$0xff]
        %v1142 = vld [vmem:[%s165 + $0x1ce8] sm:$0xff]
        %v1143 = vld [vmem:[%s165 + $0x1cf0] sm:$0xff]
        %v1144 = vld [vmem:[%s165 + $0x1cf8] sm:$0xff]
        %v1145 = vld [vmem:[%s165 + $0x1d00] sm:$0xff]
        %v1146 = vld [vmem:[%s165 + $0x1d08] sm:$0xff]
        %v1147 = vld [vmem:[%s165 + $0x1d10] sm:$0xff]
        %v1148 = vld [vmem:[%s165 + $0x1d18] sm:$0xff]
        %v1149 = vld [vmem:[%s165 + $0x1d20] sm:$0xff]
        %v1150 = vld [vmem:[%s165 + $0x1d28] sm:$0xff]
        %v1151 = vld [vmem:[%s165 + $0x1d30] sm:$0xff]
        %v1152 = vld [vmem:[%s165 + $0x1d38] sm:$0xff]
        %v1153 = vld [vmem:[%s165 + $0x1d40] sm:$0xff]
        %v1154 = vld [vmem:[%s165 + $0x1d48] sm:$0xff]
        %v1155 = vld [vmem:[%s165 + $0x1d50] sm:$0xff]
        %v1156 = vld [vmem:[%s165 + $0x1d58] sm:$0xff]
        %v1157 = vld [vmem:[%s165 + $0x1d60] sm:$0xff]
        %v1158 = vld [vmem:[%s165 + $0x1d68] sm:$0xff]
        %v1159 = vld [vmem:[%s165 + $0x1d70] sm:$0xff]
        %v1160 = vld [vmem:[%s165 + $0x1d78] sm:$0xff]
        %v1161 = vld [vmem:[%s165 + $0x1d80] sm:$0xff]
        %v1162 = vld [vmem:[%s165 + $0x1d88] sm:$0xff]
        %v1163 = vld [vmem:[%s165 + $0x1d90] sm:$0xff]
        %v1164 = vld [vmem:[%s165 + $0x1d98] sm:$0xff]
        %v1165 = vld [vmem:[%s165 + $0x1da0] sm:$0xff]
        %v1166 = vld [vmem:[%s165 + $0x1da8] sm:$0xff]
        %v1167 = vld [vmem:[%s165 + $0x1db0] sm:$0xff]
        %v1168 = vld [vmem:[%s165 + $0x1db8] sm:$0xff]
        %v1169 = vld [vmem:[%s165 + $0x1dc0] sm:$0xff]
        %v1170 = vld [vmem:[%s165 + $0x1dc8] sm:$0xff]
        %v1171 = vld [vmem:[%s165 + $0x1dd0] sm:$0xff]
        %v1172 = vld [vmem:[%s165 + $0x1dd8] sm:$0xff]
        %v1173 = vld [vmem:[%s165 + $0x1de0] sm:$0xff]
        %v1174 = vld [vmem:[%s165 + $0x1de8] sm:$0xff]
        %v1175 = vld [vmem:[%s165 + $0x1df0] sm:$0xff]
        %v1176 = vld [vmem:[%s165 + $0x1df8] sm:$0xff]
        %v1177 = vld [vmem:[%s165 + $0x1e00] sm:$0xff]
        %v1178 = vld [vmem:[%s165 + $0x1e08] sm:$0xff]
        %v1179 = vld [vmem:[%s165 + $0x1e10] sm:$0xff]
        %v1180 = vld [vmem:[%s165 + $0x1e18] sm:$0xff]
        %v1181 = vld [vmem:[%s165 + $0x1e20] sm:$0xff]
        %v1182 = vld [vmem:[%s165 + $0x1e28] sm:$0xff]
        %v1183 = vld [vmem:[%s165 + $0x1e30] sm:$0xff]
        %v1184 = vld [vmem:[%s165 + $0x1e38] sm:$0xff]
        %v1185 = vld [vmem:[%s165 + $0x1e40] sm:$0xff]
        %v1186 = vld [vmem:[%s165 + $0x1e48] sm:$0xff]
        %v1187 = vld [vmem:[%s165 + $0x1e50] sm:$0xff]
        %v1188 = vld [vmem:[%s165 + $0x1e58] sm:$0xff]
        %v1189 = vld [vmem:[%s165 + $0x1e60] sm:$0xff]
        %v1190 = vld [vmem:[%s165 + $0x1e68] sm:$0xff]
        %v1191 = vld [vmem:[%s165 + $0x1e70] sm:$0xff]
        %v1192 = vld [vmem:[%s165 + $0x1e78] sm:$0xff]
        %v1193 = vld [vmem:[%s165 + $0x1e80] sm:$0xff]
        %v1194 = vld [vmem:[%s165 + $0x1e88] sm:$0xff]
        %v1195 = vld [vmem:[%s165 + $0x1e90] sm:$0xff]
        %v1196 = vld [vmem:[%s165 + $0x1e98] sm:$0xff]
        %v1197 = vld [vmem:[%s165 + $0x1ea0] sm:$0xff]
        %v1198 = vld [vmem:[%s165 + $0x1ea8] sm:$0xff]
        %v1199 = vld [vmem:[%s165 + $0x1eb0] sm:$0xff]
        %v1200 = vld [vmem:[%s165 + $0x1eb8] sm:$0xff]
        %v1201 = vld [vmem:[%s165 + $0x1ec0] sm:$0xff]
        %v1202 = vld [vmem:[%s165 + $0x1ec8] sm:$0xff]
        %v1203 = vld [vmem:[%s165 + $0x1ed0] sm:$0xff]
        %v1204 = vld [vmem:[%s165 + $0x1ed8] sm:$0xff]
        %v1205 = vld [vmem:[%s165 + $0x1ee0] sm:$0xff]
        %v1206 = vld [vmem:[%s165 + $0x1ee8] sm:$0xff]
        %v1207 = vld [vmem:[%s165 + $0x1ef0] sm:$0xff]
        %v1208 = vld [vmem:[%s165 + $0x1ef8] sm:$0xff]
        %v1209 = vld [vmem:[%s165 + $0x1f00] sm:$0xff]
        %v1210 = vld [vmem:[%s165 + $0x1f08] sm:$0xff]
        %v1211 = vld [vmem:[%s165 + $0x1f10] sm:$0xff]
        %v1212 = vld [vmem:[%s165 + $0x1f18] sm:$0xff]
        %v1213 = vld [vmem:[%s165 + $0x1f20] sm:$0xff]
        %v1214 = vld [vmem:[%s165 + $0x1f28] sm:$0xff]
        %v1215 = vld [vmem:[%s165 + $0x1f30] sm:$0xff]
        %v1216 = vld [vmem:[%s165 + $0x1f38] sm:$0xff]
        %v1217 = vld [vmem:[%s165 + $0x1f40] sm:$0xff]
        %v1218 = vld [vmem:[%s165 + $0x1f48] sm:$0xff]
        %v1219 = vld [vmem:[%s165 + $0x1f50] sm:$0xff]
        %v1220 = vld [vmem:[%s165 + $0x1f58] sm:$0xff]
        %v1221 = vld [vmem:[%s165 + $0x1f60] sm:$0xff]
        %v1222 = vld [vmem:[%s165 + $0x1f68] sm:$0xff]
        %v1223 = vld [vmem:[%s165 + $0x1f70] sm:$0xff]
        %v1224 = vld [vmem:[%s165 + $0x1f78] sm:$0xff]
        %v1225 = vld [vmem:[%s165 + $0x1f80] sm:$0xff]
        %v1226 = vld [vmem:[%s165 + $0x1f88] sm:$0xff]
        %v1227 = vld [vmem:[%s165 + $0x1f90] sm:$0xff]
        %v1228 = vld [vmem:[%s165 + $0x1f98] sm:$0xff]
        %v1229 = vld [vmem:[%s165 + $0x1fa0] sm:$0xff]
        %v1230 = vld [vmem:[%s165 + $0x1fa8] sm:$0xff]
        %v1231 = vld [vmem:[%s165 + $0x1fb0] sm:$0xff]
        %v1232 = vld [vmem:[%s165 + $0x1fb8] sm:$0xff]
        %v1233 = vld [vmem:[%s165 + $0x1fc0] sm:$0xff]
        %v1234 = vld [vmem:[%s165 + $0x1fc8] sm:$0xff]
        %v1235 = vld [vmem:[%s165 + $0x1fd0] sm:$0xff]
        %v1236 = vld [vmem:[%s165 + $0x1fd8] sm:$0xff]
        %v1237 = vld [vmem:[%s165 + $0x1fe0] sm:$0xff]
        %v1238 = vld [vmem:[%s165 + $0x1fe8] sm:$0xff]
        %v1239 = vld [vmem:[%s165 + $0x1ff0] sm:$0xff]
        %v1240 = vld [vmem:[%s165 + $0x1ff8] sm:$0xff]
        %v1249 = vcombine.high %v209, %v209
        %v1251 = vunpack.c.l.s4 1966171168
        %v1252 = vunpack.c.0.s8 %v1251
        %v1253 = vlaneseq
        %v1254 = vshrl.u32 %v1253, 7
        %v1255 = vsub.s32 %v1252, %v1254
        %v1256 = vrot.slane %v209, %v1255
        %v1258 = vunpack.c.l.s4 1966171168
        %v1259 = vunpack.c.0.s8 %v1258
        %v1260 = vlaneseq
        %v1261 = vshrl.u32 %v1260, 7
        %v1262 = vsub.s32 %v1259, %v1261
        %v1263 = vrot.slane %v1249, %v1262
        %v1264 = vcombine.high %v1256, %v1256
        %v1265 = vcombine.high %v1263, %v1263
        %v1267 = vunpack.c.l.s4 1966171168
        %v1268 = vunpack.c.0.s8 %v1267
        %v1269 = vlaneseq
        %v1270 = vshrl.u32 %v1269, 7
        %v1271 = vsub.s32 %v1268, %v1270
        %v1272 = vrot.slane %v1256, %v1271
        %v1274 = vunpack.c.l.s4 1966171168
        %v1275 = vunpack.c.0.s8 %v1274
        %v1276 = vlaneseq
        %v1277 = vshrl.u32 %v1276, 7
        %v1278 = vsub.s32 %v1275, %v1277
        %v1279 = vrot.slane %v1263, %v1278
        %v1281 = vunpack.c.l.s4 1966171168
        %v1282 = vunpack.c.0.s8 %v1281
        %v1283 = vlaneseq
        %v1284 = vshrl.u32 %v1283, 7
        %v1285 = vsub.s32 %v1282, %v1284
        %v1286 = vrot.slane %v1264, %v1285
        %v1288 = vunpack.c.l.s4 1966171168
        %v1289 = vunpack.c.0.s8 %v1288
        %v1290 = vlaneseq
        %v1291 = vshrl.u32 %v1290, 7
        %v1292 = vsub.s32 %v1289, %v1291
        %v1293 = vrot.slane %v1265, %v1292
        %v1294 = vcombine.high %v1272, %v1272
        %v1295 = vcombine.high %v1279, %v1279
        %v1296 = vcombine.high %v1286, %v1286
        %v1297 = vcombine.high %v1293, %v1293
        %v1298 = vcombine.high %v210, %v210
        %v1300 = vunpack.c.l.s4 1966171168
        %v1301 = vunpack.c.0.s8 %v1300
        %v1302 = vlaneseq
        %v1303 = vshrl.u32 %v1302, 7
        %v1304 = vsub.s32 %v1301, %v1303
        %v1305 = vrot.slane %v210, %v1304
        %v1307 = vunpack.c.l.s4 1966171168
        %v1308 = vunpack.c.0.s8 %v1307
        %v1309 = vlaneseq
        %v1310 = vshrl.u32 %v1309, 7
        %v1311 = vsub.s32 %v1308, %v1310
        %v1312 = vrot.slane %v1298, %v1311
        %v1313 = vcombine.high %v1305, %v1305
        %v1314 = vcombine.high %v1312, %v1312
        %v1316 = vunpack.c.l.s4 1966171168
        %v1317 = vunpack.c.0.s8 %v1316
        %v1318 = vlaneseq
        %v1319 = vshrl.u32 %v1318, 7
        %v1320 = vsub.s32 %v1317, %v1319
        %v1321 = vrot.slane %v1305, %v1320
        %v1323 = vunpack.c.l.s4 1966171168
        %v1324 = vunpack.c.0.s8 %v1323
        %v1325 = vlaneseq
        %v1326 = vshrl.u32 %v1325, 7
        %v1327 = vsub.s32 %v1324, %v1326
        %v1328 = vrot.slane %v1312, %v1327
        %v1330 = vunpack.c.l.s4 1966171168
        %v1331 = vunpack.c.0.s8 %v1330
        %v1332 = vlaneseq
        %v1333 = vshrl.u32 %v1332, 7
        %v1334 = vsub.s32 %v1331, %v1333
        %v1335 = vrot.slane %v1313, %v1334
        %v1337 = vunpack.c.l.s4 1966171168
        %v1338 = vunpack.c.0.s8 %v1337
        %v1339 = vlaneseq
        %v1340 = vshrl.u32 %v1339, 7
        %v1341 = vsub.s32 %v1338, %v1340
        %v1342 = vrot.slane %v1314, %v1341
        %v1343 = vcombine.high %v1321, %v1321
        %v1344 = vcombine.high %v1328, %v1328
        %v1345 = vcombine.high %v1335, %v1335
        %v1346 = vcombine.high %v1342, %v1342
        %v1347 = vcombine.high %v211, %v211
        %v1349 = vunpack.c.l.s4 1966171168
        %v1350 = vunpack.c.0.s8 %v1349
        %v1351 = vlaneseq
        %v1352 = vshrl.u32 %v1351, 7
        %v1353 = vsub.s32 %v1350, %v1352
        %v1354 = vrot.slane %v211, %v1353
        %v1356 = vunpack.c.l.s4 1966171168
        %v1357 = vunpack.c.0.s8 %v1356
        %v1358 = vlaneseq
        %v1359 = vshrl.u32 %v1358, 7
        %v1360 = vsub.s32 %v1357, %v1359
        %v1361 = vrot.slane %v1347, %v1360
        %v1362 = vcombine.high %v1354, %v1354
        %v1363 = vcombine.high %v1361, %v1361
        %v1365 = vunpack.c.l.s4 1966171168
        %v1366 = vunpack.c.0.s8 %v1365
        %v1367 = vlaneseq
        %v1368 = vshrl.u32 %v1367, 7
        %v1369 = vsub.s32 %v1366, %v1368
        %v1370 = vrot.slane %v1354, %v1369
        %v1372 = vunpack.c.l.s4 1966171168
        %v1373 = vunpack.c.0.s8 %v1372
        %v1374 = vlaneseq
        %v1375 = vshrl.u32 %v1374, 7
        %v1376 = vsub.s32 %v1373, %v1375
        %v1377 = vrot.slane %v1361, %v1376
        %v1379 = vunpack.c.l.s4 1966171168
        %v1380 = vunpack.c.0.s8 %v1379
        %v1381 = vlaneseq
        %v1382 = vshrl.u32 %v1381, 7
        %v1383 = vsub.s32 %v1380, %v1382
        %v1384 = vrot.slane %v1362, %v1383
        %v1386 = vunpack.c.l.s4 1966171168
        %v1387 = vunpack.c.0.s8 %v1386
        %v1388 = vlaneseq
        %v1389 = vshrl.u32 %v1388, 7
        %v1390 = vsub.s32 %v1387, %v1389
        %v1391 = vrot.slane %v1363, %v1390
        %v1392 = vcombine.high %v1370, %v1370
        %v1393 = vcombine.high %v1377, %v1377
        %v1394 = vcombine.high %v1384, %v1384
        %v1395 = vcombine.high %v1391, %v1391
        %v1396 = vcombine.high %v212, %v212
        %v1398 = vunpack.c.l.s4 1966171168
        %v1399 = vunpack.c.0.s8 %v1398
        %v1400 = vlaneseq
        %v1401 = vshrl.u32 %v1400, 7
        %v1402 = vsub.s32 %v1399, %v1401
        %v1403 = vrot.slane %v212, %v1402
        %v1405 = vunpack.c.l.s4 1966171168
        %v1406 = vunpack.c.0.s8 %v1405
        %v1407 = vlaneseq
        %v1408 = vshrl.u32 %v1407, 7
        %v1409 = vsub.s32 %v1406, %v1408
        %v1410 = vrot.slane %v1396, %v1409
        %v1411 = vcombine.high %v1403, %v1403
        %v1412 = vcombine.high %v1410, %v1410
        %v1414 = vunpack.c.l.s4 1966171168
        %v1415 = vunpack.c.0.s8 %v1414
        %v1416 = vlaneseq
        %v1417 = vshrl.u32 %v1416, 7
        %v1418 = vsub.s32 %v1415, %v1417
        %v1419 = vrot.slane %v1403, %v1418
        %v1421 = vunpack.c.l.s4 1966171168
        %v1422 = vunpack.c.0.s8 %v1421
        %v1423 = vlaneseq
        %v1424 = vshrl.u32 %v1423, 7
        %v1425 = vsub.s32 %v1422, %v1424
        %v1426 = vrot.slane %v1410, %v1425
        %v1428 = vunpack.c.l.s4 1966171168
        %v1429 = vunpack.c.0.s8 %v1428
        %v1430 = vlaneseq
        %v1431 = vshrl.u32 %v1430, 7
        %v1432 = vsub.s32 %v1429, %v1431
        %v1433 = vrot.slane %v1411, %v1432
        %v1435 = vunpack.c.l.s4 1966171168
        %v1436 = vunpack.c.0.s8 %v1435
        %v1437 = vlaneseq
        %v1438 = vshrl.u32 %v1437, 7
        %v1439 = vsub.s32 %v1436, %v1438
        %v1440 = vrot.slane %v1412, %v1439
        %v1441 = vcombine.high %v1419, %v1419
        %v1442 = vcombine.high %v1426, %v1426
        %v1443 = vcombine.high %v1433, %v1433
        %v1444 = vcombine.high %v1440, %v1440
        %v1445 = vcombine.high %v213, %v213
        %v1447 = vunpack.c.l.s4 1966171168
        %v1448 = vunpack.c.0.s8 %v1447
        %v1449 = vlaneseq
        %v1450 = vshrl.u32 %v1449, 7
        %v1451 = vsub.s32 %v1448, %v1450
        %v1452 = vrot.slane %v213, %v1451
        %v1454 = vunpack.c.l.s4 1966171168
        %v1455 = vunpack.c.0.s8 %v1454
        %v1456 = vlaneseq
        %v1457 = vshrl.u32 %v1456, 7
        %v1458 = vsub.s32 %v1455, %v1457
        %v1459 = vrot.slane %v1445, %v1458
        %v1460 = vcombine.high %v1452, %v1452
        %v1461 = vcombine.high %v1459, %v1459
        %v1463 = vunpack.c.l.s4 1966171168
        %v1464 = vunpack.c.0.s8 %v1463
        %v1465 = vlaneseq
        %v1466 = vshrl.u32 %v1465, 7
        %v1467 = vsub.s32 %v1464, %v1466
        %v1468 = vrot.slane %v1452, %v1467
        %v1470 = vunpack.c.l.s4 1966171168
        %v1471 = vunpack.c.0.s8 %v1470
        %v1472 = vlaneseq
        %v1473 = vshrl.u32 %v1472, 7
        %v1474 = vsub.s32 %v1471, %v1473
        %v1475 = vrot.slane %v1459, %v1474
        %v1477 = vunpack.c.l.s4 1966171168
        %v1478 = vunpack.c.0.s8 %v1477
        %v1479 = vlaneseq
        %v1480 = vshrl.u32 %v1479, 7
        %v1481 = vsub.s32 %v1478, %v1480
        %v1482 = vrot.slane %v1460, %v1481
        %v1484 = vunpack.c.l.s4 1966171168
        %v1485 = vunpack.c.0.s8 %v1484
        %v1486 = vlaneseq
        %v1487 = vshrl.u32 %v1486, 7
        %v1488 = vsub.s32 %v1485, %v1487
        %v1489 = vrot.slane %v1461, %v1488
        %v1490 = vcombine.high %v1468, %v1468
        %v1491 = vcombine.high %v1475, %v1475
        %v1492 = vcombine.high %v1482, %v1482
        %v1493 = vcombine.high %v1489, %v1489
        %v1494 = vcombine.high %v214, %v214
        %v1496 = vunpack.c.l.s4 1966171168
        %v1497 = vunpack.c.0.s8 %v1496
        %v1498 = vlaneseq
        %v1499 = vshrl.u32 %v1498, 7
        %v1500 = vsub.s32 %v1497, %v1499
        %v1501 = vrot.slane %v214, %v1500
        %v1503 = vunpack.c.l.s4 1966171168
        %v1504 = vunpack.c.0.s8 %v1503
        %v1505 = vlaneseq
        %v1506 = vshrl.u32 %v1505, 7
        %v1507 = vsub.s32 %v1504, %v1506
        %v1508 = vrot.slane %v1494, %v1507
        %v1509 = vcombine.high %v1501, %v1501
        %v1510 = vcombine.high %v1508, %v1508
        %v1512 = vunpack.c.l.s4 1966171168
        %v1513 = vunpack.c.0.s8 %v1512
        %v1514 = vlaneseq
        %v1515 = vshrl.u32 %v1514, 7
        %v1516 = vsub.s32 %v1513, %v1515
        %v1517 = vrot.slane %v1501, %v1516
        %v1519 = vunpack.c.l.s4 1966171168
        %v1520 = vunpack.c.0.s8 %v1519
        %v1521 = vlaneseq
        %v1522 = vshrl.u32 %v1521, 7
        %v1523 = vsub.s32 %v1520, %v1522
        %v1524 = vrot.slane %v1508, %v1523
        %v1526 = vunpack.c.l.s4 1966171168
        %v1527 = vunpack.c.0.s8 %v1526
        %v1528 = vlaneseq
        %v1529 = vshrl.u32 %v1528, 7
        %v1530 = vsub.s32 %v1527, %v1529
        %v1531 = vrot.slane %v1509, %v1530
        %v1533 = vunpack.c.l.s4 1966171168
        %v1534 = vunpack.c.0.s8 %v1533
        %v1535 = vlaneseq
        %v1536 = vshrl.u32 %v1535, 7
        %v1537 = vsub.s32 %v1534, %v1536
        %v1538 = vrot.slane %v1510, %v1537
        %v1539 = vcombine.high %v1517, %v1517
        %v1540 = vcombine.high %v1524, %v1524
        %v1541 = vcombine.high %v1531, %v1531
        %v1542 = vcombine.high %v1538, %v1538
        %v1543 = vcombine.high %v215, %v215
        %v1545 = vunpack.c.l.s4 1966171168
        %v1546 = vunpack.c.0.s8 %v1545
        %v1547 = vlaneseq
        %v1548 = vshrl.u32 %v1547, 7
        %v1549 = vsub.s32 %v1546, %v1548
        %v1550 = vrot.slane %v215, %v1549
        %v1552 = vunpack.c.l.s4 1966171168
        %v1553 = vunpack.c.0.s8 %v1552
        %v1554 = vlaneseq
        %v1555 = vshrl.u32 %v1554, 7
        %v1556 = vsub.s32 %v1553, %v1555
        %v1557 = vrot.slane %v1543, %v1556
        %v1558 = vcombine.high %v1550, %v1550
        %v1559 = vcombine.high %v1557, %v1557
        %v1561 = vunpack.c.l.s4 1966171168
        %v1562 = vunpack.c.0.s8 %v1561
        %v1563 = vlaneseq
        %v1564 = vshrl.u32 %v1563, 7
        %v1565 = vsub.s32 %v1562, %v1564
        %v1566 = vrot.slane %v1550, %v1565
        %v1568 = vunpack.c.l.s4 1966171168
        %v1569 = vunpack.c.0.s8 %v1568
        %v1570 = vlaneseq
        %v1571 = vshrl.u32 %v1570, 7
        %v1572 = vsub.s32 %v1569, %v1571
        %v1573 = vrot.slane %v1557, %v1572
        %v1575 = vunpack.c.l.s4 1966171168
        %v1576 = vunpack.c.0.s8 %v1575
        %v1577 = vlaneseq
        %v1578 = vshrl.u32 %v1577, 7
        %v1579 = vsub.s32 %v1576, %v1578
        %v1580 = vrot.slane %v1558, %v1579
        %v1582 = vunpack.c.l.s4 1966171168
        %v1583 = vunpack.c.0.s8 %v1582
        %v1584 = vlaneseq
        %v1585 = vshrl.u32 %v1584, 7
        %v1586 = vsub.s32 %v1583, %v1585
        %v1587 = vrot.slane %v1559, %v1586
        %v1588 = vcombine.high %v1566, %v1566
        %v1589 = vcombine.high %v1573, %v1573
        %v1590 = vcombine.high %v1580, %v1580
        %v1591 = vcombine.high %v1587, %v1587
        %v1592 = vcombine.high %v216, %v216
        %v1594 = vunpack.c.l.s4 1966171168
        %v1595 = vunpack.c.0.s8 %v1594
        %v1596 = vlaneseq
        %v1597 = vshrl.u32 %v1596, 7
        %v1598 = vsub.s32 %v1595, %v1597
        %v1599 = vrot.slane %v216, %v1598
        %v1601 = vunpack.c.l.s4 1966171168
        %v1602 = vunpack.c.0.s8 %v1601
        %v1603 = vlaneseq
        %v1604 = vshrl.u32 %v1603, 7
        %v1605 = vsub.s32 %v1602, %v1604
        %v1606 = vrot.slane %v1592, %v1605
        %v1607 = vcombine.high %v1599, %v1599
        %v1608 = vcombine.high %v1606, %v1606
        %v1610 = vunpack.c.l.s4 1966171168
        %v1611 = vunpack.c.0.s8 %v1610
        %v1612 = vlaneseq
        %v1613 = vshrl.u32 %v1612, 7
        %v1614 = vsub.s32 %v1611, %v1613
        %v1615 = vrot.slane %v1599, %v1614
        %v1617 = vunpack.c.l.s4 1966171168
        %v1618 = vunpack.c.0.s8 %v1617
        %v1619 = vlaneseq
        %v1620 = vshrl.u32 %v1619, 7
        %v1621 = vsub.s32 %v1618, %v1620
        %v1622 = vrot.slane %v1606, %v1621
        %v1624 = vunpack.c.l.s4 1966171168
        %v1625 = vunpack.c.0.s8 %v1624
        %v1626 = vlaneseq
        %v1627 = vshrl.u32 %v1626, 7
        %v1628 = vsub.s32 %v1625, %v1627
        %v1629 = vrot.slane %v1607, %v1628
        %v1631 = vunpack.c.l.s4 1966171168
        %v1632 = vunpack.c.0.s8 %v1631
        %v1633 = vlaneseq
        %v1634 = vshrl.u32 %v1633, 7
        %v1635 = vsub.s32 %v1632, %v1634
        %v1636 = vrot.slane %v1608, %v1635
        %v1637 = vcombine.high %v1615, %v1615
        %v1638 = vcombine.high %v1622, %v1622
        %v1639 = vcombine.high %v1629, %v1629
        %v1640 = vcombine.high %v1636, %v1636
        %v2729 = vunpack.c.l.b16 %v217
        %v2730 = vunpack.c.h.b16 %v217
        %v2731 = vunpack.c.l.b16 %v218
        %v2732 = vunpack.c.h.b16 %v218
        %v2733 = vunpack.c.l.b16 %v219
        %v2734 = vunpack.c.h.b16 %v219
        %v2735 = vunpack.c.l.b16 %v220
        %v2736 = vunpack.c.h.b16 %v220
        %v2737 = vunpack.c.l.b16 %v221
        %v2738 = vunpack.c.h.b16 %v221
        %v2739 = vunpack.c.l.b16 %v222
        %v2740 = vunpack.c.h.b16 %v222
        %v2741 = vunpack.c.l.b16 %v223
        %v2742 = vunpack.c.h.b16 %v223
        %v2743 = vunpack.c.l.b16 %v224
        %v2744 = vunpack.c.h.b16 %v224
        %v2745 = vunpack.c.l.b16 %v225
        %v2746 = vunpack.c.h.b16 %v225
        %v2747 = vunpack.c.l.b16 %v226
        %v2748 = vunpack.c.h.b16 %v226
        %v2749 = vunpack.c.l.b16 %v227
        %v2750 = vunpack.c.h.b16 %v227
        %v2751 = vunpack.c.l.b16 %v228
        %v2752 = vunpack.c.h.b16 %v228
        %v2753 = vunpack.c.l.b16 %v229
        %v2754 = vunpack.c.h.b16 %v229
        %v2755 = vunpack.c.l.b16 %v230
        %v2756 = vunpack.c.h.b16 %v230
        %v2757 = vunpack.c.l.b16 %v231
        %v2758 = vunpack.c.h.b16 %v231
        %v2759 = vunpack.c.l.b16 %v232
        %v2760 = vunpack.c.h.b16 %v232
        %v2761 = vunpack.c.l.b16 %v233
        %v2762 = vunpack.c.h.b16 %v233
        %v2763 = vunpack.c.l.b16 %v234
        %v2764 = vunpack.c.h.b16 %v234
        %v2765 = vunpack.c.l.b16 %v235
        %v2766 = vunpack.c.h.b16 %v235
        %v2767 = vunpack.c.l.b16 %v236
        %v2768 = vunpack.c.h.b16 %v236
        %v2769 = vunpack.c.l.b16 %v237
        %v2770 = vunpack.c.h.b16 %v237
        %v2771 = vunpack.c.l.b16 %v238
        %v2772 = vunpack.c.h.b16 %v238
        %v2773 = vunpack.c.l.b16 %v239
        %v2774 = vunpack.c.h.b16 %v239
        %v2775 = vunpack.c.l.b16 %v240
        %v2776 = vunpack.c.h.b16 %v240
        %v2777 = vunpack.c.l.b16 %v241
        %v2778 = vunpack.c.h.b16 %v241
        %v2779 = vunpack.c.l.b16 %v242
        %v2780 = vunpack.c.h.b16 %v242
        %v2781 = vunpack.c.l.b16 %v243
        %v2782 = vunpack.c.h.b16 %v243
        %v2783 = vunpack.c.l.b16 %v244
        %v2784 = vunpack.c.h.b16 %v244
        %v2785 = vunpack.c.l.b16 %v245
        %v2786 = vunpack.c.h.b16 %v245
        %v2787 = vunpack.c.l.b16 %v246
        %v2788 = vunpack.c.h.b16 %v246
        %v2789 = vunpack.c.l.b16 %v247
        %v2790 = vunpack.c.h.b16 %v247
        %v2791 = vunpack.c.l.b16 %v248
        %v2792 = vunpack.c.h.b16 %v248
        %v2793 = vunpack.c.l.b16 %v249
        %v2794 = vunpack.c.h.b16 %v249
        %v2795 = vunpack.c.l.b16 %v250
        %v2796 = vunpack.c.h.b16 %v250
        %v2797 = vunpack.c.l.b16 %v251
        %v2798 = vunpack.c.h.b16 %v251
        %v2799 = vunpack.c.l.b16 %v252
        %v2800 = vunpack.c.h.b16 %v252
        %v2801 = vunpack.c.l.b16 %v253
        %v2802 = vunpack.c.h.b16 %v253
        %v2803 = vunpack.c.l.b16 %v254
        %v2804 = vunpack.c.h.b16 %v254
        %v2805 = vunpack.c.l.b16 %v255
        %v2806 = vunpack.c.h.b16 %v255
        %v2807 = vunpack.c.l.b16 %v256
        %v2808 = vunpack.c.h.b16 %v256
        %v2809 = vunpack.c.l.b16 %v257
        %v2810 = vunpack.c.h.b16 %v257
        %v2811 = vunpack.c.l.b16 %v258
        %v2812 = vunpack.c.h.b16 %v258
        %v2813 = vunpack.c.l.b16 %v259
        %v2814 = vunpack.c.h.b16 %v259
        %v2815 = vunpack.c.l.b16 %v260
        %v2816 = vunpack.c.h.b16 %v260
        %v2817 = vunpack.c.l.b16 %v261
        %v2818 = vunpack.c.h.b16 %v261
        %v2819 = vunpack.c.l.b16 %v262
        %v2820 = vunpack.c.h.b16 %v262
        %v2821 = vunpack.c.l.b16 %v263
        %v2822 = vunpack.c.h.b16 %v263
        %v2823 = vunpack.c.l.b16 %v264
        %v2824 = vunpack.c.h.b16 %v264
        %v2825 = vunpack.c.l.b16 %v265
        %v2826 = vunpack.c.h.b16 %v265
        %v2827 = vunpack.c.l.b16 %v266
        %v2828 = vunpack.c.h.b16 %v266
        %v2829 = vunpack.c.l.b16 %v267
        %v2830 = vunpack.c.h.b16 %v267
        %v2831 = vunpack.c.l.b16 %v268
        %v2832 = vunpack.c.h.b16 %v268
        %v2833 = vunpack.c.l.b16 %v269
        %v2834 = vunpack.c.h.b16 %v269
        %v2835 = vunpack.c.l.b16 %v270
        %v2836 = vunpack.c.h.b16 %v270
        %v2837 = vunpack.c.l.b16 %v271
        %v2838 = vunpack.c.h.b16 %v271
        %v2839 = vunpack.c.l.b16 %v272
        %v2840 = vunpack.c.h.b16 %v272
        %v2841 = vunpack.c.l.b16 %v273
        %v2842 = vunpack.c.h.b16 %v273
        %v2843 = vunpack.c.l.b16 %v274
        %v2844 = vunpack.c.h.b16 %v274
        %v2845 = vunpack.c.l.b16 %v275
        %v2846 = vunpack.c.h.b16 %v275
        %v2847 = vunpack.c.l.b16 %v276
        %v2848 = vunpack.c.h.b16 %v276
        %v2849 = vunpack.c.l.b16 %v277
        %v2850 = vunpack.c.h.b16 %v277
        %v2851 = vunpack.c.l.b16 %v278
        %v2852 = vunpack.c.h.b16 %v278
        %v2853 = vunpack.c.l.b16 %v279
        %v2854 = vunpack.c.h.b16 %v279
        %v2855 = vunpack.c.l.b16 %v280
        %v2856 = vunpack.c.h.b16 %v280
        %v2857 = vunpack.c.l.b16 %v281
        %v2858 = vunpack.c.h.b16 %v281
        %v2859 = vunpack.c.l.b16 %v282
        %v2860 = vunpack.c.h.b16 %v282
        %v2861 = vunpack.c.l.b16 %v283
        %v2862 = vunpack.c.h.b16 %v283
        %v2863 = vunpack.c.l.b16 %v284
        %v2864 = vunpack.c.h.b16 %v284
        %v2865 = vunpack.c.l.b16 %v285
        %v2866 = vunpack.c.h.b16 %v285
        %v2867 = vunpack.c.l.b16 %v286
        %v2868 = vunpack.c.h.b16 %v286
        %v2869 = vunpack.c.l.b16 %v287
        %v2870 = vunpack.c.h.b16 %v287
        %v2871 = vunpack.c.l.b16 %v288
        %v2872 = vunpack.c.h.b16 %v288
        %v2873 = vunpack.c.l.b16 %v289
        %v2874 = vunpack.c.h.b16 %v289
        %v2875 = vunpack.c.l.b16 %v290
        %v2876 = vunpack.c.h.b16 %v290
        %v2877 = vunpack.c.l.b16 %v291
        %v2878 = vunpack.c.h.b16 %v291
        %v2879 = vunpack.c.l.b16 %v292
        %v2880 = vunpack.c.h.b16 %v292
        %v2881 = vunpack.c.l.b16 %v293
        %v2882 = vunpack.c.h.b16 %v293
        %v2883 = vunpack.c.l.b16 %v294
        %v2884 = vunpack.c.h.b16 %v294
        %v2885 = vunpack.c.l.b16 %v295
        %v2886 = vunpack.c.h.b16 %v295
        %v2887 = vunpack.c.l.b16 %v296
        %v2888 = vunpack.c.h.b16 %v296
        %v2889 = vunpack.c.l.b16 %v297
        %v2890 = vunpack.c.h.b16 %v297
        %v2891 = vunpack.c.l.b16 %v298
        %v2892 = vunpack.c.h.b16 %v298
        %v2893 = vunpack.c.l.b16 %v299
        %v2894 = vunpack.c.h.b16 %v299
        %v2895 = vunpack.c.l.b16 %v300
        %v2896 = vunpack.c.h.b16 %v300
        %v2897 = vunpack.c.l.b16 %v301
        %v2898 = vunpack.c.h.b16 %v301
        %v2899 = vunpack.c.l.b16 %v302
        %v2900 = vunpack.c.h.b16 %v302
        %v2901 = vunpack.c.l.b16 %v303
        %v2902 = vunpack.c.h.b16 %v303
        %v2903 = vunpack.c.l.b16 %v304
        %v2904 = vunpack.c.h.b16 %v304
        %v2905 = vunpack.c.l.b16 %v305
        %v2906 = vunpack.c.h.b16 %v305
        %v2907 = vunpack.c.l.b16 %v306
        %v2908 = vunpack.c.h.b16 %v306
        %v2909 = vunpack.c.l.b16 %v307
        %v2910 = vunpack.c.h.b16 %v307
        %v2911 = vunpack.c.l.b16 %v308
        %v2912 = vunpack.c.h.b16 %v308
        %v2913 = vunpack.c.l.b16 %v309
        %v2914 = vunpack.c.h.b16 %v309
        %v2915 = vunpack.c.l.b16 %v310
        %v2916 = vunpack.c.h.b16 %v310
        %v2917 = vunpack.c.l.b16 %v311
        %v2918 = vunpack.c.h.b16 %v311
        %v2919 = vunpack.c.l.b16 %v312
        %v2920 = vunpack.c.h.b16 %v312
        %v2921 = vunpack.c.l.b16 %v313
        %v2922 = vunpack.c.h.b16 %v313
        %v2923 = vunpack.c.l.b16 %v314
        %v2924 = vunpack.c.h.b16 %v314
        %v2925 = vunpack.c.l.b16 %v315
        %v2926 = vunpack.c.h.b16 %v315
        %v2927 = vunpack.c.l.b16 %v316
        %v2928 = vunpack.c.h.b16 %v316
        %v2929 = vunpack.c.l.b16 %v317
        %v2930 = vunpack.c.h.b16 %v317
        %v2931 = vunpack.c.l.b16 %v318
        %v2932 = vunpack.c.h.b16 %v318
        %v2933 = vunpack.c.l.b16 %v319
        %v2934 = vunpack.c.h.b16 %v319
        %v2935 = vunpack.c.l.b16 %v320
        %v2936 = vunpack.c.h.b16 %v320
        %v2937 = vunpack.c.l.b16 %v321
        %v2938 = vunpack.c.h.b16 %v321
        %v2939 = vunpack.c.l.b16 %v322
        %v2940 = vunpack.c.h.b16 %v322
        %v2941 = vunpack.c.l.b16 %v323
        %v2942 = vunpack.c.h.b16 %v323
        %v2943 = vunpack.c.l.b16 %v324
        %v2944 = vunpack.c.h.b16 %v324
        %v2945 = vunpack.c.l.b16 %v325
        %v2946 = vunpack.c.h.b16 %v325
        %v2947 = vunpack.c.l.b16 %v326
        %v2948 = vunpack.c.h.b16 %v326
        %v2949 = vunpack.c.l.b16 %v327
        %v2950 = vunpack.c.h.b16 %v327
        %v2951 = vunpack.c.l.b16 %v328
        %v2952 = vunpack.c.h.b16 %v328
        %v2953 = vunpack.c.l.b16 %v329
        %v2954 = vunpack.c.h.b16 %v329
        %v2955 = vunpack.c.l.b16 %v330
        %v2956 = vunpack.c.h.b16 %v330
        %v2957 = vunpack.c.l.b16 %v331
        %v2958 = vunpack.c.h.b16 %v331
        %v2959 = vunpack.c.l.b16 %v332
        %v2960 = vunpack.c.h.b16 %v332
        %v2961 = vunpack.c.l.b16 %v333
        %v2962 = vunpack.c.h.b16 %v333
        %v2963 = vunpack.c.l.b16 %v334
        %v2964 = vunpack.c.h.b16 %v334
        %v2965 = vunpack.c.l.b16 %v335
        %v2966 = vunpack.c.h.b16 %v335
        %v2967 = vunpack.c.l.b16 %v336
        %v2968 = vunpack.c.h.b16 %v336
        %v2969 = vunpack.c.l.b16 %v337
        %v2970 = vunpack.c.h.b16 %v337
        %v2971 = vunpack.c.l.b16 %v338
        %v2972 = vunpack.c.h.b16 %v338
        %v2973 = vunpack.c.l.b16 %v339
        %v2974 = vunpack.c.h.b16 %v339
        %v2975 = vunpack.c.l.b16 %v340
        %v2976 = vunpack.c.h.b16 %v340
        %v2977 = vunpack.c.l.b16 %v341
        %v2978 = vunpack.c.h.b16 %v341
        %v2979 = vunpack.c.l.b16 %v342
        %v2980 = vunpack.c.h.b16 %v342
        %v2981 = vunpack.c.l.b16 %v343
        %v2982 = vunpack.c.h.b16 %v343
        %v2983 = vunpack.c.l.b16 %v344
        %v2984 = vunpack.c.h.b16 %v344
        %v2985 = vunpack.c.l.b16 %v345
        %v2986 = vunpack.c.h.b16 %v345
        %v2987 = vunpack.c.l.b16 %v346
        %v2988 = vunpack.c.h.b16 %v346
        %v2989 = vunpack.c.l.b16 %v347
        %v2990 = vunpack.c.h.b16 %v347
        %v2991 = vunpack.c.l.b16 %v348
        %v2992 = vunpack.c.h.b16 %v348
        %v2993 = vunpack.c.l.b16 %v349
        %v2994 = vunpack.c.h.b16 %v349
        %v2995 = vunpack.c.l.b16 %v350
        %v2996 = vunpack.c.h.b16 %v350
        %v2997 = vunpack.c.l.b16 %v351
        %v2998 = vunpack.c.h.b16 %v351
        %v2999 = vunpack.c.l.b16 %v352
        %v3000 = vunpack.c.h.b16 %v352
        %v3001 = vunpack.c.l.b16 %v353
        %v3002 = vunpack.c.h.b16 %v353
        %v3003 = vunpack.c.l.b16 %v354
        %v3004 = vunpack.c.h.b16 %v354
        %v3005 = vunpack.c.l.b16 %v355
        %v3006 = vunpack.c.h.b16 %v355
        %v3007 = vunpack.c.l.b16 %v356
        %v3008 = vunpack.c.h.b16 %v356
        %v3009 = vunpack.c.l.b16 %v357
        %v3010 = vunpack.c.h.b16 %v357
        %v3011 = vunpack.c.l.b16 %v358
        %v3012 = vunpack.c.h.b16 %v358
        %v3013 = vunpack.c.l.b16 %v359
        %v3014 = vunpack.c.h.b16 %v359
        %v3015 = vunpack.c.l.b16 %v360
        %v3016 = vunpack.c.h.b16 %v360
        %v3017 = vunpack.c.l.b16 %v361
        %v3018 = vunpack.c.h.b16 %v361
        %v3019 = vunpack.c.l.b16 %v362
        %v3020 = vunpack.c.h.b16 %v362
        %v3021 = vunpack.c.l.b16 %v363
        %v3022 = vunpack.c.h.b16 %v363
        %v3023 = vunpack.c.l.b16 %v364
        %v3024 = vunpack.c.h.b16 %v364
        %v3025 = vunpack.c.l.b16 %v365
        %v3026 = vunpack.c.h.b16 %v365
        %v3027 = vunpack.c.l.b16 %v366
        %v3028 = vunpack.c.h.b16 %v366
        %v3029 = vunpack.c.l.b16 %v367
        %v3030 = vunpack.c.h.b16 %v367
        %v3031 = vunpack.c.l.b16 %v368
        %v3032 = vunpack.c.h.b16 %v368
        %v3033 = vunpack.c.l.b16 %v369
        %v3034 = vunpack.c.h.b16 %v369
        %v3035 = vunpack.c.l.b16 %v370
        %v3036 = vunpack.c.h.b16 %v370
        %v3037 = vunpack.c.l.b16 %v371
        %v3038 = vunpack.c.h.b16 %v371
        %v3039 = vunpack.c.l.b16 %v372
        %v3040 = vunpack.c.h.b16 %v372
        %v3041 = vunpack.c.l.b16 %v373
        %v3042 = vunpack.c.h.b16 %v373
        %v3043 = vunpack.c.l.b16 %v374
        %v3044 = vunpack.c.h.b16 %v374
        %v3045 = vunpack.c.l.b16 %v375
        %v3046 = vunpack.c.h.b16 %v375
        %v3047 = vunpack.c.l.b16 %v376
        %v3048 = vunpack.c.h.b16 %v376
        %v3049 = vunpack.c.l.b16 %v377
        %v3050 = vunpack.c.h.b16 %v377
        %v3051 = vunpack.c.l.b16 %v378
        %v3052 = vunpack.c.h.b16 %v378
        %v3053 = vunpack.c.l.b16 %v379
        %v3054 = vunpack.c.h.b16 %v379
        %v3055 = vunpack.c.l.b16 %v380
        %v3056 = vunpack.c.h.b16 %v380
        %v3057 = vunpack.c.l.b16 %v381
        %v3058 = vunpack.c.h.b16 %v381
        %v3059 = vunpack.c.l.b16 %v382
        %v3060 = vunpack.c.h.b16 %v382
        %v3061 = vunpack.c.l.b16 %v383
        %v3062 = vunpack.c.h.b16 %v383
        %v3063 = vunpack.c.l.b16 %v384
        %v3064 = vunpack.c.h.b16 %v384
        %v3065 = vunpack.c.l.b16 %v385
        %v3066 = vunpack.c.h.b16 %v385
        %v3067 = vunpack.c.l.b16 %v386
        %v3068 = vunpack.c.h.b16 %v386
        %v3069 = vunpack.c.l.b16 %v387
        %v3070 = vunpack.c.h.b16 %v387
        %v3071 = vunpack.c.l.b16 %v388
        %v3072 = vunpack.c.h.b16 %v388
        %v3073 = vunpack.c.l.b16 %v389
        %v3074 = vunpack.c.h.b16 %v389
        %v3075 = vunpack.c.l.b16 %v390
        %v3076 = vunpack.c.h.b16 %v390
        %v3077 = vunpack.c.l.b16 %v391
        %v3078 = vunpack.c.h.b16 %v391
        %v3079 = vunpack.c.l.b16 %v392
        %v3080 = vunpack.c.h.b16 %v392
        %v3081 = vunpack.c.l.b16 %v393
        %v3082 = vunpack.c.h.b16 %v393
        %v3083 = vunpack.c.l.b16 %v394
        %v3084 = vunpack.c.h.b16 %v394
        %v3085 = vunpack.c.l.b16 %v395
        %v3086 = vunpack.c.h.b16 %v395
        %v3087 = vunpack.c.l.b16 %v396
        %v3088 = vunpack.c.h.b16 %v396
        %v3089 = vunpack.c.l.b16 %v397
        %v3090 = vunpack.c.h.b16 %v397
        %v3091 = vunpack.c.l.b16 %v398
        %v3092 = vunpack.c.h.b16 %v398
        %v3093 = vunpack.c.l.b16 %v399
        %v3094 = vunpack.c.h.b16 %v399
        %v3095 = vunpack.c.l.b16 %v400
        %v3096 = vunpack.c.h.b16 %v400
        %v3097 = vunpack.c.l.b16 %v401
        %v3098 = vunpack.c.h.b16 %v401
        %v3099 = vunpack.c.l.b16 %v402
        %v3100 = vunpack.c.h.b16 %v402
        %v3101 = vunpack.c.l.b16 %v403
        %v3102 = vunpack.c.h.b16 %v403
        %v3103 = vunpack.c.l.b16 %v404
        %v3104 = vunpack.c.h.b16 %v404
        %v3105 = vunpack.c.l.b16 %v405
        %v3106 = vunpack.c.h.b16 %v405
        %v3107 = vunpack.c.l.b16 %v406
        %v3108 = vunpack.c.h.b16 %v406
        %v3109 = vunpack.c.l.b16 %v407
        %v3110 = vunpack.c.h.b16 %v407
        %v3111 = vunpack.c.l.b16 %v408
        %v3112 = vunpack.c.h.b16 %v408
        %v3113 = vunpack.c.l.b16 %v409
        %v3114 = vunpack.c.h.b16 %v409
        %v3115 = vunpack.c.l.b16 %v410
        %v3116 = vunpack.c.h.b16 %v410
        %v3117 = vunpack.c.l.b16 %v411
        %v3118 = vunpack.c.h.b16 %v411
        %v3119 = vunpack.c.l.b16 %v412
        %v3120 = vunpack.c.h.b16 %v412
        %v3121 = vunpack.c.l.b16 %v413
        %v3122 = vunpack.c.h.b16 %v413
        %v3123 = vunpack.c.l.b16 %v414
        %v3124 = vunpack.c.h.b16 %v414
        %v3125 = vunpack.c.l.b16 %v415
        %v3126 = vunpack.c.h.b16 %v415
        %v3127 = vunpack.c.l.b16 %v416
        %v3128 = vunpack.c.h.b16 %v416
        %v3129 = vunpack.c.l.b16 %v417
        %v3130 = vunpack.c.h.b16 %v417
        %v3131 = vunpack.c.l.b16 %v418
        %v3132 = vunpack.c.h.b16 %v418
        %v3133 = vunpack.c.l.b16 %v419
        %v3134 = vunpack.c.h.b16 %v419
        %v3135 = vunpack.c.l.b16 %v420
        %v3136 = vunpack.c.h.b16 %v420
        %v3137 = vunpack.c.l.b16 %v421
        %v3138 = vunpack.c.h.b16 %v421
        %v3139 = vunpack.c.l.b16 %v422
        %v3140 = vunpack.c.h.b16 %v422
        %v3141 = vunpack.c.l.b16 %v423
        %v3142 = vunpack.c.h.b16 %v423
        %v3143 = vunpack.c.l.b16 %v424
        %v3144 = vunpack.c.h.b16 %v424
        %v3145 = vunpack.c.l.b16 %v425
        %v3146 = vunpack.c.h.b16 %v425
        %v3147 = vunpack.c.l.b16 %v426
        %v3148 = vunpack.c.h.b16 %v426
        %v3149 = vunpack.c.l.b16 %v427
        %v3150 = vunpack.c.h.b16 %v427
        %v3151 = vunpack.c.l.b16 %v428
        %v3152 = vunpack.c.h.b16 %v428
        %v3153 = vunpack.c.l.b16 %v429
        %v3154 = vunpack.c.h.b16 %v429
        %v3155 = vunpack.c.l.b16 %v430
        %v3156 = vunpack.c.h.b16 %v430
        %v3157 = vunpack.c.l.b16 %v431
        %v3158 = vunpack.c.h.b16 %v431
        %v3159 = vunpack.c.l.b16 %v432
        %v3160 = vunpack.c.h.b16 %v432
        %v3161 = vunpack.c.l.b16 %v433
        %v3162 = vunpack.c.h.b16 %v433
        %v3163 = vunpack.c.l.b16 %v434
        %v3164 = vunpack.c.h.b16 %v434
        %v3165 = vunpack.c.l.b16 %v435
        %v3166 = vunpack.c.h.b16 %v435
        %v3167 = vunpack.c.l.b16 %v436
        %v3168 = vunpack.c.h.b16 %v436
        %v3169 = vunpack.c.l.b16 %v437
        %v3170 = vunpack.c.h.b16 %v437
        %v3171 = vunpack.c.l.b16 %v438
        %v3172 = vunpack.c.h.b16 %v438
        %v3173 = vunpack.c.l.b16 %v439
        %v3174 = vunpack.c.h.b16 %v439
        %v3175 = vunpack.c.l.b16 %v440
        %v3176 = vunpack.c.h.b16 %v440
        %v3177 = vunpack.c.l.b16 %v441
        %v3178 = vunpack.c.h.b16 %v441
        %v3179 = vunpack.c.l.b16 %v442
        %v3180 = vunpack.c.h.b16 %v442
        %v3181 = vunpack.c.l.b16 %v443
        %v3182 = vunpack.c.h.b16 %v443
        %v3183 = vunpack.c.l.b16 %v444
        %v3184 = vunpack.c.h.b16 %v444
        %v3185 = vunpack.c.l.b16 %v445
        %v3186 = vunpack.c.h.b16 %v445
        %v3187 = vunpack.c.l.b16 %v446
        %v3188 = vunpack.c.h.b16 %v446
        %v3189 = vunpack.c.l.b16 %v447
        %v3190 = vunpack.c.h.b16 %v447
        %v3191 = vunpack.c.l.b16 %v448
        %v3192 = vunpack.c.h.b16 %v448
        %v3193 = vunpack.c.l.b16 %v449
        %v3194 = vunpack.c.h.b16 %v449
        %v3195 = vunpack.c.l.b16 %v450
        %v3196 = vunpack.c.h.b16 %v450
        %v3197 = vunpack.c.l.b16 %v451
        %v3198 = vunpack.c.h.b16 %v451
        %v3199 = vunpack.c.l.b16 %v452
        %v3200 = vunpack.c.h.b16 %v452
        %v3201 = vunpack.c.l.b16 %v453
        %v3202 = vunpack.c.h.b16 %v453
        %v3203 = vunpack.c.l.b16 %v454
        %v3204 = vunpack.c.h.b16 %v454
        %v3205 = vunpack.c.l.b16 %v455
        %v3206 = vunpack.c.h.b16 %v455
        %v3207 = vunpack.c.l.b16 %v456
        %v3208 = vunpack.c.h.b16 %v456
        %v3209 = vunpack.c.l.b16 %v457
        %v3210 = vunpack.c.h.b16 %v457
        %v3211 = vunpack.c.l.b16 %v458
        %v3212 = vunpack.c.h.b16 %v458
        %v3213 = vunpack.c.l.b16 %v459
        %v3214 = vunpack.c.h.b16 %v459
        %v3215 = vunpack.c.l.b16 %v460
        %v3216 = vunpack.c.h.b16 %v460
        %v3217 = vunpack.c.l.b16 %v461
        %v3218 = vunpack.c.h.b16 %v461
        %v3219 = vunpack.c.l.b16 %v462
        %v3220 = vunpack.c.h.b16 %v462
        %v3221 = vunpack.c.l.b16 %v463
        %v3222 = vunpack.c.h.b16 %v463
        %v3223 = vunpack.c.l.b16 %v464
        %v3224 = vunpack.c.h.b16 %v464
        %v3225 = vunpack.c.l.b16 %v465
        %v3226 = vunpack.c.h.b16 %v465
        %v3227 = vunpack.c.l.b16 %v466
        %v3228 = vunpack.c.h.b16 %v466
        %v3229 = vunpack.c.l.b16 %v467
        %v3230 = vunpack.c.h.b16 %v467
        %v3231 = vunpack.c.l.b16 %v468
        %v3232 = vunpack.c.h.b16 %v468
        %v3233 = vunpack.c.l.b16 %v469
        %v3234 = vunpack.c.h.b16 %v469
        %v3235 = vunpack.c.l.b16 %v470
        %v3236 = vunpack.c.h.b16 %v470
        %v3237 = vunpack.c.l.b16 %v471
        %v3238 = vunpack.c.h.b16 %v471
        %v3239 = vunpack.c.l.b16 %v472
        %v3240 = vunpack.c.h.b16 %v472
        %v3241 = vunpack.c.l.b16 %v473
        %v3242 = vunpack.c.h.b16 %v473
        %v3243 = vunpack.c.l.b16 %v474
        %v3244 = vunpack.c.h.b16 %v474
        %v3245 = vunpack.c.l.b16 %v475
        %v3246 = vunpack.c.h.b16 %v475
        %v3247 = vunpack.c.l.b16 %v476
        %v3248 = vunpack.c.h.b16 %v476
        %v3249 = vunpack.c.l.b16 %v477
        %v3250 = vunpack.c.h.b16 %v477
        %v3251 = vunpack.c.l.b16 %v478
        %v3252 = vunpack.c.h.b16 %v478
        %v3253 = vunpack.c.l.b16 %v479
        %v3254 = vunpack.c.h.b16 %v479
        %v3255 = vunpack.c.l.b16 %v480
        %v3256 = vunpack.c.h.b16 %v480
        %v3257 = vunpack.c.l.b16 %v481
        %v3258 = vunpack.c.h.b16 %v481
        %v3259 = vunpack.c.l.b16 %v482
        %v3260 = vunpack.c.h.b16 %v482
        %v3261 = vunpack.c.l.b16 %v483
        %v3262 = vunpack.c.h.b16 %v483
        %v3263 = vunpack.c.l.b16 %v484
        %v3264 = vunpack.c.h.b16 %v484
        %v3265 = vunpack.c.l.b16 %v485
        %v3266 = vunpack.c.h.b16 %v485
        %v3267 = vunpack.c.l.b16 %v486
        %v3268 = vunpack.c.h.b16 %v486
        %v3269 = vunpack.c.l.b16 %v487
        %v3270 = vunpack.c.h.b16 %v487
        %v3271 = vunpack.c.l.b16 %v488
        %v3272 = vunpack.c.h.b16 %v488
        %v3273 = vunpack.c.l.b16 %v489
        %v3274 = vunpack.c.h.b16 %v489
        %v3275 = vunpack.c.l.b16 %v490
        %v3276 = vunpack.c.h.b16 %v490
        %v3277 = vunpack.c.l.b16 %v491
        %v3278 = vunpack.c.h.b16 %v491
        %v3279 = vunpack.c.l.b16 %v492
        %v3280 = vunpack.c.h.b16 %v492
        %v3281 = vunpack.c.l.b16 %v493
        %v3282 = vunpack.c.h.b16 %v493
        %v3283 = vunpack.c.l.b16 %v494
        %v3284 = vunpack.c.h.b16 %v494
        %v3285 = vunpack.c.l.b16 %v495
        %v3286 = vunpack.c.h.b16 %v495
        %v3287 = vunpack.c.l.b16 %v496
        %v3288 = vunpack.c.h.b16 %v496
        %v3289 = vunpack.c.l.b16 %v497
        %v3290 = vunpack.c.h.b16 %v497
        %v3291 = vunpack.c.l.b16 %v498
        %v3292 = vunpack.c.h.b16 %v498
        %v3293 = vunpack.c.l.b16 %v499
        %v3294 = vunpack.c.h.b16 %v499
        %v3295 = vunpack.c.l.b16 %v500
        %v3296 = vunpack.c.h.b16 %v500
        %v3297 = vunpack.c.l.b16 %v501
        %v3298 = vunpack.c.h.b16 %v501
        %v3299 = vunpack.c.l.b16 %v502
        %v3300 = vunpack.c.h.b16 %v502
        %v3301 = vunpack.c.l.b16 %v503
        %v3302 = vunpack.c.h.b16 %v503
        %v3303 = vunpack.c.l.b16 %v504
        %v3304 = vunpack.c.h.b16 %v504
        %v3305 = vunpack.c.l.b16 %v505
        %v3306 = vunpack.c.h.b16 %v505
        %v3307 = vunpack.c.l.b16 %v506
        %v3308 = vunpack.c.h.b16 %v506
        %v3309 = vunpack.c.l.b16 %v507
        %v3310 = vunpack.c.h.b16 %v507
        %v3311 = vunpack.c.l.b16 %v508
        %v3312 = vunpack.c.h.b16 %v508
        %v3313 = vunpack.c.l.b16 %v509
        %v3314 = vunpack.c.h.b16 %v509
        %v3315 = vunpack.c.l.b16 %v510
        %v3316 = vunpack.c.h.b16 %v510
        %v3317 = vunpack.c.l.b16 %v511
        %v3318 = vunpack.c.h.b16 %v511
        %v3319 = vunpack.c.l.b16 %v512
        %v3320 = vunpack.c.h.b16 %v512
        %v3321 = vunpack.c.l.b16 %v513
        %v3322 = vunpack.c.h.b16 %v513
        %v3323 = vunpack.c.l.b16 %v514
        %v3324 = vunpack.c.h.b16 %v514
        %v3325 = vunpack.c.l.b16 %v515
        %v3326 = vunpack.c.h.b16 %v515
        %v3327 = vunpack.c.l.b16 %v516
        %v3328 = vunpack.c.h.b16 %v516
        %v3329 = vunpack.c.l.b16 %v517
        %v3330 = vunpack.c.h.b16 %v517
        %v3331 = vunpack.c.l.b16 %v518
        %v3332 = vunpack.c.h.b16 %v518
        %v3333 = vunpack.c.l.b16 %v519
        %v3334 = vunpack.c.h.b16 %v519
        %v3335 = vunpack.c.l.b16 %v520
        %v3336 = vunpack.c.h.b16 %v520
        %v3337 = vunpack.c.l.b16 %v521
        %v3338 = vunpack.c.h.b16 %v521
        %v3339 = vunpack.c.l.b16 %v522
        %v3340 = vunpack.c.h.b16 %v522
        %v3341 = vunpack.c.l.b16 %v523
        %v3342 = vunpack.c.h.b16 %v523
        %v3343 = vunpack.c.l.b16 %v524
        %v3344 = vunpack.c.h.b16 %v524
        %v3345 = vunpack.c.l.b16 %v525
        %v3346 = vunpack.c.h.b16 %v525
        %v3347 = vunpack.c.l.b16 %v526
        %v3348 = vunpack.c.h.b16 %v526
        %v3349 = vunpack.c.l.b16 %v527
        %v3350 = vunpack.c.h.b16 %v527
        %v3351 = vunpack.c.l.b16 %v528
        %v3352 = vunpack.c.h.b16 %v528
        %v3353 = vunpack.c.l.b16 %v529
        %v3354 = vunpack.c.h.b16 %v529
        %v3355 = vunpack.c.l.b16 %v530
        %v3356 = vunpack.c.h.b16 %v530
        %v3357 = vunpack.c.l.b16 %v531
        %v3358 = vunpack.c.h.b16 %v531
        %v3359 = vunpack.c.l.b16 %v532
        %v3360 = vunpack.c.h.b16 %v532
        %v3361 = vunpack.c.l.b16 %v533
        %v3362 = vunpack.c.h.b16 %v533
        %v3363 = vunpack.c.l.b16 %v534
        %v3364 = vunpack.c.h.b16 %v534
        %v3365 = vunpack.c.l.b16 %v535
        %v3366 = vunpack.c.h.b16 %v535
        %v3367 = vunpack.c.l.b16 %v536
        %v3368 = vunpack.c.h.b16 %v536
        %v3369 = vunpack.c.l.b16 %v537
        %v3370 = vunpack.c.h.b16 %v537
        %v3371 = vunpack.c.l.b16 %v538
        %v3372 = vunpack.c.h.b16 %v538
        %v3373 = vunpack.c.l.b16 %v539
        %v3374 = vunpack.c.h.b16 %v539
        %v3375 = vunpack.c.l.b16 %v540
        %v3376 = vunpack.c.h.b16 %v540
        %v3377 = vunpack.c.l.b16 %v541
        %v3378 = vunpack.c.h.b16 %v541
        %v3379 = vunpack.c.l.b16 %v542
        %v3380 = vunpack.c.h.b16 %v542
        %v3381 = vunpack.c.l.b16 %v543
        %v3382 = vunpack.c.h.b16 %v543
        %v3383 = vunpack.c.l.b16 %v544
        %v3384 = vunpack.c.h.b16 %v544
        %v3385 = vunpack.c.l.b16 %v545
        %v3386 = vunpack.c.h.b16 %v545
        %v3387 = vunpack.c.l.b16 %v546
        %v3388 = vunpack.c.h.b16 %v546
        %v3389 = vunpack.c.l.b16 %v547
        %v3390 = vunpack.c.h.b16 %v547
        %v3391 = vunpack.c.l.b16 %v548
        %v3392 = vunpack.c.h.b16 %v548
        %v3393 = vunpack.c.l.b16 %v549
        %v3394 = vunpack.c.h.b16 %v549
        %v3395 = vunpack.c.l.b16 %v550
        %v3396 = vunpack.c.h.b16 %v550
        %v3397 = vunpack.c.l.b16 %v551
        %v3398 = vunpack.c.h.b16 %v551
        %v3399 = vunpack.c.l.b16 %v552
        %v3400 = vunpack.c.h.b16 %v552
        %v3401 = vunpack.c.l.b16 %v553
        %v3402 = vunpack.c.h.b16 %v553
        %v3403 = vunpack.c.l.b16 %v554
        %v3404 = vunpack.c.h.b16 %v554
        %v3405 = vunpack.c.l.b16 %v555
        %v3406 = vunpack.c.h.b16 %v555
        %v3407 = vunpack.c.l.b16 %v556
        %v3408 = vunpack.c.h.b16 %v556
        %v3409 = vunpack.c.l.b16 %v557
        %v3410 = vunpack.c.h.b16 %v557
        %v3411 = vunpack.c.l.b16 %v558
        %v3412 = vunpack.c.h.b16 %v558
        %v3413 = vunpack.c.l.b16 %v559
        %v3414 = vunpack.c.h.b16 %v559
        %v3415 = vunpack.c.l.b16 %v560
        %v3416 = vunpack.c.h.b16 %v560
        %v3417 = vunpack.c.l.b16 %v561
        %v3418 = vunpack.c.h.b16 %v561
        %v3419 = vunpack.c.l.b16 %v562
        %v3420 = vunpack.c.h.b16 %v562
        %v3421 = vunpack.c.l.b16 %v563
        %v3422 = vunpack.c.h.b16 %v563
        %v3423 = vunpack.c.l.b16 %v564
        %v3424 = vunpack.c.h.b16 %v564
        %v3425 = vunpack.c.l.b16 %v565
        %v3426 = vunpack.c.h.b16 %v565
        %v3427 = vunpack.c.l.b16 %v566
        %v3428 = vunpack.c.h.b16 %v566
        %v3429 = vunpack.c.l.b16 %v567
        %v3430 = vunpack.c.h.b16 %v567
        %v3431 = vunpack.c.l.b16 %v568
        %v3432 = vunpack.c.h.b16 %v568
        %v3433 = vunpack.c.l.b16 %v569
        %v3434 = vunpack.c.h.b16 %v569
        %v3435 = vunpack.c.l.b16 %v570
        %v3436 = vunpack.c.h.b16 %v570
        %v3437 = vunpack.c.l.b16 %v571
        %v3438 = vunpack.c.h.b16 %v571
        %v3439 = vunpack.c.l.b16 %v572
        %v3440 = vunpack.c.h.b16 %v572
        %v3441 = vunpack.c.l.b16 %v573
        %v3442 = vunpack.c.h.b16 %v573
        %v3443 = vunpack.c.l.b16 %v574
        %v3444 = vunpack.c.h.b16 %v574
        %v3445 = vunpack.c.l.b16 %v575
        %v3446 = vunpack.c.h.b16 %v575
        %v3447 = vunpack.c.l.b16 %v576
        %v3448 = vunpack.c.h.b16 %v576
        %v3449 = vunpack.c.l.b16 %v577
        %v3450 = vunpack.c.h.b16 %v577
        %v3451 = vunpack.c.l.b16 %v578
        %v3452 = vunpack.c.h.b16 %v578
        %v3453 = vunpack.c.l.b16 %v579
        %v3454 = vunpack.c.h.b16 %v579
        %v3455 = vunpack.c.l.b16 %v580
        %v3456 = vunpack.c.h.b16 %v580
        %v3457 = vunpack.c.l.b16 %v581
        %v3458 = vunpack.c.h.b16 %v581
        %v3459 = vunpack.c.l.b16 %v582
        %v3460 = vunpack.c.h.b16 %v582
        %v3461 = vunpack.c.l.b16 %v583
        %v3462 = vunpack.c.h.b16 %v583
        %v3463 = vunpack.c.l.b16 %v584
        %v3464 = vunpack.c.h.b16 %v584
        %v3465 = vunpack.c.l.b16 %v585
        %v3466 = vunpack.c.h.b16 %v585
        %v3467 = vunpack.c.l.b16 %v586
        %v3468 = vunpack.c.h.b16 %v586
        %v3469 = vunpack.c.l.b16 %v587
        %v3470 = vunpack.c.h.b16 %v587
        %v3471 = vunpack.c.l.b16 %v588
        %v3472 = vunpack.c.h.b16 %v588
        %v3473 = vunpack.c.l.b16 %v589
        %v3474 = vunpack.c.h.b16 %v589
        %v3475 = vunpack.c.l.b16 %v590
        %v3476 = vunpack.c.h.b16 %v590
        %v3477 = vunpack.c.l.b16 %v591
        %v3478 = vunpack.c.h.b16 %v591
        %v3479 = vunpack.c.l.b16 %v592
        %v3480 = vunpack.c.h.b16 %v592
        %v3481 = vunpack.c.l.b16 %v593
        %v3482 = vunpack.c.h.b16 %v593
        %v3483 = vunpack.c.l.b16 %v594
        %v3484 = vunpack.c.h.b16 %v594
        %v3485 = vunpack.c.l.b16 %v595
        %v3486 = vunpack.c.h.b16 %v595
        %v3487 = vunpack.c.l.b16 %v596
        %v3488 = vunpack.c.h.b16 %v596
        %v3489 = vunpack.c.l.b16 %v597
        %v3490 = vunpack.c.h.b16 %v597
        %v3491 = vunpack.c.l.b16 %v598
        %v3492 = vunpack.c.h.b16 %v598
        %v3493 = vunpack.c.l.b16 %v599
        %v3494 = vunpack.c.h.b16 %v599
        %v3495 = vunpack.c.l.b16 %v600
        %v3496 = vunpack.c.h.b16 %v600
        %v3497 = vunpack.c.l.b16 %v601
        %v3498 = vunpack.c.h.b16 %v601
        %v3499 = vunpack.c.l.b16 %v602
        %v3500 = vunpack.c.h.b16 %v602
        %v3501 = vunpack.c.l.b16 %v603
        %v3502 = vunpack.c.h.b16 %v603
        %v3503 = vunpack.c.l.b16 %v604
        %v3504 = vunpack.c.h.b16 %v604
        %v3505 = vunpack.c.l.b16 %v605
        %v3506 = vunpack.c.h.b16 %v605
        %v3507 = vunpack.c.l.b16 %v606
        %v3508 = vunpack.c.h.b16 %v606
        %v3509 = vunpack.c.l.b16 %v607
        %v3510 = vunpack.c.h.b16 %v607
        %v3511 = vunpack.c.l.b16 %v608
        %v3512 = vunpack.c.h.b16 %v608
        %v3513 = vunpack.c.l.b16 %v609
        %v3514 = vunpack.c.h.b16 %v609
        %v3515 = vunpack.c.l.b16 %v610
        %v3516 = vunpack.c.h.b16 %v610
        %v3517 = vunpack.c.l.b16 %v611
        %v3518 = vunpack.c.h.b16 %v611
        %v3519 = vunpack.c.l.b16 %v612
        %v3520 = vunpack.c.h.b16 %v612
        %v3521 = vunpack.c.l.b16 %v613
        %v3522 = vunpack.c.h.b16 %v613
        %v3523 = vunpack.c.l.b16 %v614
        %v3524 = vunpack.c.h.b16 %v614
        %v3525 = vunpack.c.l.b16 %v615
        %v3526 = vunpack.c.h.b16 %v615
        %v3527 = vunpack.c.l.b16 %v616
        %v3528 = vunpack.c.h.b16 %v616
        %v3529 = vunpack.c.l.b16 %v617
        %v3530 = vunpack.c.h.b16 %v617
        %v3531 = vunpack.c.l.b16 %v618
        %v3532 = vunpack.c.h.b16 %v618
        %v3533 = vunpack.c.l.b16 %v619
        %v3534 = vunpack.c.h.b16 %v619
        %v3535 = vunpack.c.l.b16 %v620
        %v3536 = vunpack.c.h.b16 %v620
        %v3537 = vunpack.c.l.b16 %v621
        %v3538 = vunpack.c.h.b16 %v621
        %v3539 = vunpack.c.l.b16 %v622
        %v3540 = vunpack.c.h.b16 %v622
        %v3541 = vunpack.c.l.b16 %v623
        %v3542 = vunpack.c.h.b16 %v623
        %v3543 = vunpack.c.l.b16 %v624
        %v3544 = vunpack.c.h.b16 %v624
        %v3545 = vunpack.c.l.b16 %v625
        %v3546 = vunpack.c.h.b16 %v625
        %v3547 = vunpack.c.l.b16 %v626
        %v3548 = vunpack.c.h.b16 %v626
        %v3549 = vunpack.c.l.b16 %v627
        %v3550 = vunpack.c.h.b16 %v627
        %v3551 = vunpack.c.l.b16 %v628
        %v3552 = vunpack.c.h.b16 %v628
        %v3553 = vunpack.c.l.b16 %v629
        %v3554 = vunpack.c.h.b16 %v629
        %v3555 = vunpack.c.l.b16 %v630
        %v3556 = vunpack.c.h.b16 %v630
        %v3557 = vunpack.c.l.b16 %v631
        %v3558 = vunpack.c.h.b16 %v631
        %v3559 = vunpack.c.l.b16 %v632
        %v3560 = vunpack.c.h.b16 %v632
        %v3561 = vunpack.c.l.b16 %v633
        %v3562 = vunpack.c.h.b16 %v633
        %v3563 = vunpack.c.l.b16 %v634
        %v3564 = vunpack.c.h.b16 %v634
        %v3565 = vunpack.c.l.b16 %v635
        %v3566 = vunpack.c.h.b16 %v635
        %v3567 = vunpack.c.l.b16 %v636
        %v3568 = vunpack.c.h.b16 %v636
        %v3569 = vunpack.c.l.b16 %v637
        %v3570 = vunpack.c.h.b16 %v637
        %v3571 = vunpack.c.l.b16 %v638
        %v3572 = vunpack.c.h.b16 %v638
        %v3573 = vunpack.c.l.b16 %v639
        %v3574 = vunpack.c.h.b16 %v639
        %v3575 = vunpack.c.l.b16 %v640
        %v3576 = vunpack.c.h.b16 %v640
        %v3577 = vunpack.c.l.b16 %v641
        %v3578 = vunpack.c.h.b16 %v641
        %v3579 = vunpack.c.l.b16 %v642
        %v3580 = vunpack.c.h.b16 %v642
        %v3581 = vunpack.c.l.b16 %v643
        %v3582 = vunpack.c.h.b16 %v643
        %v3583 = vunpack.c.l.b16 %v644
        %v3584 = vunpack.c.h.b16 %v644
        %v3585 = vunpack.c.l.b16 %v645
        %v3586 = vunpack.c.h.b16 %v645
        %v3587 = vunpack.c.l.b16 %v646
        %v3588 = vunpack.c.h.b16 %v646
        %v3589 = vunpack.c.l.b16 %v647
        %v3590 = vunpack.c.h.b16 %v647
        %v3591 = vunpack.c.l.b16 %v648
        %v3592 = vunpack.c.h.b16 %v648
        %v3593 = vunpack.c.l.b16 %v649
        %v3594 = vunpack.c.h.b16 %v649
        %v3595 = vunpack.c.l.b16 %v650
        %v3596 = vunpack.c.h.b16 %v650
        %v3597 = vunpack.c.l.b16 %v651
        %v3598 = vunpack.c.h.b16 %v651
        %v3599 = vunpack.c.l.b16 %v652
        %v3600 = vunpack.c.h.b16 %v652
        %v3601 = vunpack.c.l.b16 %v653
        %v3602 = vunpack.c.h.b16 %v653
        %v3603 = vunpack.c.l.b16 %v654
        %v3604 = vunpack.c.h.b16 %v654
        %v3605 = vunpack.c.l.b16 %v655
        %v3606 = vunpack.c.h.b16 %v655
        %v3607 = vunpack.c.l.b16 %v656
        %v3608 = vunpack.c.h.b16 %v656
        %v3609 = vunpack.c.l.b16 %v657
        %v3610 = vunpack.c.h.b16 %v657
        %v3611 = vunpack.c.l.b16 %v658
        %v3612 = vunpack.c.h.b16 %v658
        %v3613 = vunpack.c.l.b16 %v659
        %v3614 = vunpack.c.h.b16 %v659
        %v3615 = vunpack.c.l.b16 %v660
        %v3616 = vunpack.c.h.b16 %v660
        %v3617 = vunpack.c.l.b16 %v661
        %v3618 = vunpack.c.h.b16 %v661
        %v3619 = vunpack.c.l.b16 %v662
        %v3620 = vunpack.c.h.b16 %v662
        %v3621 = vunpack.c.l.b16 %v663
        %v3622 = vunpack.c.h.b16 %v663
        %v3623 = vunpack.c.l.b16 %v664
        %v3624 = vunpack.c.h.b16 %v664
        %v3625 = vunpack.c.l.b16 %v665
        %v3626 = vunpack.c.h.b16 %v665
        %v3627 = vunpack.c.l.b16 %v666
        %v3628 = vunpack.c.h.b16 %v666
        %v3629 = vunpack.c.l.b16 %v667
        %v3630 = vunpack.c.h.b16 %v667
        %v3631 = vunpack.c.l.b16 %v668
        %v3632 = vunpack.c.h.b16 %v668
        %v3633 = vunpack.c.l.b16 %v669
        %v3634 = vunpack.c.h.b16 %v669
        %v3635 = vunpack.c.l.b16 %v670
        %v3636 = vunpack.c.h.b16 %v670
        %v3637 = vunpack.c.l.b16 %v671
        %v3638 = vunpack.c.h.b16 %v671
        %v3639 = vunpack.c.l.b16 %v672
        %v3640 = vunpack.c.h.b16 %v672
        %v3641 = vunpack.c.l.b16 %v673
        %v3642 = vunpack.c.h.b16 %v673
        %v3643 = vunpack.c.l.b16 %v674
        %v3644 = vunpack.c.h.b16 %v674
        %v3645 = vunpack.c.l.b16 %v675
        %v3646 = vunpack.c.h.b16 %v675
        %v3647 = vunpack.c.l.b16 %v676
        %v3648 = vunpack.c.h.b16 %v676
        %v3649 = vunpack.c.l.b16 %v677
        %v3650 = vunpack.c.h.b16 %v677
        %v3651 = vunpack.c.l.b16 %v678
        %v3652 = vunpack.c.h.b16 %v678
        %v3653 = vunpack.c.l.b16 %v679
        %v3654 = vunpack.c.h.b16 %v679
        %v3655 = vunpack.c.l.b16 %v680
        %v3656 = vunpack.c.h.b16 %v680
        %v3657 = vunpack.c.l.b16 %v681
        %v3658 = vunpack.c.h.b16 %v681
        %v3659 = vunpack.c.l.b16 %v682
        %v3660 = vunpack.c.h.b16 %v682
        %v3661 = vunpack.c.l.b16 %v683
        %v3662 = vunpack.c.h.b16 %v683
        %v3663 = vunpack.c.l.b16 %v684
        %v3664 = vunpack.c.h.b16 %v684
        %v3665 = vunpack.c.l.b16 %v685
        %v3666 = vunpack.c.h.b16 %v685
        %v3667 = vunpack.c.l.b16 %v686
        %v3668 = vunpack.c.h.b16 %v686
        %v3669 = vunpack.c.l.b16 %v687
        %v3670 = vunpack.c.h.b16 %v687
        %v3671 = vunpack.c.l.b16 %v688
        %v3672 = vunpack.c.h.b16 %v688
        %v3673 = vunpack.c.l.b16 %v689
        %v3674 = vunpack.c.h.b16 %v689
        %v3675 = vunpack.c.l.b16 %v690
        %v3676 = vunpack.c.h.b16 %v690
        %v3677 = vunpack.c.l.b16 %v691
        %v3678 = vunpack.c.h.b16 %v691
        %v3679 = vunpack.c.l.b16 %v692
        %v3680 = vunpack.c.h.b16 %v692
        %v3681 = vunpack.c.l.b16 %v693
        %v3682 = vunpack.c.h.b16 %v693
        %v3683 = vunpack.c.l.b16 %v694
        %v3684 = vunpack.c.h.b16 %v694
        %v3685 = vunpack.c.l.b16 %v695
        %v3686 = vunpack.c.h.b16 %v695
        %v3687 = vunpack.c.l.b16 %v696
        %v3688 = vunpack.c.h.b16 %v696
        %v3689 = vunpack.c.l.b16 %v697
        %v3690 = vunpack.c.h.b16 %v697
        %v3691 = vunpack.c.l.b16 %v698
        %v3692 = vunpack.c.h.b16 %v698
        %v3693 = vunpack.c.l.b16 %v699
        %v3694 = vunpack.c.h.b16 %v699
        %v3695 = vunpack.c.l.b16 %v700
        %v3696 = vunpack.c.h.b16 %v700
        %v3697 = vunpack.c.l.b16 %v701
        %v3698 = vunpack.c.h.b16 %v701
        %v3699 = vunpack.c.l.b16 %v702
        %v3700 = vunpack.c.h.b16 %v702
        %v3701 = vunpack.c.l.b16 %v703
        %v3702 = vunpack.c.h.b16 %v703
        %v3703 = vunpack.c.l.b16 %v704
        %v3704 = vunpack.c.h.b16 %v704
        %v3705 = vunpack.c.l.b16 %v705
        %v3706 = vunpack.c.h.b16 %v705
        %v3707 = vunpack.c.l.b16 %v706
        %v3708 = vunpack.c.h.b16 %v706
        %v3709 = vunpack.c.l.b16 %v707
        %v3710 = vunpack.c.h.b16 %v707
        %v3711 = vunpack.c.l.b16 %v708
        %v3712 = vunpack.c.h.b16 %v708
        %v3713 = vunpack.c.l.b16 %v709
        %v3714 = vunpack.c.h.b16 %v709
        %v3715 = vunpack.c.l.b16 %v710
        %v3716 = vunpack.c.h.b16 %v710
        %v3717 = vunpack.c.l.b16 %v711
        %v3718 = vunpack.c.h.b16 %v711
        %v3719 = vunpack.c.l.b16 %v712
        %v3720 = vunpack.c.h.b16 %v712
        %v3721 = vunpack.c.l.b16 %v713
        %v3722 = vunpack.c.h.b16 %v713
        %v3723 = vunpack.c.l.b16 %v714
        %v3724 = vunpack.c.h.b16 %v714
        %v3725 = vunpack.c.l.b16 %v715
        %v3726 = vunpack.c.h.b16 %v715
        %v3727 = vunpack.c.l.b16 %v716
        %v3728 = vunpack.c.h.b16 %v716
        %v3729 = vunpack.c.l.b16 %v717
        %v3730 = vunpack.c.h.b16 %v717
        %v3731 = vunpack.c.l.b16 %v718
        %v3732 = vunpack.c.h.b16 %v718
        %v3733 = vunpack.c.l.b16 %v719
        %v3734 = vunpack.c.h.b16 %v719
        %v3735 = vunpack.c.l.b16 %v720
        %v3736 = vunpack.c.h.b16 %v720
        %v3737 = vunpack.c.l.b16 %v721
        %v3738 = vunpack.c.h.b16 %v721
        %v3739 = vunpack.c.l.b16 %v722
        %v3740 = vunpack.c.h.b16 %v722
        %v3741 = vunpack.c.l.b16 %v723
        %v3742 = vunpack.c.h.b16 %v723
        %v3743 = vunpack.c.l.b16 %v724
        %v3744 = vunpack.c.h.b16 %v724
        %v3745 = vunpack.c.l.b16 %v725
        %v3746 = vunpack.c.h.b16 %v725
        %v3747 = vunpack.c.l.b16 %v726
        %v3748 = vunpack.c.h.b16 %v726
        %v3749 = vunpack.c.l.b16 %v727
        %v3750 = vunpack.c.h.b16 %v727
        %v3751 = vunpack.c.l.b16 %v728
        %v3752 = vunpack.c.h.b16 %v728
        %v3753 = vunpack.c.l.b16 %v729
        %v3754 = vunpack.c.h.b16 %v729
        %v3755 = vunpack.c.l.b16 %v730
        %v3756 = vunpack.c.h.b16 %v730
        %v3757 = vunpack.c.l.b16 %v731
        %v3758 = vunpack.c.h.b16 %v731
        %v3759 = vunpack.c.l.b16 %v732
        %v3760 = vunpack.c.h.b16 %v732
        %v3761 = vunpack.c.l.b16 %v733
        %v3762 = vunpack.c.h.b16 %v733
        %v3763 = vunpack.c.l.b16 %v734
        %v3764 = vunpack.c.h.b16 %v734
        %v3765 = vunpack.c.l.b16 %v735
        %v3766 = vunpack.c.h.b16 %v735
        %v3767 = vunpack.c.l.b16 %v736
        %v3768 = vunpack.c.h.b16 %v736
        %v3769 = vunpack.c.l.b16 %v737
        %v3770 = vunpack.c.h.b16 %v737
        %v3771 = vunpack.c.l.b16 %v738
        %v3772 = vunpack.c.h.b16 %v738
        %v3773 = vunpack.c.l.b16 %v739
        %v3774 = vunpack.c.h.b16 %v739
        %v3775 = vunpack.c.l.b16 %v740
        %v3776 = vunpack.c.h.b16 %v740
        %v3777 = vunpack.c.l.b16 %v741
        %v3778 = vunpack.c.h.b16 %v741
        %v3779 = vunpack.c.l.b16 %v742
        %v3780 = vunpack.c.h.b16 %v742
        %v3781 = vunpack.c.l.b16 %v743
        %v3782 = vunpack.c.h.b16 %v743
        %v3783 = vunpack.c.l.b16 %v744
        %v3784 = vunpack.c.h.b16 %v744
        %v3785 = vunpack.c.l.b16 %v745
        %v3786 = vunpack.c.h.b16 %v745
        %v3787 = vunpack.c.l.b16 %v746
        %v3788 = vunpack.c.h.b16 %v746
        %v3789 = vunpack.c.l.b16 %v747
        %v3790 = vunpack.c.h.b16 %v747
        %v3791 = vunpack.c.l.b16 %v748
        %v3792 = vunpack.c.h.b16 %v748
        %v3793 = vunpack.c.l.b16 %v749
        %v3794 = vunpack.c.h.b16 %v749
        %v3795 = vunpack.c.l.b16 %v750
        %v3796 = vunpack.c.h.b16 %v750
        %v3797 = vunpack.c.l.b16 %v751
        %v3798 = vunpack.c.h.b16 %v751
        %v3799 = vunpack.c.l.b16 %v752
        %v3800 = vunpack.c.h.b16 %v752
        %v3801 = vunpack.c.l.b16 %v753
        %v3802 = vunpack.c.h.b16 %v753
        %v3803 = vunpack.c.l.b16 %v754
        %v3804 = vunpack.c.h.b16 %v754
        %v3805 = vunpack.c.l.b16 %v755
        %v3806 = vunpack.c.h.b16 %v755
        %v3807 = vunpack.c.l.b16 %v756
        %v3808 = vunpack.c.h.b16 %v756
        %v3809 = vunpack.c.l.b16 %v757
        %v3810 = vunpack.c.h.b16 %v757
        %v3811 = vunpack.c.l.b16 %v758
        %v3812 = vunpack.c.h.b16 %v758
        %v3813 = vunpack.c.l.b16 %v759
        %v3814 = vunpack.c.h.b16 %v759
        %v3815 = vunpack.c.l.b16 %v760
        %v3816 = vunpack.c.h.b16 %v760
        %v3817 = vunpack.c.l.b16 %v761
        %v3818 = vunpack.c.h.b16 %v761
        %v3819 = vunpack.c.l.b16 %v762
        %v3820 = vunpack.c.h.b16 %v762
        %v3821 = vunpack.c.l.b16 %v763
        %v3822 = vunpack.c.h.b16 %v763
        %v3823 = vunpack.c.l.b16 %v764
        %v3824 = vunpack.c.h.b16 %v764
        %v3825 = vunpack.c.l.b16 %v765
        %v3826 = vunpack.c.h.b16 %v765
        %v3827 = vunpack.c.l.b16 %v766
        %v3828 = vunpack.c.h.b16 %v766
        %v3829 = vunpack.c.l.b16 %v767
        %v3830 = vunpack.c.h.b16 %v767
        %v3831 = vunpack.c.l.b16 %v768
        %v3832 = vunpack.c.h.b16 %v768
        %v3833 = vunpack.c.l.b16 %v769
        %v3834 = vunpack.c.h.b16 %v769
        %v3835 = vunpack.c.l.b16 %v770
        %v3836 = vunpack.c.h.b16 %v770
        %v3837 = vunpack.c.l.b16 %v771
        %v3838 = vunpack.c.h.b16 %v771
        %v3839 = vunpack.c.l.b16 %v772
        %v3840 = vunpack.c.h.b16 %v772
        %v3841 = vunpack.c.l.b16 %v773
        %v3842 = vunpack.c.h.b16 %v773
        %v3843 = vunpack.c.l.b16 %v774
        %v3844 = vunpack.c.h.b16 %v774
        %v3845 = vunpack.c.l.b16 %v775
        %v3846 = vunpack.c.h.b16 %v775
        %v3847 = vunpack.c.l.b16 %v776
        %v3848 = vunpack.c.h.b16 %v776
        %v3849 = vunpack.c.l.b16 %v777
        %v3850 = vunpack.c.h.b16 %v777
        %v3851 = vunpack.c.l.b16 %v778
        %v3852 = vunpack.c.h.b16 %v778
        %v3853 = vunpack.c.l.b16 %v779
        %v3854 = vunpack.c.h.b16 %v779
        %v3855 = vunpack.c.l.b16 %v780
        %v3856 = vunpack.c.h.b16 %v780
        %v3857 = vunpack.c.l.b16 %v781
        %v3858 = vunpack.c.h.b16 %v781
        %v3859 = vunpack.c.l.b16 %v782
        %v3860 = vunpack.c.h.b16 %v782
        %v3861 = vunpack.c.l.b16 %v783
        %v3862 = vunpack.c.h.b16 %v783
        %v3863 = vunpack.c.l.b16 %v784
        %v3864 = vunpack.c.h.b16 %v784
        %v3865 = vunpack.c.l.b16 %v785
        %v3866 = vunpack.c.h.b16 %v785
        %v3867 = vunpack.c.l.b16 %v786
        %v3868 = vunpack.c.h.b16 %v786
        %v3869 = vunpack.c.l.b16 %v787
        %v3870 = vunpack.c.h.b16 %v787
        %v3871 = vunpack.c.l.b16 %v788
        %v3872 = vunpack.c.h.b16 %v788
        %v3873 = vunpack.c.l.b16 %v789
        %v3874 = vunpack.c.h.b16 %v789
        %v3875 = vunpack.c.l.b16 %v790
        %v3876 = vunpack.c.h.b16 %v790
        %v3877 = vunpack.c.l.b16 %v791
        %v3878 = vunpack.c.h.b16 %v791
        %v3879 = vunpack.c.l.b16 %v792
        %v3880 = vunpack.c.h.b16 %v792
        %v3881 = vunpack.c.l.b16 %v793
        %v3882 = vunpack.c.h.b16 %v793
        %v3883 = vunpack.c.l.b16 %v794
        %v3884 = vunpack.c.h.b16 %v794
        %v3885 = vunpack.c.l.b16 %v795
        %v3886 = vunpack.c.h.b16 %v795
        %v3887 = vunpack.c.l.b16 %v796
        %v3888 = vunpack.c.h.b16 %v796
        %v3889 = vunpack.c.l.b16 %v797
        %v3890 = vunpack.c.h.b16 %v797
        %v3891 = vunpack.c.l.b16 %v798
        %v3892 = vunpack.c.h.b16 %v798
        %v3893 = vunpack.c.l.b16 %v799
        %v3894 = vunpack.c.h.b16 %v799
        %v3895 = vunpack.c.l.b16 %v800
        %v3896 = vunpack.c.h.b16 %v800
        %v3897 = vunpack.c.l.b16 %v801
        %v3898 = vunpack.c.h.b16 %v801
        %v3899 = vunpack.c.l.b16 %v802
        %v3900 = vunpack.c.h.b16 %v802
        %v3901 = vunpack.c.l.b16 %v803
        %v3902 = vunpack.c.h.b16 %v803
        %v3903 = vunpack.c.l.b16 %v804
        %v3904 = vunpack.c.h.b16 %v804
        %v3905 = vunpack.c.l.b16 %v805
        %v3906 = vunpack.c.h.b16 %v805
        %v3907 = vunpack.c.l.b16 %v806
        %v3908 = vunpack.c.h.b16 %v806
        %v3909 = vunpack.c.l.b16 %v807
        %v3910 = vunpack.c.h.b16 %v807
        %v3911 = vunpack.c.l.b16 %v808
        %v3912 = vunpack.c.h.b16 %v808
        %v3913 = vunpack.c.l.b16 %v809
        %v3914 = vunpack.c.h.b16 %v809
        %v3915 = vunpack.c.l.b16 %v810
        %v3916 = vunpack.c.h.b16 %v810
        %v3917 = vunpack.c.l.b16 %v811
        %v3918 = vunpack.c.h.b16 %v811
        %v3919 = vunpack.c.l.b16 %v812
        %v3920 = vunpack.c.h.b16 %v812
        %v3921 = vunpack.c.l.b16 %v813
        %v3922 = vunpack.c.h.b16 %v813
        %v3923 = vunpack.c.l.b16 %v814
        %v3924 = vunpack.c.h.b16 %v814
        %v3925 = vunpack.c.l.b16 %v815
        %v3926 = vunpack.c.h.b16 %v815
        %v3927 = vunpack.c.l.b16 %v816
        %v3928 = vunpack.c.h.b16 %v816
        %v3929 = vunpack.c.l.b16 %v817
        %v3930 = vunpack.c.h.b16 %v817
        %v3931 = vunpack.c.l.b16 %v818
        %v3932 = vunpack.c.h.b16 %v818
        %v3933 = vunpack.c.l.b16 %v819
        %v3934 = vunpack.c.h.b16 %v819
        %v3935 = vunpack.c.l.b16 %v820
        %v3936 = vunpack.c.h.b16 %v820
        %v3937 = vunpack.c.l.b16 %v821
        %v3938 = vunpack.c.h.b16 %v821
        %v3939 = vunpack.c.l.b16 %v822
        %v3940 = vunpack.c.h.b16 %v822
        %v3941 = vunpack.c.l.b16 %v823
        %v3942 = vunpack.c.h.b16 %v823
        %v3943 = vunpack.c.l.b16 %v824
        %v3944 = vunpack.c.h.b16 %v824
        %v3945 = vunpack.c.l.b16 %v825
        %v3946 = vunpack.c.h.b16 %v825
        %v3947 = vunpack.c.l.b16 %v826
        %v3948 = vunpack.c.h.b16 %v826
        %v3949 = vunpack.c.l.b16 %v827
        %v3950 = vunpack.c.h.b16 %v827
        %v3951 = vunpack.c.l.b16 %v828
        %v3952 = vunpack.c.h.b16 %v828
        %v3953 = vunpack.c.l.b16 %v829
        %v3954 = vunpack.c.h.b16 %v829
        %v3955 = vunpack.c.l.b16 %v830
        %v3956 = vunpack.c.h.b16 %v830
        %v3957 = vunpack.c.l.b16 %v831
        %v3958 = vunpack.c.h.b16 %v831
        %v3959 = vunpack.c.l.b16 %v832
        %v3960 = vunpack.c.h.b16 %v832
        %v3961 = vunpack.c.l.b16 %v833
        %v3962 = vunpack.c.h.b16 %v833
        %v3963 = vunpack.c.l.b16 %v834
        %v3964 = vunpack.c.h.b16 %v834
        %v3965 = vunpack.c.l.b16 %v835
        %v3966 = vunpack.c.h.b16 %v835
        %v3967 = vunpack.c.l.b16 %v836
        %v3968 = vunpack.c.h.b16 %v836
        %v3969 = vunpack.c.l.b16 %v837
        %v3970 = vunpack.c.h.b16 %v837
        %v3971 = vunpack.c.l.b16 %v838
        %v3972 = vunpack.c.h.b16 %v838
        %v3973 = vunpack.c.l.b16 %v839
        %v3974 = vunpack.c.h.b16 %v839
        %v3975 = vunpack.c.l.b16 %v840
        %v3976 = vunpack.c.h.b16 %v840
        %v3977 = vunpack.c.l.b16 %v841
        %v3978 = vunpack.c.h.b16 %v841
        %v3979 = vunpack.c.l.b16 %v842
        %v3980 = vunpack.c.h.b16 %v842
        %v3981 = vunpack.c.l.b16 %v843
        %v3982 = vunpack.c.h.b16 %v843
        %v3983 = vunpack.c.l.b16 %v844
        %v3984 = vunpack.c.h.b16 %v844
        %v3985 = vunpack.c.l.b16 %v845
        %v3986 = vunpack.c.h.b16 %v845
        %v3987 = vunpack.c.l.b16 %v846
        %v3988 = vunpack.c.h.b16 %v846
        %v3989 = vunpack.c.l.b16 %v847
        %v3990 = vunpack.c.h.b16 %v847
        %v3991 = vunpack.c.l.b16 %v848
        %v3992 = vunpack.c.h.b16 %v848
        %v3993 = vunpack.c.l.b16 %v849
        %v3994 = vunpack.c.h.b16 %v849
        %v3995 = vunpack.c.l.b16 %v850
        %v3996 = vunpack.c.h.b16 %v850
        %v3997 = vunpack.c.l.b16 %v851
        %v3998 = vunpack.c.h.b16 %v851
        %v3999 = vunpack.c.l.b16 %v852
        %v4000 = vunpack.c.h.b16 %v852
        %v4001 = vunpack.c.l.b16 %v853
        %v4002 = vunpack.c.h.b16 %v853
        %v4003 = vunpack.c.l.b16 %v854
        %v4004 = vunpack.c.h.b16 %v854
        %v4005 = vunpack.c.l.b16 %v855
        %v4006 = vunpack.c.h.b16 %v855
        %v4007 = vunpack.c.l.b16 %v856
        %v4008 = vunpack.c.h.b16 %v856
        %v4009 = vunpack.c.l.b16 %v857
        %v4010 = vunpack.c.h.b16 %v857
        %v4011 = vunpack.c.l.b16 %v858
        %v4012 = vunpack.c.h.b16 %v858
        %v4013 = vunpack.c.l.b16 %v859
        %v4014 = vunpack.c.h.b16 %v859
        %v4015 = vunpack.c.l.b16 %v860
        %v4016 = vunpack.c.h.b16 %v860
        %v4017 = vunpack.c.l.b16 %v861
        %v4018 = vunpack.c.h.b16 %v861
        %v4019 = vunpack.c.l.b16 %v862
        %v4020 = vunpack.c.h.b16 %v862
        %v4021 = vunpack.c.l.b16 %v863
        %v4022 = vunpack.c.h.b16 %v863
        %v4023 = vunpack.c.l.b16 %v864
        %v4024 = vunpack.c.h.b16 %v864
        %v4025 = vunpack.c.l.b16 %v865
        %v4026 = vunpack.c.h.b16 %v865
        %v4027 = vunpack.c.l.b16 %v866
        %v4028 = vunpack.c.h.b16 %v866
        %v4029 = vunpack.c.l.b16 %v867
        %v4030 = vunpack.c.h.b16 %v867
        %v4031 = vunpack.c.l.b16 %v868
        %v4032 = vunpack.c.h.b16 %v868
        %v4033 = vunpack.c.l.b16 %v869
        %v4034 = vunpack.c.h.b16 %v869
        %v4035 = vunpack.c.l.b16 %v870
        %v4036 = vunpack.c.h.b16 %v870
        %v4037 = vunpack.c.l.b16 %v871
        %v4038 = vunpack.c.h.b16 %v871
        %v4039 = vunpack.c.l.b16 %v872
        %v4040 = vunpack.c.h.b16 %v872
        %v4041 = vunpack.c.l.b16 %v873
        %v4042 = vunpack.c.h.b16 %v873
        %v4043 = vunpack.c.l.b16 %v874
        %v4044 = vunpack.c.h.b16 %v874
        %v4045 = vunpack.c.l.b16 %v875
        %v4046 = vunpack.c.h.b16 %v875
        %v4047 = vunpack.c.l.b16 %v876
        %v4048 = vunpack.c.h.b16 %v876
        %v4049 = vunpack.c.l.b16 %v877
        %v4050 = vunpack.c.h.b16 %v877
        %v4051 = vunpack.c.l.b16 %v878
        %v4052 = vunpack.c.h.b16 %v878
        %v4053 = vunpack.c.l.b16 %v879
        %v4054 = vunpack.c.h.b16 %v879
        %v4055 = vunpack.c.l.b16 %v880
        %v4056 = vunpack.c.h.b16 %v880
        %v4057 = vunpack.c.l.b16 %v881
        %v4058 = vunpack.c.h.b16 %v881
        %v4059 = vunpack.c.l.b16 %v882
        %v4060 = vunpack.c.h.b16 %v882
        %v4061 = vunpack.c.l.b16 %v883
        %v4062 = vunpack.c.h.b16 %v883
        %v4063 = vunpack.c.l.b16 %v884
        %v4064 = vunpack.c.h.b16 %v884
        %v4065 = vunpack.c.l.b16 %v885
        %v4066 = vunpack.c.h.b16 %v885
        %v4067 = vunpack.c.l.b16 %v886
        %v4068 = vunpack.c.h.b16 %v886
        %v4069 = vunpack.c.l.b16 %v887
        %v4070 = vunpack.c.h.b16 %v887
        %v4071 = vunpack.c.l.b16 %v888
        %v4072 = vunpack.c.h.b16 %v888
        %v4073 = vunpack.c.l.b16 %v889
        %v4074 = vunpack.c.h.b16 %v889
        %v4075 = vunpack.c.l.b16 %v890
        %v4076 = vunpack.c.h.b16 %v890
        %v4077 = vunpack.c.l.b16 %v891
        %v4078 = vunpack.c.h.b16 %v891
        %v4079 = vunpack.c.l.b16 %v892
        %v4080 = vunpack.c.h.b16 %v892
        %v4081 = vunpack.c.l.b16 %v893
        %v4082 = vunpack.c.h.b16 %v893
        %v4083 = vunpack.c.l.b16 %v894
        %v4084 = vunpack.c.h.b16 %v894
        %v4085 = vunpack.c.l.b16 %v895
        %v4086 = vunpack.c.h.b16 %v895
        %v4087 = vunpack.c.l.b16 %v896
        %v4088 = vunpack.c.h.b16 %v896
        %v4089 = vunpack.c.l.b16 %v897
        %v4090 = vunpack.c.h.b16 %v897
        %v4091 = vunpack.c.l.b16 %v898
        %v4092 = vunpack.c.h.b16 %v898
        %v4093 = vunpack.c.l.b16 %v899
        %v4094 = vunpack.c.h.b16 %v899
        %v4095 = vunpack.c.l.b16 %v900
        %v4096 = vunpack.c.h.b16 %v900
        %v4097 = vunpack.c.l.b16 %v901
        %v4098 = vunpack.c.h.b16 %v901
        %v4099 = vunpack.c.l.b16 %v902
        %v4100 = vunpack.c.h.b16 %v902
        %v4101 = vunpack.c.l.b16 %v903
        %v4102 = vunpack.c.h.b16 %v903
        %v4103 = vunpack.c.l.b16 %v904
        %v4104 = vunpack.c.h.b16 %v904
        %v4105 = vunpack.c.l.b16 %v905
        %v4106 = vunpack.c.h.b16 %v905
        %v4107 = vunpack.c.l.b16 %v906
        %v4108 = vunpack.c.h.b16 %v906
        %v4109 = vunpack.c.l.b16 %v907
        %v4110 = vunpack.c.h.b16 %v907
        %v4111 = vunpack.c.l.b16 %v908
        %v4112 = vunpack.c.h.b16 %v908
        %v4113 = vunpack.c.l.b16 %v909
        %v4114 = vunpack.c.h.b16 %v909
        %v4115 = vunpack.c.l.b16 %v910
        %v4116 = vunpack.c.h.b16 %v910
        %v4117 = vunpack.c.l.b16 %v911
        %v4118 = vunpack.c.h.b16 %v911
        %v4119 = vunpack.c.l.b16 %v912
        %v4120 = vunpack.c.h.b16 %v912
        %v4121 = vunpack.c.l.b16 %v913
        %v4122 = vunpack.c.h.b16 %v913
        %v4123 = vunpack.c.l.b16 %v914
        %v4124 = vunpack.c.h.b16 %v914
        %v4125 = vunpack.c.l.b16 %v915
        %v4126 = vunpack.c.h.b16 %v915
        %v4127 = vunpack.c.l.b16 %v916
        %v4128 = vunpack.c.h.b16 %v916
        %v4129 = vunpack.c.l.b16 %v917
        %v4130 = vunpack.c.h.b16 %v917
        %v4131 = vunpack.c.l.b16 %v918
        %v4132 = vunpack.c.h.b16 %v918
        %v4133 = vunpack.c.l.b16 %v919
        %v4134 = vunpack.c.h.b16 %v919
        %v4135 = vunpack.c.l.b16 %v920
        %v4136 = vunpack.c.h.b16 %v920
        %v4137 = vunpack.c.l.b16 %v921
        %v4138 = vunpack.c.h.b16 %v921
        %v4139 = vunpack.c.l.b16 %v922
        %v4140 = vunpack.c.h.b16 %v922
        %v4141 = vunpack.c.l.b16 %v923
        %v4142 = vunpack.c.h.b16 %v923
        %v4143 = vunpack.c.l.b16 %v924
        %v4144 = vunpack.c.h.b16 %v924
        %v4145 = vunpack.c.l.b16 %v925
        %v4146 = vunpack.c.h.b16 %v925
        %v4147 = vunpack.c.l.b16 %v926
        %v4148 = vunpack.c.h.b16 %v926
        %v4149 = vunpack.c.l.b16 %v927
        %v4150 = vunpack.c.h.b16 %v927
        %v4151 = vunpack.c.l.b16 %v928
        %v4152 = vunpack.c.h.b16 %v928
        %v4153 = vunpack.c.l.b16 %v929
        %v4154 = vunpack.c.h.b16 %v929
        %v4155 = vunpack.c.l.b16 %v930
        %v4156 = vunpack.c.h.b16 %v930
        %v4157 = vunpack.c.l.b16 %v931
        %v4158 = vunpack.c.h.b16 %v931
        %v4159 = vunpack.c.l.b16 %v932
        %v4160 = vunpack.c.h.b16 %v932
        %v4161 = vunpack.c.l.b16 %v933
        %v4162 = vunpack.c.h.b16 %v933
        %v4163 = vunpack.c.l.b16 %v934
        %v4164 = vunpack.c.h.b16 %v934
        %v4165 = vunpack.c.l.b16 %v935
        %v4166 = vunpack.c.h.b16 %v935
        %v4167 = vunpack.c.l.b16 %v936
        %v4168 = vunpack.c.h.b16 %v936
        %v4169 = vunpack.c.l.b16 %v937
        %v4170 = vunpack.c.h.b16 %v937
        %v4171 = vunpack.c.l.b16 %v938
        %v4172 = vunpack.c.h.b16 %v938
        %v4173 = vunpack.c.l.b16 %v939
        %v4174 = vunpack.c.h.b16 %v939
        %v4175 = vunpack.c.l.b16 %v940
        %v4176 = vunpack.c.h.b16 %v940
        %v4177 = vunpack.c.l.b16 %v941
        %v4178 = vunpack.c.h.b16 %v941
        %v4179 = vunpack.c.l.b16 %v942
        %v4180 = vunpack.c.h.b16 %v942
        %v4181 = vunpack.c.l.b16 %v943
        %v4182 = vunpack.c.h.b16 %v943
        %v4183 = vunpack.c.l.b16 %v944
        %v4184 = vunpack.c.h.b16 %v944
        %v4185 = vunpack.c.l.b16 %v945
        %v4186 = vunpack.c.h.b16 %v945
        %v4187 = vunpack.c.l.b16 %v946
        %v4188 = vunpack.c.h.b16 %v946
        %v4189 = vunpack.c.l.b16 %v947
        %v4190 = vunpack.c.h.b16 %v947
        %v4191 = vunpack.c.l.b16 %v948
        %v4192 = vunpack.c.h.b16 %v948
        %v4193 = vunpack.c.l.b16 %v949
        %v4194 = vunpack.c.h.b16 %v949
        %v4195 = vunpack.c.l.b16 %v950
        %v4196 = vunpack.c.h.b16 %v950
        %v4197 = vunpack.c.l.b16 %v951
        %v4198 = vunpack.c.h.b16 %v951
        %v4199 = vunpack.c.l.b16 %v952
        %v4200 = vunpack.c.h.b16 %v952
        %v4201 = vunpack.c.l.b16 %v953
        %v4202 = vunpack.c.h.b16 %v953
        %v4203 = vunpack.c.l.b16 %v954
        %v4204 = vunpack.c.h.b16 %v954
        %v4205 = vunpack.c.l.b16 %v955
        %v4206 = vunpack.c.h.b16 %v955
        %v4207 = vunpack.c.l.b16 %v956
        %v4208 = vunpack.c.h.b16 %v956
        %v4209 = vunpack.c.l.b16 %v957
        %v4210 = vunpack.c.h.b16 %v957
        %v4211 = vunpack.c.l.b16 %v958
        %v4212 = vunpack.c.h.b16 %v958
        %v4213 = vunpack.c.l.b16 %v959
        %v4214 = vunpack.c.h.b16 %v959
        %v4215 = vunpack.c.l.b16 %v960
        %v4216 = vunpack.c.h.b16 %v960
        %v4217 = vunpack.c.l.b16 %v961
        %v4218 = vunpack.c.h.b16 %v961
        %v4219 = vunpack.c.l.b16 %v962
        %v4220 = vunpack.c.h.b16 %v962
        %v4221 = vunpack.c.l.b16 %v963
        %v4222 = vunpack.c.h.b16 %v963
        %v4223 = vunpack.c.l.b16 %v964
        %v4224 = vunpack.c.h.b16 %v964
        %v4225 = vunpack.c.l.b16 %v965
        %v4226 = vunpack.c.h.b16 %v965
        %v4227 = vunpack.c.l.b16 %v966
        %v4228 = vunpack.c.h.b16 %v966
        %v4229 = vunpack.c.l.b16 %v967
        %v4230 = vunpack.c.h.b16 %v967
        %v4231 = vunpack.c.l.b16 %v968
        %v4232 = vunpack.c.h.b16 %v968
        %v4233 = vunpack.c.l.b16 %v969
        %v4234 = vunpack.c.h.b16 %v969
        %v4235 = vunpack.c.l.b16 %v970
        %v4236 = vunpack.c.h.b16 %v970
        %v4237 = vunpack.c.l.b16 %v971
        %v4238 = vunpack.c.h.b16 %v971
        %v4239 = vunpack.c.l.b16 %v972
        %v4240 = vunpack.c.h.b16 %v972
        %v4241 = vunpack.c.l.b16 %v973
        %v4242 = vunpack.c.h.b16 %v973
        %v4243 = vunpack.c.l.b16 %v974
        %v4244 = vunpack.c.h.b16 %v974
        %v4245 = vunpack.c.l.b16 %v975
        %v4246 = vunpack.c.h.b16 %v975
        %v4247 = vunpack.c.l.b16 %v976
        %v4248 = vunpack.c.h.b16 %v976
        %v4249 = vunpack.c.l.b16 %v977
        %v4250 = vunpack.c.h.b16 %v977
        %v4251 = vunpack.c.l.b16 %v978
        %v4252 = vunpack.c.h.b16 %v978
        %v4253 = vunpack.c.l.b16 %v979
        %v4254 = vunpack.c.h.b16 %v979
        %v4255 = vunpack.c.l.b16 %v980
        %v4256 = vunpack.c.h.b16 %v980
        %v4257 = vunpack.c.l.b16 %v981
        %v4258 = vunpack.c.h.b16 %v981
        %v4259 = vunpack.c.l.b16 %v982
        %v4260 = vunpack.c.h.b16 %v982
        %v4261 = vunpack.c.l.b16 %v983
        %v4262 = vunpack.c.h.b16 %v983
        %v4263 = vunpack.c.l.b16 %v984
        %v4264 = vunpack.c.h.b16 %v984
        %v4265 = vunpack.c.l.b16 %v985
        %v4266 = vunpack.c.h.b16 %v985
        %v4267 = vunpack.c.l.b16 %v986
        %v4268 = vunpack.c.h.b16 %v986
        %v4269 = vunpack.c.l.b16 %v987
        %v4270 = vunpack.c.h.b16 %v987
        %v4271 = vunpack.c.l.b16 %v988
        %v4272 = vunpack.c.h.b16 %v988
        %v4273 = vunpack.c.l.b16 %v989
        %v4274 = vunpack.c.h.b16 %v989
        %v4275 = vunpack.c.l.b16 %v990
        %v4276 = vunpack.c.h.b16 %v990
        %v4277 = vunpack.c.l.b16 %v991
        %v4278 = vunpack.c.h.b16 %v991
        %v4279 = vunpack.c.l.b16 %v992
        %v4280 = vunpack.c.h.b16 %v992
        %v4281 = vunpack.c.l.b16 %v993
        %v4282 = vunpack.c.h.b16 %v993
        %v4283 = vunpack.c.l.b16 %v994
        %v4284 = vunpack.c.h.b16 %v994
        %v4285 = vunpack.c.l.b16 %v995
        %v4286 = vunpack.c.h.b16 %v995
        %v4287 = vunpack.c.l.b16 %v996
        %v4288 = vunpack.c.h.b16 %v996
        %v4289 = vunpack.c.l.b16 %v997
        %v4290 = vunpack.c.h.b16 %v997
        %v4291 = vunpack.c.l.b16 %v998
        %v4292 = vunpack.c.h.b16 %v998
        %v4293 = vunpack.c.l.b16 %v999
        %v4294 = vunpack.c.h.b16 %v999
        %v4295 = vunpack.c.l.b16 %v1000
        %v4296 = vunpack.c.h.b16 %v1000
        %v4297 = vunpack.c.l.b16 %v1001
        %v4298 = vunpack.c.h.b16 %v1001
        %v4299 = vunpack.c.l.b16 %v1002
        %v4300 = vunpack.c.h.b16 %v1002
        %v4301 = vunpack.c.l.b16 %v1003
        %v4302 = vunpack.c.h.b16 %v1003
        %v4303 = vunpack.c.l.b16 %v1004
        %v4304 = vunpack.c.h.b16 %v1004
        %v4305 = vunpack.c.l.b16 %v1005
        %v4306 = vunpack.c.h.b16 %v1005
        %v4307 = vunpack.c.l.b16 %v1006
        %v4308 = vunpack.c.h.b16 %v1006
        %v4309 = vunpack.c.l.b16 %v1007
        %v4310 = vunpack.c.h.b16 %v1007
        %v4311 = vunpack.c.l.b16 %v1008
        %v4312 = vunpack.c.h.b16 %v1008
        %v4313 = vunpack.c.l.b16 %v1009
        %v4314 = vunpack.c.h.b16 %v1009
        %v4315 = vunpack.c.l.b16 %v1010
        %v4316 = vunpack.c.h.b16 %v1010
        %v4317 = vunpack.c.l.b16 %v1011
        %v4318 = vunpack.c.h.b16 %v1011
        %v4319 = vunpack.c.l.b16 %v1012
        %v4320 = vunpack.c.h.b16 %v1012
        %v4321 = vunpack.c.l.b16 %v1013
        %v4322 = vunpack.c.h.b16 %v1013
        %v4323 = vunpack.c.l.b16 %v1014
        %v4324 = vunpack.c.h.b16 %v1014
        %v4325 = vunpack.c.l.b16 %v1015
        %v4326 = vunpack.c.h.b16 %v1015
        %v4327 = vunpack.c.l.b16 %v1016
        %v4328 = vunpack.c.h.b16 %v1016
        %v4329 = vunpack.c.l.b16 %v1017
        %v4330 = vunpack.c.h.b16 %v1017
        %v4331 = vunpack.c.l.b16 %v1018
        %v4332 = vunpack.c.h.b16 %v1018
        %v4333 = vunpack.c.l.b16 %v1019
        %v4334 = vunpack.c.h.b16 %v1019
        %v4335 = vunpack.c.l.b16 %v1020
        %v4336 = vunpack.c.h.b16 %v1020
        %v4337 = vunpack.c.l.b16 %v1021
        %v4338 = vunpack.c.h.b16 %v1021
        %v4339 = vunpack.c.l.b16 %v1022
        %v4340 = vunpack.c.h.b16 %v1022
        %v4341 = vunpack.c.l.b16 %v1023
        %v4342 = vunpack.c.h.b16 %v1023
        %v4343 = vunpack.c.l.b16 %v1024
        %v4344 = vunpack.c.h.b16 %v1024
        %v4345 = vunpack.c.l.b16 %v1025
        %v4346 = vunpack.c.h.b16 %v1025
        %v4347 = vunpack.c.l.b16 %v1026
        %v4348 = vunpack.c.h.b16 %v1026
        %v4349 = vunpack.c.l.b16 %v1027
        %v4350 = vunpack.c.h.b16 %v1027
        %v4351 = vunpack.c.l.b16 %v1028
        %v4352 = vunpack.c.h.b16 %v1028
        %v4353 = vunpack.c.l.b16 %v1029
        %v4354 = vunpack.c.h.b16 %v1029
        %v4355 = vunpack.c.l.b16 %v1030
        %v4356 = vunpack.c.h.b16 %v1030
        %v4357 = vunpack.c.l.b16 %v1031
        %v4358 = vunpack.c.h.b16 %v1031
        %v4359 = vunpack.c.l.b16 %v1032
        %v4360 = vunpack.c.h.b16 %v1032
        %v4361 = vunpack.c.l.b16 %v1033
        %v4362 = vunpack.c.h.b16 %v1033
        %v4363 = vunpack.c.l.b16 %v1034
        %v4364 = vunpack.c.h.b16 %v1034
        %v4365 = vunpack.c.l.b16 %v1035
        %v4366 = vunpack.c.h.b16 %v1035
        %v4367 = vunpack.c.l.b16 %v1036
        %v4368 = vunpack.c.h.b16 %v1036
        %v4369 = vunpack.c.l.b16 %v1037
        %v4370 = vunpack.c.h.b16 %v1037
        %v4371 = vunpack.c.l.b16 %v1038
        %v4372 = vunpack.c.h.b16 %v1038
        %v4373 = vunpack.c.l.b16 %v1039
        %v4374 = vunpack.c.h.b16 %v1039
        %v4375 = vunpack.c.l.b16 %v1040
        %v4376 = vunpack.c.h.b16 %v1040
        %v4377 = vunpack.c.l.b16 %v1041
        %v4378 = vunpack.c.h.b16 %v1041
        %v4379 = vunpack.c.l.b16 %v1042
        %v4380 = vunpack.c.h.b16 %v1042
        %v4381 = vunpack.c.l.b16 %v1043
        %v4382 = vunpack.c.h.b16 %v1043
        %v4383 = vunpack.c.l.b16 %v1044
        %v4384 = vunpack.c.h.b16 %v1044
        %v4385 = vunpack.c.l.b16 %v1045
        %v4386 = vunpack.c.h.b16 %v1045
        %v4387 = vunpack.c.l.b16 %v1046
        %v4388 = vunpack.c.h.b16 %v1046
        %v4389 = vunpack.c.l.b16 %v1047
        %v4390 = vunpack.c.h.b16 %v1047
        %v4391 = vunpack.c.l.b16 %v1048
        %v4392 = vunpack.c.h.b16 %v1048
        %v4393 = vunpack.c.l.b16 %v1049
        %v4394 = vunpack.c.h.b16 %v1049
        %v4395 = vunpack.c.l.b16 %v1050
        %v4396 = vunpack.c.h.b16 %v1050
        %v4397 = vunpack.c.l.b16 %v1051
        %v4398 = vunpack.c.h.b16 %v1051
        %v4399 = vunpack.c.l.b16 %v1052
        %v4400 = vunpack.c.h.b16 %v1052
        %v4401 = vunpack.c.l.b16 %v1053
        %v4402 = vunpack.c.h.b16 %v1053
        %v4403 = vunpack.c.l.b16 %v1054
        %v4404 = vunpack.c.h.b16 %v1054
        %v4405 = vunpack.c.l.b16 %v1055
        %v4406 = vunpack.c.h.b16 %v1055
        %v4407 = vunpack.c.l.b16 %v1056
        %v4408 = vunpack.c.h.b16 %v1056
        %v4409 = vunpack.c.l.b16 %v1057
        %v4410 = vunpack.c.h.b16 %v1057
        %v4411 = vunpack.c.l.b16 %v1058
        %v4412 = vunpack.c.h.b16 %v1058
        %v4413 = vunpack.c.l.b16 %v1059
        %v4414 = vunpack.c.h.b16 %v1059
        %v4415 = vunpack.c.l.b16 %v1060
        %v4416 = vunpack.c.h.b16 %v1060
        %v4417 = vunpack.c.l.b16 %v1061
        %v4418 = vunpack.c.h.b16 %v1061
        %v4419 = vunpack.c.l.b16 %v1062
        %v4420 = vunpack.c.h.b16 %v1062
        %v4421 = vunpack.c.l.b16 %v1063
        %v4422 = vunpack.c.h.b16 %v1063
        %v4423 = vunpack.c.l.b16 %v1064
        %v4424 = vunpack.c.h.b16 %v1064
        %v4425 = vunpack.c.l.b16 %v1065
        %v4426 = vunpack.c.h.b16 %v1065
        %v4427 = vunpack.c.l.b16 %v1066
        %v4428 = vunpack.c.h.b16 %v1066
        %v4429 = vunpack.c.l.b16 %v1067
        %v4430 = vunpack.c.h.b16 %v1067
        %v4431 = vunpack.c.l.b16 %v1068
        %v4432 = vunpack.c.h.b16 %v1068
        %v4433 = vunpack.c.l.b16 %v1069
        %v4434 = vunpack.c.h.b16 %v1069
        %v4435 = vunpack.c.l.b16 %v1070
        %v4436 = vunpack.c.h.b16 %v1070
        %v4437 = vunpack.c.l.b16 %v1071
        %v4438 = vunpack.c.h.b16 %v1071
        %v4439 = vunpack.c.l.b16 %v1072
        %v4440 = vunpack.c.h.b16 %v1072
        %v4441 = vunpack.c.l.b16 %v1073
        %v4442 = vunpack.c.h.b16 %v1073
        %v4443 = vunpack.c.l.b16 %v1074
        %v4444 = vunpack.c.h.b16 %v1074
        %v4445 = vunpack.c.l.b16 %v1075
        %v4446 = vunpack.c.h.b16 %v1075
        %v4447 = vunpack.c.l.b16 %v1076
        %v4448 = vunpack.c.h.b16 %v1076
        %v4449 = vunpack.c.l.b16 %v1077
        %v4450 = vunpack.c.h.b16 %v1077
        %v4451 = vunpack.c.l.b16 %v1078
        %v4452 = vunpack.c.h.b16 %v1078
        %v4453 = vunpack.c.l.b16 %v1079
        %v4454 = vunpack.c.h.b16 %v1079
        %v4455 = vunpack.c.l.b16 %v1080
        %v4456 = vunpack.c.h.b16 %v1080
        %v4457 = vunpack.c.l.b16 %v1081
        %v4458 = vunpack.c.h.b16 %v1081
        %v4459 = vunpack.c.l.b16 %v1082
        %v4460 = vunpack.c.h.b16 %v1082
        %v4461 = vunpack.c.l.b16 %v1083
        %v4462 = vunpack.c.h.b16 %v1083
        %v4463 = vunpack.c.l.b16 %v1084
        %v4464 = vunpack.c.h.b16 %v1084
        %v4465 = vunpack.c.l.b16 %v1085
        %v4466 = vunpack.c.h.b16 %v1085
        %v4467 = vunpack.c.l.b16 %v1086
        %v4468 = vunpack.c.h.b16 %v1086
        %v4469 = vunpack.c.l.b16 %v1087
        %v4470 = vunpack.c.h.b16 %v1087
        %v4471 = vunpack.c.l.b16 %v1088
        %v4472 = vunpack.c.h.b16 %v1088
        %v4473 = vunpack.c.l.b16 %v1089
        %v4474 = vunpack.c.h.b16 %v1089
        %v4475 = vunpack.c.l.b16 %v1090
        %v4476 = vunpack.c.h.b16 %v1090
        %v4477 = vunpack.c.l.b16 %v1091
        %v4478 = vunpack.c.h.b16 %v1091
        %v4479 = vunpack.c.l.b16 %v1092
        %v4480 = vunpack.c.h.b16 %v1092
        %v4481 = vunpack.c.l.b16 %v1093
        %v4482 = vunpack.c.h.b16 %v1093
        %v4483 = vunpack.c.l.b16 %v1094
        %v4484 = vunpack.c.h.b16 %v1094
        %v4485 = vunpack.c.l.b16 %v1095
        %v4486 = vunpack.c.h.b16 %v1095
        %v4487 = vunpack.c.l.b16 %v1096
        %v4488 = vunpack.c.h.b16 %v1096
        %v4489 = vunpack.c.l.b16 %v1097
        %v4490 = vunpack.c.h.b16 %v1097
        %v4491 = vunpack.c.l.b16 %v1098
        %v4492 = vunpack.c.h.b16 %v1098
        %v4493 = vunpack.c.l.b16 %v1099
        %v4494 = vunpack.c.h.b16 %v1099
        %v4495 = vunpack.c.l.b16 %v1100
        %v4496 = vunpack.c.h.b16 %v1100
        %v4497 = vunpack.c.l.b16 %v1101
        %v4498 = vunpack.c.h.b16 %v1101
        %v4499 = vunpack.c.l.b16 %v1102
        %v4500 = vunpack.c.h.b16 %v1102
        %v4501 = vunpack.c.l.b16 %v1103
        %v4502 = vunpack.c.h.b16 %v1103
        %v4503 = vunpack.c.l.b16 %v1104
        %v4504 = vunpack.c.h.b16 %v1104
        %v4505 = vunpack.c.l.b16 %v1105
        %v4506 = vunpack.c.h.b16 %v1105
        %v4507 = vunpack.c.l.b16 %v1106
        %v4508 = vunpack.c.h.b16 %v1106
        %v4509 = vunpack.c.l.b16 %v1107
        %v4510 = vunpack.c.h.b16 %v1107
        %v4511 = vunpack.c.l.b16 %v1108
        %v4512 = vunpack.c.h.b16 %v1108
        %v4513 = vunpack.c.l.b16 %v1109
        %v4514 = vunpack.c.h.b16 %v1109
        %v4515 = vunpack.c.l.b16 %v1110
        %v4516 = vunpack.c.h.b16 %v1110
        %v4517 = vunpack.c.l.b16 %v1111
        %v4518 = vunpack.c.h.b16 %v1111
        %v4519 = vunpack.c.l.b16 %v1112
        %v4520 = vunpack.c.h.b16 %v1112
        %v4521 = vunpack.c.l.b16 %v1113
        %v4522 = vunpack.c.h.b16 %v1113
        %v4523 = vunpack.c.l.b16 %v1114
        %v4524 = vunpack.c.h.b16 %v1114
        %v4525 = vunpack.c.l.b16 %v1115
        %v4526 = vunpack.c.h.b16 %v1115
        %v4527 = vunpack.c.l.b16 %v1116
        %v4528 = vunpack.c.h.b16 %v1116
        %v4529 = vunpack.c.l.b16 %v1117
        %v4530 = vunpack.c.h.b16 %v1117
        %v4531 = vunpack.c.l.b16 %v1118
        %v4532 = vunpack.c.h.b16 %v1118
        %v4533 = vunpack.c.l.b16 %v1119
        %v4534 = vunpack.c.h.b16 %v1119
        %v4535 = vunpack.c.l.b16 %v1120
        %v4536 = vunpack.c.h.b16 %v1120
        %v4537 = vunpack.c.l.b16 %v1121
        %v4538 = vunpack.c.h.b16 %v1121
        %v4539 = vunpack.c.l.b16 %v1122
        %v4540 = vunpack.c.h.b16 %v1122
        %v4541 = vunpack.c.l.b16 %v1123
        %v4542 = vunpack.c.h.b16 %v1123
        %v4543 = vunpack.c.l.b16 %v1124
        %v4544 = vunpack.c.h.b16 %v1124
        %v4545 = vunpack.c.l.b16 %v1125
        %v4546 = vunpack.c.h.b16 %v1125
        %v4547 = vunpack.c.l.b16 %v1126
        %v4548 = vunpack.c.h.b16 %v1126
        %v4549 = vunpack.c.l.b16 %v1127
        %v4550 = vunpack.c.h.b16 %v1127
        %v4551 = vunpack.c.l.b16 %v1128
        %v4552 = vunpack.c.h.b16 %v1128
        %v4553 = vunpack.c.l.b16 %v1129
        %v4554 = vunpack.c.h.b16 %v1129
        %v4555 = vunpack.c.l.b16 %v1130
        %v4556 = vunpack.c.h.b16 %v1130
        %v4557 = vunpack.c.l.b16 %v1131
        %v4558 = vunpack.c.h.b16 %v1131
        %v4559 = vunpack.c.l.b16 %v1132
        %v4560 = vunpack.c.h.b16 %v1132
        %v4561 = vunpack.c.l.b16 %v1133
        %v4562 = vunpack.c.h.b16 %v1133
        %v4563 = vunpack.c.l.b16 %v1134
        %v4564 = vunpack.c.h.b16 %v1134
        %v4565 = vunpack.c.l.b16 %v1135
        %v4566 = vunpack.c.h.b16 %v1135
        %v4567 = vunpack.c.l.b16 %v1136
        %v4568 = vunpack.c.h.b16 %v1136
        %v4569 = vunpack.c.l.b16 %v1137
        %v4570 = vunpack.c.h.b16 %v1137
        %v4571 = vunpack.c.l.b16 %v1138
        %v4572 = vunpack.c.h.b16 %v1138
        %v4573 = vunpack.c.l.b16 %v1139
        %v4574 = vunpack.c.h.b16 %v1139
        %v4575 = vunpack.c.l.b16 %v1140
        %v4576 = vunpack.c.h.b16 %v1140
        %v4577 = vunpack.c.l.b16 %v1141
        %v4578 = vunpack.c.h.b16 %v1141
        %v4579 = vunpack.c.l.b16 %v1142
        %v4580 = vunpack.c.h.b16 %v1142
        %v4581 = vunpack.c.l.b16 %v1143
        %v4582 = vunpack.c.h.b16 %v1143
        %v4583 = vunpack.c.l.b16 %v1144
        %v4584 = vunpack.c.h.b16 %v1144
        %v4585 = vunpack.c.l.b16 %v1145
        %v4586 = vunpack.c.h.b16 %v1145
        %v4587 = vunpack.c.l.b16 %v1146
        %v4588 = vunpack.c.h.b16 %v1146
        %v4589 = vunpack.c.l.b16 %v1147
        %v4590 = vunpack.c.h.b16 %v1147
        %v4591 = vunpack.c.l.b16 %v1148
        %v4592 = vunpack.c.h.b16 %v1148
        %v4593 = vunpack.c.l.b16 %v1149
        %v4594 = vunpack.c.h.b16 %v1149
        %v4595 = vunpack.c.l.b16 %v1150
        %v4596 = vunpack.c.h.b16 %v1150
        %v4597 = vunpack.c.l.b16 %v1151
        %v4598 = vunpack.c.h.b16 %v1151
        %v4599 = vunpack.c.l.b16 %v1152
        %v4600 = vunpack.c.h.b16 %v1152
        %v4601 = vunpack.c.l.b16 %v1153
        %v4602 = vunpack.c.h.b16 %v1153
        %v4603 = vunpack.c.l.b16 %v1154
        %v4604 = vunpack.c.h.b16 %v1154
        %v4605 = vunpack.c.l.b16 %v1155
        %v4606 = vunpack.c.h.b16 %v1155
        %v4607 = vunpack.c.l.b16 %v1156
        %v4608 = vunpack.c.h.b16 %v1156
        %v4609 = vunpack.c.l.b16 %v1157
        %v4610 = vunpack.c.h.b16 %v1157
        %v4611 = vunpack.c.l.b16 %v1158
        %v4612 = vunpack.c.h.b16 %v1158
        %v4613 = vunpack.c.l.b16 %v1159
        %v4614 = vunpack.c.h.b16 %v1159
        %v4615 = vunpack.c.l.b16 %v1160
        %v4616 = vunpack.c.h.b16 %v1160
        %v4617 = vunpack.c.l.b16 %v1161
        %v4618 = vunpack.c.h.b16 %v1161
        %v4619 = vunpack.c.l.b16 %v1162
        %v4620 = vunpack.c.h.b16 %v1162
        %v4621 = vunpack.c.l.b16 %v1163
        %v4622 = vunpack.c.h.b16 %v1163
        %v4623 = vunpack.c.l.b16 %v1164
        %v4624 = vunpack.c.h.b16 %v1164
        %v4625 = vunpack.c.l.b16 %v1165
        %v4626 = vunpack.c.h.b16 %v1165
        %v4627 = vunpack.c.l.b16 %v1166
        %v4628 = vunpack.c.h.b16 %v1166
        %v4629 = vunpack.c.l.b16 %v1167
        %v4630 = vunpack.c.h.b16 %v1167
        %v4631 = vunpack.c.l.b16 %v1168
        %v4632 = vunpack.c.h.b16 %v1168
        %v4633 = vunpack.c.l.b16 %v1169
        %v4634 = vunpack.c.h.b16 %v1169
        %v4635 = vunpack.c.l.b16 %v1170
        %v4636 = vunpack.c.h.b16 %v1170
        %v4637 = vunpack.c.l.b16 %v1171
        %v4638 = vunpack.c.h.b16 %v1171
        %v4639 = vunpack.c.l.b16 %v1172
        %v4640 = vunpack.c.h.b16 %v1172
        %v4641 = vunpack.c.l.b16 %v1173
        %v4642 = vunpack.c.h.b16 %v1173
        %v4643 = vunpack.c.l.b16 %v1174
        %v4644 = vunpack.c.h.b16 %v1174
        %v4645 = vunpack.c.l.b16 %v1175
        %v4646 = vunpack.c.h.b16 %v1175
        %v4647 = vunpack.c.l.b16 %v1176
        %v4648 = vunpack.c.h.b16 %v1176
        %v4649 = vunpack.c.l.b16 %v1177
        %v4650 = vunpack.c.h.b16 %v1177
        %v4651 = vunpack.c.l.b16 %v1178
        %v4652 = vunpack.c.h.b16 %v1178
        %v4653 = vunpack.c.l.b16 %v1179
        %v4654 = vunpack.c.h.b16 %v1179
        %v4655 = vunpack.c.l.b16 %v1180
        %v4656 = vunpack.c.h.b16 %v1180
        %v4657 = vunpack.c.l.b16 %v1181
        %v4658 = vunpack.c.h.b16 %v1181
        %v4659 = vunpack.c.l.b16 %v1182
        %v4660 = vunpack.c.h.b16 %v1182
        %v4661 = vunpack.c.l.b16 %v1183
        %v4662 = vunpack.c.h.b16 %v1183
        %v4663 = vunpack.c.l.b16 %v1184
        %v4664 = vunpack.c.h.b16 %v1184
        %v4665 = vunpack.c.l.b16 %v1185
        %v4666 = vunpack.c.h.b16 %v1185
        %v4667 = vunpack.c.l.b16 %v1186
        %v4668 = vunpack.c.h.b16 %v1186
        %v4669 = vunpack.c.l.b16 %v1187
        %v4670 = vunpack.c.h.b16 %v1187
        %v4671 = vunpack.c.l.b16 %v1188
        %v4672 = vunpack.c.h.b16 %v1188
        %v4673 = vunpack.c.l.b16 %v1189
        %v4674 = vunpack.c.h.b16 %v1189
        %v4675 = vunpack.c.l.b16 %v1190
        %v4676 = vunpack.c.h.b16 %v1190
        %v4677 = vunpack.c.l.b16 %v1191
        %v4678 = vunpack.c.h.b16 %v1191
        %v4679 = vunpack.c.l.b16 %v1192
        %v4680 = vunpack.c.h.b16 %v1192
        %v4681 = vunpack.c.l.b16 %v1193
        %v4682 = vunpack.c.h.b16 %v1193
        %v4683 = vunpack.c.l.b16 %v1194
        %v4684 = vunpack.c.h.b16 %v1194
        %v4685 = vunpack.c.l.b16 %v1195
        %v4686 = vunpack.c.h.b16 %v1195
        %v4687 = vunpack.c.l.b16 %v1196
        %v4688 = vunpack.c.h.b16 %v1196
        %v4689 = vunpack.c.l.b16 %v1197
        %v4690 = vunpack.c.h.b16 %v1197
        %v4691 = vunpack.c.l.b16 %v1198
        %v4692 = vunpack.c.h.b16 %v1198
        %v4693 = vunpack.c.l.b16 %v1199
        %v4694 = vunpack.c.h.b16 %v1199
        %v4695 = vunpack.c.l.b16 %v1200
        %v4696 = vunpack.c.h.b16 %v1200
        %v4697 = vunpack.c.l.b16 %v1201
        %v4698 = vunpack.c.h.b16 %v1201
        %v4699 = vunpack.c.l.b16 %v1202
        %v4700 = vunpack.c.h.b16 %v1202
        %v4701 = vunpack.c.l.b16 %v1203
        %v4702 = vunpack.c.h.b16 %v1203
        %v4703 = vunpack.c.l.b16 %v1204
        %v4704 = vunpack.c.h.b16 %v1204
        %v4705 = vunpack.c.l.b16 %v1205
        %v4706 = vunpack.c.h.b16 %v1205
        %v4707 = vunpack.c.l.b16 %v1206
        %v4708 = vunpack.c.h.b16 %v1206
        %v4709 = vunpack.c.l.b16 %v1207
        %v4710 = vunpack.c.h.b16 %v1207
        %v4711 = vunpack.c.l.b16 %v1208
        %v4712 = vunpack.c.h.b16 %v1208
        %v4713 = vunpack.c.l.b16 %v1209
        %v4714 = vunpack.c.h.b16 %v1209
        %v4715 = vunpack.c.l.b16 %v1210
        %v4716 = vunpack.c.h.b16 %v1210
        %v4717 = vunpack.c.l.b16 %v1211
        %v4718 = vunpack.c.h.b16 %v1211
        %v4719 = vunpack.c.l.b16 %v1212
        %v4720 = vunpack.c.h.b16 %v1212
        %v4721 = vunpack.c.l.b16 %v1213
        %v4722 = vunpack.c.h.b16 %v1213
        %v4723 = vunpack.c.l.b16 %v1214
        %v4724 = vunpack.c.h.b16 %v1214
        %v4725 = vunpack.c.l.b16 %v1215
        %v4726 = vunpack.c.h.b16 %v1215
        %v4727 = vunpack.c.l.b16 %v1216
        %v4728 = vunpack.c.h.b16 %v1216
        %v4729 = vunpack.c.l.b16 %v1217
        %v4730 = vunpack.c.h.b16 %v1217
        %v4731 = vunpack.c.l.b16 %v1218
        %v4732 = vunpack.c.h.b16 %v1218
        %v4733 = vunpack.c.l.b16 %v1219
        %v4734 = vunpack.c.h.b16 %v1219
        %v4735 = vunpack.c.l.b16 %v1220
        %v4736 = vunpack.c.h.b16 %v1220
        %v4737 = vunpack.c.l.b16 %v1221
        %v4738 = vunpack.c.h.b16 %v1221
        %v4739 = vunpack.c.l.b16 %v1222
        %v4740 = vunpack.c.h.b16 %v1222
        %v4741 = vunpack.c.l.b16 %v1223
        %v4742 = vunpack.c.h.b16 %v1223
        %v4743 = vunpack.c.l.b16 %v1224
        %v4744 = vunpack.c.h.b16 %v1224
        %v4745 = vunpack.c.l.b16 %v1225
        %v4746 = vunpack.c.h.b16 %v1225
        %v4747 = vunpack.c.l.b16 %v1226
        %v4748 = vunpack.c.h.b16 %v1226
        %v4749 = vunpack.c.l.b16 %v1227
        %v4750 = vunpack.c.h.b16 %v1227
        %v4751 = vunpack.c.l.b16 %v1228
        %v4752 = vunpack.c.h.b16 %v1228
        %v4753 = vunpack.c.l.b16 %v1229
        %v4754 = vunpack.c.h.b16 %v1229
        %v4755 = vunpack.c.l.b16 %v1230
        %v4756 = vunpack.c.h.b16 %v1230
        %v4757 = vunpack.c.l.b16 %v1231
        %v4758 = vunpack.c.h.b16 %v1231
        %v4759 = vunpack.c.l.b16 %v1232
        %v4760 = vunpack.c.h.b16 %v1232
        %v4761 = vunpack.c.l.b16 %v1233
        %v4762 = vunpack.c.h.b16 %v1233
        %v4763 = vunpack.c.l.b16 %v1234
        %v4764 = vunpack.c.h.b16 %v1234
        %v4765 = vunpack.c.l.b16 %v1235
        %v4766 = vunpack.c.h.b16 %v1235
        %v4767 = vunpack.c.l.b16 %v1236
        %v4768 = vunpack.c.h.b16 %v1236
        %v4769 = vunpack.c.l.b16 %v1237
        %v4770 = vunpack.c.h.b16 %v1237
        %v4771 = vunpack.c.l.b16 %v1238
        %v4772 = vunpack.c.h.b16 %v1238
        %v4773 = vunpack.c.l.b16 %v1239
        %v4774 = vunpack.c.h.b16 %v1239
        %v4775 = vunpack.c.l.b16 %v1240
        %v4776 = vunpack.c.h.b16 %v1240
        %v4777 = vpack.c.b16 %v2731, %v2729
        %v4778 = vpack.c.b16 %v2732, %v2730
        %v4779 = vpack.c.b16 %v2735, %v2733
        %v4780 = vpack.c.b16 %v2736, %v2734
        %v4781 = vpack.c.b16 %v2739, %v2737
        %v4782 = vpack.c.b16 %v2740, %v2738
        %v4783 = vpack.c.b16 %v2743, %v2741
        %v4784 = vpack.c.b16 %v2744, %v2742
        %v4785 = vpack.c.b16 %v2747, %v2745
        %v4786 = vpack.c.b16 %v2748, %v2746
        %v4787 = vpack.c.b16 %v2751, %v2749
        %v4788 = vpack.c.b16 %v2752, %v2750
        %v4789 = vpack.c.b16 %v2755, %v2753
        %v4790 = vpack.c.b16 %v2756, %v2754
        %v4791 = vpack.c.b16 %v2759, %v2757
        %v4792 = vpack.c.b16 %v2760, %v2758
        %v4793 = vpack.c.b16 %v2763, %v2761
        %v4794 = vpack.c.b16 %v2764, %v2762
        %v4795 = vpack.c.b16 %v2767, %v2765
        %v4796 = vpack.c.b16 %v2768, %v2766
        %v4797 = vpack.c.b16 %v2771, %v2769
        %v4798 = vpack.c.b16 %v2772, %v2770
        %v4799 = vpack.c.b16 %v2775, %v2773
        %v4800 = vpack.c.b16 %v2776, %v2774
        %v4801 = vpack.c.b16 %v2779, %v2777
        %v4802 = vpack.c.b16 %v2780, %v2778
        %v4803 = vpack.c.b16 %v2783, %v2781
        %v4804 = vpack.c.b16 %v2784, %v2782
        %v4805 = vpack.c.b16 %v2787, %v2785
        %v4806 = vpack.c.b16 %v2788, %v2786
        %v4807 = vpack.c.b16 %v2791, %v2789
        %v4808 = vpack.c.b16 %v2792, %v2790
        %v4809 = vpack.c.b16 %v2795, %v2793
        %v4810 = vpack.c.b16 %v2796, %v2794
        %v4811 = vpack.c.b16 %v2799, %v2797
        %v4812 = vpack.c.b16 %v2800, %v2798
        %v4813 = vpack.c.b16 %v2803, %v2801
        %v4814 = vpack.c.b16 %v2804, %v2802
        %v4815 = vpack.c.b16 %v2807, %v2805
        %v4816 = vpack.c.b16 %v2808, %v2806
        %v4817 = vpack.c.b16 %v2811, %v2809
        %v4818 = vpack.c.b16 %v2812, %v2810
        %v4819 = vpack.c.b16 %v2815, %v2813
        %v4820 = vpack.c.b16 %v2816, %v2814
        %v4821 = vpack.c.b16 %v2819, %v2817
        %v4822 = vpack.c.b16 %v2820, %v2818
        %v4823 = vpack.c.b16 %v2823, %v2821
        %v4824 = vpack.c.b16 %v2824, %v2822
        %v4825 = vpack.c.b16 %v2827, %v2825
        %v4826 = vpack.c.b16 %v2828, %v2826
        %v4827 = vpack.c.b16 %v2831, %v2829
        %v4828 = vpack.c.b16 %v2832, %v2830
        %v4829 = vpack.c.b16 %v2835, %v2833
        %v4830 = vpack.c.b16 %v2836, %v2834
        %v4831 = vpack.c.b16 %v2839, %v2837
        %v4832 = vpack.c.b16 %v2840, %v2838
        %v4833 = vpack.c.b16 %v2843, %v2841
        %v4834 = vpack.c.b16 %v2844, %v2842
        %v4835 = vpack.c.b16 %v2847, %v2845
        %v4836 = vpack.c.b16 %v2848, %v2846
        %v4837 = vpack.c.b16 %v2851, %v2849
        %v4838 = vpack.c.b16 %v2852, %v2850
        %v4839 = vpack.c.b16 %v2855, %v2853
        %v4840 = vpack.c.b16 %v2856, %v2854
        %v4841 = vpack.c.b16 %v2859, %v2857
        %v4842 = vpack.c.b16 %v2860, %v2858
        %v4843 = vpack.c.b16 %v2863, %v2861
        %v4844 = vpack.c.b16 %v2864, %v2862
        %v4845 = vpack.c.b16 %v2867, %v2865
        %v4846 = vpack.c.b16 %v2868, %v2866
        %v4847 = vpack.c.b16 %v2871, %v2869
        %v4848 = vpack.c.b16 %v2872, %v2870
        %v4849 = vpack.c.b16 %v2875, %v2873
        %v4850 = vpack.c.b16 %v2876, %v2874
        %v4851 = vpack.c.b16 %v2879, %v2877
        %v4852 = vpack.c.b16 %v2880, %v2878
        %v4853 = vpack.c.b16 %v2883, %v2881
        %v4854 = vpack.c.b16 %v2884, %v2882
        %v4855 = vpack.c.b16 %v2887, %v2885
        %v4856 = vpack.c.b16 %v2888, %v2886
        %v4857 = vpack.c.b16 %v2891, %v2889
        %v4858 = vpack.c.b16 %v2892, %v2890
        %v4859 = vpack.c.b16 %v2895, %v2893
        %v4860 = vpack.c.b16 %v2896, %v2894
        %v4861 = vpack.c.b16 %v2899, %v2897
        %v4862 = vpack.c.b16 %v2900, %v2898
        %v4863 = vpack.c.b16 %v2903, %v2901
        %v4864 = vpack.c.b16 %v2904, %v2902
        %v4865 = vpack.c.b16 %v2907, %v2905
        %v4866 = vpack.c.b16 %v2908, %v2906
        %v4867 = vpack.c.b16 %v2911, %v2909
        %v4868 = vpack.c.b16 %v2912, %v2910
        %v4869 = vpack.c.b16 %v2915, %v2913
        %v4870 = vpack.c.b16 %v2916, %v2914
        %v4871 = vpack.c.b16 %v2919, %v2917
        %v4872 = vpack.c.b16 %v2920, %v2918
        %v4873 = vpack.c.b16 %v2923, %v2921
        %v4874 = vpack.c.b16 %v2924, %v2922
        %v4875 = vpack.c.b16 %v2927, %v2925
        %v4876 = vpack.c.b16 %v2928, %v2926
        %v4877 = vpack.c.b16 %v2931, %v2929
        %v4878 = vpack.c.b16 %v2932, %v2930
        %v4879 = vpack.c.b16 %v2935, %v2933
        %v4880 = vpack.c.b16 %v2936, %v2934
        %v4881 = vpack.c.b16 %v2939, %v2937
        %v4882 = vpack.c.b16 %v2940, %v2938
        %v4883 = vpack.c.b16 %v2943, %v2941
        %v4884 = vpack.c.b16 %v2944, %v2942
        %v4885 = vpack.c.b16 %v2947, %v2945
        %v4886 = vpack.c.b16 %v2948, %v2946
        %v4887 = vpack.c.b16 %v2951, %v2949
        %v4888 = vpack.c.b16 %v2952, %v2950
        %v4889 = vpack.c.b16 %v2955, %v2953
        %v4890 = vpack.c.b16 %v2956, %v2954
        %v4891 = vpack.c.b16 %v2959, %v2957
        %v4892 = vpack.c.b16 %v2960, %v2958
        %v4893 = vpack.c.b16 %v2963, %v2961
        %v4894 = vpack.c.b16 %v2964, %v2962
        %v4895 = vpack.c.b16 %v2967, %v2965
        %v4896 = vpack.c.b16 %v2968, %v2966
        %v4897 = vpack.c.b16 %v2971, %v2969
        %v4898 = vpack.c.b16 %v2972, %v2970
        %v4899 = vpack.c.b16 %v2975, %v2973
        %v4900 = vpack.c.b16 %v2976, %v2974
        %v4901 = vpack.c.b16 %v2979, %v2977
        %v4902 = vpack.c.b16 %v2980, %v2978
        %v4903 = vpack.c.b16 %v2983, %v2981
        %v4904 = vpack.c.b16 %v2984, %v2982
        %v4905 = vpack.c.b16 %v2987, %v2985
        %v4906 = vpack.c.b16 %v2988, %v2986
        %v4907 = vpack.c.b16 %v2991, %v2989
        %v4908 = vpack.c.b16 %v2992, %v2990
        %v4909 = vpack.c.b16 %v2995, %v2993
        %v4910 = vpack.c.b16 %v2996, %v2994
        %v4911 = vpack.c.b16 %v2999, %v2997
        %v4912 = vpack.c.b16 %v3000, %v2998
        %v4913 = vpack.c.b16 %v3003, %v3001
        %v4914 = vpack.c.b16 %v3004, %v3002
        %v4915 = vpack.c.b16 %v3007, %v3005
        %v4916 = vpack.c.b16 %v3008, %v3006
        %v4917 = vpack.c.b16 %v3011, %v3009
        %v4918 = vpack.c.b16 %v3012, %v3010
        %v4919 = vpack.c.b16 %v3015, %v3013
        %v4920 = vpack.c.b16 %v3016, %v3014
        %v4921 = vpack.c.b16 %v3019, %v3017
        %v4922 = vpack.c.b16 %v3020, %v3018
        %v4923 = vpack.c.b16 %v3023, %v3021
        %v4924 = vpack.c.b16 %v3024, %v3022
        %v4925 = vpack.c.b16 %v3027, %v3025
        %v4926 = vpack.c.b16 %v3028, %v3026
        %v4927 = vpack.c.b16 %v3031, %v3029
        %v4928 = vpack.c.b16 %v3032, %v3030
        %v4929 = vpack.c.b16 %v3035, %v3033
        %v4930 = vpack.c.b16 %v3036, %v3034
        %v4931 = vpack.c.b16 %v3039, %v3037
        %v4932 = vpack.c.b16 %v3040, %v3038
        %v4933 = vpack.c.b16 %v3043, %v3041
        %v4934 = vpack.c.b16 %v3044, %v3042
        %v4935 = vpack.c.b16 %v3047, %v3045
        %v4936 = vpack.c.b16 %v3048, %v3046
        %v4937 = vpack.c.b16 %v3051, %v3049
        %v4938 = vpack.c.b16 %v3052, %v3050
        %v4939 = vpack.c.b16 %v3055, %v3053
        %v4940 = vpack.c.b16 %v3056, %v3054
        %v4941 = vpack.c.b16 %v3059, %v3057
        %v4942 = vpack.c.b16 %v3060, %v3058
        %v4943 = vpack.c.b16 %v3063, %v3061
        %v4944 = vpack.c.b16 %v3064, %v3062
        %v4945 = vpack.c.b16 %v3067, %v3065
        %v4946 = vpack.c.b16 %v3068, %v3066
        %v4947 = vpack.c.b16 %v3071, %v3069
        %v4948 = vpack.c.b16 %v3072, %v3070
        %v4949 = vpack.c.b16 %v3075, %v3073
        %v4950 = vpack.c.b16 %v3076, %v3074
        %v4951 = vpack.c.b16 %v3079, %v3077
        %v4952 = vpack.c.b16 %v3080, %v3078
        %v4953 = vpack.c.b16 %v3083, %v3081
        %v4954 = vpack.c.b16 %v3084, %v3082
        %v4955 = vpack.c.b16 %v3087, %v3085
        %v4956 = vpack.c.b16 %v3088, %v3086
        %v4957 = vpack.c.b16 %v3091, %v3089
        %v4958 = vpack.c.b16 %v3092, %v3090
        %v4959 = vpack.c.b16 %v3095, %v3093
        %v4960 = vpack.c.b16 %v3096, %v3094
        %v4961 = vpack.c.b16 %v3099, %v3097
        %v4962 = vpack.c.b16 %v3100, %v3098
        %v4963 = vpack.c.b16 %v3103, %v3101
        %v4964 = vpack.c.b16 %v3104, %v3102
        %v4965 = vpack.c.b16 %v3107, %v3105
        %v4966 = vpack.c.b16 %v3108, %v3106
        %v4967 = vpack.c.b16 %v3111, %v3109
        %v4968 = vpack.c.b16 %v3112, %v3110
        %v4969 = vpack.c.b16 %v3115, %v3113
        %v4970 = vpack.c.b16 %v3116, %v3114
        %v4971 = vpack.c.b16 %v3119, %v3117
        %v4972 = vpack.c.b16 %v3120, %v3118
        %v4973 = vpack.c.b16 %v3123, %v3121
        %v4974 = vpack.c.b16 %v3124, %v3122
        %v4975 = vpack.c.b16 %v3127, %v3125
        %v4976 = vpack.c.b16 %v3128, %v3126
        %v4977 = vpack.c.b16 %v3131, %v3129
        %v4978 = vpack.c.b16 %v3132, %v3130
        %v4979 = vpack.c.b16 %v3135, %v3133
        %v4980 = vpack.c.b16 %v3136, %v3134
        %v4981 = vpack.c.b16 %v3139, %v3137
        %v4982 = vpack.c.b16 %v3140, %v3138
        %v4983 = vpack.c.b16 %v3143, %v3141
        %v4984 = vpack.c.b16 %v3144, %v3142
        %v4985 = vpack.c.b16 %v3147, %v3145
        %v4986 = vpack.c.b16 %v3148, %v3146
        %v4987 = vpack.c.b16 %v3151, %v3149
        %v4988 = vpack.c.b16 %v3152, %v3150
        %v4989 = vpack.c.b16 %v3155, %v3153
        %v4990 = vpack.c.b16 %v3156, %v3154
        %v4991 = vpack.c.b16 %v3159, %v3157
        %v4992 = vpack.c.b16 %v3160, %v3158
        %v4993 = vpack.c.b16 %v3163, %v3161
        %v4994 = vpack.c.b16 %v3164, %v3162
        %v4995 = vpack.c.b16 %v3167, %v3165
        %v4996 = vpack.c.b16 %v3168, %v3166
        %v4997 = vpack.c.b16 %v3171, %v3169
        %v4998 = vpack.c.b16 %v3172, %v3170
        %v4999 = vpack.c.b16 %v3175, %v3173
        %v5000 = vpack.c.b16 %v3176, %v3174
        %v5001 = vpack.c.b16 %v3179, %v3177
        %v5002 = vpack.c.b16 %v3180, %v3178
        %v5003 = vpack.c.b16 %v3183, %v3181
        %v5004 = vpack.c.b16 %v3184, %v3182
        %v5005 = vpack.c.b16 %v3187, %v3185
        %v5006 = vpack.c.b16 %v3188, %v3186
        %v5007 = vpack.c.b16 %v3191, %v3189
        %v5008 = vpack.c.b16 %v3192, %v3190
        %v5009 = vpack.c.b16 %v3195, %v3193
        %v5010 = vpack.c.b16 %v3196, %v3194
        %v5011 = vpack.c.b16 %v3199, %v3197
        %v5012 = vpack.c.b16 %v3200, %v3198
        %v5013 = vpack.c.b16 %v3203, %v3201
        %v5014 = vpack.c.b16 %v3204, %v3202
        %v5015 = vpack.c.b16 %v3207, %v3205
        %v5016 = vpack.c.b16 %v3208, %v3206
        %v5017 = vpack.c.b16 %v3211, %v3209
        %v5018 = vpack.c.b16 %v3212, %v3210
        %v5019 = vpack.c.b16 %v3215, %v3213
        %v5020 = vpack.c.b16 %v3216, %v3214
        %v5021 = vpack.c.b16 %v3219, %v3217
        %v5022 = vpack.c.b16 %v3220, %v3218
        %v5023 = vpack.c.b16 %v3223, %v3221
        %v5024 = vpack.c.b16 %v3224, %v3222
        %v5025 = vpack.c.b16 %v3227, %v3225
        %v5026 = vpack.c.b16 %v3228, %v3226
        %v5027 = vpack.c.b16 %v3231, %v3229
        %v5028 = vpack.c.b16 %v3232, %v3230
        %v5029 = vpack.c.b16 %v3235, %v3233
        %v5030 = vpack.c.b16 %v3236, %v3234
        %v5031 = vpack.c.b16 %v3239, %v3237
        %v5032 = vpack.c.b16 %v3240, %v3238
        %v5033 = vpack.c.b16 %v3243, %v3241
        %v5034 = vpack.c.b16 %v3244, %v3242
        %v5035 = vpack.c.b16 %v3247, %v3245
        %v5036 = vpack.c.b16 %v3248, %v3246
        %v5037 = vpack.c.b16 %v3251, %v3249
        %v5038 = vpack.c.b16 %v3252, %v3250
        %v5039 = vpack.c.b16 %v3255, %v3253
        %v5040 = vpack.c.b16 %v3256, %v3254
        %v5041 = vpack.c.b16 %v3259, %v3257
        %v5042 = vpack.c.b16 %v3260, %v3258
        %v5043 = vpack.c.b16 %v3263, %v3261
        %v5044 = vpack.c.b16 %v3264, %v3262
        %v5045 = vpack.c.b16 %v3267, %v3265
        %v5046 = vpack.c.b16 %v3268, %v3266
        %v5047 = vpack.c.b16 %v3271, %v3269
        %v5048 = vpack.c.b16 %v3272, %v3270
        %v5049 = vpack.c.b16 %v3275, %v3273
        %v5050 = vpack.c.b16 %v3276, %v3274
        %v5051 = vpack.c.b16 %v3279, %v3277
        %v5052 = vpack.c.b16 %v3280, %v3278
        %v5053 = vpack.c.b16 %v3283, %v3281
        %v5054 = vpack.c.b16 %v3284, %v3282
        %v5055 = vpack.c.b16 %v3287, %v3285
        %v5056 = vpack.c.b16 %v3288, %v3286
        %v5057 = vpack.c.b16 %v3291, %v3289
        %v5058 = vpack.c.b16 %v3292, %v3290
        %v5059 = vpack.c.b16 %v3295, %v3293
        %v5060 = vpack.c.b16 %v3296, %v3294
        %v5061 = vpack.c.b16 %v3299, %v3297
        %v5062 = vpack.c.b16 %v3300, %v3298
        %v5063 = vpack.c.b16 %v3303, %v3301
        %v5064 = vpack.c.b16 %v3304, %v3302
        %v5065 = vpack.c.b16 %v3307, %v3305
        %v5066 = vpack.c.b16 %v3308, %v3306
        %v5067 = vpack.c.b16 %v3311, %v3309
        %v5068 = vpack.c.b16 %v3312, %v3310
        %v5069 = vpack.c.b16 %v3315, %v3313
        %v5070 = vpack.c.b16 %v3316, %v3314
        %v5071 = vpack.c.b16 %v3319, %v3317
        %v5072 = vpack.c.b16 %v3320, %v3318
        %v5073 = vpack.c.b16 %v3323, %v3321
        %v5074 = vpack.c.b16 %v3324, %v3322
        %v5075 = vpack.c.b16 %v3327, %v3325
        %v5076 = vpack.c.b16 %v3328, %v3326
        %v5077 = vpack.c.b16 %v3331, %v3329
        %v5078 = vpack.c.b16 %v3332, %v3330
        %v5079 = vpack.c.b16 %v3335, %v3333
        %v5080 = vpack.c.b16 %v3336, %v3334
        %v5081 = vpack.c.b16 %v3339, %v3337
        %v5082 = vpack.c.b16 %v3340, %v3338
        %v5083 = vpack.c.b16 %v3343, %v3341
        %v5084 = vpack.c.b16 %v3344, %v3342
        %v5085 = vpack.c.b16 %v3347, %v3345
        %v5086 = vpack.c.b16 %v3348, %v3346
        %v5087 = vpack.c.b16 %v3351, %v3349
        %v5088 = vpack.c.b16 %v3352, %v3350
        %v5089 = vpack.c.b16 %v3355, %v3353
        %v5090 = vpack.c.b16 %v3356, %v3354
        %v5091 = vpack.c.b16 %v3359, %v3357
        %v5092 = vpack.c.b16 %v3360, %v3358
        %v5093 = vpack.c.b16 %v3363, %v3361
        %v5094 = vpack.c.b16 %v3364, %v3362
        %v5095 = vpack.c.b16 %v3367, %v3365
        %v5096 = vpack.c.b16 %v3368, %v3366
        %v5097 = vpack.c.b16 %v3371, %v3369
        %v5098 = vpack.c.b16 %v3372, %v3370
        %v5099 = vpack.c.b16 %v3375, %v3373
        %v5100 = vpack.c.b16 %v3376, %v3374
        %v5101 = vpack.c.b16 %v3379, %v3377
        %v5102 = vpack.c.b16 %v3380, %v3378
        %v5103 = vpack.c.b16 %v3383, %v3381
        %v5104 = vpack.c.b16 %v3384, %v3382
        %v5105 = vpack.c.b16 %v3387, %v3385
        %v5106 = vpack.c.b16 %v3388, %v3386
        %v5107 = vpack.c.b16 %v3391, %v3389
        %v5108 = vpack.c.b16 %v3392, %v3390
        %v5109 = vpack.c.b16 %v3395, %v3393
        %v5110 = vpack.c.b16 %v3396, %v3394
        %v5111 = vpack.c.b16 %v3399, %v3397
        %v5112 = vpack.c.b16 %v3400, %v3398
        %v5113 = vpack.c.b16 %v3403, %v3401
        %v5114 = vpack.c.b16 %v3404, %v3402
        %v5115 = vpack.c.b16 %v3407, %v3405
        %v5116 = vpack.c.b16 %v3408, %v3406
        %v5117 = vpack.c.b16 %v3411, %v3409
        %v5118 = vpack.c.b16 %v3412, %v3410
        %v5119 = vpack.c.b16 %v3415, %v3413
        %v5120 = vpack.c.b16 %v3416, %v3414
        %v5121 = vpack.c.b16 %v3419, %v3417
        %v5122 = vpack.c.b16 %v3420, %v3418
        %v5123 = vpack.c.b16 %v3423, %v3421
        %v5124 = vpack.c.b16 %v3424, %v3422
        %v5125 = vpack.c.b16 %v3427, %v3425
        %v5126 = vpack.c.b16 %v3428, %v3426
        %v5127 = vpack.c.b16 %v3431, %v3429
        %v5128 = vpack.c.b16 %v3432, %v3430
        %v5129 = vpack.c.b16 %v3435, %v3433
        %v5130 = vpack.c.b16 %v3436, %v3434
        %v5131 = vpack.c.b16 %v3439, %v3437
        %v5132 = vpack.c.b16 %v3440, %v3438
        %v5133 = vpack.c.b16 %v3443, %v3441
        %v5134 = vpack.c.b16 %v3444, %v3442
        %v5135 = vpack.c.b16 %v3447, %v3445
        %v5136 = vpack.c.b16 %v3448, %v3446
        %v5137 = vpack.c.b16 %v3451, %v3449
        %v5138 = vpack.c.b16 %v3452, %v3450
        %v5139 = vpack.c.b16 %v3455, %v3453
        %v5140 = vpack.c.b16 %v3456, %v3454
        %v5141 = vpack.c.b16 %v3459, %v3457
        %v5142 = vpack.c.b16 %v3460, %v3458
        %v5143 = vpack.c.b16 %v3463, %v3461
        %v5144 = vpack.c.b16 %v3464, %v3462
        %v5145 = vpack.c.b16 %v3467, %v3465
        %v5146 = vpack.c.b16 %v3468, %v3466
        %v5147 = vpack.c.b16 %v3471, %v3469
        %v5148 = vpack.c.b16 %v3472, %v3470
        %v5149 = vpack.c.b16 %v3475, %v3473
        %v5150 = vpack.c.b16 %v3476, %v3474
        %v5151 = vpack.c.b16 %v3479, %v3477
        %v5152 = vpack.c.b16 %v3480, %v3478
        %v5153 = vpack.c.b16 %v3483, %v3481
        %v5154 = vpack.c.b16 %v3484, %v3482
        %v5155 = vpack.c.b16 %v3487, %v3485
        %v5156 = vpack.c.b16 %v3488, %v3486
        %v5157 = vpack.c.b16 %v3491, %v3489
        %v5158 = vpack.c.b16 %v3492, %v3490
        %v5159 = vpack.c.b16 %v3495, %v3493
        %v5160 = vpack.c.b16 %v3496, %v3494
        %v5161 = vpack.c.b16 %v3499, %v3497
        %v5162 = vpack.c.b16 %v3500, %v3498
        %v5163 = vpack.c.b16 %v3503, %v3501
        %v5164 = vpack.c.b16 %v3504, %v3502
        %v5165 = vpack.c.b16 %v3507, %v3505
        %v5166 = vpack.c.b16 %v3508, %v3506
        %v5167 = vpack.c.b16 %v3511, %v3509
        %v5168 = vpack.c.b16 %v3512, %v3510
        %v5169 = vpack.c.b16 %v3515, %v3513
        %v5170 = vpack.c.b16 %v3516, %v3514
        %v5171 = vpack.c.b16 %v3519, %v3517
        %v5172 = vpack.c.b16 %v3520, %v3518
        %v5173 = vpack.c.b16 %v3523, %v3521
        %v5174 = vpack.c.b16 %v3524, %v3522
        %v5175 = vpack.c.b16 %v3527, %v3525
        %v5176 = vpack.c.b16 %v3528, %v3526
        %v5177 = vpack.c.b16 %v3531, %v3529
        %v5178 = vpack.c.b16 %v3532, %v3530
        %v5179 = vpack.c.b16 %v3535, %v3533
        %v5180 = vpack.c.b16 %v3536, %v3534
        %v5181 = vpack.c.b16 %v3539, %v3537
        %v5182 = vpack.c.b16 %v3540, %v3538
        %v5183 = vpack.c.b16 %v3543, %v3541
        %v5184 = vpack.c.b16 %v3544, %v3542
        %v5185 = vpack.c.b16 %v3547, %v3545
        %v5186 = vpack.c.b16 %v3548, %v3546
        %v5187 = vpack.c.b16 %v3551, %v3549
        %v5188 = vpack.c.b16 %v3552, %v3550
        %v5189 = vpack.c.b16 %v3555, %v3553
        %v5190 = vpack.c.b16 %v3556, %v3554
        %v5191 = vpack.c.b16 %v3559, %v3557
        %v5192 = vpack.c.b16 %v3560, %v3558
        %v5193 = vpack.c.b16 %v3563, %v3561
        %v5194 = vpack.c.b16 %v3564, %v3562
        %v5195 = vpack.c.b16 %v3567, %v3565
        %v5196 = vpack.c.b16 %v3568, %v3566
        %v5197 = vpack.c.b16 %v3571, %v3569
        %v5198 = vpack.c.b16 %v3572, %v3570
        %v5199 = vpack.c.b16 %v3575, %v3573
        %v5200 = vpack.c.b16 %v3576, %v3574
        %v5201 = vpack.c.b16 %v3579, %v3577
        %v5202 = vpack.c.b16 %v3580, %v3578
        %v5203 = vpack.c.b16 %v3583, %v3581
        %v5204 = vpack.c.b16 %v3584, %v3582
        %v5205 = vpack.c.b16 %v3587, %v3585
        %v5206 = vpack.c.b16 %v3588, %v3586
        %v5207 = vpack.c.b16 %v3591, %v3589
        %v5208 = vpack.c.b16 %v3592, %v3590
        %v5209 = vpack.c.b16 %v3595, %v3593
        %v5210 = vpack.c.b16 %v3596, %v3594
        %v5211 = vpack.c.b16 %v3599, %v3597
        %v5212 = vpack.c.b16 %v3600, %v3598
        %v5213 = vpack.c.b16 %v3603, %v3601
        %v5214 = vpack.c.b16 %v3604, %v3602
        %v5215 = vpack.c.b16 %v3607, %v3605
        %v5216 = vpack.c.b16 %v3608, %v3606
        %v5217 = vpack.c.b16 %v3611, %v3609
        %v5218 = vpack.c.b16 %v3612, %v3610
        %v5219 = vpack.c.b16 %v3615, %v3613
        %v5220 = vpack.c.b16 %v3616, %v3614
        %v5221 = vpack.c.b16 %v3619, %v3617
        %v5222 = vpack.c.b16 %v3620, %v3618
        %v5223 = vpack.c.b16 %v3623, %v3621
        %v5224 = vpack.c.b16 %v3624, %v3622
        %v5225 = vpack.c.b16 %v3627, %v3625
        %v5226 = vpack.c.b16 %v3628, %v3626
        %v5227 = vpack.c.b16 %v3631, %v3629
        %v5228 = vpack.c.b16 %v3632, %v3630
        %v5229 = vpack.c.b16 %v3635, %v3633
        %v5230 = vpack.c.b16 %v3636, %v3634
        %v5231 = vpack.c.b16 %v3639, %v3637
        %v5232 = vpack.c.b16 %v3640, %v3638
        %v5233 = vpack.c.b16 %v3643, %v3641
        %v5234 = vpack.c.b16 %v3644, %v3642
        %v5235 = vpack.c.b16 %v3647, %v3645
        %v5236 = vpack.c.b16 %v3648, %v3646
        %v5237 = vpack.c.b16 %v3651, %v3649
        %v5238 = vpack.c.b16 %v3652, %v3650
        %v5239 = vpack.c.b16 %v3655, %v3653
        %v5240 = vpack.c.b16 %v3656, %v3654
        %v5241 = vpack.c.b16 %v3659, %v3657
        %v5242 = vpack.c.b16 %v3660, %v3658
        %v5243 = vpack.c.b16 %v3663, %v3661
        %v5244 = vpack.c.b16 %v3664, %v3662
        %v5245 = vpack.c.b16 %v3667, %v3665
        %v5246 = vpack.c.b16 %v3668, %v3666
        %v5247 = vpack.c.b16 %v3671, %v3669
        %v5248 = vpack.c.b16 %v3672, %v3670
        %v5249 = vpack.c.b16 %v3675, %v3673
        %v5250 = vpack.c.b16 %v3676, %v3674
        %v5251 = vpack.c.b16 %v3679, %v3677
        %v5252 = vpack.c.b16 %v3680, %v3678
        %v5253 = vpack.c.b16 %v3683, %v3681
        %v5254 = vpack.c.b16 %v3684, %v3682
        %v5255 = vpack.c.b16 %v3687, %v3685
        %v5256 = vpack.c.b16 %v3688, %v3686
        %v5257 = vpack.c.b16 %v3691, %v3689
        %v5258 = vpack.c.b16 %v3692, %v3690
        %v5259 = vpack.c.b16 %v3695, %v3693
        %v5260 = vpack.c.b16 %v3696, %v3694
        %v5261 = vpack.c.b16 %v3699, %v3697
        %v5262 = vpack.c.b16 %v3700, %v3698
        %v5263 = vpack.c.b16 %v3703, %v3701
        %v5264 = vpack.c.b16 %v3704, %v3702
        %v5265 = vpack.c.b16 %v3707, %v3705
        %v5266 = vpack.c.b16 %v3708, %v3706
        %v5267 = vpack.c.b16 %v3711, %v3709
        %v5268 = vpack.c.b16 %v3712, %v3710
        %v5269 = vpack.c.b16 %v3715, %v3713
        %v5270 = vpack.c.b16 %v3716, %v3714
        %v5271 = vpack.c.b16 %v3719, %v3717
        %v5272 = vpack.c.b16 %v3720, %v3718
        %v5273 = vpack.c.b16 %v3723, %v3721
        %v5274 = vpack.c.b16 %v3724, %v3722
        %v5275 = vpack.c.b16 %v3727, %v3725
        %v5276 = vpack.c.b16 %v3728, %v3726
        %v5277 = vpack.c.b16 %v3731, %v3729
        %v5278 = vpack.c.b16 %v3732, %v3730
        %v5279 = vpack.c.b16 %v3735, %v3733
        %v5280 = vpack.c.b16 %v3736, %v3734
        %v5281 = vpack.c.b16 %v3739, %v3737
        %v5282 = vpack.c.b16 %v3740, %v3738
        %v5283 = vpack.c.b16 %v3743, %v3741
        %v5284 = vpack.c.b16 %v3744, %v3742
        %v5285 = vpack.c.b16 %v3747, %v3745
        %v5286 = vpack.c.b16 %v3748, %v3746
        %v5287 = vpack.c.b16 %v3751, %v3749
        %v5288 = vpack.c.b16 %v3752, %v3750
        %v5289 = vpack.c.b16 %v3755, %v3753
        %v5290 = vpack.c.b16 %v3756, %v3754
        %v5291 = vpack.c.b16 %v3759, %v3757
        %v5292 = vpack.c.b16 %v3760, %v3758
        %v5293 = vpack.c.b16 %v3763, %v3761
        %v5294 = vpack.c.b16 %v3764, %v3762
        %v5295 = vpack.c.b16 %v3767, %v3765
        %v5296 = vpack.c.b16 %v3768, %v3766
        %v5297 = vpack.c.b16 %v3771, %v3769
        %v5298 = vpack.c.b16 %v3772, %v3770
        %v5299 = vpack.c.b16 %v3775, %v3773
        %v5300 = vpack.c.b16 %v3776, %v3774
        %v5301 = vpack.c.b16 %v3779, %v3777
        %v5302 = vpack.c.b16 %v3780, %v3778
        %v5303 = vpack.c.b16 %v3783, %v3781
        %v5304 = vpack.c.b16 %v3784, %v3782
        %v5305 = vpack.c.b16 %v3787, %v3785
        %v5306 = vpack.c.b16 %v3788, %v3786
        %v5307 = vpack.c.b16 %v3791, %v3789
        %v5308 = vpack.c.b16 %v3792, %v3790
        %v5309 = vpack.c.b16 %v3795, %v3793
        %v5310 = vpack.c.b16 %v3796, %v3794
        %v5311 = vpack.c.b16 %v3799, %v3797
        %v5312 = vpack.c.b16 %v3800, %v3798
        %v5313 = vpack.c.b16 %v3803, %v3801
        %v5314 = vpack.c.b16 %v3804, %v3802
        %v5315 = vpack.c.b16 %v3807, %v3805
        %v5316 = vpack.c.b16 %v3808, %v3806
        %v5317 = vpack.c.b16 %v3811, %v3809
        %v5318 = vpack.c.b16 %v3812, %v3810
        %v5319 = vpack.c.b16 %v3815, %v3813
        %v5320 = vpack.c.b16 %v3816, %v3814
        %v5321 = vpack.c.b16 %v3819, %v3817
        %v5322 = vpack.c.b16 %v3820, %v3818
        %v5323 = vpack.c.b16 %v3823, %v3821
        %v5324 = vpack.c.b16 %v3824, %v3822
        %v5325 = vpack.c.b16 %v3827, %v3825
        %v5326 = vpack.c.b16 %v3828, %v3826
        %v5327 = vpack.c.b16 %v3831, %v3829
        %v5328 = vpack.c.b16 %v3832, %v3830
        %v5329 = vpack.c.b16 %v3835, %v3833
        %v5330 = vpack.c.b16 %v3836, %v3834
        %v5331 = vpack.c.b16 %v3839, %v3837
        %v5332 = vpack.c.b16 %v3840, %v3838
        %v5333 = vpack.c.b16 %v3843, %v3841
        %v5334 = vpack.c.b16 %v3844, %v3842
        %v5335 = vpack.c.b16 %v3847, %v3845
        %v5336 = vpack.c.b16 %v3848, %v3846
        %v5337 = vpack.c.b16 %v3851, %v3849
        %v5338 = vpack.c.b16 %v3852, %v3850
        %v5339 = vpack.c.b16 %v3855, %v3853
        %v5340 = vpack.c.b16 %v3856, %v3854
        %v5341 = vpack.c.b16 %v3859, %v3857
        %v5342 = vpack.c.b16 %v3860, %v3858
        %v5343 = vpack.c.b16 %v3863, %v3861
        %v5344 = vpack.c.b16 %v3864, %v3862
        %v5345 = vpack.c.b16 %v3867, %v3865
        %v5346 = vpack.c.b16 %v3868, %v3866
        %v5347 = vpack.c.b16 %v3871, %v3869
        %v5348 = vpack.c.b16 %v3872, %v3870
        %v5349 = vpack.c.b16 %v3875, %v3873
        %v5350 = vpack.c.b16 %v3876, %v3874
        %v5351 = vpack.c.b16 %v3879, %v3877
        %v5352 = vpack.c.b16 %v3880, %v3878
        %v5353 = vpack.c.b16 %v3883, %v3881
        %v5354 = vpack.c.b16 %v3884, %v3882
        %v5355 = vpack.c.b16 %v3887, %v3885
        %v5356 = vpack.c.b16 %v3888, %v3886
        %v5357 = vpack.c.b16 %v3891, %v3889
        %v5358 = vpack.c.b16 %v3892, %v3890
        %v5359 = vpack.c.b16 %v3895, %v3893
        %v5360 = vpack.c.b16 %v3896, %v3894
        %v5361 = vpack.c.b16 %v3899, %v3897
        %v5362 = vpack.c.b16 %v3900, %v3898
        %v5363 = vpack.c.b16 %v3903, %v3901
        %v5364 = vpack.c.b16 %v3904, %v3902
        %v5365 = vpack.c.b16 %v3907, %v3905
        %v5366 = vpack.c.b16 %v3908, %v3906
        %v5367 = vpack.c.b16 %v3911, %v3909
        %v5368 = vpack.c.b16 %v3912, %v3910
        %v5369 = vpack.c.b16 %v3915, %v3913
        %v5370 = vpack.c.b16 %v3916, %v3914
        %v5371 = vpack.c.b16 %v3919, %v3917
        %v5372 = vpack.c.b16 %v3920, %v3918
        %v5373 = vpack.c.b16 %v3923, %v3921
        %v5374 = vpack.c.b16 %v3924, %v3922
        %v5375 = vpack.c.b16 %v3927, %v3925
        %v5376 = vpack.c.b16 %v3928, %v3926
        %v5377 = vpack.c.b16 %v3931, %v3929
        %v5378 = vpack.c.b16 %v3932, %v3930
        %v5379 = vpack.c.b16 %v3935, %v3933
        %v5380 = vpack.c.b16 %v3936, %v3934
        %v5381 = vpack.c.b16 %v3939, %v3937
        %v5382 = vpack.c.b16 %v3940, %v3938
        %v5383 = vpack.c.b16 %v3943, %v3941
        %v5384 = vpack.c.b16 %v3944, %v3942
        %v5385 = vpack.c.b16 %v3947, %v3945
        %v5386 = vpack.c.b16 %v3948, %v3946
        %v5387 = vpack.c.b16 %v3951, %v3949
        %v5388 = vpack.c.b16 %v3952, %v3950
        %v5389 = vpack.c.b16 %v3955, %v3953
        %v5390 = vpack.c.b16 %v3956, %v3954
        %v5391 = vpack.c.b16 %v3959, %v3957
        %v5392 = vpack.c.b16 %v3960, %v3958
        %v5393 = vpack.c.b16 %v3963, %v3961
        %v5394 = vpack.c.b16 %v3964, %v3962
        %v5395 = vpack.c.b16 %v3967, %v3965
        %v5396 = vpack.c.b16 %v3968, %v3966
        %v5397 = vpack.c.b16 %v3971, %v3969
        %v5398 = vpack.c.b16 %v3972, %v3970
        %v5399 = vpack.c.b16 %v3975, %v3973
        %v5400 = vpack.c.b16 %v3976, %v3974
        %v5401 = vpack.c.b16 %v3979, %v3977
        %v5402 = vpack.c.b16 %v3980, %v3978
        %v5403 = vpack.c.b16 %v3983, %v3981
        %v5404 = vpack.c.b16 %v3984, %v3982
        %v5405 = vpack.c.b16 %v3987, %v3985
        %v5406 = vpack.c.b16 %v3988, %v3986
        %v5407 = vpack.c.b16 %v3991, %v3989
        %v5408 = vpack.c.b16 %v3992, %v3990
        %v5409 = vpack.c.b16 %v3995, %v3993
        %v5410 = vpack.c.b16 %v3996, %v3994
        %v5411 = vpack.c.b16 %v3999, %v3997
        %v5412 = vpack.c.b16 %v4000, %v3998
        %v5413 = vpack.c.b16 %v4003, %v4001
        %v5414 = vpack.c.b16 %v4004, %v4002
        %v5415 = vpack.c.b16 %v4007, %v4005
        %v5416 = vpack.c.b16 %v4008, %v4006
        %v5417 = vpack.c.b16 %v4011, %v4009
        %v5418 = vpack.c.b16 %v4012, %v4010
        %v5419 = vpack.c.b16 %v4015, %v4013
        %v5420 = vpack.c.b16 %v4016, %v4014
        %v5421 = vpack.c.b16 %v4019, %v4017
        %v5422 = vpack.c.b16 %v4020, %v4018
        %v5423 = vpack.c.b16 %v4023, %v4021
        %v5424 = vpack.c.b16 %v4024, %v4022
        %v5425 = vpack.c.b16 %v4027, %v4025
        %v5426 = vpack.c.b16 %v4028, %v4026
        %v5427 = vpack.c.b16 %v4031, %v4029
        %v5428 = vpack.c.b16 %v4032, %v4030
        %v5429 = vpack.c.b16 %v4035, %v4033
        %v5430 = vpack.c.b16 %v4036, %v4034
        %v5431 = vpack.c.b16 %v4039, %v4037
        %v5432 = vpack.c.b16 %v4040, %v4038
        %v5433 = vpack.c.b16 %v4043, %v4041
        %v5434 = vpack.c.b16 %v4044, %v4042
        %v5435 = vpack.c.b16 %v4047, %v4045
        %v5436 = vpack.c.b16 %v4048, %v4046
        %v5437 = vpack.c.b16 %v4051, %v4049
        %v5438 = vpack.c.b16 %v4052, %v4050
        %v5439 = vpack.c.b16 %v4055, %v4053
        %v5440 = vpack.c.b16 %v4056, %v4054
        %v5441 = vpack.c.b16 %v4059, %v4057
        %v5442 = vpack.c.b16 %v4060, %v4058
        %v5443 = vpack.c.b16 %v4063, %v4061
        %v5444 = vpack.c.b16 %v4064, %v4062
        %v5445 = vpack.c.b16 %v4067, %v4065
        %v5446 = vpack.c.b16 %v4068, %v4066
        %v5447 = vpack.c.b16 %v4071, %v4069
        %v5448 = vpack.c.b16 %v4072, %v4070
        %v5449 = vpack.c.b16 %v4075, %v4073
        %v5450 = vpack.c.b16 %v4076, %v4074
        %v5451 = vpack.c.b16 %v4079, %v4077
        %v5452 = vpack.c.b16 %v4080, %v4078
        %v5453 = vpack.c.b16 %v4083, %v4081
        %v5454 = vpack.c.b16 %v4084, %v4082
        %v5455 = vpack.c.b16 %v4087, %v4085
        %v5456 = vpack.c.b16 %v4088, %v4086
        %v5457 = vpack.c.b16 %v4091, %v4089
        %v5458 = vpack.c.b16 %v4092, %v4090
        %v5459 = vpack.c.b16 %v4095, %v4093
        %v5460 = vpack.c.b16 %v4096, %v4094
        %v5461 = vpack.c.b16 %v4099, %v4097
        %v5462 = vpack.c.b16 %v4100, %v4098
        %v5463 = vpack.c.b16 %v4103, %v4101
        %v5464 = vpack.c.b16 %v4104, %v4102
        %v5465 = vpack.c.b16 %v4107, %v4105
        %v5466 = vpack.c.b16 %v4108, %v4106
        %v5467 = vpack.c.b16 %v4111, %v4109
        %v5468 = vpack.c.b16 %v4112, %v4110
        %v5469 = vpack.c.b16 %v4115, %v4113
        %v5470 = vpack.c.b16 %v4116, %v4114
        %v5471 = vpack.c.b16 %v4119, %v4117
        %v5472 = vpack.c.b16 %v4120, %v4118
        %v5473 = vpack.c.b16 %v4123, %v4121
        %v5474 = vpack.c.b16 %v4124, %v4122
        %v5475 = vpack.c.b16 %v4127, %v4125
        %v5476 = vpack.c.b16 %v4128, %v4126
        %v5477 = vpack.c.b16 %v4131, %v4129
        %v5478 = vpack.c.b16 %v4132, %v4130
        %v5479 = vpack.c.b16 %v4135, %v4133
        %v5480 = vpack.c.b16 %v4136, %v4134
        %v5481 = vpack.c.b16 %v4139, %v4137
        %v5482 = vpack.c.b16 %v4140, %v4138
        %v5483 = vpack.c.b16 %v4143, %v4141
        %v5484 = vpack.c.b16 %v4144, %v4142
        %v5485 = vpack.c.b16 %v4147, %v4145
        %v5486 = vpack.c.b16 %v4148, %v4146
        %v5487 = vpack.c.b16 %v4151, %v4149
        %v5488 = vpack.c.b16 %v4152, %v4150
        %v5489 = vpack.c.b16 %v4155, %v4153
        %v5490 = vpack.c.b16 %v4156, %v4154
        %v5491 = vpack.c.b16 %v4159, %v4157
        %v5492 = vpack.c.b16 %v4160, %v4158
        %v5493 = vpack.c.b16 %v4163, %v4161
        %v5494 = vpack.c.b16 %v4164, %v4162
        %v5495 = vpack.c.b16 %v4167, %v4165
        %v5496 = vpack.c.b16 %v4168, %v4166
        %v5497 = vpack.c.b16 %v4171, %v4169
        %v5498 = vpack.c.b16 %v4172, %v4170
        %v5499 = vpack.c.b16 %v4175, %v4173
        %v5500 = vpack.c.b16 %v4176, %v4174
        %v5501 = vpack.c.b16 %v4179, %v4177
        %v5502 = vpack.c.b16 %v4180, %v4178
        %v5503 = vpack.c.b16 %v4183, %v4181
        %v5504 = vpack.c.b16 %v4184, %v4182
        %v5505 = vpack.c.b16 %v4187, %v4185
        %v5506 = vpack.c.b16 %v4188, %v4186
        %v5507 = vpack.c.b16 %v4191, %v4189
        %v5508 = vpack.c.b16 %v4192, %v4190
        %v5509 = vpack.c.b16 %v4195, %v4193
        %v5510 = vpack.c.b16 %v4196, %v4194
        %v5511 = vpack.c.b16 %v4199, %v4197
        %v5512 = vpack.c.b16 %v4200, %v4198
        %v5513 = vpack.c.b16 %v4203, %v4201
        %v5514 = vpack.c.b16 %v4204, %v4202
        %v5515 = vpack.c.b16 %v4207, %v4205
        %v5516 = vpack.c.b16 %v4208, %v4206
        %v5517 = vpack.c.b16 %v4211, %v4209
        %v5518 = vpack.c.b16 %v4212, %v4210
        %v5519 = vpack.c.b16 %v4215, %v4213
        %v5520 = vpack.c.b16 %v4216, %v4214
        %v5521 = vpack.c.b16 %v4219, %v4217
        %v5522 = vpack.c.b16 %v4220, %v4218
        %v5523 = vpack.c.b16 %v4223, %v4221
        %v5524 = vpack.c.b16 %v4224, %v4222
        %v5525 = vpack.c.b16 %v4227, %v4225
        %v5526 = vpack.c.b16 %v4228, %v4226
        %v5527 = vpack.c.b16 %v4231, %v4229
        %v5528 = vpack.c.b16 %v4232, %v4230
        %v5529 = vpack.c.b16 %v4235, %v4233
        %v5530 = vpack.c.b16 %v4236, %v4234
        %v5531 = vpack.c.b16 %v4239, %v4237
        %v5532 = vpack.c.b16 %v4240, %v4238
        %v5533 = vpack.c.b16 %v4243, %v4241
        %v5534 = vpack.c.b16 %v4244, %v4242
        %v5535 = vpack.c.b16 %v4247, %v4245
        %v5536 = vpack.c.b16 %v4248, %v4246
        %v5537 = vpack.c.b16 %v4251, %v4249
        %v5538 = vpack.c.b16 %v4252, %v4250
        %v5539 = vpack.c.b16 %v4255, %v4253
        %v5540 = vpack.c.b16 %v4256, %v4254
        %v5541 = vpack.c.b16 %v4259, %v4257
        %v5542 = vpack.c.b16 %v4260, %v4258
        %v5543 = vpack.c.b16 %v4263, %v4261
        %v5544 = vpack.c.b16 %v4264, %v4262
        %v5545 = vpack.c.b16 %v4267, %v4265
        %v5546 = vpack.c.b16 %v4268, %v4266
        %v5547 = vpack.c.b16 %v4271, %v4269
        %v5548 = vpack.c.b16 %v4272, %v4270
        %v5549 = vpack.c.b16 %v4275, %v4273
        %v5550 = vpack.c.b16 %v4276, %v4274
        %v5551 = vpack.c.b16 %v4279, %v4277
        %v5552 = vpack.c.b16 %v4280, %v4278
        %v5553 = vpack.c.b16 %v4283, %v4281
        %v5554 = vpack.c.b16 %v4284, %v4282
        %v5555 = vpack.c.b16 %v4287, %v4285
        %v5556 = vpack.c.b16 %v4288, %v4286
        %v5557 = vpack.c.b16 %v4291, %v4289
        %v5558 = vpack.c.b16 %v4292, %v4290
        %v5559 = vpack.c.b16 %v4295, %v4293
        %v5560 = vpack.c.b16 %v4296, %v4294
        %v5561 = vpack.c.b16 %v4299, %v4297
        %v5562 = vpack.c.b16 %v4300, %v4298
        %v5563 = vpack.c.b16 %v4303, %v4301
        %v5564 = vpack.c.b16 %v4304, %v4302
        %v5565 = vpack.c.b16 %v4307, %v4305
        %v5566 = vpack.c.b16 %v4308, %v4306
        %v5567 = vpack.c.b16 %v4311, %v4309
        %v5568 = vpack.c.b16 %v4312, %v4310
        %v5569 = vpack.c.b16 %v4315, %v4313
        %v5570 = vpack.c.b16 %v4316, %v4314
        %v5571 = vpack.c.b16 %v4319, %v4317
        %v5572 = vpack.c.b16 %v4320, %v4318
        %v5573 = vpack.c.b16 %v4323, %v4321
        %v5574 = vpack.c.b16 %v4324, %v4322
        %v5575 = vpack.c.b16 %v4327, %v4325
        %v5576 = vpack.c.b16 %v4328, %v4326
        %v5577 = vpack.c.b16 %v4331, %v4329
        %v5578 = vpack.c.b16 %v4332, %v4330
        %v5579 = vpack.c.b16 %v4335, %v4333
        %v5580 = vpack.c.b16 %v4336, %v4334
        %v5581 = vpack.c.b16 %v4339, %v4337
        %v5582 = vpack.c.b16 %v4340, %v4338
        %v5583 = vpack.c.b16 %v4343, %v4341
        %v5584 = vpack.c.b16 %v4344, %v4342
        %v5585 = vpack.c.b16 %v4347, %v4345
        %v5586 = vpack.c.b16 %v4348, %v4346
        %v5587 = vpack.c.b16 %v4351, %v4349
        %v5588 = vpack.c.b16 %v4352, %v4350
        %v5589 = vpack.c.b16 %v4355, %v4353
        %v5590 = vpack.c.b16 %v4356, %v4354
        %v5591 = vpack.c.b16 %v4359, %v4357
        %v5592 = vpack.c.b16 %v4360, %v4358
        %v5593 = vpack.c.b16 %v4363, %v4361
        %v5594 = vpack.c.b16 %v4364, %v4362
        %v5595 = vpack.c.b16 %v4367, %v4365
        %v5596 = vpack.c.b16 %v4368, %v4366
        %v5597 = vpack.c.b16 %v4371, %v4369
        %v5598 = vpack.c.b16 %v4372, %v4370
        %v5599 = vpack.c.b16 %v4375, %v4373
        %v5600 = vpack.c.b16 %v4376, %v4374
        %v5601 = vpack.c.b16 %v4379, %v4377
        %v5602 = vpack.c.b16 %v4380, %v4378
        %v5603 = vpack.c.b16 %v4383, %v4381
        %v5604 = vpack.c.b16 %v4384, %v4382
        %v5605 = vpack.c.b16 %v4387, %v4385
        %v5606 = vpack.c.b16 %v4388, %v4386
        %v5607 = vpack.c.b16 %v4391, %v4389
        %v5608 = vpack.c.b16 %v4392, %v4390
        %v5609 = vpack.c.b16 %v4395, %v4393
        %v5610 = vpack.c.b16 %v4396, %v4394
        %v5611 = vpack.c.b16 %v4399, %v4397
        %v5612 = vpack.c.b16 %v4400, %v4398
        %v5613 = vpack.c.b16 %v4403, %v4401
        %v5614 = vpack.c.b16 %v4404, %v4402
        %v5615 = vpack.c.b16 %v4407, %v4405
        %v5616 = vpack.c.b16 %v4408, %v4406
        %v5617 = vpack.c.b16 %v4411, %v4409
        %v5618 = vpack.c.b16 %v4412, %v4410
        %v5619 = vpack.c.b16 %v4415, %v4413
        %v5620 = vpack.c.b16 %v4416, %v4414
        %v5621 = vpack.c.b16 %v4419, %v4417
        %v5622 = vpack.c.b16 %v4420, %v4418
        %v5623 = vpack.c.b16 %v4423, %v4421
        %v5624 = vpack.c.b16 %v4424, %v4422
        %v5625 = vpack.c.b16 %v4427, %v4425
        %v5626 = vpack.c.b16 %v4428, %v4426
        %v5627 = vpack.c.b16 %v4431, %v4429
        %v5628 = vpack.c.b16 %v4432, %v4430
        %v5629 = vpack.c.b16 %v4435, %v4433
        %v5630 = vpack.c.b16 %v4436, %v4434
        %v5631 = vpack.c.b16 %v4439, %v4437
        %v5632 = vpack.c.b16 %v4440, %v4438
        %v5633 = vpack.c.b16 %v4443, %v4441
        %v5634 = vpack.c.b16 %v4444, %v4442
        %v5635 = vpack.c.b16 %v4447, %v4445
        %v5636 = vpack.c.b16 %v4448, %v4446
        %v5637 = vpack.c.b16 %v4451, %v4449
        %v5638 = vpack.c.b16 %v4452, %v4450
        %v5639 = vpack.c.b16 %v4455, %v4453
        %v5640 = vpack.c.b16 %v4456, %v4454
        %v5641 = vpack.c.b16 %v4459, %v4457
        %v5642 = vpack.c.b16 %v4460, %v4458
        %v5643 = vpack.c.b16 %v4463, %v4461
        %v5644 = vpack.c.b16 %v4464, %v4462
        %v5645 = vpack.c.b16 %v4467, %v4465
        %v5646 = vpack.c.b16 %v4468, %v4466
        %v5647 = vpack.c.b16 %v4471, %v4469
        %v5648 = vpack.c.b16 %v4472, %v4470
        %v5649 = vpack.c.b16 %v4475, %v4473
        %v5650 = vpack.c.b16 %v4476, %v4474
        %v5651 = vpack.c.b16 %v4479, %v4477
        %v5652 = vpack.c.b16 %v4480, %v4478
        %v5653 = vpack.c.b16 %v4483, %v4481
        %v5654 = vpack.c.b16 %v4484, %v4482
        %v5655 = vpack.c.b16 %v4487, %v4485
        %v5656 = vpack.c.b16 %v4488, %v4486
        %v5657 = vpack.c.b16 %v4491, %v4489
        %v5658 = vpack.c.b16 %v4492, %v4490
        %v5659 = vpack.c.b16 %v4495, %v4493
        %v5660 = vpack.c.b16 %v4496, %v4494
        %v5661 = vpack.c.b16 %v4499, %v4497
        %v5662 = vpack.c.b16 %v4500, %v4498
        %v5663 = vpack.c.b16 %v4503, %v4501
        %v5664 = vpack.c.b16 %v4504, %v4502
        %v5665 = vpack.c.b16 %v4507, %v4505
        %v5666 = vpack.c.b16 %v4508, %v4506
        %v5667 = vpack.c.b16 %v4511, %v4509
        %v5668 = vpack.c.b16 %v4512, %v4510
        %v5669 = vpack.c.b16 %v4515, %v4513
        %v5670 = vpack.c.b16 %v4516, %v4514
        %v5671 = vpack.c.b16 %v4519, %v4517
        %v5672 = vpack.c.b16 %v4520, %v4518
        %v5673 = vpack.c.b16 %v4523, %v4521
        %v5674 = vpack.c.b16 %v4524, %v4522
        %v5675 = vpack.c.b16 %v4527, %v4525
        %v5676 = vpack.c.b16 %v4528, %v4526
        %v5677 = vpack.c.b16 %v4531, %v4529
        %v5678 = vpack.c.b16 %v4532, %v4530
        %v5679 = vpack.c.b16 %v4535, %v4533
        %v5680 = vpack.c.b16 %v4536, %v4534
        %v5681 = vpack.c.b16 %v4539, %v4537
        %v5682 = vpack.c.b16 %v4540, %v4538
        %v5683 = vpack.c.b16 %v4543, %v4541
        %v5684 = vpack.c.b16 %v4544, %v4542
        %v5685 = vpack.c.b16 %v4547, %v4545
        %v5686 = vpack.c.b16 %v4548, %v4546
        %v5687 = vpack.c.b16 %v4551, %v4549
        %v5688 = vpack.c.b16 %v4552, %v4550
        %v5689 = vpack.c.b16 %v4555, %v4553
        %v5690 = vpack.c.b16 %v4556, %v4554
        %v5691 = vpack.c.b16 %v4559, %v4557
        %v5692 = vpack.c.b16 %v4560, %v4558
        %v5693 = vpack.c.b16 %v4563, %v4561
        %v5694 = vpack.c.b16 %v4564, %v4562
        %v5695 = vpack.c.b16 %v4567, %v4565
        %v5696 = vpack.c.b16 %v4568, %v4566
        %v5697 = vpack.c.b16 %v4571, %v4569
        %v5698 = vpack.c.b16 %v4572, %v4570
        %v5699 = vpack.c.b16 %v4575, %v4573
        %v5700 = vpack.c.b16 %v4576, %v4574
        %v5701 = vpack.c.b16 %v4579, %v4577
        %v5702 = vpack.c.b16 %v4580, %v4578
        %v5703 = vpack.c.b16 %v4583, %v4581
        %v5704 = vpack.c.b16 %v4584, %v4582
        %v5705 = vpack.c.b16 %v4587, %v4585
        %v5706 = vpack.c.b16 %v4588, %v4586
        %v5707 = vpack.c.b16 %v4591, %v4589
        %v5708 = vpack.c.b16 %v4592, %v4590
        %v5709 = vpack.c.b16 %v4595, %v4593
        %v5710 = vpack.c.b16 %v4596, %v4594
        %v5711 = vpack.c.b16 %v4599, %v4597
        %v5712 = vpack.c.b16 %v4600, %v4598
        %v5713 = vpack.c.b16 %v4603, %v4601
        %v5714 = vpack.c.b16 %v4604, %v4602
        %v5715 = vpack.c.b16 %v4607, %v4605
        %v5716 = vpack.c.b16 %v4608, %v4606
        %v5717 = vpack.c.b16 %v4611, %v4609
        %v5718 = vpack.c.b16 %v4612, %v4610
        %v5719 = vpack.c.b16 %v4615, %v4613
        %v5720 = vpack.c.b16 %v4616, %v4614
        %v5721 = vpack.c.b16 %v4619, %v4617
        %v5722 = vpack.c.b16 %v4620, %v4618
        %v5723 = vpack.c.b16 %v4623, %v4621
        %v5724 = vpack.c.b16 %v4624, %v4622
        %v5725 = vpack.c.b16 %v4627, %v4625
        %v5726 = vpack.c.b16 %v4628, %v4626
        %v5727 = vpack.c.b16 %v4631, %v4629
        %v5728 = vpack.c.b16 %v4632, %v4630
        %v5729 = vpack.c.b16 %v4635, %v4633
        %v5730 = vpack.c.b16 %v4636, %v4634
        %v5731 = vpack.c.b16 %v4639, %v4637
        %v5732 = vpack.c.b16 %v4640, %v4638
        %v5733 = vpack.c.b16 %v4643, %v4641
        %v5734 = vpack.c.b16 %v4644, %v4642
        %v5735 = vpack.c.b16 %v4647, %v4645
        %v5736 = vpack.c.b16 %v4648, %v4646
        %v5737 = vpack.c.b16 %v4651, %v4649
        %v5738 = vpack.c.b16 %v4652, %v4650
        %v5739 = vpack.c.b16 %v4655, %v4653
        %v5740 = vpack.c.b16 %v4656, %v4654
        %v5741 = vpack.c.b16 %v4659, %v4657
        %v5742 = vpack.c.b16 %v4660, %v4658
        %v5743 = vpack.c.b16 %v4663, %v4661
        %v5744 = vpack.c.b16 %v4664, %v4662
        %v5745 = vpack.c.b16 %v4667, %v4665
        %v5746 = vpack.c.b16 %v4668, %v4666
        %v5747 = vpack.c.b16 %v4671, %v4669
        %v5748 = vpack.c.b16 %v4672, %v4670
        %v5749 = vpack.c.b16 %v4675, %v4673
        %v5750 = vpack.c.b16 %v4676, %v4674
        %v5751 = vpack.c.b16 %v4679, %v4677
        %v5752 = vpack.c.b16 %v4680, %v4678
        %v5753 = vpack.c.b16 %v4683, %v4681
        %v5754 = vpack.c.b16 %v4684, %v4682
        %v5755 = vpack.c.b16 %v4687, %v4685
        %v5756 = vpack.c.b16 %v4688, %v4686
        %v5757 = vpack.c.b16 %v4691, %v4689
        %v5758 = vpack.c.b16 %v4692, %v4690
        %v5759 = vpack.c.b16 %v4695, %v4693
        %v5760 = vpack.c.b16 %v4696, %v4694
        %v5761 = vpack.c.b16 %v4699, %v4697
        %v5762 = vpack.c.b16 %v4700, %v4698
        %v5763 = vpack.c.b16 %v4703, %v4701
        %v5764 = vpack.c.b16 %v4704, %v4702
        %v5765 = vpack.c.b16 %v4707, %v4705
        %v5766 = vpack.c.b16 %v4708, %v4706
        %v5767 = vpack.c.b16 %v4711, %v4709
        %v5768 = vpack.c.b16 %v4712, %v4710
        %v5769 = vpack.c.b16 %v4715, %v4713
        %v5770 = vpack.c.b16 %v4716, %v4714
        %v5771 = vpack.c.b16 %v4719, %v4717
        %v5772 = vpack.c.b16 %v4720, %v4718
        %v5773 = vpack.c.b16 %v4723, %v4721
        %v5774 = vpack.c.b16 %v4724, %v4722
        %v5775 = vpack.c.b16 %v4727, %v4725
        %v5776 = vpack.c.b16 %v4728, %v4726
        %v5777 = vpack.c.b16 %v4731, %v4729
        %v5778 = vpack.c.b16 %v4732, %v4730
        %v5779 = vpack.c.b16 %v4735, %v4733
        %v5780 = vpack.c.b16 %v4736, %v4734
        %v5781 = vpack.c.b16 %v4739, %v4737
        %v5782 = vpack.c.b16 %v4740, %v4738
        %v5783 = vpack.c.b16 %v4743, %v4741
        %v5784 = vpack.c.b16 %v4744, %v4742
        %v5785 = vpack.c.b16 %v4747, %v4745
        %v5786 = vpack.c.b16 %v4748, %v4746
        %v5787 = vpack.c.b16 %v4751, %v4749
        %v5788 = vpack.c.b16 %v4752, %v4750
        %v5789 = vpack.c.b16 %v4755, %v4753
        %v5790 = vpack.c.b16 %v4756, %v4754
        %v5791 = vpack.c.b16 %v4759, %v4757
        %v5792 = vpack.c.b16 %v4760, %v4758
        %v5793 = vpack.c.b16 %v4763, %v4761
        %v5794 = vpack.c.b16 %v4764, %v4762
        %v5795 = vpack.c.b16 %v4767, %v4765
        %v5796 = vpack.c.b16 %v4768, %v4766
        %v5797 = vpack.c.b16 %v4771, %v4769
        %v5798 = vpack.c.b16 %v4772, %v4770
        %v5799 = vpack.c.b16 %v4775, %v4773
        %v5800 = vpack.c.b16 %v4776, %v4774
        %6825 = vmatprep.subr.bf16.mxu0 %v4778
        %6826 = vmatpush1.bf16.msra.mxu0 %v4777
        %6827 = vmatprep.subr.bf16.mxu0 %v4780
        %6828 = vmatpush1.bf16.msra.mxu0 %v4779
        %6829 = vmatprep.subr.bf16.mxu0 %v4782
        %6830 = vmatpush1.bf16.msra.mxu0 %v4781
        %6831 = vmatprep.subr.bf16.mxu0 %v4784
        %6832 = vmatpush1.bf16.msra.mxu0 %v4783
        %6833 = vmatprep.subr.bf16.mxu0 %v4786
        %6834 = vmatpush1.bf16.msra.mxu0 %v4785
        %6835 = vmatprep.subr.bf16.mxu0 %v4788
        %6836 = vmatpush1.bf16.msra.mxu0 %v4787
        %6837 = vmatprep.subr.bf16.mxu0 %v4790
        %6838 = vmatpush1.bf16.msra.mxu0 %v4789
        %6839 = vmatprep.subr.bf16.mxu0 %v4792
        %6840 = vmatpush1.bf16.msra.mxu0 %v4791
        %6841 = vmatprep.subr.bf16.mxu0 %v4794
        %6842 = vmatpush1.bf16.msra.mxu0 %v4793
        %6843 = vmatprep.subr.bf16.mxu0 %v4796
        %6844 = vmatpush1.bf16.msra.mxu0 %v4795
        %6845 = vmatprep.subr.bf16.mxu0 %v4798
        %6846 = vmatpush1.bf16.msra.mxu0 %v4797
        %6847 = vmatprep.subr.bf16.mxu0 %v4800
        %6848 = vmatpush1.bf16.msra.mxu0 %v4799
        %6849 = vmatprep.subr.bf16.mxu0 %v4802
        %6850 = vmatpush1.bf16.msra.mxu0 %v4801
        %6851 = vmatprep.subr.bf16.mxu0 %v4804
        %6852 = vmatpush1.bf16.msra.mxu0 %v4803
        %6853 = vmatprep.subr.bf16.mxu0 %v4806
        %6854 = vmatpush1.bf16.msra.mxu0 %v4805
        %6855 = vmatprep.subr.bf16.mxu0 %v4808
        %6856 = vmatpush1.bf16.msra.mxu0 %v4807
        %6857 = vmatprep.mubr.bf16.mxu0 %v1286
        %6858 = vmatmul.mubr.bf16.gmra.mrb[0].mxu0 %v1272
        %v6859 = vpop.f32.mrb[0].mxu0
        %v6860 = vadd.f32 0.0, %v6859
        %v6861 = vpop.f32.mrb[0].mxu0
        %v6862 = vadd.f32 0.0, %v6861
        %v6863 = vpop.f32.mrb[0].mxu0
        %v6864 = vpop.f32.mrb[0].mxu0
        %6865 = vdwg.mxu0
        %6866 = vmatprep.subr.bf16.mxu0 %v4810
        %6867 = vmatpush1.bf16.msra.mxu0 %v4809
        %6868 = vmatprep.subr.bf16.mxu0 %v4812
        %6869 = vmatpush1.bf16.msra.mxu0 %v4811
        %6870 = vmatprep.subr.bf16.mxu0 %v4814
        %6871 = vmatpush1.bf16.msra.mxu0 %v4813
        %6872 = vmatprep.subr.bf16.mxu0 %v4816
        %6873 = vmatpush1.bf16.msra.mxu0 %v4815
        %6874 = vmatprep.subr.bf16.mxu0 %v4818
        %6875 = vmatpush1.bf16.msra.mxu0 %v4817
        %6876 = vmatprep.subr.bf16.mxu0 %v4820
        %6877 = vmatpush1.bf16.msra.mxu0 %v4819
        %6878 = vmatprep.subr.bf16.mxu0 %v4822
        %6879 = vmatpush1.bf16.msra.mxu0 %v4821
        %6880 = vmatprep.subr.bf16.mxu0 %v4824
        %6881 = vmatpush1.bf16.msra.mxu0 %v4823
        %6882 = vmatprep.subr.bf16.mxu0 %v4826
        %6883 = vmatpush1.bf16.msra.mxu0 %v4825
        %6884 = vmatprep.subr.bf16.mxu0 %v4828
        %6885 = vmatpush1.bf16.msra.mxu0 %v4827
        %6886 = vmatprep.subr.bf16.mxu0 %v4830
        %6887 = vmatpush1.bf16.msra.mxu0 %v4829
        %6888 = vmatprep.subr.bf16.mxu0 %v4832
        %6889 = vmatpush1.bf16.msra.mxu0 %v4831
        %6890 = vmatprep.subr.bf16.mxu0 %v4834
        %6891 = vmatpush1.bf16.msra.mxu0 %v4833
        %6892 = vmatprep.subr.bf16.mxu0 %v4836
        %6893 = vmatpush1.bf16.msra.mxu0 %v4835
        %6894 = vmatprep.subr.bf16.mxu0 %v4838
        %6895 = vmatpush1.bf16.msra.mxu0 %v4837
        %6896 = vmatprep.subr.bf16.mxu0 %v4840
        %6897 = vmatpush1.bf16.msra.mxu0 %v4839
        %6898 = vmatprep.mubr.bf16.mxu0 %v1296
        %6899 = vmatmul.mubr.bf16.gmra.mrb[0].mxu0 %v1294
        %v6900 = vpop.f32.mrb[0].mxu0
        %v6901 = vadd.f32 %v6860, %v6900
        %v6902 = vpop.f32.mrb[0].mxu0
        %v6903 = vadd.f32 %v6862, %v6902
        %v6904 = vpop.f32.mrb[0].mxu0
        %v6905 = vpop.f32.mrb[0].mxu0
        %6906 = vdwg.mxu0
        %6907 = vmatprep.subr.bf16.mxu0 %v4842
        %6908 = vmatpush1.bf16.msra.mxu0 %v4841
        %6909 = vmatprep.subr.bf16.mxu0 %v4844
        %6910 = vmatpush1.bf16.msra.mxu0 %v4843
        %6911 = vmatprep.subr.bf16.mxu0 %v4846
        %6912 = vmatpush1.bf16.msra.mxu0 %v4845
        %6913 = vmatprep.subr.bf16.mxu0 %v4848
        %6914 = vmatpush1.bf16.msra.mxu0 %v4847
        %6915 = vmatprep.subr.bf16.mxu0 %v4850
        %6916 = vmatpush1.bf16.msra.mxu0 %v4849
        %6917 = vmatprep.subr.bf16.mxu0 %v4852
        %6918 = vmatpush1.bf16.msra.mxu0 %v4851
        %6919 = vmatprep.subr.bf16.mxu0 %v4854
        %6920 = vmatpush1.bf16.msra.mxu0 %v4853
        %6921 = vmatprep.subr.bf16.mxu0 %v4856
        %6922 = vmatpush1.bf16.msra.mxu0 %v4855
        %6923 = vmatprep.subr.bf16.mxu0 %v4858
        %6924 = vmatpush1.bf16.msra.mxu0 %v4857
        %6925 = vmatprep.subr.bf16.mxu0 %v4860
        %6926 = vmatpush1.bf16.msra.mxu0 %v4859
        %6927 = vmatprep.subr.bf16.mxu0 %v4862
        %6928 = vmatpush1.bf16.msra.mxu0 %v4861
        %6929 = vmatprep.subr.bf16.mxu0 %v4864
        %6930 = vmatpush1.bf16.msra.mxu0 %v4863
        %6931 = vmatprep.subr.bf16.mxu0 %v4866
        %6932 = vmatpush1.bf16.msra.mxu0 %v4865
        %6933 = vmatprep.subr.bf16.mxu0 %v4868
        %6934 = vmatpush1.bf16.msra.mxu0 %v4867
        %6935 = vmatprep.subr.bf16.mxu0 %v4870
        %6936 = vmatpush1.bf16.msra.mxu0 %v4869
        %6937 = vmatprep.subr.bf16.mxu0 %v4872
        %6938 = vmatpush1.bf16.msra.mxu0 %v4871
        %6939 = vmatprep.mubr.bf16.mxu0 %v1293
        %6940 = vmatmul.mubr.bf16.gmra.mrb[0].mxu0 %v1279
        %v6941 = vpop.f32.mrb[0].mxu0
        %v6942 = vadd.f32 %v6901, %v6941
        %v6943 = vpop.f32.mrb[0].mxu0
        %v6944 = vadd.f32 %v6903, %v6943
        %v6945 = vpop.f32.mrb[0].mxu0
        %v6946 = vpop.f32.mrb[0].mxu0
        %6947 = vdwg.mxu0
        %6948 = vmatprep.subr.bf16.mxu0 %v4874
        %6949 = vmatpush1.bf16.msra.mxu0 %v4873
        %6950 = vmatprep.subr.bf16.mxu0 %v4876
        %6951 = vmatpush1.bf16.msra.mxu0 %v4875
        %6952 = vmatprep.subr.bf16.mxu0 %v4878
        %6953 = vmatpush1.bf16.msra.mxu0 %v4877
        %6954 = vmatprep.subr.bf16.mxu0 %v4880
        %6955 = vmatpush1.bf16.msra.mxu0 %v4879
        %6956 = vmatprep.subr.bf16.mxu0 %v4882
        %6957 = vmatpush1.bf16.msra.mxu0 %v4881
        %6958 = vmatprep.subr.bf16.mxu0 %v4884
        %6959 = vmatpush1.bf16.msra.mxu0 %v4883
        %6960 = vmatprep.subr.bf16.mxu0 %v4886
        %6961 = vmatpush1.bf16.msra.mxu0 %v4885
        %6962 = vmatprep.subr.bf16.mxu0 %v4888
        %6963 = vmatpush1.bf16.msra.mxu0 %v4887
        %6964 = vmatprep.subr.bf16.mxu0 %v4890
        %6965 = vmatpush1.bf16.msra.mxu0 %v4889
        %6966 = vmatprep.subr.bf16.mxu0 %v4892
        %6967 = vmatpush1.bf16.msra.mxu0 %v4891
        %6968 = vmatprep.subr.bf16.mxu0 %v4894
        %6969 = vmatpush1.bf16.msra.mxu0 %v4893
        %6970 = vmatprep.subr.bf16.mxu0 %v4896
        %6971 = vmatpush1.bf16.msra.mxu0 %v4895
        %6972 = vmatprep.subr.bf16.mxu0 %v4898
        %6973 = vmatpush1.bf16.msra.mxu0 %v4897
        %6974 = vmatprep.subr.bf16.mxu0 %v4900
        %6975 = vmatpush1.bf16.msra.mxu0 %v4899
        %6976 = vmatprep.subr.bf16.mxu0 %v4902
        %6977 = vmatpush1.bf16.msra.mxu0 %v4901
        %6978 = vmatprep.subr.bf16.mxu0 %v4904
        %6979 = vmatpush1.bf16.msra.mxu0 %v4903
        %6980 = vmatprep.mubr.bf16.mxu0 %v1297
        %6981 = vmatmul.mubr.bf16.gmra.mrb[0].mxu0 %v1295
        %v6982 = vpop.f32.mrb[0].mxu0
        %v6983 = vadd.f32 %v6942, %v6982
        %v6984 = vpop.f32.mrb[0].mxu0
        %v6985 = vadd.f32 %v6944, %v6984
        %v6986 = vpop.f32.mrb[0].mxu0
        %v6987 = vpop.f32.mrb[0].mxu0
        %6988 = vdwg.mxu0
        %6989 = vmatprep.subr.bf16.mxu0 %v4906
        %6990 = vmatpush1.bf16.msra.mxu0 %v4905
        %6991 = vmatprep.subr.bf16.mxu0 %v4908
        %6992 = vmatpush1.bf16.msra.mxu0 %v4907
        %6993 = vmatprep.subr.bf16.mxu0 %v4910
        %6994 = vmatpush1.bf16.msra.mxu0 %v4909
        %6995 = vmatprep.subr.bf16.mxu0 %v4912
        %6996 = vmatpush1.bf16.msra.mxu0 %v4911
        %6997 = vmatprep.subr.bf16.mxu0 %v4914
        %6998 = vmatpush1.bf16.msra.mxu0 %v4913
        %6999 = vmatprep.subr.bf16.mxu0 %v4916
        %7000 = vmatpush1.bf16.msra.mxu0 %v4915
        %7001 = vmatprep.subr.bf16.mxu0 %v4918
        %7002 = vmatpush1.bf16.msra.mxu0 %v4917
        %7003 = vmatprep.subr.bf16.mxu0 %v4920
        %7004 = vmatpush1.bf16.msra.mxu0 %v4919
        %7005 = vmatprep.subr.bf16.mxu0 %v4922
        %7006 = vmatpush1.bf16.msra.mxu0 %v4921
        %7007 = vmatprep.subr.bf16.mxu0 %v4924
        %7008 = vmatpush1.bf16.msra.mxu0 %v4923
        %7009 = vmatprep.subr.bf16.mxu0 %v4926
        %7010 = vmatpush1.bf16.msra.mxu0 %v4925
        %7011 = vmatprep.subr.bf16.mxu0 %v4928
        %7012 = vmatpush1.bf16.msra.mxu0 %v4927
        %7013 = vmatprep.subr.bf16.mxu0 %v4930
        %7014 = vmatpush1.bf16.msra.mxu0 %v4929
        %7015 = vmatprep.subr.bf16.mxu0 %v4932
        %7016 = vmatpush1.bf16.msra.mxu0 %v4931
        %7017 = vmatprep.subr.bf16.mxu0 %v4934
        %7018 = vmatpush1.bf16.msra.mxu0 %v4933
        %7019 = vmatprep.subr.bf16.mxu0 %v4936
        %7020 = vmatpush1.bf16.msra.mxu0 %v4935
        %7021 = vmatprep.mubr.bf16.mxu0 %v1335
        %7022 = vmatmul.mubr.bf16.gmra.mrb[0].mxu0 %v1321
        %v7023 = vpop.f32.mrb[0].mxu0
        %v7024 = vadd.f32 %v6983, %v7023
        %v7025 = vpop.f32.mrb[0].mxu0
        %v7026 = vadd.f32 %v6985, %v7025
        %v7027 = vpop.f32.mrb[0].mxu0
        %v7028 = vpop.f32.mrb[0].mxu0
        %7029 = vdwg.mxu0
        %7030 = vmatprep.subr.bf16.mxu0 %v4938
        %7031 = vmatpush1.bf16.msra.mxu0 %v4937
        %7032 = vmatprep.subr.bf16.mxu0 %v4940
        %7033 = vmatpush1.bf16.msra.mxu0 %v4939
        %7034 = vmatprep.subr.bf16.mxu0 %v4942
        %7035 = vmatpush1.bf16.msra.mxu0 %v4941
        %7036 = vmatprep.subr.bf16.mxu0 %v4944
        %7037 = vmatpush1.bf16.msra.mxu0 %v4943
        %7038 = vmatprep.subr.bf16.mxu0 %v4946
        %7039 = vmatpush1.bf16.msra.mxu0 %v4945
        %7040 = vmatprep.subr.bf16.mxu0 %v4948
        %7041 = vmatpush1.bf16.msra.mxu0 %v4947
        %7042 = vmatprep.subr.bf16.mxu0 %v4950
        %7043 = vmatpush1.bf16.msra.mxu0 %v4949
        %7044 = vmatprep.subr.bf16.mxu0 %v4952
        %7045 = vmatpush1.bf16.msra.mxu0 %v4951
        %7046 = vmatprep.subr.bf16.mxu0 %v4954
        %7047 = vmatpush1.bf16.msra.mxu0 %v4953
        %7048 = vmatprep.subr.bf16.mxu0 %v4956
        %7049 = vmatpush1.bf16.msra.mxu0 %v4955
        %7050 = vmatprep.subr.bf16.mxu0 %v4958
        %7051 = vmatpush1.bf16.msra.mxu0 %v4957
        %7052 = vmatprep.subr.bf16.mxu0 %v4960
        %7053 = vmatpush1.bf16.msra.mxu0 %v4959
        %7054 = vmatprep.subr.bf16.mxu0 %v4962
        %7055 = vmatpush1.bf16.msra.mxu0 %v4961
        %7056 = vmatprep.subr.bf16.mxu0 %v4964
        %7057 = vmatpush1.bf16.msra.mxu0 %v4963
        %7058 = vmatprep.subr.bf16.mxu0 %v4966
        %7059 = vmatpush1.bf16.msra.mxu0 %v4965
        %7060 = vmatprep.subr.bf16.mxu0 %v4968
        %7061 = vmatpush1.bf16.msra.mxu0 %v4967
        %7062 = vmatprep.mubr.bf16.mxu0 %v1345
        %7063 = vmatmul.mubr.bf16.gmra.mrb[0].mxu0 %v1343
        %v7064 = vpop.f32.mrb[0].mxu0
        %v7065 = vadd.f32 %v7024, %v7064
        %v7066 = vpop.f32.mrb[0].mxu0
        %v7067 = vadd.f32 %v7026, %v7066
        %v7068 = vpop.f32.mrb[0].mxu0
        %v7069 = vpop.f32.mrb[0].mxu0
        %7070 = vdwg.mxu0
        %7071 = vmatprep.subr.bf16.mxu0 %v4970
        %7072 = vmatpush1.bf16.msra.mxu0 %v4969
        %7073 = vmatprep.subr.bf16.mxu0 %v4972
        %7074 = vmatpush1.bf16.msra.mxu0 %v4971
        %7075 = vmatprep.subr.bf16.mxu0 %v4974
        %7076 = vmatpush1.bf16.msra.mxu0 %v4973
        %7077 = vmatprep.subr.bf16.mxu0 %v4976
        %7078 = vmatpush1.bf16.msra.mxu0 %v4975
        %7079 = vmatprep.subr.bf16.mxu0 %v4978
        %7080 = vmatpush1.bf16.msra.mxu0 %v4977
        %7081 = vmatprep.subr.bf16.mxu0 %v4980
        %7082 = vmatpush1.bf16.msra.mxu0 %v4979
        %7083 = vmatprep.subr.bf16.mxu0 %v4982
        %7084 = vmatpush1.bf16.msra.mxu0 %v4981
        %7085 = vmatprep.subr.bf16.mxu0 %v4984
        %7086 = vmatpush1.bf16.msra.mxu0 %v4983
        %7087 = vmatprep.subr.bf16.mxu0 %v4986
        %7088 = vmatpush1.bf16.msra.mxu0 %v4985
        %7089 = vmatprep.subr.bf16.mxu0 %v4988
        %7090 = vmatpush1.bf16.msra.mxu0 %v4987
        %7091 = vmatprep.subr.bf16.mxu0 %v4990
        %7092 = vmatpush1.bf16.msra.mxu0 %v4989
        %7093 = vmatprep.subr.bf16.mxu0 %v4992
        %7094 = vmatpush1.bf16.msra.mxu0 %v4991
        %7095 = vmatprep.subr.bf16.mxu0 %v4994
        %7096 = vmatpush1.bf16.msra.mxu0 %v4993
        %7097 = vmatprep.subr.bf16.mxu0 %v4996
        %7098 = vmatpush1.bf16.msra.mxu0 %v4995
        %7099 = vmatprep.subr.bf16.mxu0 %v4998
        %7100 = vmatpush1.bf16.msra.mxu0 %v4997
        %7101 = vmatprep.subr.bf16.mxu0 %v5000
        %7102 = vmatpush1.bf16.msra.mxu0 %v4999
        %7103 = vmatprep.mubr.bf16.mxu0 %v1342
        %7104 = vmatmul.mubr.bf16.gmra.mrb[0].mxu0 %v1328
        %v7105 = vpop.f32.mrb[0].mxu0
        %v7106 = vadd.f32 %v7065, %v7105
        %v7107 = vpop.f32.mrb[0].mxu0
        %v7108 = vadd.f32 %v7067, %v7107
        %v7109 = vpop.f32.mrb[0].mxu0
        %v7110 = vpop.f32.mrb[0].mxu0
        %7111 = vdwg.mxu0
        %7112 = vmatprep.subr.bf16.mxu0 %v5002
        %7113 = vmatpush1.bf16.msra.mxu0 %v5001
        %7114 = vmatprep.subr.bf16.mxu0 %v5004
        %7115 = vmatpush1.bf16.msra.mxu0 %v5003
        %7116 = vmatprep.subr.bf16.mxu0 %v5006
        %7117 = vmatpush1.bf16.msra.mxu0 %v5005
        %7118 = vmatprep.subr.bf16.mxu0 %v5008
        %7119 = vmatpush1.bf16.msra.mxu0 %v5007
        %7120 = vmatprep.subr.bf16.mxu0 %v5010
        %7121 = vmatpush1.bf16.msra.mxu0 %v5009
        %7122 = vmatprep.subr.bf16.mxu0 %v5012
        %7123 = vmatpush1.bf16.msra.mxu0 %v5011
        %7124 = vmatprep.subr.bf16.mxu0 %v5014
        %7125 = vmatpush1.bf16.msra.mxu0 %v5013
        %7126 = vmatprep.subr.bf16.mxu0 %v5016
        %7127 = vmatpush1.bf16.msra.mxu0 %v5015
        %7128 = vmatprep.subr.bf16.mxu0 %v5018
        %7129 = vmatpush1.bf16.msra.mxu0 %v5017
        %7130 = vmatprep.subr.bf16.mxu0 %v5020
        %7131 = vmatpush1.bf16.msra.mxu0 %v5019
        %7132 = vmatprep.subr.bf16.mxu0 %v5022
        %7133 = vmatpush1.bf16.msra.mxu0 %v5021
        %7134 = vmatprep.subr.bf16.mxu0 %v5024
        %7135 = vmatpush1.bf16.msra.mxu0 %v5023
        %7136 = vmatprep.subr.bf16.mxu0 %v5026
        %7137 = vmatpush1.bf16.msra.mxu0 %v5025
        %7138 = vmatprep.subr.bf16.mxu0 %v5028
        %7139 = vmatpush1.bf16.msra.mxu0 %v5027
        %7140 = vmatprep.subr.bf16.mxu0 %v5030
        %7141 = vmatpush1.bf16.msra.mxu0 %v5029
        %7142 = vmatprep.subr.bf16.mxu0 %v5032
        %7143 = vmatpush1.bf16.msra.mxu0 %v5031
        %7144 = vmatprep.mubr.bf16.mxu0 %v1346
        %7145 = vmatmul.mubr.bf16.gmra.mrb[0].mxu0 %v1344
        %v7146 = vpop.f32.mrb[0].mxu0
        %v7147 = vadd.f32 %v7106, %v7146
        %v7148 = vpop.f32.mrb[0].mxu0
        %v7149 = vadd.f32 %v7108, %v7148
        %v7150 = vpop.f32.mrb[0].mxu0
        %v7151 = vpop.f32.mrb[0].mxu0
        %7152 = vdwg.mxu0
        %7153 = vmatprep.subr.bf16.mxu0 %v5034
        %7154 = vmatpush1.bf16.msra.mxu0 %v5033
        %7155 = vmatprep.subr.bf16.mxu0 %v5036
        %7156 = vmatpush1.bf16.msra.mxu0 %v5035
        %7157 = vmatprep.subr.bf16.mxu0 %v5038
        %7158 = vmatpush1.bf16.msra.mxu0 %v5037
        %7159 = vmatprep.subr.bf16.mxu0 %v5040
        %7160 = vmatpush1.bf16.msra.mxu0 %v5039
        %7161 = vmatprep.subr.bf16.mxu0 %v5042
        %7162 = vmatpush1.bf16.msra.mxu0 %v5041
        %7163 = vmatprep.subr.bf16.mxu0 %v5044
        %7164 = vmatpush1.bf16.msra.mxu0 %v5043
        %7165 = vmatprep.subr.bf16.mxu0 %v5046
        %7166 = vmatpush1.bf16.msra.mxu0 %v5045
        %7167 = vmatprep.subr.bf16.mxu0 %v5048
        %7168 = vmatpush1.bf16.msra.mxu0 %v5047
        %7169 = vmatprep.subr.bf16.mxu0 %v5050
        %7170 = vmatpush1.bf16.msra.mxu0 %v5049
        %7171 = vmatprep.subr.bf16.mxu0 %v5052
        %7172 = vmatpush1.bf16.msra.mxu0 %v5051
        %7173 = vmatprep.subr.bf16.mxu0 %v5054
        %7174 = vmatpush1.bf16.msra.mxu0 %v5053
        %7175 = vmatprep.subr.bf16.mxu0 %v5056
        %7176 = vmatpush1.bf16.msra.mxu0 %v5055
        %7177 = vmatprep.subr.bf16.mxu0 %v5058
        %7178 = vmatpush1.bf16.msra.mxu0 %v5057
        %7179 = vmatprep.subr.bf16.mxu0 %v5060
        %7180 = vmatpush1.bf16.msra.mxu0 %v5059
        %7181 = vmatprep.subr.bf16.mxu0 %v5062
        %7182 = vmatpush1.bf16.msra.mxu0 %v5061
        %7183 = vmatprep.subr.bf16.mxu0 %v5064
        %7184 = vmatpush1.bf16.msra.mxu0 %v5063
        %7185 = vmatprep.mubr.bf16.mxu0 %v1384
        %7186 = vmatmul.mubr.bf16.gmra.mrb[0].mxu0 %v1370
        %v7187 = vpop.f32.mrb[0].mxu0
        %v7188 = vadd.f32 %v7147, %v7187
        %v7189 = vpop.f32.mrb[0].mxu0
        %v7190 = vadd.f32 %v7149, %v7189
        %v7191 = vpop.f32.mrb[0].mxu0
        %v7192 = vpop.f32.mrb[0].mxu0
        %7193 = vdwg.mxu0
        %7194 = vmatprep.subr.bf16.mxu0 %v5066
        %7195 = vmatpush1.bf16.msra.mxu0 %v5065
        %7196 = vmatprep.subr.bf16.mxu0 %v5068
        %7197 = vmatpush1.bf16.msra.mxu0 %v5067
        %7198 = vmatprep.subr.bf16.mxu0 %v5070
        %7199 = vmatpush1.bf16.msra.mxu0 %v5069
        %7200 = vmatprep.subr.bf16.mxu0 %v5072
        %7201 = vmatpush1.bf16.msra.mxu0 %v5071
        %7202 = vmatprep.subr.bf16.mxu0 %v5074
        %7203 = vmatpush1.bf16.msra.mxu0 %v5073
        %7204 = vmatprep.subr.bf16.mxu0 %v5076
        %7205 = vmatpush1.bf16.msra.mxu0 %v5075
        %7206 = vmatprep.subr.bf16.mxu0 %v5078
        %7207 = vmatpush1.bf16.msra.mxu0 %v5077
        %7208 = vmatprep.subr.bf16.mxu0 %v5080
        %7209 = vmatpush1.bf16.msra.mxu0 %v5079
        %7210 = vmatprep.subr.bf16.mxu0 %v5082
        %7211 = vmatpush1.bf16.msra.mxu0 %v5081
        %7212 = vmatprep.subr.bf16.mxu0 %v5084
        %7213 = vmatpush1.bf16.msra.mxu0 %v5083
        %7214 = vmatprep.subr.bf16.mxu0 %v5086
        %7215 = vmatpush1.bf16.msra.mxu0 %v5085
        %7216 = vmatprep.subr.bf16.mxu0 %v5088
        %7217 = vmatpush1.bf16.msra.mxu0 %v5087
        %7218 = vmatprep.subr.bf16.mxu0 %v5090
        %7219 = vmatpush1.bf16.msra.mxu0 %v5089
        %7220 = vmatprep.subr.bf16.mxu0 %v5092
        %7221 = vmatpush1.bf16.msra.mxu0 %v5091
        %7222 = vmatprep.subr.bf16.mxu0 %v5094
        %7223 = vmatpush1.bf16.msra.mxu0 %v5093
        %7224 = vmatprep.subr.bf16.mxu0 %v5096
        %7225 = vmatpush1.bf16.msra.mxu0 %v5095
        %7226 = vmatprep.mubr.bf16.mxu0 %v1394
        %7227 = vmatmul.mubr.bf16.gmra.mrb[0].mxu0 %v1392
        %v7228 = vpop.f32.mrb[0].mxu0
        %v7229 = vadd.f32 %v7188, %v7228
        %v7230 = vpop.f32.mrb[0].mxu0
        %v7231 = vadd.f32 %v7190, %v7230
        %v7232 = vpop.f32.mrb[0].mxu0
        %v7233 = vpop.f32.mrb[0].mxu0
        %7234 = vdwg.mxu0
        %7235 = vmatprep.subr.bf16.mxu0 %v5098
        %7236 = vmatpush1.bf16.msra.mxu0 %v5097
        %7237 = vmatprep.subr.bf16.mxu0 %v5100
        %7238 = vmatpush1.bf16.msra.mxu0 %v5099
        %7239 = vmatprep.subr.bf16.mxu0 %v5102
        %7240 = vmatpush1.bf16.msra.mxu0 %v5101
        %7241 = vmatprep.subr.bf16.mxu0 %v5104
        %7242 = vmatpush1.bf16.msra.mxu0 %v5103
        %7243 = vmatprep.subr.bf16.mxu0 %v5106
        %7244 = vmatpush1.bf16.msra.mxu0 %v5105
        %7245 = vmatprep.subr.bf16.mxu0 %v5108
        %7246 = vmatpush1.bf16.msra.mxu0 %v5107
        %7247 = vmatprep.subr.bf16.mxu0 %v5110
        %7248 = vmatpush1.bf16.msra.mxu0 %v5109
        %7249 = vmatprep.subr.bf16.mxu0 %v5112
        %7250 = vmatpush1.bf16.msra.mxu0 %v5111
        %7251 = vmatprep.subr.bf16.mxu0 %v5114
        %7252 = vmatpush1.bf16.msra.mxu0 %v5113
        %7253 = vmatprep.subr.bf16.mxu0 %v5116
        %7254 = vmatpush1.bf16.msra.mxu0 %v5115
        %7255 = vmatprep.subr.bf16.mxu0 %v5118
        %7256 = vmatpush1.bf16.msra.mxu0 %v5117
        %7257 = vmatprep.subr.bf16.mxu0 %v5120
        %7258 = vmatpush1.bf16.msra.mxu0 %v5119
        %7259 = vmatprep.subr.bf16.mxu0 %v5122
        %7260 = vmatpush1.bf16.msra.mxu0 %v5121
        %7261 = vmatprep.subr.bf16.mxu0 %v5124
        %7262 = vmatpush1.bf16.msra.mxu0 %v5123
        %7263 = vmatprep.subr.bf16.mxu0 %v5126
        %7264 = vmatpush1.bf16.msra.mxu0 %v5125
        %7265 = vmatprep.subr.bf16.mxu0 %v5128
        %7266 = vmatpush1.bf16.msra.mxu0 %v5127
        %7267 = vmatprep.mubr.bf16.mxu0 %v1391
        %7268 = vmatmul.mubr.bf16.gmra.mrb[0].mxu0 %v1377
        %v7269 = vpop.f32.mrb[0].mxu0
        %v7270 = vadd.f32 %v7229, %v7269
        %v7271 = vpop.f32.mrb[0].mxu0
        %v7272 = vadd.f32 %v7231, %v7271
        %v7273 = vpop.f32.mrb[0].mxu0
        %v7274 = vpop.f32.mrb[0].mxu0
        %7275 = vdwg.mxu0
        %7276 = vmatprep.subr.bf16.mxu0 %v5130
        %7277 = vmatpush1.bf16.msra.mxu0 %v5129
        %7278 = vmatprep.subr.bf16.mxu0 %v5132
        %7279 = vmatpush1.bf16.msra.mxu0 %v5131
        %7280 = vmatprep.subr.bf16.mxu0 %v5134
        %7281 = vmatpush1.bf16.msra.mxu0 %v5133
        %7282 = vmatprep.subr.bf16.mxu0 %v5136
        %7283 = vmatpush1.bf16.msra.mxu0 %v5135
        %7284 = vmatprep.subr.bf16.mxu0 %v5138
        %7285 = vmatpush1.bf16.msra.mxu0 %v5137
        %7286 = vmatprep.subr.bf16.mxu0 %v5140
        %7287 = vmatpush1.bf16.msra.mxu0 %v5139
        %7288 = vmatprep.subr.bf16.mxu0 %v5142
        %7289 = vmatpush1.bf16.msra.mxu0 %v5141
        %7290 = vmatprep.subr.bf16.mxu0 %v5144
        %7291 = vmatpush1.bf16.msra.mxu0 %v5143
        %7292 = vmatprep.subr.bf16.mxu0 %v5146
        %7293 = vmatpush1.bf16.msra.mxu0 %v5145
        %7294 = vmatprep.subr.bf16.mxu0 %v5148
        %7295 = vmatpush1.bf16.msra.mxu0 %v5147
        %7296 = vmatprep.subr.bf16.mxu0 %v5150
        %7297 = vmatpush1.bf16.msra.mxu0 %v5149
        %7298 = vmatprep.subr.bf16.mxu0 %v5152
        %7299 = vmatpush1.bf16.msra.mxu0 %v5151
        %7300 = vmatprep.subr.bf16.mxu0 %v5154
        %7301 = vmatpush1.bf16.msra.mxu0 %v5153
        %7302 = vmatprep.subr.bf16.mxu0 %v5156
        %7303 = vmatpush1.bf16.msra.mxu0 %v5155
        %7304 = vmatprep.subr.bf16.mxu0 %v5158
        %7305 = vmatpush1.bf16.msra.mxu0 %v5157
        %7306 = vmatprep.subr.bf16.mxu0 %v5160
        %7307 = vmatpush1.bf16.msra.mxu0 %v5159
        %7308 = vmatprep.mubr.bf16.mxu0 %v1395
        %7309 = vmatmul.mubr.bf16.gmra.mrb[0].mxu0 %v1393
        %v7310 = vpop.f32.mrb[0].mxu0
        %v7311 = vadd.f32 %v7270, %v7310
        %v7312 = vpop.f32.mrb[0].mxu0
        %v7313 = vadd.f32 %v7272, %v7312
        %v7314 = vpop.f32.mrb[0].mxu0
        %v7315 = vpop.f32.mrb[0].mxu0
        %7316 = vdwg.mxu0
        %7317 = vmatprep.subr.bf16.mxu0 %v5162
        %7318 = vmatpush1.bf16.msra.mxu0 %v5161
        %7319 = vmatprep.subr.bf16.mxu0 %v5164
        %7320 = vmatpush1.bf16.msra.mxu0 %v5163
        %7321 = vmatprep.subr.bf16.mxu0 %v5166
        %7322 = vmatpush1.bf16.msra.mxu0 %v5165
        %7323 = vmatprep.subr.bf16.mxu0 %v5168
        %7324 = vmatpush1.bf16.msra.mxu0 %v5167
        %7325 = vmatprep.subr.bf16.mxu0 %v5170
        %7326 = vmatpush1.bf16.msra.mxu0 %v5169
        %7327 = vmatprep.subr.bf16.mxu0 %v5172
        %7328 = vmatpush1.bf16.msra.mxu0 %v5171
        %7329 = vmatprep.subr.bf16.mxu0 %v5174
        %7330 = vmatpush1.bf16.msra.mxu0 %v5173
        %7331 = vmatprep.subr.bf16.mxu0 %v5176
        %7332 = vmatpush1.bf16.msra.mxu0 %v5175
        %7333 = vmatprep.subr.bf16.mxu0 %v5178
        %7334 = vmatpush1.bf16.msra.mxu0 %v5177
        %7335 = vmatprep.subr.bf16.mxu0 %v5180
        %7336 = vmatpush1.bf16.msra.mxu0 %v5179
        %7337 = vmatprep.subr.bf16.mxu0 %v5182
        %7338 = vmatpush1.bf16.msra.mxu0 %v5181
        %7339 = vmatprep.subr.bf16.mxu0 %v5184
        %7340 = vmatpush1.bf16.msra.mxu0 %v5183
        %7341 = vmatprep.subr.bf16.mxu0 %v5186
        %7342 = vmatpush1.bf16.msra.mxu0 %v5185
        %7343 = vmatprep.subr.bf16.mxu0 %v5188
        %7344 = vmatpush1.bf16.msra.mxu0 %v5187
        %7345 = vmatprep.subr.bf16.mxu0 %v5190
        %7346 = vmatpush1.bf16.msra.mxu0 %v5189
        %7347 = vmatprep.subr.bf16.mxu0 %v5192
        %7348 = vmatpush1.bf16.msra.mxu0 %v5191
        %7349 = vmatprep.mubr.bf16.mxu0 %v1433
        %7350 = vmatmul.mubr.bf16.gmra.mrb[0].mxu0 %v1419
        %v7351 = vpop.f32.mrb[0].mxu0
        %v7352 = vadd.f32 %v7311, %v7351
        %v7353 = vpop.f32.mrb[0].mxu0
        %v7354 = vadd.f32 %v7313, %v7353
        %v7355 = vpop.f32.mrb[0].mxu0
        %v7356 = vpop.f32.mrb[0].mxu0
        %7357 = vdwg.mxu0
        %7358 = vmatprep.subr.bf16.mxu0 %v5194
        %7359 = vmatpush1.bf16.msra.mxu0 %v5193
        %7360 = vmatprep.subr.bf16.mxu0 %v5196
        %7361 = vmatpush1.bf16.msra.mxu0 %v5195
        %7362 = vmatprep.subr.bf16.mxu0 %v5198
        %7363 = vmatpush1.bf16.msra.mxu0 %v5197
        %7364 = vmatprep.subr.bf16.mxu0 %v5200
        %7365 = vmatpush1.bf16.msra.mxu0 %v5199
        %7366 = vmatprep.subr.bf16.mxu0 %v5202
        %7367 = vmatpush1.bf16.msra.mxu0 %v5201
        %7368 = vmatprep.subr.bf16.mxu0 %v5204
        %7369 = vmatpush1.bf16.msra.mxu0 %v5203
        %7370 = vmatprep.subr.bf16.mxu0 %v5206
        %7371 = vmatpush1.bf16.msra.mxu0 %v5205
        %7372 = vmatprep.subr.bf16.mxu0 %v5208
        %7373 = vmatpush1.bf16.msra.mxu0 %v5207
        %7374 = vmatprep.subr.bf16.mxu0 %v5210
        %7375 = vmatpush1.bf16.msra.mxu0 %v5209
        %7376 = vmatprep.subr.bf16.mxu0 %v5212
        %7377 = vmatpush1.bf16.msra.mxu0 %v5211
        %7378 = vmatprep.subr.bf16.mxu0 %v5214
        %7379 = vmatpush1.bf16.msra.mxu0 %v5213
        %7380 = vmatprep.subr.bf16.mxu0 %v5216
        %7381 = vmatpush1.bf16.msra.mxu0 %v5215
        %7382 = vmatprep.subr.bf16.mxu0 %v5218
        %7383 = vmatpush1.bf16.msra.mxu0 %v5217
        %7384 = vmatprep.subr.bf16.mxu0 %v5220
        %7385 = vmatpush1.bf16.msra.mxu0 %v5219
        %7386 = vmatprep.subr.bf16.mxu0 %v5222
        %7387 = vmatpush1.bf16.msra.mxu0 %v5221
        %7388 = vmatprep.subr.bf16.mxu0 %v5224
        %7389 = vmatpush1.bf16.msra.mxu0 %v5223
        %7390 = vmatprep.mubr.bf16.mxu0 %v1443
        %7391 = vmatmul.mubr.bf16.gmra.mrb[0].mxu0 %v1441
        %v7392 = vpop.f32.mrb[0].mxu0
        %v7393 = vadd.f32 %v7352, %v7392
        %v7394 = vpop.f32.mrb[0].mxu0
        %v7395 = vadd.f32 %v7354, %v7394
        %v7396 = vpop.f32.mrb[0].mxu0
        %v7397 = vpop.f32.mrb[0].mxu0
        %7398 = vdwg.mxu0
        %7399 = vmatprep.subr.bf16.mxu0 %v5226
        %7400 = vmatpush1.bf16.msra.mxu0 %v5225
        %7401 = vmatprep.subr.bf16.mxu0 %v5228
        %7402 = vmatpush1.bf16.msra.mxu0 %v5227
        %7403 = vmatprep.subr.bf16.mxu0 %v5230
        %7404 = vmatpush1.bf16.msra.mxu0 %v5229
        %7405 = vmatprep.subr.bf16.mxu0 %v5232
        %7406 = vmatpush1.bf16.msra.mxu0 %v5231
        %7407 = vmatprep.subr.bf16.mxu0 %v5234
        %7408 = vmatpush1.bf16.msra.mxu0 %v5233
        %7409 = vmatprep.subr.bf16.mxu0 %v5236
        %7410 = vmatpush1.bf16.msra.mxu0 %v5235
        %7411 = vmatprep.subr.bf16.mxu0 %v5238
        %7412 = vmatpush1.bf16.msra.mxu0 %v5237
        %7413 = vmatprep.subr.bf16.mxu0 %v5240
        %7414 = vmatpush1.bf16.msra.mxu0 %v5239
        %7415 = vmatprep.subr.bf16.mxu0 %v5242
        %7416 = vmatpush1.bf16.msra.mxu0 %v5241
        %7417 = vmatprep.subr.bf16.mxu0 %v5244
        %7418 = vmatpush1.bf16.msra.mxu0 %v5243
        %7419 = vmatprep.subr.bf16.mxu0 %v5246
        %7420 = vmatpush1.bf16.msra.mxu0 %v5245
        %7421 = vmatprep.subr.bf16.mxu0 %v5248
        %7422 = vmatpush1.bf16.msra.mxu0 %v5247
        %7423 = vmatprep.subr.bf16.mxu0 %v5250
        %7424 = vmatpush1.bf16.msra.mxu0 %v5249
        %7425 = vmatprep.subr.bf16.mxu0 %v5252
        %7426 = vmatpush1.bf16.msra.mxu0 %v5251
        %7427 = vmatprep.subr.bf16.mxu0 %v5254
        %7428 = vmatpush1.bf16.msra.mxu0 %v5253
        %7429 = vmatprep.subr.bf16.mxu0 %v5256
        %7430 = vmatpush1.bf16.msra.mxu0 %v5255
        %7431 = vmatprep.mubr.bf16.mxu0 %v1440
        %7432 = vmatmul.mubr.bf16.gmra.mrb[0].mxu0 %v1426
        %v7433 = vpop.f32.mrb[0].mxu0
        %v7434 = vadd.f32 %v7393, %v7433
        %v7435 = vpop.f32.mrb[0].mxu0
        %v7436 = vadd.f32 %v7395, %v7435
        %v7437 = vpop.f32.mrb[0].mxu0
        %v7438 = vpop.f32.mrb[0].mxu0
        %7439 = vdwg.mxu0
        %7440 = vmatprep.subr.bf16.mxu0 %v5258
        %7441 = vmatpush1.bf16.msra.mxu0 %v5257
        %7442 = vmatprep.subr.bf16.mxu0 %v5260
        %7443 = vmatpush1.bf16.msra.mxu0 %v5259
        %7444 = vmatprep.subr.bf16.mxu0 %v5262
        %7445 = vmatpush1.bf16.msra.mxu0 %v5261
        %7446 = vmatprep.subr.bf16.mxu0 %v5264
        %7447 = vmatpush1.bf16.msra.mxu0 %v5263
        %7448 = vmatprep.subr.bf16.mxu0 %v5266
        %7449 = vmatpush1.bf16.msra.mxu0 %v5265
        %7450 = vmatprep.subr.bf16.mxu0 %v5268
        %7451 = vmatpush1.bf16.msra.mxu0 %v5267
        %7452 = vmatprep.subr.bf16.mxu0 %v5270
        %7453 = vmatpush1.bf16.msra.mxu0 %v5269
        %7454 = vmatprep.subr.bf16.mxu0 %v5272
        %7455 = vmatpush1.bf16.msra.mxu0 %v5271
        %7456 = vmatprep.subr.bf16.mxu0 %v5274
        %7457 = vmatpush1.bf16.msra.mxu0 %v5273
        %7458 = vmatprep.subr.bf16.mxu0 %v5276
        %7459 = vmatpush1.bf16.msra.mxu0 %v5275
        %7460 = vmatprep.subr.bf16.mxu0 %v5278
        %7461 = vmatpush1.bf16.msra.mxu0 %v5277
        %7462 = vmatprep.subr.bf16.mxu0 %v5280
        %7463 = vmatpush1.bf16.msra.mxu0 %v5279
        %7464 = vmatprep.subr.bf16.mxu0 %v5282
        %7465 = vmatpush1.bf16.msra.mxu0 %v5281
        %7466 = vmatprep.subr.bf16.mxu0 %v5284
        %7467 = vmatpush1.bf16.msra.mxu0 %v5283
        %7468 = vmatprep.subr.bf16.mxu0 %v5286
        %7469 = vmatpush1.bf16.msra.mxu0 %v5285
        %7470 = vmatprep.subr.bf16.mxu0 %v5288
        %7471 = vmatpush1.bf16.msra.mxu0 %v5287
        %7472 = vmatprep.mubr.bf16.mxu0 %v1444
        %7473 = vmatmul.mubr.bf16.gmra.mrb[0].mxu0 %v1442
        %v7474 = vpop.f32.mrb[0].mxu0
        %v7475 = vadd.f32 %v7434, %v7474
        %v7476 = vpop.f32.mrb[0].mxu0
        %v7477 = vadd.f32 %v7436, %v7476
        %v7478 = vpop.f32.mrb[0].mxu0
        %v7479 = vpop.f32.mrb[0].mxu0
        %7480 = vdwg.mxu0
        %7481 = vmatprep.subr.bf16.mxu0 %v5290
        %7482 = vmatpush1.bf16.msra.mxu0 %v5289
        %7483 = vmatprep.subr.bf16.mxu0 %v5292
        %7484 = vmatpush1.bf16.msra.mxu0 %v5291
        %7485 = vmatprep.subr.bf16.mxu0 %v5294
        %7486 = vmatpush1.bf16.msra.mxu0 %v5293
        %7487 = vmatprep.subr.bf16.mxu0 %v5296
        %7488 = vmatpush1.bf16.msra.mxu0 %v5295
        %7489 = vmatprep.subr.bf16.mxu0 %v5298
        %7490 = vmatpush1.bf16.msra.mxu0 %v5297
        %7491 = vmatprep.subr.bf16.mxu0 %v5300
        %7492 = vmatpush1.bf16.msra.mxu0 %v5299
        %7493 = vmatprep.subr.bf16.mxu0 %v5302
        %7494 = vmatpush1.bf16.msra.mxu0 %v5301
        %7495 = vmatprep.subr.bf16.mxu0 %v5304
        %7496 = vmatpush1.bf16.msra.mxu0 %v5303
        %7497 = vmatprep.subr.bf16.mxu0 %v5306
        %7498 = vmatpush1.bf16.msra.mxu0 %v5305
        %7499 = vmatprep.subr.bf16.mxu0 %v5308
        %7500 = vmatpush1.bf16.msra.mxu0 %v5307
        %7501 = vmatprep.subr.bf16.mxu0 %v5310
        %7502 = vmatpush1.bf16.msra.mxu0 %v5309
        %7503 = vmatprep.subr.bf16.mxu0 %v5312
        %7504 = vmatpush1.bf16.msra.mxu0 %v5311
        %7505 = vmatprep.subr.bf16.mxu0 %v5314
        %7506 = vmatpush1.bf16.msra.mxu0 %v5313
        %7507 = vmatprep.subr.bf16.mxu0 %v5316
        %7508 = vmatpush1.bf16.msra.mxu0 %v5315
        %7509 = vmatprep.subr.bf16.mxu0 %v5318
        %7510 = vmatpush1.bf16.msra.mxu0 %v5317
        %7511 = vmatprep.subr.bf16.mxu0 %v5320
        %7512 = vmatpush1.bf16.msra.mxu0 %v5319
        %7513 = vmatprep.mubr.bf16.mxu0 %v1482
        %7514 = vmatmul.mubr.bf16.gmra.mrb[0].mxu0 %v1468
        %v7515 = vpop.f32.mrb[0].mxu0
        %v7516 = vadd.f32 %v7475, %v7515
        %v7517 = vpop.f32.mrb[0].mxu0
        %v7518 = vadd.f32 %v7477, %v7517
        %v7519 = vpop.f32.mrb[0].mxu0
        %v7520 = vpop.f32.mrb[0].mxu0
        %7521 = vdwg.mxu0
        %7522 = vmatprep.subr.bf16.mxu0 %v5322
        %7523 = vmatpush1.bf16.msra.mxu0 %v5321
        %7524 = vmatprep.subr.bf16.mxu0 %v5324
        %7525 = vmatpush1.bf16.msra.mxu0 %v5323
        %7526 = vmatprep.subr.bf16.mxu0 %v5326
        %7527 = vmatpush1.bf16.msra.mxu0 %v5325
        %7528 = vmatprep.subr.bf16.mxu0 %v5328
        %7529 = vmatpush1.bf16.msra.mxu0 %v5327
        %7530 = vmatprep.subr.bf16.mxu0 %v5330
        %7531 = vmatpush1.bf16.msra.mxu0 %v5329
        %7532 = vmatprep.subr.bf16.mxu0 %v5332
        %7533 = vmatpush1.bf16.msra.mxu0 %v5331
        %7534 = vmatprep.subr.bf16.mxu0 %v5334
        %7535 = vmatpush1.bf16.msra.mxu0 %v5333
        %7536 = vmatprep.subr.bf16.mxu0 %v5336
        %7537 = vmatpush1.bf16.msra.mxu0 %v5335
        %7538 = vmatprep.subr.bf16.mxu0 %v5338
        %7539 = vmatpush1.bf16.msra.mxu0 %v5337
        %7540 = vmatprep.subr.bf16.mxu0 %v5340
        %7541 = vmatpush1.bf16.msra.mxu0 %v5339
        %7542 = vmatprep.subr.bf16.mxu0 %v5342
        %7543 = vmatpush1.bf16.msra.mxu0 %v5341
        %7544 = vmatprep.subr.bf16.mxu0 %v5344
        %7545 = vmatpush1.bf16.msra.mxu0 %v5343
        %7546 = vmatprep.subr.bf16.mxu0 %v5346
        %7547 = vmatpush1.bf16.msra.mxu0 %v5345
        %7548 = vmatprep.subr.bf16.mxu0 %v5348
        %7549 = vmatpush1.bf16.msra.mxu0 %v5347
        %7550 = vmatprep.subr.bf16.mxu0 %v5350
        %7551 = vmatpush1.bf16.msra.mxu0 %v5349
        %7552 = vmatprep.subr.bf16.mxu0 %v5352
        %7553 = vmatpush1.bf16.msra.mxu0 %v5351
        %7554 = vmatprep.mubr.bf16.mxu0 %v1492
        %7555 = vmatmul.mubr.bf16.gmra.mrb[0].mxu0 %v1490
        %v7556 = vpop.f32.mrb[0].mxu0
        %v7557 = vadd.f32 %v7516, %v7556
        %v7558 = vpop.f32.mrb[0].mxu0
        %v7559 = vadd.f32 %v7518, %v7558
        %v7560 = vpop.f32.mrb[0].mxu0
        %v7561 = vpop.f32.mrb[0].mxu0
        %7562 = vdwg.mxu0
        %7563 = vmatprep.subr.bf16.mxu0 %v5354
        %7564 = vmatpush1.bf16.msra.mxu0 %v5353
        %7565 = vmatprep.subr.bf16.mxu0 %v5356
        %7566 = vmatpush1.bf16.msra.mxu0 %v5355
        %7567 = vmatprep.subr.bf16.mxu0 %v5358
        %7568 = vmatpush1.bf16.msra.mxu0 %v5357
        %7569 = vmatprep.subr.bf16.mxu0 %v5360
        %7570 = vmatpush1.bf16.msra.mxu0 %v5359
        %7571 = vmatprep.subr.bf16.mxu0 %v5362
        %7572 = vmatpush1.bf16.msra.mxu0 %v5361
        %7573 = vmatprep.subr.bf16.mxu0 %v5364
        %7574 = vmatpush1.bf16.msra.mxu0 %v5363
        %7575 = vmatprep.subr.bf16.mxu0 %v5366
        %7576 = vmatpush1.bf16.msra.mxu0 %v5365
        %7577 = vmatprep.subr.bf16.mxu0 %v5368
        %7578 = vmatpush1.bf16.msra.mxu0 %v5367
        %7579 = vmatprep.subr.bf16.mxu0 %v5370
        %7580 = vmatpush1.bf16.msra.mxu0 %v5369
        %7581 = vmatprep.subr.bf16.mxu0 %v5372
        %7582 = vmatpush1.bf16.msra.mxu0 %v5371
        %7583 = vmatprep.subr.bf16.mxu0 %v5374
        %7584 = vmatpush1.bf16.msra.mxu0 %v5373
        %7585 = vmatprep.subr.bf16.mxu0 %v5376
        %7586 = vmatpush1.bf16.msra.mxu0 %v5375
        %7587 = vmatprep.subr.bf16.mxu0 %v5378
        %7588 = vmatpush1.bf16.msra.mxu0 %v5377
        %7589 = vmatprep.subr.bf16.mxu0 %v5380
        %7590 = vmatpush1.bf16.msra.mxu0 %v5379
        %7591 = vmatprep.subr.bf16.mxu0 %v5382
        %7592 = vmatpush1.bf16.msra.mxu0 %v5381
        %7593 = vmatprep.subr.bf16.mxu0 %v5384
        %7594 = vmatpush1.bf16.msra.mxu0 %v5383
        %7595 = vmatprep.mubr.bf16.mxu0 %v1489
        %7596 = vmatmul.mubr.bf16.gmra.mrb[0].mxu0 %v1475
        %v7597 = vpop.f32.mrb[0].mxu0
        %v7598 = vadd.f32 %v7557, %v7597
        %v7599 = vpop.f32.mrb[0].mxu0
        %v7600 = vadd.f32 %v7559, %v7599
        %v7601 = vpop.f32.mrb[0].mxu0
        %v7602 = vpop.f32.mrb[0].mxu0
        %7603 = vdwg.mxu0
        %7604 = vmatprep.subr.bf16.mxu0 %v5386
        %7605 = vmatpush1.bf16.msra.mxu0 %v5385
        %7606 = vmatprep.subr.bf16.mxu0 %v5388
        %7607 = vmatpush1.bf16.msra.mxu0 %v5387
        %7608 = vmatprep.subr.bf16.mxu0 %v5390
        %7609 = vmatpush1.bf16.msra.mxu0 %v5389
        %7610 = vmatprep.subr.bf16.mxu0 %v5392
        %7611 = vmatpush1.bf16.msra.mxu0 %v5391
        %7612 = vmatprep.subr.bf16.mxu0 %v5394
        %7613 = vmatpush1.bf16.msra.mxu0 %v5393
        %7614 = vmatprep.subr.bf16.mxu0 %v5396
        %7615 = vmatpush1.bf16.msra.mxu0 %v5395
        %7616 = vmatprep.subr.bf16.mxu0 %v5398
        %7617 = vmatpush1.bf16.msra.mxu0 %v5397
        %7618 = vmatprep.subr.bf16.mxu0 %v5400
        %7619 = vmatpush1.bf16.msra.mxu0 %v5399
        %7620 = vmatprep.subr.bf16.mxu0 %v5402
        %7621 = vmatpush1.bf16.msra.mxu0 %v5401
        %7622 = vmatprep.subr.bf16.mxu0 %v5404
        %7623 = vmatpush1.bf16.msra.mxu0 %v5403
        %7624 = vmatprep.subr.bf16.mxu0 %v5406
        %7625 = vmatpush1.bf16.msra.mxu0 %v5405
        %7626 = vmatprep.subr.bf16.mxu0 %v5408
        %7627 = vmatpush1.bf16.msra.mxu0 %v5407
        %7628 = vmatprep.subr.bf16.mxu0 %v5410
        %7629 = vmatpush1.bf16.msra.mxu0 %v5409
        %7630 = vmatprep.subr.bf16.mxu0 %v5412
        %7631 = vmatpush1.bf16.msra.mxu0 %v5411
        %7632 = vmatprep.subr.bf16.mxu0 %v5414
        %7633 = vmatpush1.bf16.msra.mxu0 %v5413
        %7634 = vmatprep.subr.bf16.mxu0 %v5416
        %7635 = vmatpush1.bf16.msra.mxu0 %v5415
        %7636 = vmatprep.mubr.bf16.mxu0 %v1493
        %7637 = vmatmul.mubr.bf16.gmra.mrb[0].mxu0 %v1491
        %v7638 = vpop.f32.mrb[0].mxu0
        %v7639 = vadd.f32 %v7598, %v7638
        %v7640 = vpop.f32.mrb[0].mxu0
        %v7641 = vadd.f32 %v7600, %v7640
        %v7642 = vpop.f32.mrb[0].mxu0
        %v7643 = vpop.f32.mrb[0].mxu0
        %7644 = vdwg.mxu0
        %7645 = vmatprep.subr.bf16.mxu0 %v5418
        %7646 = vmatpush1.bf16.msra.mxu0 %v5417
        %7647 = vmatprep.subr.bf16.mxu0 %v5420
        %7648 = vmatpush1.bf16.msra.mxu0 %v5419
        %7649 = vmatprep.subr.bf16.mxu0 %v5422
        %7650 = vmatpush1.bf16.msra.mxu0 %v5421
        %7651 = vmatprep.subr.bf16.mxu0 %v5424
        %7652 = vmatpush1.bf16.msra.mxu0 %v5423
        %7653 = vmatprep.subr.bf16.mxu0 %v5426
        %7654 = vmatpush1.bf16.msra.mxu0 %v5425
        %7655 = vmatprep.subr.bf16.mxu0 %v5428
        %7656 = vmatpush1.bf16.msra.mxu0 %v5427
        %7657 = vmatprep.subr.bf16.mxu0 %v5430
        %7658 = vmatpush1.bf16.msra.mxu0 %v5429
        %7659 = vmatprep.subr.bf16.mxu0 %v5432
        %7660 = vmatpush1.bf16.msra.mxu0 %v5431
        %7661 = vmatprep.subr.bf16.mxu0 %v5434
        %7662 = vmatpush1.bf16.msra.mxu0 %v5433
        %7663 = vmatprep.subr.bf16.mxu0 %v5436
        %7664 = vmatpush1.bf16.msra.mxu0 %v5435
        %7665 = vmatprep.subr.bf16.mxu0 %v5438
        %7666 = vmatpush1.bf16.msra.mxu0 %v5437
        %7667 = vmatprep.subr.bf16.mxu0 %v5440
        %7668 = vmatpush1.bf16.msra.mxu0 %v5439
        %7669 = vmatprep.subr.bf16.mxu0 %v5442
        %7670 = vmatpush1.bf16.msra.mxu0 %v5441
        %7671 = vmatprep.subr.bf16.mxu0 %v5444
        %7672 = vmatpush1.bf16.msra.mxu0 %v5443
        %7673 = vmatprep.subr.bf16.mxu0 %v5446
        %7674 = vmatpush1.bf16.msra.mxu0 %v5445
        %7675 = vmatprep.subr.bf16.mxu0 %v5448
        %7676 = vmatpush1.bf16.msra.mxu0 %v5447
        %7677 = vmatprep.mubr.bf16.mxu0 %v1531
        %7678 = vmatmul.mubr.bf16.gmra.mrb[0].mxu0 %v1517
        %v7679 = vpop.f32.mrb[0].mxu0
        %v7680 = vadd.f32 %v7639, %v7679
        %v7681 = vpop.f32.mrb[0].mxu0
        %v7682 = vadd.f32 %v7641, %v7681
        %v7683 = vpop.f32.mrb[0].mxu0
        %v7684 = vpop.f32.mrb[0].mxu0
        %7685 = vdwg.mxu0
        %7686 = vmatprep.subr.bf16.mxu0 %v5450
        %7687 = vmatpush1.bf16.msra.mxu0 %v5449
        %7688 = vmatprep.subr.bf16.mxu0 %v5452
        %7689 = vmatpush1.bf16.msra.mxu0 %v5451
        %7690 = vmatprep.subr.bf16.mxu0 %v5454
        %7691 = vmatpush1.bf16.msra.mxu0 %v5453
        %7692 = vmatprep.subr.bf16.mxu0 %v5456
        %7693 = vmatpush1.bf16.msra.mxu0 %v5455
        %7694 = vmatprep.subr.bf16.mxu0 %v5458
        %7695 = vmatpush1.bf16.msra.mxu0 %v5457
        %7696 = vmatprep.subr.bf16.mxu0 %v5460
        %7697 = vmatpush1.bf16.msra.mxu0 %v5459
        %7698 = vmatprep.subr.bf16.mxu0 %v5462
        %7699 = vmatpush1.bf16.msra.mxu0 %v5461
        %7700 = vmatprep.subr.bf16.mxu0 %v5464
        %7701 = vmatpush1.bf16.msra.mxu0 %v5463
        %7702 = vmatprep.subr.bf16.mxu0 %v5466
        %7703 = vmatpush1.bf16.msra.mxu0 %v5465
        %7704 = vmatprep.subr.bf16.mxu0 %v5468
        %7705 = vmatpush1.bf16.msra.mxu0 %v5467
        %7706 = vmatprep.subr.bf16.mxu0 %v5470
        %7707 = vmatpush1.bf16.msra.mxu0 %v5469
        %7708 = vmatprep.subr.bf16.mxu0 %v5472
        %7709 = vmatpush1.bf16.msra.mxu0 %v5471
        %7710 = vmatprep.subr.bf16.mxu0 %v5474
        %7711 = vmatpush1.bf16.msra.mxu0 %v5473
        %7712 = vmatprep.subr.bf16.mxu0 %v5476
        %7713 = vmatpush1.bf16.msra.mxu0 %v5475
        %7714 = vmatprep.subr.bf16.mxu0 %v5478
        %7715 = vmatpush1.bf16.msra.mxu0 %v5477
        %7716 = vmatprep.subr.bf16.mxu0 %v5480
        %7717 = vmatpush1.bf16.msra.mxu0 %v5479
        %7718 = vmatprep.mubr.bf16.mxu0 %v1541
        %7719 = vmatmul.mubr.bf16.gmra.mrb[0].mxu0 %v1539
        %v7720 = vpop.f32.mrb[0].mxu0
        %v7721 = vadd.f32 %v7680, %v7720
        %v7722 = vpop.f32.mrb[0].mxu0
        %v7723 = vadd.f32 %v7682, %v7722
        %v7724 = vpop.f32.mrb[0].mxu0
        %v7725 = vpop.f32.mrb[0].mxu0
        %7726 = vdwg.mxu0
        %7727 = vmatprep.subr.bf16.mxu0 %v5482
        %7728 = vmatpush1.bf16.msra.mxu0 %v5481
        %7729 = vmatprep.subr.bf16.mxu0 %v5484
        %7730 = vmatpush1.bf16.msra.mxu0 %v5483
        %7731 = vmatprep.subr.bf16.mxu0 %v5486
        %7732 = vmatpush1.bf16.msra.mxu0 %v5485
        %7733 = vmatprep.subr.bf16.mxu0 %v5488
        %7734 = vmatpush1.bf16.msra.mxu0 %v5487
        %7735 = vmatprep.subr.bf16.mxu0 %v5490
        %7736 = vmatpush1.bf16.msra.mxu0 %v5489
        %7737 = vmatprep.subr.bf16.mxu0 %v5492
        %7738 = vmatpush1.bf16.msra.mxu0 %v5491
        %7739 = vmatprep.subr.bf16.mxu0 %v5494
        %7740 = vmatpush1.bf16.msra.mxu0 %v5493
        %7741 = vmatprep.subr.bf16.mxu0 %v5496
        %7742 = vmatpush1.bf16.msra.mxu0 %v5495
        %7743 = vmatprep.subr.bf16.mxu0 %v5498
        %7744 = vmatpush1.bf16.msra.mxu0 %v5497
        %7745 = vmatprep.subr.bf16.mxu0 %v5500
        %7746 = vmatpush1.bf16.msra.mxu0 %v5499
        %7747 = vmatprep.subr.bf16.mxu0 %v5502
        %7748 = vmatpush1.bf16.msra.mxu0 %v5501
        %7749 = vmatprep.subr.bf16.mxu0 %v5504
        %7750 = vmatpush1.bf16.msra.mxu0 %v5503
        %7751 = vmatprep.subr.bf16.mxu0 %v5506
        %7752 = vmatpush1.bf16.msra.mxu0 %v5505
        %7753 = vmatprep.subr.bf16.mxu0 %v5508
        %7754 = vmatpush1.bf16.msra.mxu0 %v5507
        %7755 = vmatprep.subr.bf16.mxu0 %v5510
        %7756 = vmatpush1.bf16.msra.mxu0 %v5509
        %7757 = vmatprep.subr.bf16.mxu0 %v5512
        %7758 = vmatpush1.bf16.msra.mxu0 %v5511
        %7759 = vmatprep.mubr.bf16.mxu0 %v1538
        %7760 = vmatmul.mubr.bf16.gmra.mrb[0].mxu0 %v1524
        %v7761 = vpop.f32.mrb[0].mxu0
        %v7762 = vadd.f32 %v7721, %v7761
        %v7763 = vpop.f32.mrb[0].mxu0
        %v7764 = vadd.f32 %v7723, %v7763
        %v7765 = vpop.f32.mrb[0].mxu0
        %v7766 = vpop.f32.mrb[0].mxu0
        %7767 = vdwg.mxu0
        %7768 = vmatprep.subr.bf16.mxu0 %v5514
        %7769 = vmatpush1.bf16.msra.mxu0 %v5513
        %7770 = vmatprep.subr.bf16.mxu0 %v5516
        %7771 = vmatpush1.bf16.msra.mxu0 %v5515
        %7772 = vmatprep.subr.bf16.mxu0 %v5518
        %7773 = vmatpush1.bf16.msra.mxu0 %v5517
        %7774 = vmatprep.subr.bf16.mxu0 %v5520
        %7775 = vmatpush1.bf16.msra.mxu0 %v5519
        %7776 = vmatprep.subr.bf16.mxu0 %v5522
        %7777 = vmatpush1.bf16.msra.mxu0 %v5521
        %7778 = vmatprep.subr.bf16.mxu0 %v5524
        %7779 = vmatpush1.bf16.msra.mxu0 %v5523
        %7780 = vmatprep.subr.bf16.mxu0 %v5526
        %7781 = vmatpush1.bf16.msra.mxu0 %v5525
        %7782 = vmatprep.subr.bf16.mxu0 %v5528
        %7783 = vmatpush1.bf16.msra.mxu0 %v5527
        %7784 = vmatprep.subr.bf16.mxu0 %v5530
        %7785 = vmatpush1.bf16.msra.mxu0 %v5529
        %7786 = vmatprep.subr.bf16.mxu0 %v5532
        %7787 = vmatpush1.bf16.msra.mxu0 %v5531
        %7788 = vmatprep.subr.bf16.mxu0 %v5534
        %7789 = vmatpush1.bf16.msra.mxu0 %v5533
        %7790 = vmatprep.subr.bf16.mxu0 %v5536
        %7791 = vmatpush1.bf16.msra.mxu0 %v5535
        %7792 = vmatprep.subr.bf16.mxu0 %v5538
        %7793 = vmatpush1.bf16.msra.mxu0 %v5537
        %7794 = vmatprep.subr.bf16.mxu0 %v5540
        %7795 = vmatpush1.bf16.msra.mxu0 %v5539
        %7796 = vmatprep.subr.bf16.mxu0 %v5542
        %7797 = vmatpush1.bf16.msra.mxu0 %v5541
        %7798 = vmatprep.subr.bf16.mxu0 %v5544
        %7799 = vmatpush1.bf16.msra.mxu0 %v5543
        %7800 = vmatprep.mubr.bf16.mxu0 %v1542
        %7801 = vmatmul.mubr.bf16.gmra.mrb[0].mxu0 %v1540
        %v7802 = vpop.f32.mrb[0].mxu0
        %v7803 = vadd.f32 %v7762, %v7802
        %v7804 = vpop.f32.mrb[0].mxu0
        %v7805 = vadd.f32 %v7764, %v7804
        %v7806 = vpop.f32.mrb[0].mxu0
        %v7807 = vpop.f32.mrb[0].mxu0
        %7808 = vdwg.mxu0
        %7809 = vmatprep.subr.bf16.mxu0 %v5546
        %7810 = vmatpush1.bf16.msra.mxu0 %v5545
        %7811 = vmatprep.subr.bf16.mxu0 %v5548
        %7812 = vmatpush1.bf16.msra.mxu0 %v5547
        %7813 = vmatprep.subr.bf16.mxu0 %v5550
        %7814 = vmatpush1.bf16.msra.mxu0 %v5549
        %7815 = vmatprep.subr.bf16.mxu0 %v5552
        %7816 = vmatpush1.bf16.msra.mxu0 %v5551
        %7817 = vmatprep.subr.bf16.mxu0 %v5554
        %7818 = vmatpush1.bf16.msra.mxu0 %v5553
        %7819 = vmatprep.subr.bf16.mxu0 %v5556
        %7820 = vmatpush1.bf16.msra.mxu0 %v5555
        %7821 = vmatprep.subr.bf16.mxu0 %v5558
        %7822 = vmatpush1.bf16.msra.mxu0 %v5557
        %7823 = vmatprep.subr.bf16.mxu0 %v5560
        %7824 = vmatpush1.bf16.msra.mxu0 %v5559
        %7825 = vmatprep.subr.bf16.mxu0 %v5562
        %7826 = vmatpush1.bf16.msra.mxu0 %v5561
        %7827 = vmatprep.subr.bf16.mxu0 %v5564
        %7828 = vmatpush1.bf16.msra.mxu0 %v5563
        %7829 = vmatprep.subr.bf16.mxu0 %v5566
        %7830 = vmatpush1.bf16.msra.mxu0 %v5565
        %7831 = vmatprep.subr.bf16.mxu0 %v5568
        %7832 = vmatpush1.bf16.msra.mxu0 %v5567
        %7833 = vmatprep.subr.bf16.mxu0 %v5570
        %7834 = vmatpush1.bf16.msra.mxu0 %v5569
        %7835 = vmatprep.subr.bf16.mxu0 %v5572
        %7836 = vmatpush1.bf16.msra.mxu0 %v5571
        %7837 = vmatprep.subr.bf16.mxu0 %v5574
        %7838 = vmatpush1.bf16.msra.mxu0 %v5573
        %7839 = vmatprep.subr.bf16.mxu0 %v5576
        %7840 = vmatpush1.bf16.msra.mxu0 %v5575
        %7841 = vmatprep.mubr.bf16.mxu0 %v1580
        %7842 = vmatmul.mubr.bf16.gmra.mrb[0].mxu0 %v1566
        %v7843 = vpop.f32.mrb[0].mxu0
        %v7844 = vadd.f32 %v7803, %v7843
        %v7845 = vpop.f32.mrb[0].mxu0
        %v7846 = vadd.f32 %v7805, %v7845
        %v7847 = vpop.f32.mrb[0].mxu0
        %v7848 = vpop.f32.mrb[0].mxu0
        %7849 = vdwg.mxu0
        %7850 = vmatprep.subr.bf16.mxu0 %v5578
        %7851 = vmatpush1.bf16.msra.mxu0 %v5577
        %7852 = vmatprep.subr.bf16.mxu0 %v5580
        %7853 = vmatpush1.bf16.msra.mxu0 %v5579
        %7854 = vmatprep.subr.bf16.mxu0 %v5582
        %7855 = vmatpush1.bf16.msra.mxu0 %v5581
        %7856 = vmatprep.subr.bf16.mxu0 %v5584
        %7857 = vmatpush1.bf16.msra.mxu0 %v5583
        %7858 = vmatprep.subr.bf16.mxu0 %v5586
        %7859 = vmatpush1.bf16.msra.mxu0 %v5585
        %7860 = vmatprep.subr.bf16.mxu0 %v5588
        %7861 = vmatpush1.bf16.msra.mxu0 %v5587
        %7862 = vmatprep.subr.bf16.mxu0 %v5590
        %7863 = vmatpush1.bf16.msra.mxu0 %v5589
        %7864 = vmatprep.subr.bf16.mxu0 %v5592
        %7865 = vmatpush1.bf16.msra.mxu0 %v5591
        %7866 = vmatprep.subr.bf16.mxu0 %v5594
        %7867 = vmatpush1.bf16.msra.mxu0 %v5593
        %7868 = vmatprep.subr.bf16.mxu0 %v5596
        %7869 = vmatpush1.bf16.msra.mxu0 %v5595
        %7870 = vmatprep.subr.bf16.mxu0 %v5598
        %7871 = vmatpush1.bf16.msra.mxu0 %v5597
        %7872 = vmatprep.subr.bf16.mxu0 %v5600
        %7873 = vmatpush1.bf16.msra.mxu0 %v5599
        %7874 = vmatprep.subr.bf16.mxu0 %v5602
        %7875 = vmatpush1.bf16.msra.mxu0 %v5601
        %7876 = vmatprep.subr.bf16.mxu0 %v5604
        %7877 = vmatpush1.bf16.msra.mxu0 %v5603
        %7878 = vmatprep.subr.bf16.mxu0 %v5606
        %7879 = vmatpush1.bf16.msra.mxu0 %v5605
        %7880 = vmatprep.subr.bf16.mxu0 %v5608
        %7881 = vmatpush1.bf16.msra.mxu0 %v5607
        %7882 = vmatprep.mubr.bf16.mxu0 %v1590
        %7883 = vmatmul.mubr.bf16.gmra.mrb[0].mxu0 %v1588
        %v7884 = vpop.f32.mrb[0].mxu0
        %v7885 = vadd.f32 %v7844, %v7884
        %v7886 = vpop.f32.mrb[0].mxu0
        %v7887 = vadd.f32 %v7846, %v7886
        %v7888 = vpop.f32.mrb[0].mxu0
        %v7889 = vpop.f32.mrb[0].mxu0
        %7890 = vdwg.mxu0
        %7891 = vmatprep.subr.bf16.mxu0 %v5610
        %7892 = vmatpush1.bf16.msra.mxu0 %v5609
        %7893 = vmatprep.subr.bf16.mxu0 %v5612
        %7894 = vmatpush1.bf16.msra.mxu0 %v5611
        %7895 = vmatprep.subr.bf16.mxu0 %v5614
        %7896 = vmatpush1.bf16.msra.mxu0 %v5613
        %7897 = vmatprep.subr.bf16.mxu0 %v5616
        %7898 = vmatpush1.bf16.msra.mxu0 %v5615
        %7899 = vmatprep.subr.bf16.mxu0 %v5618
        %7900 = vmatpush1.bf16.msra.mxu0 %v5617
        %7901 = vmatprep.subr.bf16.mxu0 %v5620
        %7902 = vmatpush1.bf16.msra.mxu0 %v5619
        %7903 = vmatprep.subr.bf16.mxu0 %v5622
        %7904 = vmatpush1.bf16.msra.mxu0 %v5621
        %7905 = vmatprep.subr.bf16.mxu0 %v5624
        %7906 = vmatpush1.bf16.msra.mxu0 %v5623
        %7907 = vmatprep.subr.bf16.mxu0 %v5626
        %7908 = vmatpush1.bf16.msra.mxu0 %v5625
        %7909 = vmatprep.subr.bf16.mxu0 %v5628
        %7910 = vmatpush1.bf16.msra.mxu0 %v5627
        %7911 = vmatprep.subr.bf16.mxu0 %v5630
        %7912 = vmatpush1.bf16.msra.mxu0 %v5629
        %7913 = vmatprep.subr.bf16.mxu0 %v5632
        %7914 = vmatpush1.bf16.msra.mxu0 %v5631
        %7915 = vmatprep.subr.bf16.mxu0 %v5634
        %7916 = vmatpush1.bf16.msra.mxu0 %v5633
        %7917 = vmatprep.subr.bf16.mxu0 %v5636
        %7918 = vmatpush1.bf16.msra.mxu0 %v5635
        %7919 = vmatprep.subr.bf16.mxu0 %v5638
        %7920 = vmatpush1.bf16.msra.mxu0 %v5637
        %7921 = vmatprep.subr.bf16.mxu0 %v5640
        %7922 = vmatpush1.bf16.msra.mxu0 %v5639
        %7923 = vmatprep.mubr.bf16.mxu0 %v1587
        %7924 = vmatmul.mubr.bf16.gmra.mrb[0].mxu0 %v1573
        %v7925 = vpop.f32.mrb[0].mxu0
        %v7926 = vadd.f32 %v7885, %v7925
        %v7927 = vpop.f32.mrb[0].mxu0
        %v7928 = vadd.f32 %v7887, %v7927
        %v7929 = vpop.f32.mrb[0].mxu0
        %v7930 = vpop.f32.mrb[0].mxu0
        %7931 = vdwg.mxu0
        %7932 = vmatprep.subr.bf16.mxu0 %v5642
        %7933 = vmatpush1.bf16.msra.mxu0 %v5641
        %7934 = vmatprep.subr.bf16.mxu0 %v5644
        %7935 = vmatpush1.bf16.msra.mxu0 %v5643
        %7936 = vmatprep.subr.bf16.mxu0 %v5646
        %7937 = vmatpush1.bf16.msra.mxu0 %v5645
        %7938 = vmatprep.subr.bf16.mxu0 %v5648
        %7939 = vmatpush1.bf16.msra.mxu0 %v5647
        %7940 = vmatprep.subr.bf16.mxu0 %v5650
        %7941 = vmatpush1.bf16.msra.mxu0 %v5649
        %7942 = vmatprep.subr.bf16.mxu0 %v5652
        %7943 = vmatpush1.bf16.msra.mxu0 %v5651
        %7944 = vmatprep.subr.bf16.mxu0 %v5654
        %7945 = vmatpush1.bf16.msra.mxu0 %v5653
        %7946 = vmatprep.subr.bf16.mxu0 %v5656
        %7947 = vmatpush1.bf16.msra.mxu0 %v5655
        %7948 = vmatprep.subr.bf16.mxu0 %v5658
        %7949 = vmatpush1.bf16.msra.mxu0 %v5657
        %7950 = vmatprep.subr.bf16.mxu0 %v5660
        %7951 = vmatpush1.bf16.msra.mxu0 %v5659
        %7952 = vmatprep.subr.bf16.mxu0 %v5662
        %7953 = vmatpush1.bf16.msra.mxu0 %v5661
        %7954 = vmatprep.subr.bf16.mxu0 %v5664
        %7955 = vmatpush1.bf16.msra.mxu0 %v5663
        %7956 = vmatprep.subr.bf16.mxu0 %v5666
        %7957 = vmatpush1.bf16.msra.mxu0 %v5665
        %7958 = vmatprep.subr.bf16.mxu0 %v5668
        %7959 = vmatpush1.bf16.msra.mxu0 %v5667
        %7960 = vmatprep.subr.bf16.mxu0 %v5670
        %7961 = vmatpush1.bf16.msra.mxu0 %v5669
        %7962 = vmatprep.subr.bf16.mxu0 %v5672
        %7963 = vmatpush1.bf16.msra.mxu0 %v5671
        %7964 = vmatprep.mubr.bf16.mxu0 %v1591
        %7965 = vmatmul.mubr.bf16.gmra.mrb[0].mxu0 %v1589
        %v7966 = vpop.f32.mrb[0].mxu0
        %v7967 = vadd.f32 %v7926, %v7966
        %v7968 = vpop.f32.mrb[0].mxu0
        %v7969 = vadd.f32 %v7928, %v7968
        %v7970 = vpop.f32.mrb[0].mxu0
        %v7971 = vpop.f32.mrb[0].mxu0
        %7972 = vdwg.mxu0
        %7973 = vmatprep.subr.bf16.mxu0 %v5674
        %7974 = vmatpush1.bf16.msra.mxu0 %v5673
        %7975 = vmatprep.subr.bf16.mxu0 %v5676
        %7976 = vmatpush1.bf16.msra.mxu0 %v5675
        %7977 = vmatprep.subr.bf16.mxu0 %v5678
        %7978 = vmatpush1.bf16.msra.mxu0 %v5677
        %7979 = vmatprep.subr.bf16.mxu0 %v5680
        %7980 = vmatpush1.bf16.msra.mxu0 %v5679
        %7981 = vmatprep.subr.bf16.mxu0 %v5682
        %7982 = vmatpush1.bf16.msra.mxu0 %v5681
        %7983 = vmatprep.subr.bf16.mxu0 %v5684
        %7984 = vmatpush1.bf16.msra.mxu0 %v5683
        %7985 = vmatprep.subr.bf16.mxu0 %v5686
        %7986 = vmatpush1.bf16.msra.mxu0 %v5685
        %7987 = vmatprep.subr.bf16.mxu0 %v5688
        %7988 = vmatpush1.bf16.msra.mxu0 %v5687
        %7989 = vmatprep.subr.bf16.mxu0 %v5690
        %7990 = vmatpush1.bf16.msra.mxu0 %v5689
        %7991 = vmatprep.subr.bf16.mxu0 %v5692
        %7992 = vmatpush1.bf16.msra.mxu0 %v5691
        %7993 = vmatprep.subr.bf16.mxu0 %v5694
        %7994 = vmatpush1.bf16.msra.mxu0 %v5693
        %7995 = vmatprep.subr.bf16.mxu0 %v5696
        %7996 = vmatpush1.bf16.msra.mxu0 %v5695
        %7997 = vmatprep.subr.bf16.mxu0 %v5698
        %7998 = vmatpush1.bf16.msra.mxu0 %v5697
        %7999 = vmatprep.subr.bf16.mxu0 %v5700
        %8000 = vmatpush1.bf16.msra.mxu0 %v5699
        %8001 = vmatprep.subr.bf16.mxu0 %v5702
        %8002 = vmatpush1.bf16.msra.mxu0 %v5701
        %8003 = vmatprep.subr.bf16.mxu0 %v5704
        %8004 = vmatpush1.bf16.msra.mxu0 %v5703
        %8005 = vmatprep.mubr.bf16.mxu0 %v1629
        %8006 = vmatmul.mubr.bf16.gmra.mrb[0].mxu0 %v1615
        %v8007 = vpop.f32.mrb[0].mxu0
        %v8008 = vadd.f32 %v7967, %v8007
        %v8009 = vpop.f32.mrb[0].mxu0
        %v8010 = vadd.f32 %v7969, %v8009
        %v8011 = vpop.f32.mrb[0].mxu0
        %v8012 = vpop.f32.mrb[0].mxu0
        %8013 = vdwg.mxu0
        %8014 = vmatprep.subr.bf16.mxu0 %v5706
        %8015 = vmatpush1.bf16.msra.mxu0 %v5705
        %8016 = vmatprep.subr.bf16.mxu0 %v5708
        %8017 = vmatpush1.bf16.msra.mxu0 %v5707
        %8018 = vmatprep.subr.bf16.mxu0 %v5710
        %8019 = vmatpush1.bf16.msra.mxu0 %v5709
        %8020 = vmatprep.subr.bf16.mxu0 %v5712
        %8021 = vmatpush1.bf16.msra.mxu0 %v5711
        %8022 = vmatprep.subr.bf16.mxu0 %v5714
        %8023 = vmatpush1.bf16.msra.mxu0 %v5713
        %8024 = vmatprep.subr.bf16.mxu0 %v5716
        %8025 = vmatpush1.bf16.msra.mxu0 %v5715
        %8026 = vmatprep.subr.bf16.mxu0 %v5718
        %8027 = vmatpush1.bf16.msra.mxu0 %v5717
        %8028 = vmatprep.subr.bf16.mxu0 %v5720
        %8029 = vmatpush1.bf16.msra.mxu0 %v5719
        %8030 = vmatprep.subr.bf16.mxu0 %v5722
        %8031 = vmatpush1.bf16.msra.mxu0 %v5721
        %8032 = vmatprep.subr.bf16.mxu0 %v5724
        %8033 = vmatpush1.bf16.msra.mxu0 %v5723
        %8034 = vmatprep.subr.bf16.mxu0 %v5726
        %8035 = vmatpush1.bf16.msra.mxu0 %v5725
        %8036 = vmatprep.subr.bf16.mxu0 %v5728
        %8037 = vmatpush1.bf16.msra.mxu0 %v5727
        %8038 = vmatprep.subr.bf16.mxu0 %v5730
        %8039 = vmatpush1.bf16.msra.mxu0 %v5729
        %8040 = vmatprep.subr.bf16.mxu0 %v5732
        %8041 = vmatpush1.bf16.msra.mxu0 %v5731
        %8042 = vmatprep.subr.bf16.mxu0 %v5734
        %8043 = vmatpush1.bf16.msra.mxu0 %v5733
        %8044 = vmatprep.subr.bf16.mxu0 %v5736
        %8045 = vmatpush1.bf16.msra.mxu0 %v5735
        %8046 = vmatprep.mubr.bf16.mxu0 %v1639
        %8047 = vmatmul.mubr.bf16.gmra.mrb[0].mxu0 %v1637
        %v8048 = vpop.f32.mrb[0].mxu0
        %v8049 = vadd.f32 %v8008, %v8048
        %v8050 = vpop.f32.mrb[0].mxu0
        %v8051 = vadd.f32 %v8010, %v8050
        %v8052 = vpop.f32.mrb[0].mxu0
        %v8053 = vpop.f32.mrb[0].mxu0
        %8054 = vdwg.mxu0
        %8055 = vmatprep.subr.bf16.mxu0 %v5738
        %8056 = vmatpush1.bf16.msra.mxu0 %v5737
        %8057 = vmatprep.subr.bf16.mxu0 %v5740
        %8058 = vmatpush1.bf16.msra.mxu0 %v5739
        %8059 = vmatprep.subr.bf16.mxu0 %v5742
        %8060 = vmatpush1.bf16.msra.mxu0 %v5741
        %8061 = vmatprep.subr.bf16.mxu0 %v5744
        %8062 = vmatpush1.bf16.msra.mxu0 %v5743
        %8063 = vmatprep.subr.bf16.mxu0 %v5746
        %8064 = vmatpush1.bf16.msra.mxu0 %v5745
        %8065 = vmatprep.subr.bf16.mxu0 %v5748
        %8066 = vmatpush1.bf16.msra.mxu0 %v5747
        %8067 = vmatprep.subr.bf16.mxu0 %v5750
        %8068 = vmatpush1.bf16.msra.mxu0 %v5749
        %8069 = vmatprep.subr.bf16.mxu0 %v5752
        %8070 = vmatpush1.bf16.msra.mxu0 %v5751
        %8071 = vmatprep.subr.bf16.mxu0 %v5754
        %8072 = vmatpush1.bf16.msra.mxu0 %v5753
        %8073 = vmatprep.subr.bf16.mxu0 %v5756
        %8074 = vmatpush1.bf16.msra.mxu0 %v5755
        %8075 = vmatprep.subr.bf16.mxu0 %v5758
        %8076 = vmatpush1.bf16.msra.mxu0 %v5757
        %8077 = vmatprep.subr.bf16.mxu0 %v5760
        %8078 = vmatpush1.bf16.msra.mxu0 %v5759
        %8079 = vmatprep.subr.bf16.mxu0 %v5762
        %8080 = vmatpush1.bf16.msra.mxu0 %v5761
        %8081 = vmatprep.subr.bf16.mxu0 %v5764
        %8082 = vmatpush1.bf16.msra.mxu0 %v5763
        %8083 = vmatprep.subr.bf16.mxu0 %v5766
        %8084 = vmatpush1.bf16.msra.mxu0 %v5765
        %8085 = vmatprep.subr.bf16.mxu0 %v5768
        %8086 = vmatpush1.bf16.msra.mxu0 %v5767
        %8087 = vmatprep.mubr.bf16.mxu0 %v1636
        %8088 = vmatmul.mubr.bf16.gmra.mrb[0].mxu0 %v1622
        %v8089 = vpop.f32.mrb[0].mxu0
        %v8090 = vadd.f32 %v8049, %v8089
        %v8091 = vpop.f32.mrb[0].mxu0
        %v8092 = vadd.f32 %v8051, %v8091
        %v8093 = vpop.f32.mrb[0].mxu0
        %v8094 = vpop.f32.mrb[0].mxu0
        %8095 = vdwg.mxu0
        %8096 = vmatprep.subr.bf16.mxu0 %v5770
        %8097 = vmatpush1.bf16.msra.mxu0 %v5769
        %8098 = vmatprep.subr.bf16.mxu0 %v5772
        %8099 = vmatpush1.bf16.msra.mxu0 %v5771
        %8100 = vmatprep.subr.bf16.mxu0 %v5774
        %8101 = vmatpush1.bf16.msra.mxu0 %v5773
        %8102 = vmatprep.subr.bf16.mxu0 %v5776
        %8103 = vmatpush1.bf16.msra.mxu0 %v5775
        %8104 = vmatprep.subr.bf16.mxu0 %v5778
        %8105 = vmatpush1.bf16.msra.mxu0 %v5777
        %8106 = vmatprep.subr.bf16.mxu0 %v5780
        %8107 = vmatpush1.bf16.msra.mxu0 %v5779
        %8108 = vmatprep.subr.bf16.mxu0 %v5782
        %8109 = vmatpush1.bf16.msra.mxu0 %v5781
        %8110 = vmatprep.subr.bf16.mxu0 %v5784
        %8111 = vmatpush1.bf16.msra.mxu0 %v5783
        %8112 = vmatprep.subr.bf16.mxu0 %v5786
        %8113 = vmatpush1.bf16.msra.mxu0 %v5785
        %8114 = vmatprep.subr.bf16.mxu0 %v5788
        %8115 = vmatpush1.bf16.msra.mxu0 %v5787
        %8116 = vmatprep.subr.bf16.mxu0 %v5790
        %8117 = vmatpush1.bf16.msra.mxu0 %v5789
        %8118 = vmatprep.subr.bf16.mxu0 %v5792
        %8119 = vmatpush1.bf16.msra.mxu0 %v5791
        %8120 = vmatprep.subr.bf16.mxu0 %v5794
        %8121 = vmatpush1.bf16.msra.mxu0 %v5793
        %8122 = vmatprep.subr.bf16.mxu0 %v5796
        %8123 = vmatpush1.bf16.msra.mxu0 %v5795
        %8124 = vmatprep.subr.bf16.mxu0 %v5798
        %8125 = vmatpush1.bf16.msra.mxu0 %v5797
        %8126 = vmatprep.subr.bf16.mxu0 %v5800
        %8127 = vmatpush1.bf16.msra.mxu0 %v5799
        %8128 = vmatprep.mubr.bf16.mxu0 %v1640
        %8129 = vmatmul.mubr.bf16.gmra.mrb[0].mxu0 %v1638
        %v8130 = vpop.f32.mrb[0].mxu0
        %v8131 = vadd.f32 %v8090, %v8130
        %v8132 = vpop.f32.mrb[0].mxu0
        %v8133 = vadd.f32 %v8092, %v8132
        %v8134 = vpop.f32.mrb[0].mxu0
        %v8135 = vpop.f32.mrb[0].mxu0
        %8136 = vdwg.mxu0
        %v8139 = vcombine.low %v8131, %v8133
        %v8141 = vunpack.c.l.s4 1983009808
        %v8142 = vunpack.c.0.s8 %v8141
        %v8143 = vlaneseq
        %v8144 = vshrl.u32 %v8143, 7
        %v8145 = vsub.s32 %v8142, %v8144
        %v8146 = vrot.slane %v8139, %v8145
        %v8148 = vadd.f32 %v208, %v8146
        %8149 = vst [vmem:[#allocation2] sm:$0xf] %v8148
        %p8150 = scmp.eq.s32.totalorder %s21, 1
        // Predicated region
        $region37: #{simple_nn_forward.2} parent=27 // pred_check
          %p8151 = pneg %p8150
        $region38: #{simple_nn_forward.2} parent=27 // pred_check_branch
          %8153 = sbr.rel (%p8151) target = $region40
        $region39: #{simple_nn_forward.2} parent=27 // pred_region
          %v8154 = vld [vmem:[#allocation2] sm:$0xf]
          %8155 = vst [vmem:[%s201] sm:$0xf] %v8154
        $region40: #{simple_nn_forward.2} parent=27 // pred_fallthru
          _
        %s8156 = smul.u32 2, %s20
        %p8157 = scmp.lt.s32.totalorder %s8156, 3
        %s8158 = scalar_select %p8157, %s8156, 3
        %s8159 = smul.addr %s8158, 2
        %s8160 = scalar_lea.vmem %s2, %s8159
        // Predicated region
        $region41: #{simple_nn_forward.2} parent=27 // pred_check
          %p8161 = pneg %p100
        $region42: #{simple_nn_forward.2} parent=27 // pred_check_branch
          %8163 = sbr.rel (%p8161) target = $region44
        $region43: #{simple_nn_forward.2} parent=27 // pred_region
          %s8164 = smul.u32 2, %s20
        $region44: #{simple_nn_forward.2} parent=27 // pred_fallthru
          _
      $region28: #{simple_nn_forward.2} parent=5 // pred_fallthru
        _
      %p8165 = scmp.le.s32.totalorder 2, %s11
      // Predicated region
      $region45: #{simple_nn_forward.2} parent=5 // pred_check
        %p8166 = pneg %p8165
      $region46: #{simple_nn_forward.2} parent=5 // pred_check_branch
        %8168 = sbr.rel (%p8166) target = $region48
      $region47: #{simple_nn_forward.2} parent=5 // pred_region
        %s8169 = ssub.s32 %s11, 2
        // Predicated region
        $region49: #{simple_nn_forward.2} parent=47 // pred_check
          %p8170 = pneg %p106
        $region50: #{simple_nn_forward.2} parent=47 // pred_check_branch
          %8172 = sbr.rel (%p8170) target = $region52
        $region51: #{simple_nn_forward.2} parent=47 // pred_region
          %s8173 = smul.u32 2, %s22
          %p8174 = scmp.lt.s32.totalorder %s8173, 3
          %s8175 = scalar_select %p8174, %s8173, 3
          %s8176 = smul.addr %s8175, 2
          %s8177 = scalar_lea.vmem %s2, %s8176
        $region52: #{simple_nn_forward.2} parent=47 // pred_fallthru
          _
      $region48: #{simple_nn_forward.2} parent=5 // pred_fallthru
        _
    $region6: #{simple_nn_forward.2} parent=1 // loop_footer
      %s15 = sadd.s32 1, %s11
    $region7: #{simple_nn_forward.2} parent=1 // loop_footer_branch
      %10 = sbr.rel target = $region3
    $region8: #{simple_nn_forward.2} parent=1 // loop_exit
      _
    %8178 = vsyncpa [#allocation4], 1
    %s8179 = scalar_lea.sflag [#allocation4], 1
    %8180 = vsyncpa %s8179, 1

</llo_original>
